<compile_context>
chip_gen: v7x
topology: tpu7x:2x2x1
jax: 0.10.0
libtpu: 0.0.40
codegen_flags: <defaults>
</compile_context>

<pallas_src>
import math
import functools

import jax
import jax.numpy as jnp
import numpy as np
from jax.experimental import pallas as pl
from jax.experimental.pallas import tpu as pltpu


# ----------------------------------------------------------------------------
# Fused kernel: ConvLSTM gates + SA attention memory + conv_output update
# ----------------------------------------------------------------------------
def _fused_sa_convlstm_kernel(
        x_ref, h_ref, c_ref, m_ref,
        cw_ref, cb_ref, wh_ref, bh_ref, wm_ref, bm_ref, wz_ref, bz_ref,
        ow_ref, ob_ref,
        h_out_ref, c_out_ref, m_out_ref,
        pad1_ref, pad2_ref,
        *, kh, kw, H, W, hid, d_attn):
    f32, bf16 = jnp.float32, jnp.bfloat16
    S = H * W
    ph, pw = kh // 2, kw // 2

    def im2col(pad_ref, combined_pm, cin):
        # combined_pm: (S, cin) pixel-major.  Zero-pad spatially in a VMEM scratch
        # and gather the kh*kw shifted views into one (S, kh*kw*cin) patch matrix.
        pad_ref[...] = jnp.zeros(pad_ref.shape, pad_ref.dtype)
        pad_ref[ph:ph + H, pw:pw + W, :] = combined_pm.reshape(H, W, cin)
        padded = pad_ref[...]
        cols = []
        for dy in range(kh):
            for dx in range(kw):
                cols.append(padded[dy:dy + H, dx:dx + W, :].reshape(S, cin))
        return jnp.concatenate(cols, axis=-1).astype(bf16)

    # ---------------- stage 1: ConvLSTM conv + gates ----------------
    combined_cm = jnp.concatenate([x_ref[...], h_ref[...]], axis=0)   # (cin1, S)
    cin1 = combined_cm.shape[0]
    patches1 = im2col(pad1_ref, combined_cm.T, cin1)                  # (S, K1) bf16
    acc1 = jnp.dot(patches1, cw_ref[...],
                   preferred_element_type=f32) + cb_ref[...]          # (S, 4*hid) f32

    i = jax.nn.sigmoid(acc1[:, 0 * hid:1 * hid])
    f = jax.nn.sigmoid(acc1[:, 1 * hid:2 * hid])
    o = jax.nn.sigmoid(acc1[:, 2 * hid:3 * hid])
    g = jnp.tanh(acc1[:, 3 * hid:4 * hid])

    c_prev = c_ref[...].T                                             # (S, hid)
    c_new = f * c_prev + i * g
    h_conv = o * jnp.tanh(c_new)                                      # (S, hid)

    # ---------------- stage 2: self-attention memory ----------------
    C = d_attn
    m_pm = m_ref[...].T                                               # (S, hid)
    hproj = jnp.dot(h_conv.astype(bf16), wh_ref[...],
                    preferred_element_type=f32) + bh_ref[...]         # (S, 3C)
    mproj = jnp.dot(m_pm.astype(bf16), wm_ref[...],
                    preferred_element_type=f32) + bm_ref[...]         # (S, 2C)

    scale = 1.0 / math.sqrt(C)
    hq = (hproj[:, 0 * C:1 * C] * scale).astype(bf16)                 # pre-scaled q
    hk = hproj[:, 1 * C:2 * C].astype(bf16)
    hv = hproj[:, 2 * C:3 * C].astype(bf16)
    mk = mproj[:, 0 * C:1 * C].astype(bf16)
    mv = mproj[:, 1 * C:2 * C].astype(bf16)

    # fused score matmul: one (S,C) x (2S,C)^T contraction for both attentions
    k_cat = jnp.concatenate([hk, mk], axis=0)                         # (2S, C)
    scores = jax.lax.dot_general(hq, k_cat, (((1,), (1,)), ((), ())),
                                 preferred_element_type=f32)          # (S, 2S)

    def softmax_rows(s):
        s = s - jnp.max(s, axis=-1, keepdims=True)
        e = jnp.exp(s)
        return e * pl.reciprocal(jnp.sum(e, axis=-1, keepdims=True), approx=True)

    p_h = softmax_rows(scores[:, 0:S]).astype(bf16)                   # (S, S)
    p_m = softmax_rows(scores[:, S:2 * S]).astype(bf16)

    zh = jnp.dot(p_h, hv, preferred_element_type=f32)                 # (S, C)
    zm = jnp.dot(p_m, mv, preferred_element_type=f32)
    zcat = jnp.concatenate([zh, zm], axis=-1).astype(bf16)            # (S, 2C)
    z = jnp.dot(zcat, wz_ref[...],
                preferred_element_type=f32) + bz_ref[...]             # (S, C)

    # ---------------- stage 3: conv_output + memory/hidden update ----------------
    combined2 = jnp.concatenate([z, h_conv], axis=-1)                 # (S, C+hid)
    cin2 = C + hid
    patches2 = im2col(pad2_ref, combined2, cin2)                      # (S, K2) bf16
    acc2 = jnp.dot(patches2, ow_ref[...],
                   preferred_element_type=f32) + ob_ref[...]          # (S, 3*hid)

    i2 = jax.nn.sigmoid(acc2[:, 0 * hid:1 * hid])
    g2 = jnp.tanh(acc2[:, 1 * hid:2 * hid])
    o2 = jax.nn.sigmoid(acc2[:, 2 * hid:3 * hid])

    m_new = i2 * g2 + (1.0 - i2) * m_pm
    h_new = o2 * m_new

    # lane-dense channel-major stores: (hid, S), lane dim = S = H*W
    h_out_ref[...] = h_new.T
    c_out_ref[...] = c_new.T
    m_out_ref[...] = m_new.T


# ----------------------------------------------------------------------------
# Wrapper (NCHW in / NCHW out, pure reshapes only)
# ----------------------------------------------------------------------------
def sa_convlstm_cell_forward(params, x_nchw, h_nchw, c_nchw, m_nchw,
                             kernel_size, hidden_dim, d_attn):
    """One SAConvLSTMCell forward step (functional: states passed explicitly)."""
    kh, kw = kernel_size
    N, Cx, H, W = x_nchw.shape
    S = H * W
    cin1 = Cx + hidden_dim
    cin2 = d_attn + hidden_dim
    K1, K2 = kh * kw * cin1, kh * kw * cin2
    f32, bf16 = jnp.float32, jnp.bfloat16

    # NCHW -> (N, C, H*W) channel-major (free reshape, no transpose)
    x = x_nchw.reshape(N, Cx, S).astype(f32)
    h = h_nchw.reshape(N, hidden_dim, S).astype(f32)
    c = c_nchw.reshape(N, hidden_dim, S).astype(f32)
    m = m_nchw.reshape(N, hidden_dim, S).astype(f32)

    # matmul weights in bf16; biases stay f32
    cw = params["conv_w"].reshape(K1, 4 * hidden_dim).astype(bf16)
    ow = params["out_w"].reshape(K2, 3 * hidden_dim).astype(bf16)
    wh = params["h_w"].astype(bf16)
    wm = params["m_w"].astype(bf16)
    wz = params["z_w"].astype(bf16)
    cb, bh, bm, bz, ob = (params["conv_b"].astype(f32), params["h_b"].astype(f32),
                          params["m_b"].astype(f32), params["z_b"].astype(f32),
                          params["out_b"].astype(f32))

    kernel = functools.partial(_fused_sa_convlstm_kernel,
                               kh=kh, kw=kw, H=H, W=W,
                               hid=hidden_dim, d_attn=d_attn)

    def rep(shape):
        return pl.BlockSpec(shape, lambda n, _s=shape: (0,) * len(_s))

    def per_n(ch):
        return pl.BlockSpec((None, ch, S), lambda n: (n, 0, 0))

    operands = (x, h, c, m, cw, cb, wh, bh, wm, bm, wz, bz, ow, ob)

    flops = 2 * N * (S * K1 * 4 * hidden_dim           # conv gates
                     + S * hidden_dim * 5 * d_attn     # h/m projections
                     + S * d_attn * 2 * S              # fused scores
                     + 2 * S * S * d_attn              # p @ v  (x2)
                     + S * 2 * d_attn * d_attn         # conv_z
                     + S * K2 * 3 * hidden_dim)        # conv_output
    transcendentals = N * (2 * S * S + 7 * hidden_dim * S)
    bytes_accessed = int(sum(int(a.size) * a.dtype.itemsize for a in operands)
                         + 3 * N * hidden_dim * S * 4)

    h_new, c_new, m_new = pl.pallas_call(
        kernel,
        grid=(N,),
        in_specs=[
            per_n(Cx), per_n(hidden_dim), per_n(hidden_dim), per_n(hidden_dim),
            rep((K1, 4 * hidden_dim)), rep((1, 4 * hidden_dim)),
            rep((hidden_dim, 3 * d_attn)), rep((1, 3 * d_attn)),
            rep((hidden_dim, 2 * d_attn)), rep((1, 2 * d_attn)),
            rep((2 * d_attn, d_attn)), rep((1, d_attn)),
            rep((K2, 3 * hidden_dim)), rep((1, 3 * hidden_dim)),
        ],
        out_specs=[per_n(hidden_dim), per_n(hidden_dim), per_n(hidden_dim)],
        out_shape=[jax.ShapeDtypeStruct((N, hidden_dim, S), f32),
                   jax.ShapeDtypeStruct((N, hidden_dim, S), f32),
                   jax.ShapeDtypeStruct((N, hidden_dim, S), f32)],
        scratch_shapes=[
            pltpu.VMEM((H + kh - 1, W + kw - 1, cin1), f32),
            pltpu.VMEM((H + kh - 1, W + kw - 1, cin2), f32),
        ],
        compiler_params=pltpu.CompilerParams(
            dimension_semantics=("parallel",),
            vmem_limit_bytes=32 * 1024 * 1024),
        cost_estimate=pl.CostEstimate(flops=flops,
                                      transcendentals=transcendentals,
                                      bytes_accessed=bytes_accessed),
    )(*operands)

    out = lambda a: a.reshape(N, hidden_dim, H, W)   # free reshape to NCHW
    return out(h_new), out(c_new), out(m_new)


# ----------------------------------------------------------------------------
# Parameters (deterministic, in-script)
# ----------------------------------------------------------------------------
def init_params(key, input_dim, hidden_dim, d_attn, kernel_size):
    kh, kw = kernel_size
    ks = jax.random.split(key, 10)

    def w(k, shape, fan_in):
        return jax.random.normal(k, shape, jnp.float32) / math.sqrt(fan_in)

    cin_conv = input_dim + hidden_dim
    cin_out = hidden_dim + d_attn
    return {
        "conv_w": w(ks[0], (kh, kw, cin_conv, 4 * hidden_dim), kh * kw * cin_conv),
        "conv_b": 0.01 * jax.random.normal(ks[1], (1, 4 * hidden_dim), jnp.float32),
        "h_w": w(ks[2], (hidden_dim, 3 * d_attn), hidden_dim),
        "h_b": 0.01 * jax.random.normal(ks[3], (1, 3 * d_attn), jnp.float32),
        "m_w": w(ks[4], (hidden_dim, 2 * d_attn), hidden_dim),
        "m_b": 0.01 * jax.random.normal(ks[5], (1, 2 * d_attn), jnp.float32),
        "z_w": w(ks[6], (2 * d_attn, d_attn), 2 * d_attn),
        "z_b": 0.01 * jax.random.normal(ks[7], (1, d_attn), jnp.float32),
        "out_w": w(ks[8], (kh, kw, cin_out, 3 * hidden_dim), kh * kw * cin_out),
        "out_b": 0.01 * jax.random.normal(ks[9], (1, 3 * hidden_dim), jnp.float32),
    }


# ----------------------------------------------------------------------------
# Pure-JAX reference (same bf16 matmul-operand quantisation, f32 accumulation)
# ----------------------------------------------------------------------------
def reference_forward(params, x_nchw, h_nchw, c_nchw, m_nchw,
                      kernel_size, hidden_dim, d_attn):
    f32, bf16 = jnp.float32, jnp.bfloat16
    to_nhwc = lambda a: jnp.transpose(a, (0, 2, 3, 1)).astype(f32)
    to_nchw = lambda a: jnp.transpose(a, (0, 3, 1, 2))
    x, h, c, m = map(to_nhwc, (x_nchw, h_nchw, c_nchw, m_nchw))
    N, H, W, _ = x.shape

    def conv2d(xx, w, b):
        y = jax.lax.conv_general_dilated(
            xx.astype(bf16), w.astype(bf16), (1, 1), "SAME",
            dimension_numbers=("NHWC", "HWIO", "NHWC"),
            preferred_element_type=f32)
        return y + b.reshape(1, 1, 1, -1)

    cc = conv2d(jnp.concatenate([x, h], -1), params["conv_w"], params["conv_b"])
    i, f, o, g = jnp.split(cc, 4, axis=-1)
    i, f, o, g = jax.nn.sigmoid(i), jax.nn.sigmoid(f), jax.nn.sigmoid(o), jnp.tanh(g)
    c_next = f * c + i * g
    h_conv = o * jnp.tanh(c_next)

    hf = h_conv.reshape(N, H * W, hidden_dim)
    mf = m.reshape(N, H * W, hidden_dim)
    mm = lambda a, w: jnp.einsum("nsc,cd->nsd", a.astype(bf16), w.astype(bf16),
                                 preferred_element_type=f32)
    hproj = mm(hf, params["h_w"]) + params["h_b"]
    mproj = mm(mf, params["m_w"]) + params["m_b"]
    hq, hk, hv = jnp.split(hproj, 3, axis=-1)
    mk, mv = jnp.split(mproj, 2, axis=-1)
    hq = hq * (1.0 / math.sqrt(d_attn))

    def attn(q, k, v):
        s = jnp.einsum("nsc,ntc->nst", q.astype(bf16), k.astype(bf16),
                       preferred_element_type=f32)
        p = jax.nn.softmax(s, axis=-1)
        return jnp.einsum("nst,ntc->nsc", p.astype(bf16), v.astype(bf16),
                          preferred_element_type=f32)

    zh = attn(hq, hk, hv)
    zm = attn(hq, mk, mv)
    zcat = jnp.concatenate([zh, zm], -1)
    z = (jnp.einsum("nsc,cd->nsd", zcat.astype(bf16), params["z_w"].astype(bf16),
                    preferred_element_type=f32) + params["z_b"]).reshape(N, H, W, d_attn)

    out = conv2d(jnp.concatenate([z, h_conv], -1), params["out_w"], params["out_b"])
    i2, g2, o2 = jnp.split(out, 3, axis=-1)
    i2, g2, o2 = jax.nn.sigmoid(i2), jnp.tanh(g2), jax.nn.sigmoid(o2)
    m_next = i2 * g2 + (1.0 - i2) * m
    h_next = o2 * m_next
    return to_nchw(h_next), to_nchw(c_next), to_nchw(m_next)


# ----------------------------------------------------------------------------
if __name__ == "__main__":
    N, input_dim, H, W = 2, 4, 16, 16
    hidden_dim, d_attn = 32, 16
    kernel_size = (3, 3)

    key = jax.random.PRNGKey(0)
    kx, kp = jax.random.split(key)
    x = jax.random.normal(kx, (N, input_dim, H, W), jnp.float32)
    params = init_params(kp, input_dim, hidden_dim, d_attn, kernel_size)

    # first_step=True semantics: hidden / cell / memory states start at zero.
    h0 = jnp.zeros((N, hidden_dim, H, W), jnp.float32)
    c0 = jnp.zeros_like(h0)
    m0 = jnp.zeros_like(h0)

    fwd = jax.jit(functools.partial(sa_convlstm_cell_forward,
                                    kernel_size=kernel_size,
                                    hidden_dim=hidden_dim, d_attn=d_attn))
    h1, c1, m1 = fwd(params, x, h0, c0, m0)
    jax.block_until_ready((h1, c1, m1))

    hr, cr, mr = reference_forward(params, x, h0, c0, m0,
                                   kernel_size, hidden_dim, d_attn)
    np.testing.assert_allclose(np.asarray(h1), np.asarray(hr), rtol=2e-3, atol=2e-3)
    np.testing.assert_allclose(np.asarray(c1), np.asarray(cr), rtol=2e-3, atol=2e-3)
    np.testing.assert_allclose(np.asarray(m1), np.asarray(mr), rtol=2e-3, atol=2e-3)

    print("KERNEL_OK")
</pallas_src>

<mosaic_0001>
module attributes {stable_mosaic.version = 11 : i64} {
  func.func @_fused_sa_convlstm_kernel(%arg0: i32, %arg1: memref<1x4x256xf32, #tpu.memory_space<vmem>>, %arg2: memref<1x32x256xf32, #tpu.memory_space<vmem>>, %arg3: memref<1x32x256xf32, #tpu.memory_space<vmem>>, %arg4: memref<1x32x256xf32, #tpu.memory_space<vmem>>, %arg5: memref<324x128xbf16, #tpu.memory_space<vmem>>, %arg6: memref<1x128xf32, #tpu.memory_space<vmem>>, %arg7: memref<32x48xbf16, #tpu.memory_space<vmem>>, %arg8: memref<1x48xf32, #tpu.memory_space<vmem>>, %arg9: memref<32x32xbf16, #tpu.memory_space<vmem>>, %arg10: memref<1x32xf32, #tpu.memory_space<vmem>>, %arg11: memref<32x16xbf16, #tpu.memory_space<vmem>>, %arg12: memref<1x16xf32, #tpu.memory_space<vmem>>, %arg13: memref<432x96xbf16, #tpu.memory_space<vmem>>, %arg14: memref<1x96xf32, #tpu.memory_space<vmem>>, %arg15: memref<1x32x256xf32, #tpu.memory_space<vmem>>, %arg16: memref<1x32x256xf32, #tpu.memory_space<vmem>>, %arg17: memref<1x32x256xf32, #tpu.memory_space<vmem>>, %arg18: memref<18x18x36xf32, #tpu.memory_space<vmem>>, %arg19: memref<18x18x48xf32, #tpu.memory_space<vmem>>) attributes {dimension_semantics = [#tpu.dimension_semantics<parallel>], iteration_bounds = array<i64: 2>, scalar_prefetch = 0 : i64, scratch_operands = 2 : i64, tpu.core_type = #tpu.core_type<tc>, window_params = [{transform_indices = @transform_0, window_bounds = array<i64: 1, 4, 256>}, {transform_indices = @transform_1, window_bounds = array<i64: 1, 32, 256>}, {transform_indices = @transform_2, window_bounds = array<i64: 1, 32, 256>}, {transform_indices = @transform_3, window_bounds = array<i64: 1, 32, 256>}, {pipeline_mode = #tpu.pipeline_mode<synchronous>, transform_indices = @transform_4, window_bounds = array<i64: 324, 128>}, {pipeline_mode = #tpu.pipeline_mode<synchronous>, transform_indices = @transform_5, window_bounds = array<i64: 1, 128>}, {pipeline_mode = #tpu.pipeline_mode<synchronous>, transform_indices = @transform_6, window_bounds = array<i64: 32, 48>}, {pipeline_mode = #tpu.pipeline_mode<synchronous>, transform_indices = @transform_7, window_bounds = array<i64: 1, 48>}, {pipeline_mode = #tpu.pipeline_mode<synchronous>, transform_indices = @transform_8, window_bounds = array<i64: 32, 32>}, {pipeline_mode = #tpu.pipeline_mode<synchronous>, transform_indices = @transform_9, window_bounds = array<i64: 1, 32>}, {pipeline_mode = #tpu.pipeline_mode<synchronous>, transform_indices = @transform_10, window_bounds = array<i64: 32, 16>}, {pipeline_mode = #tpu.pipeline_mode<synchronous>, transform_indices = @transform_11, window_bounds = array<i64: 1, 16>}, {pipeline_mode = #tpu.pipeline_mode<synchronous>, transform_indices = @transform_12, window_bounds = array<i64: 432, 96>}, {pipeline_mode = #tpu.pipeline_mode<synchronous>, transform_indices = @transform_13, window_bounds = array<i64: 1, 96>}, {transform_indices = @transform_14, window_bounds = array<i64: 1, 32, 256>}, {transform_indices = @transform_15, window_bounds = array<i64: 1, 32, 256>}, {transform_indices = @transform_16, window_bounds = array<i64: 1, 32, 256>}]} {
    %c0 = arith.constant 0 : index
    %c0_0 = arith.constant 0 : index
    %c0_1 = arith.constant 0 : index
    %0 = vector.load %arg1[%c0, %c0_0, %c0_1] : memref<1x4x256xf32, #tpu.memory_space<vmem>>, vector<1x4x256xf32>
    %1 = vector.shape_cast %0 : vector<1x4x256xf32> to vector<4x256xf32>
    %c0_2 = arith.constant 0 : index
    %c0_3 = arith.constant 0 : index
    %c0_4 = arith.constant 0 : index
    %2 = vector.load %arg2[%c0_2, %c0_3, %c0_4] : memref<1x32x256xf32, #tpu.memory_space<vmem>>, vector<1x32x256xf32>
    %3 = vector.shape_cast %2 : vector<1x32x256xf32> to vector<32x256xf32>
    %4 = tpu.concatenate %1, %3 in 0 : vector<4x256xf32>, vector<32x256xf32> -> vector<36x256xf32>
    %5 = tpu.transpose %4, [1, 0] : vector<36x256xf32> -> vector<256x36xf32>
    %cst = arith.constant 0.000000e+00 : f32
    %6 = vector.broadcast %cst : f32 to vector<18x18x36xf32>
    %c0_5 = arith.constant 0 : index
    %c0_6 = arith.constant 0 : index
    %c0_7 = arith.constant 0 : index
    %7 = vector.load %arg18[%c0_5, %c0_6, %c0_7] : memref<18x18x36xf32, #tpu.memory_space<vmem>>, vector<18x18x36xf32>
    tpu.vector_store %arg18[%c0_5, %c0_6, %c0_7], %6 {strides = array<i32>} : memref<18x18x36xf32, #tpu.memory_space<vmem>>, vector<18x18x36xf32>,
    %8 = vector.shape_cast %5 : vector<256x36xf32> to vector<16x16x36xf32>
    %c1 = arith.constant 1 : index
    %c1_8 = arith.constant 1 : index
    %c0_9 = arith.constant 0 : index
    %9 = vector.load %arg18[%c1, %c1_8, %c0_9] : memref<18x18x36xf32, #tpu.memory_space<vmem>>, vector<16x16x36xf32>
    tpu.vector_store %arg18[%c1, %c1_8, %c0_9], %8 {strides = array<i32>} : memref<18x18x36xf32, #tpu.memory_space<vmem>>, vector<16x16x36xf32>,
    %c0_10 = arith.constant 0 : index
    %c0_11 = arith.constant 0 : index
    %c0_12 = arith.constant 0 : index
    %10 = vector.load %arg18[%c0_10, %c0_11, %c0_12] : memref<18x18x36xf32, #tpu.memory_space<vmem>>, vector<18x18x36xf32>
    %11 = vector.extract_strided_slice %10 {offsets = [0, 0, 0], sizes = [16, 16, 36], strides = [1, 1, 1]} : vector<18x18x36xf32> to vector<16x16x36xf32>
    %12 = vector.shape_cast %11 : vector<16x16x36xf32> to vector<256x36xf32>
    %13 = vector.extract_strided_slice %10 {offsets = [0, 1, 0], sizes = [16, 16, 36], strides = [1, 1, 1]} : vector<18x18x36xf32> to vector<16x16x36xf32>
    %14 = vector.shape_cast %13 : vector<16x16x36xf32> to vector<256x36xf32>
    %15 = vector.extract_strided_slice %10 {offsets = [0, 2, 0], sizes = [16, 16, 36], strides = [1, 1, 1]} : vector<18x18x36xf32> to vector<16x16x36xf32>
    %16 = vector.shape_cast %15 : vector<16x16x36xf32> to vector<256x36xf32>
    %17 = vector.extract_strided_slice %10 {offsets = [1, 0, 0], sizes = [16, 16, 36], strides = [1, 1, 1]} : vector<18x18x36xf32> to vector<16x16x36xf32>
    %18 = vector.shape_cast %17 : vector<16x16x36xf32> to vector<256x36xf32>
    %19 = vector.extract_strided_slice %10 {offsets = [1, 1, 0], sizes = [16, 16, 36], strides = [1, 1, 1]} : vector<18x18x36xf32> to vector<16x16x36xf32>
    %20 = vector.shape_cast %19 : vector<16x16x36xf32> to vector<256x36xf32>
    %21 = vector.extract_strided_slice %10 {offsets = [1, 2, 0], sizes = [16, 16, 36], strides = [1, 1, 1]} : vector<18x18x36xf32> to vector<16x16x36xf32>
    %22 = vector.shape_cast %21 : vector<16x16x36xf32> to vector<256x36xf32>
    %23 = vector.extract_strided_slice %10 {offsets = [2, 0, 0], sizes = [16, 16, 36], strides = [1, 1, 1]} : vector<18x18x36xf32> to vector<16x16x36xf32>
    %24 = vector.shape_cast %23 : vector<16x16x36xf32> to vector<256x36xf32>
    %25 = vector.extract_strided_slice %10 {offsets = [2, 1, 0], sizes = [16, 16, 36], strides = [1, 1, 1]} : vector<18x18x36xf32> to vector<16x16x36xf32>
    %26 = vector.shape_cast %25 : vector<16x16x36xf32> to vector<256x36xf32>
    %27 = vector.extract_strided_slice %10 {offsets = [2, 2, 0], sizes = [16, 16, 36], strides = [1, 1, 1]} : vector<18x18x36xf32> to vector<16x16x36xf32>
    %28 = vector.shape_cast %27 : vector<16x16x36xf32> to vector<256x36xf32>
    %29 = tpu.concatenate %12, %14, %16, %18, %20, %22, %24, %26, %28 in 1 : vector<256x36xf32>, vector<256x36xf32>, vector<256x36xf32>, vector<256x36xf32>, vector<256x36xf32>, vector<256x36xf32>, vector<256x36xf32>, vector<256x36xf32>, vector<256x36xf32> -> vector<256x324xf32>
    %30 = arith.truncf %29 : vector<256x324xf32> to vector<256x324xbf16>
    %c0_13 = arith.constant 0 : index
    %c0_14 = arith.constant 0 : index
    %31 = vector.load %arg5[%c0_13, %c0_14] : memref<324x128xbf16, #tpu.memory_space<vmem>>, vector<324x128xbf16>
    %cst_15 = arith.constant dense<0.000000e+00> : vector<256x128xf32>
    %32 = tpu.matmul %30, %31, %cst_15 {dimension_numbers = #tpu.dot_dimension_numbers<[1], [0], [0], [1], [0, 0, 1, 1], [], []>} : vector<256x324xbf16>, vector<324x128xbf16>, vector<256x128xf32> -> vector<256x128xf32>
    %c0_16 = arith.constant 0 : index
    %c0_17 = arith.constant 0 : index
    %33 = vector.load %arg6[%c0_16, %c0_17] : memref<1x128xf32, #tpu.memory_space<vmem>>, vector<1x128xf32>
    %34 = vector.broadcast %33 : vector<1x128xf32> to vector<256x128xf32>
    %35 = arith.addf %32, %34 : vector<256x128xf32>
    %36 = vector.extract_strided_slice %35 {offsets = [0, 0], sizes = [256, 32], strides = [1, 1]} : vector<256x128xf32> to vector<256x32xf32>
    %37 = arith.negf %36 : vector<256x32xf32>
    %38 = math.exp %37 : vector<256x32xf32>
    %cst_18 = arith.constant 1.000000e+00 : f32
    %39 = vector.broadcast %cst_18 : f32 to vector<256x32xf32>
    %40 = arith.addf %39, %38 : vector<256x32xf32>
    %41 = arith.divf %39, %40 : vector<256x32xf32>
    %42 = vector.extract_strided_slice %35 {offsets = [0, 32], sizes = [256, 32], strides = [1, 1]} : vector<256x128xf32> to vector<256x32xf32>
    %43 = arith.negf %42 : vector<256x32xf32>
    %44 = math.exp %43 : vector<256x32xf32>
    %cst_19 = arith.constant 1.000000e+00 : f32
    %45 = vector.broadcast %cst_19 : f32 to vector<256x32xf32>
    %46 = arith.addf %45, %44 : vector<256x32xf32>
    %47 = arith.divf %45, %46 : vector<256x32xf32>
    %48 = vector.extract_strided_slice %35 {offsets = [0, 64], sizes = [256, 32], strides = [1, 1]} : vector<256x128xf32> to vector<256x32xf32>
    %49 = arith.negf %48 : vector<256x32xf32>
    %50 = math.exp %49 : vector<256x32xf32>
    %cst_20 = arith.constant 1.000000e+00 : f32
    %51 = vector.broadcast %cst_20 : f32 to vector<256x32xf32>
    %52 = arith.addf %51, %50 : vector<256x32xf32>
    %53 = arith.divf %51, %52 : vector<256x32xf32>
    %54 = vector.extract_strided_slice %35 {offsets = [0, 96], sizes = [256, 32], strides = [1, 1]} : vector<256x128xf32> to vector<256x32xf32>
    %55 = math.tanh %54 : vector<256x32xf32>
    %c0_21 = arith.constant 0 : index
    %c0_22 = arith.constant 0 : index
    %c0_23 = arith.constant 0 : index
    %56 = vector.load %arg3[%c0_21, %c0_22, %c0_23] : memref<1x32x256xf32, #tpu.memory_space<vmem>>, vector<1x32x256xf32>
    %57 = vector.shape_cast %56 : vector<1x32x256xf32> to vector<32x256xf32>
    %58 = tpu.transpose %57, [1, 0] : vector<32x256xf32> -> vector<256x32xf32>
    %59 = arith.mulf %47, %58 : vector<256x32xf32>
    %60 = arith.mulf %41, %55 : vector<256x32xf32>
    %61 = arith.addf %59, %60 : vector<256x32xf32>
    %62 = math.tanh %61 : vector<256x32xf32>
    %63 = arith.mulf %53, %62 : vector<256x32xf32>
    %c0_24 = arith.constant 0 : index
    %c0_25 = arith.constant 0 : index
    %c0_26 = arith.constant 0 : index
    %64 = vector.load %arg4[%c0_24, %c0_25, %c0_26] : memref<1x32x256xf32, #tpu.memory_space<vmem>>, vector<1x32x256xf32>
    %65 = vector.shape_cast %64 : vector<1x32x256xf32> to vector<32x256xf32>
    %66 = tpu.transpose %65, [1, 0] : vector<32x256xf32> -> vector<256x32xf32>
    %67 = arith.truncf %63 : vector<256x32xf32> to vector<256x32xbf16>
    %c0_27 = arith.constant 0 : index
    %c0_28 = arith.constant 0 : index
    %68 = vector.load %arg7[%c0_27, %c0_28] : memref<32x48xbf16, #tpu.memory_space<vmem>>, vector<32x48xbf16>
    %cst_29 = arith.constant dense<0.000000e+00> : vector<256x48xf32>
    %69 = tpu.matmul %67, %68, %cst_29 {dimension_numbers = #tpu.dot_dimension_numbers<[1], [0], [0], [1], [0, 0, 1, 1], [], []>} : vector<256x32xbf16>, vector<32x48xbf16>, vector<256x48xf32> -> vector<256x48xf32>
    %c0_30 = arith.constant 0 : index
    %c0_31 = arith.constant 0 : index
    %70 = vector.load %arg8[%c0_30, %c0_31] : memref<1x48xf32, #tpu.memory_space<vmem>>, vector<1x48xf32>
    %71 = vector.broadcast %70 : vector<1x48xf32> to vector<256x48xf32>
    %72 = arith.addf %69, %71 : vector<256x48xf32>
    %73 = arith.truncf %66 : vector<256x32xf32> to vector<256x32xbf16>
    %c0_32 = arith.constant 0 : index
    %c0_33 = arith.constant 0 : index
    %74 = vector.load %arg9[%c0_32, %c0_33] : memref<32x32xbf16, #tpu.memory_space<vmem>>, vector<32x32xbf16>
    %cst_34 = arith.constant dense<0.000000e+00> : vector<256x32xf32>
    %75 = tpu.matmul %73, %74, %cst_34 {dimension_numbers = #tpu.dot_dimension_numbers<[1], [0], [0], [1], [0, 0, 1, 1], [], []>} : vector<256x32xbf16>, vector<32x32xbf16>, vector<256x32xf32> -> vector<256x32xf32>
    %c0_35 = arith.constant 0 : index
    %c0_36 = arith.constant 0 : index
    %76 = vector.load %arg10[%c0_35, %c0_36] : memref<1x32xf32, #tpu.memory_space<vmem>>, vector<1x32xf32>
    %77 = vector.broadcast %76 : vector<1x32xf32> to vector<256x32xf32>
    %78 = arith.addf %75, %77 : vector<256x32xf32>
    %79 = vector.extract_strided_slice %72 {offsets = [0, 0], sizes = [256, 16], strides = [1, 1]} : vector<256x48xf32> to vector<256x16xf32>
    %cst_37 = arith.constant 2.500000e-01 : f32
    %80 = vector.broadcast %cst_37 : f32 to vector<256x16xf32>
    %81 = arith.mulf %79, %80 : vector<256x16xf32>
    %82 = arith.truncf %81 : vector<256x16xf32> to vector<256x16xbf16>
    %83 = vector.extract_strided_slice %72 {offsets = [0, 16], sizes = [256, 16], strides = [1, 1]} : vector<256x48xf32> to vector<256x16xf32>
    %84 = arith.truncf %83 : vector<256x16xf32> to vector<256x16xbf16>
    %85 = vector.extract_strided_slice %72 {offsets = [0, 32], sizes = [256, 16], strides = [1, 1]} : vector<256x48xf32> to vector<256x16xf32>
    %86 = arith.truncf %85 : vector<256x16xf32> to vector<256x16xbf16>
    %87 = vector.extract_strided_slice %78 {offsets = [0, 0], sizes = [256, 16], strides = [1, 1]} : vector<256x32xf32> to vector<256x16xf32>
    %88 = arith.truncf %87 : vector<256x16xf32> to vector<256x16xbf16>
    %89 = vector.extract_strided_slice %78 {offsets = [0, 16], sizes = [256, 16], strides = [1, 1]} : vector<256x32xf32> to vector<256x16xf32>
    %90 = arith.truncf %89 : vector<256x16xf32> to vector<256x16xbf16>
    %91 = tpu.concatenate %84, %88 in 0 : vector<256x16xbf16>, vector<256x16xbf16> -> vector<512x16xbf16>
    %cst_38 = arith.constant dense<0.000000e+00> : vector<256x512xf32>
    %92 = tpu.matmul %82, %91, %cst_38 {dimension_numbers = #tpu.dot_dimension_numbers<[1], [1], [0], [0], [0, 0, 1, 0], [], []>} : vector<256x16xbf16>, vector<512x16xbf16>, vector<256x512xf32> -> vector<256x512xf32>
    %93 = vector.extract_strided_slice %92 {offsets = [0, 0], sizes = [256, 256], strides = [1, 1]} : vector<256x512xf32> to vector<256x256xf32>
    %cst_39 = arith.constant dense<0xFF800000> : vector<256xf32>
    %94 = vector.multi_reduction <maximumf>, %93, %cst_39 [1] : vector<256x256xf32> to vector<256xf32>
    %95 = vector.shape_cast %94 : vector<256xf32> to vector<256x1xf32>
    %96 = vector.broadcast %95 : vector<256x1xf32> to vector<256x256xf32>
    %97 = arith.subf %93, %96 : vector<256x256xf32>
    %98 = math.exp %97 : vector<256x256xf32>
    %cst_40 = arith.constant dense<0.000000e+00> : vector<256xf32>
    %99 = vector.multi_reduction <add>, %98, %cst_40 [1] : vector<256x256xf32> to vector<256xf32>
    %100 = vector.shape_cast %99 : vector<256xf32> to vector<256x1xf32>
    %101 = tpu.reciprocal %100 {approx = true} : vector<256x1xf32> -> vector<256x1xf32>
    %102 = vector.broadcast %101 : vector<256x1xf32> to vector<256x256xf32>
    %103 = arith.mulf %98, %102 : vector<256x256xf32>
    %104 = arith.truncf %103 : vector<256x256xf32> to vector<256x256xbf16>
    %105 = vector.extract_strided_slice %92 {offsets = [0, 256], sizes = [256, 256], strides = [1, 1]} : vector<256x512xf32> to vector<256x256xf32>
    %cst_41 = arith.constant dense<0xFF800000> : vector<256xf32>
    %106 = vector.multi_reduction <maximumf>, %105, %cst_41 [1] : vector<256x256xf32> to vector<256xf32>
    %107 = vector.shape_cast %106 : vector<256xf32> to vector<256x1xf32>
    %108 = vector.broadcast %107 : vector<256x1xf32> to vector<256x256xf32>
    %109 = arith.subf %105, %108 : vector<256x256xf32>
    %110 = math.exp %109 : vector<256x256xf32>
    %cst_42 = arith.constant dense<0.000000e+00> : vector<256xf32>
    %111 = vector.multi_reduction <add>, %110, %cst_42 [1] : vector<256x256xf32> to vector<256xf32>
    %112 = vector.shape_cast %111 : vector<256xf32> to vector<256x1xf32>
    %113 = tpu.reciprocal %112 {approx = true} : vector<256x1xf32> -> vector<256x1xf32>
    %114 = vector.broadcast %113 : vector<256x1xf32> to vector<256x256xf32>
    %115 = arith.mulf %110, %114 : vector<256x256xf32>
    %116 = arith.truncf %115 : vector<256x256xf32> to vector<256x256xbf16>
    %cst_43 = arith.constant dense<0.000000e+00> : vector<256x16xf32>
    %117 = tpu.matmul %104, %86, %cst_43 {dimension_numbers = #tpu.dot_dimension_numbers<[1], [0], [0], [1], [0, 0, 1, 1], [], []>} : vector<256x256xbf16>, vector<256x16xbf16>, vector<256x16xf32> -> vector<256x16xf32>
    %cst_44 = arith.constant dense<0.000000e+00> : vector<256x16xf32>
    %118 = tpu.matmul %116, %90, %cst_44 {dimension_numbers = #tpu.dot_dimension_numbers<[1], [0], [0], [1], [0, 0, 1, 1], [], []>} : vector<256x256xbf16>, vector<256x16xbf16>, vector<256x16xf32> -> vector<256x16xf32>
    %119 = tpu.concatenate %117, %118 in 1 : vector<256x16xf32>, vector<256x16xf32> -> vector<256x32xf32>
    %120 = arith.truncf %119 : vector<256x32xf32> to vector<256x32xbf16>
    %c0_45 = arith.constant 0 : index
    %c0_46 = arith.constant 0 : index
    %121 = vector.load %arg11[%c0_45, %c0_46] : memref<32x16xbf16, #tpu.memory_space<vmem>>, vector<32x16xbf16>
    %cst_47 = arith.constant dense<0.000000e+00> : vector<256x16xf32>
    %122 = tpu.matmul %120, %121, %cst_47 {dimension_numbers = #tpu.dot_dimension_numbers<[1], [0], [0], [1], [0, 0, 1, 1], [], []>} : vector<256x32xbf16>, vector<32x16xbf16>, vector<256x16xf32> -> vector<256x16xf32>
    %c0_48 = arith.constant 0 : index
    %c0_49 = arith.constant 0 : index
    %123 = vector.load %arg12[%c0_48, %c0_49] : memref<1x16xf32, #tpu.memory_space<vmem>>, vector<1x16xf32>
    %124 = vector.broadcast %123 : vector<1x16xf32> to vector<256x16xf32>
    %125 = arith.addf %122, %124 : vector<256x16xf32>
    %126 = tpu.concatenate %125, %63 in 1 : vector<256x16xf32>, vector<256x32xf32> -> vector<256x48xf32>
    %cst_50 = arith.constant 0.000000e+00 : f32
    %127 = vector.broadcast %cst_50 : f32 to vector<18x18x48xf32>
    %c0_51 = arith.constant 0 : index
    %c0_52 = arith.constant 0 : index
    %c0_53 = arith.constant 0 : index
    %128 = vector.load %arg19[%c0_51, %c0_52, %c0_53] : memref<18x18x48xf32, #tpu.memory_space<vmem>>, vector<18x18x48xf32>
    tpu.vector_store %arg19[%c0_51, %c0_52, %c0_53], %127 {strides = array<i32>} : memref<18x18x48xf32, #tpu.memory_space<vmem>>, vector<18x18x48xf32>,
    %129 = vector.shape_cast %126 : vector<256x48xf32> to vector<16x16x48xf32>
    %c1_54 = arith.constant 1 : index
    %c1_55 = arith.constant 1 : index
    %c0_56 = arith.constant 0 : index
    %130 = vector.load %arg19[%c1_54, %c1_55, %c0_56] : memref<18x18x48xf32, #tpu.memory_space<vmem>>, vector<16x16x48xf32>
    tpu.vector_store %arg19[%c1_54, %c1_55, %c0_56], %129 {strides = array<i32>} : memref<18x18x48xf32, #tpu.memory_space<vmem>>, vector<16x16x48xf32>,
    %c0_57 = arith.constant 0 : index
    %c0_58 = arith.constant 0 : index
    %c0_59 = arith.constant 0 : index
    %131 = vector.load %arg19[%c0_57, %c0_58, %c0_59] : memref<18x18x48xf32, #tpu.memory_space<vmem>>, vector<18x18x48xf32>
    %132 = vector.extract_strided_slice %131 {offsets = [0, 0, 0], sizes = [16, 16, 48], strides = [1, 1, 1]} : vector<18x18x48xf32> to vector<16x16x48xf32>
    %133 = vector.shape_cast %132 : vector<16x16x48xf32> to vector<256x48xf32>
    %134 = vector.extract_strided_slice %131 {offsets = [0, 1, 0], sizes = [16, 16, 48], strides = [1, 1, 1]} : vector<18x18x48xf32> to vector<16x16x48xf32>
    %135 = vector.shape_cast %134 : vector<16x16x48xf32> to vector<256x48xf32>
    %136 = vector.extract_strided_slice %131 {offsets = [0, 2, 0], sizes = [16, 16, 48], strides = [1, 1, 1]} : vector<18x18x48xf32> to vector<16x16x48xf32>
    %137 = vector.shape_cast %136 : vector<16x16x48xf32> to vector<256x48xf32>
    %138 = vector.extract_strided_slice %131 {offsets = [1, 0, 0], sizes = [16, 16, 48], strides = [1, 1, 1]} : vector<18x18x48xf32> to vector<16x16x48xf32>
    %139 = vector.shape_cast %138 : vector<16x16x48xf32> to vector<256x48xf32>
    %140 = vector.extract_strided_slice %131 {offsets = [1, 1, 0], sizes = [16, 16, 48], strides = [1, 1, 1]} : vector<18x18x48xf32> to vector<16x16x48xf32>
    %141 = vector.shape_cast %140 : vector<16x16x48xf32> to vector<256x48xf32>
    %142 = vector.extract_strided_slice %131 {offsets = [1, 2, 0], sizes = [16, 16, 48], strides = [1, 1, 1]} : vector<18x18x48xf32> to vector<16x16x48xf32>
    %143 = vector.shape_cast %142 : vector<16x16x48xf32> to vector<256x48xf32>
    %144 = vector.extract_strided_slice %131 {offsets = [2, 0, 0], sizes = [16, 16, 48], strides = [1, 1, 1]} : vector<18x18x48xf32> to vector<16x16x48xf32>
    %145 = vector.shape_cast %144 : vector<16x16x48xf32> to vector<256x48xf32>
    %146 = vector.extract_strided_slice %131 {offsets = [2, 1, 0], sizes = [16, 16, 48], strides = [1, 1, 1]} : vector<18x18x48xf32> to vector<16x16x48xf32>
    %147 = vector.shape_cast %146 : vector<16x16x48xf32> to vector<256x48xf32>
    %148 = vector.extract_strided_slice %131 {offsets = [2, 2, 0], sizes = [16, 16, 48], strides = [1, 1, 1]} : vector<18x18x48xf32> to vector<16x16x48xf32>
    %149 = vector.shape_cast %148 : vector<16x16x48xf32> to vector<256x48xf32>
    %150 = tpu.concatenate %133, %135, %137, %139, %141, %143, %145, %147, %149 in 1 : vector<256x48xf32>, vector<256x48xf32>, vector<256x48xf32>, vector<256x48xf32>, vector<256x48xf32>, vector<256x48xf32>, vector<256x48xf32>, vector<256x48xf32>, vector<256x48xf32> -> vector<256x432xf32>
    %151 = arith.truncf %150 : vector<256x432xf32> to vector<256x432xbf16>
    %c0_60 = arith.constant 0 : index
    %c0_61 = arith.constant 0 : index
    %152 = vector.load %arg13[%c0_60, %c0_61] : memref<432x96xbf16, #tpu.memory_space<vmem>>, vector<432x96xbf16>
    %cst_62 = arith.constant dense<0.000000e+00> : vector<256x96xf32>
    %153 = tpu.matmul %151, %152, %cst_62 {dimension_numbers = #tpu.dot_dimension_numbers<[1], [0], [0], [1], [0, 0, 1, 1], [], []>} : vector<256x432xbf16>, vector<432x96xbf16>, vector<256x96xf32> -> vector<256x96xf32>
    %c0_63 = arith.constant 0 : index
    %c0_64 = arith.constant 0 : index
    %154 = vector.load %arg14[%c0_63, %c0_64] : memref<1x96xf32, #tpu.memory_space<vmem>>, vector<1x96xf32>
    %155 = vector.broadcast %154 : vector<1x96xf32> to vector<256x96xf32>
    %156 = arith.addf %153, %155 : vector<256x96xf32>
    %157 = vector.extract_strided_slice %156 {offsets = [0, 0], sizes = [256, 32], strides = [1, 1]} : vector<256x96xf32> to vector<256x32xf32>
    %158 = arith.negf %157 : vector<256x32xf32>
    %159 = math.exp %158 : vector<256x32xf32>
    %cst_65 = arith.constant 1.000000e+00 : f32
    %160 = vector.broadcast %cst_65 : f32 to vector<256x32xf32>
    %161 = arith.addf %160, %159 : vector<256x32xf32>
    %162 = arith.divf %160, %161 : vector<256x32xf32>
    %163 = vector.extract_strided_slice %156 {offsets = [0, 32], sizes = [256, 32], strides = [1, 1]} : vector<256x96xf32> to vector<256x32xf32>
    %164 = math.tanh %163 : vector<256x32xf32>
    %165 = vector.extract_strided_slice %156 {offsets = [0, 64], sizes = [256, 32], strides = [1, 1]} : vector<256x96xf32> to vector<256x32xf32>
    %166 = arith.negf %165 : vector<256x32xf32>
    %167 = math.exp %166 : vector<256x32xf32>
    %cst_66 = arith.constant 1.000000e+00 : f32
    %168 = vector.broadcast %cst_66 : f32 to vector<256x32xf32>
    %169 = arith.addf %168, %167 : vector<256x32xf32>
    %170 = arith.divf %168, %169 : vector<256x32xf32>
    %171 = arith.mulf %162, %164 : vector<256x32xf32>
    %cst_67 = arith.constant 1.000000e+00 : f32
    %172 = vector.broadcast %cst_67 : f32 to vector<256x32xf32>
    %173 = arith.subf %172, %162 : vector<256x32xf32>
    %174 = arith.mulf %173, %66 : vector<256x32xf32>
    %175 = arith.addf %171, %174 : vector<256x32xf32>
    %176 = arith.mulf %170, %175 : vector<256x32xf32>
    %177 = tpu.transpose %176, [1, 0] : vector<256x32xf32> -> vector<32x256xf32>
    %c0_68 = arith.constant 0 : index
    %c0_69 = arith.constant 0 : index
    %c0_70 = arith.constant 0 : index
    %178 = vector.load %arg15[%c0_68, %c0_69, %c0_70] : memref<1x32x256xf32, #tpu.memory_space<vmem>>, vector<1x32x256xf32>
    %179 = vector.shape_cast %178 : vector<1x32x256xf32> to vector<32x256xf32>
    %180 = vector.shape_cast %177 : vector<32x256xf32> to vector<1x32x256xf32>
    tpu.vector_store %arg15[%c0_68, %c0_69, %c0_70], %180 {strides = array<i32>} : memref<1x32x256xf32, #tpu.memory_space<vmem>>, vector<1x32x256xf32>,
    %181 = tpu.transpose %61, [1, 0] : vector<256x32xf32> -> vector<32x256xf32>
    %c0_71 = arith.constant 0 : index
    %c0_72 = arith.constant 0 : index
    %c0_73 = arith.constant 0 : index
    %182 = vector.load %arg16[%c0_71, %c0_72, %c0_73] : memref<1x32x256xf32, #tpu.memory_space<vmem>>, vector<1x32x256xf32>
    %183 = vector.shape_cast %182 : vector<1x32x256xf32> to vector<32x256xf32>
    %184 = vector.shape_cast %181 : vector<32x256xf32> to vector<1x32x256xf32>
    tpu.vector_store %arg16[%c0_71, %c0_72, %c0_73], %184 {strides = array<i32>} : memref<1x32x256xf32, #tpu.memory_space<vmem>>, vector<1x32x256xf32>,
    %185 = tpu.transpose %175, [1, 0] : vector<256x32xf32> -> vector<32x256xf32>
    %c0_74 = arith.constant 0 : index
    %c0_75 = arith.constant 0 : index
    %c0_76 = arith.constant 0 : index
    %186 = vector.load %arg17[%c0_74, %c0_75, %c0_76] : memref<1x32x256xf32, #tpu.memory_space<vmem>>, vector<1x32x256xf32>
    %187 = vector.shape_cast %186 : vector<1x32x256xf32> to vector<32x256xf32>
    %188 = vector.shape_cast %185 : vector<32x256xf32> to vector<1x32x256xf32>
    tpu.vector_store %arg17[%c0_74, %c0_75, %c0_76], %188 {strides = array<i32>} : memref<1x32x256xf32, #tpu.memory_space<vmem>>, vector<1x32x256xf32>,
    return
  }
  func.func @transform_0(%arg0: i32) -> (i32, i32, i32) {
    %c0_i32 = arith.constant 0 : i32
    %c0_i32_0 = arith.constant 0 : i32
    %c0_i32_1 = arith.constant 0 : i32
    return %arg0, %c0_i32, %c0_i32_0 : i32, i32, i32
  }
  func.func @transform_1(%arg0: i32) -> (i32, i32, i32) {
    %c0_i32 = arith.constant 0 : i32
    %c0_i32_0 = arith.constant 0 : i32
    %c0_i32_1 = arith.constant 0 : i32
    return %arg0, %c0_i32, %c0_i32_0 : i32, i32, i32
  }
  func.func @transform_2(%arg0: i32) -> (i32, i32, i32) {
    %c0_i32 = arith.constant 0 : i32
    %c0_i32_0 = arith.constant 0 : i32
    %c0_i32_1 = arith.constant 0 : i32
    return %arg0, %c0_i32, %c0_i32_0 : i32, i32, i32
  }
  func.func @transform_3(%arg0: i32) -> (i32, i32, i32) {
    %c0_i32 = arith.constant 0 : i32
    %c0_i32_0 = arith.constant 0 : i32
    %c0_i32_1 = arith.constant 0 : i32
    return %arg0, %c0_i32, %c0_i32_0 : i32, i32, i32
  }
  func.func @transform_4(%arg0: i32) -> (i32, i32) {
    %c0_i32 = arith.constant 0 : i32
    %c0_i32_0 = arith.constant 0 : i32
    %c0_i32_1 = arith.constant 0 : i32
    return %c0_i32, %c0_i32_0 : i32, i32
  }
  func.func @transform_5(%arg0: i32) -> (i32, i32) {
    %c0_i32 = arith.constant 0 : i32
    %c0_i32_0 = arith.constant 0 : i32
    %c0_i32_1 = arith.constant 0 : i32
    return %c0_i32, %c0_i32_0 : i32, i32
  }
  func.func @transform_6(%arg0: i32) -> (i32, i32) {
    %c0_i32 = arith.constant 0 : i32
    %c0_i32_0 = arith.constant 0 : i32
    %c0_i32_1 = arith.constant 0 : i32
    return %c0_i32, %c0_i32_0 : i32, i32
  }
  func.func @transform_7(%arg0: i32) -> (i32, i32) {
    %c0_i32 = arith.constant 0 : i32
    %c0_i32_0 = arith.constant 0 : i32
    %c0_i32_1 = arith.constant 0 : i32
    return %c0_i32, %c0_i32_0 : i32, i32
  }
  func.func @transform_8(%arg0: i32) -> (i32, i32) {
    %c0_i32 = arith.constant 0 : i32
    %c0_i32_0 = arith.constant 0 : i32
    %c0_i32_1 = arith.constant 0 : i32
    return %c0_i32, %c0_i32_0 : i32, i32
  }
  func.func @transform_9(%arg0: i32) -> (i32, i32) {
    %c0_i32 = arith.constant 0 : i32
    %c0_i32_0 = arith.constant 0 : i32
    %c0_i32_1 = arith.constant 0 : i32
    return %c0_i32, %c0_i32_0 : i32, i32
  }
  func.func @transform_10(%arg0: i32) -> (i32, i32) {
    %c0_i32 = arith.constant 0 : i32
    %c0_i32_0 = arith.constant 0 : i32
    %c0_i32_1 = arith.constant 0 : i32
    return %c0_i32, %c0_i32_0 : i32, i32
  }
  func.func @transform_11(%arg0: i32) -> (i32, i32) {
    %c0_i32 = arith.constant 0 : i32
    %c0_i32_0 = arith.constant 0 : i32
    %c0_i32_1 = arith.constant 0 : i32
    return %c0_i32, %c0_i32_0 : i32, i32
  }
  func.func @transform_12(%arg0: i32) -> (i32, i32) {
    %c0_i32 = arith.constant 0 : i32
    %c0_i32_0 = arith.constant 0 : i32
    %c0_i32_1 = arith.constant 0 : i32
    return %c0_i32, %c0_i32_0 : i32, i32
  }
  func.func @transform_13(%arg0: i32) -> (i32, i32) {
    %c0_i32 = arith.constant 0 : i32
    %c0_i32_0 = arith.constant 0 : i32
    %c0_i32_1 = arith.constant 0 : i32
    return %c0_i32, %c0_i32_0 : i32, i32
  }
  func.func @transform_14(%arg0: i32) -> (i32, i32, i32) {
    %c0_i32 = arith.constant 0 : i32
    %c0_i32_0 = arith.constant 0 : i32
    %c0_i32_1 = arith.constant 0 : i32
    return %arg0, %c0_i32, %c0_i32_0 : i32, i32, i32
  }
  func.func @transform_15(%arg0: i32) -> (i32, i32, i32) {
    %c0_i32 = arith.constant 0 : i32
    %c0_i32_0 = arith.constant 0 : i32
    %c0_i32_1 = arith.constant 0 : i32
    return %arg0, %c0_i32, %c0_i32_0 : i32, i32, i32
  }
  func.func @transform_16(%arg0: i32) -> (i32, i32, i32) {
    %c0_i32 = arith.constant 0 : i32
    %c0_i32_0 = arith.constant 0 : i32
    %c0_i32_1 = arith.constant 0 : i32
    return %arg0, %c0_i32, %c0_i32_0 : i32, i32, i32
  }
}

</mosaic_0001>

<llo_original>
// kernel: sa_convlstm_cell_forward.1
$region0: #{sa_convlstm_cell_forward.1}
  #allocation0 [shape = 'u32[]', space=smem, size = 0x4, offset = 0x4, fixed_abs, tag = 'smem constant byte address 0x4 - core index']
  #allocation1 [shape = 'u32[144,128]{1,0:T(1,128)}', space=vmem, size = 0x12000, scoped, tag = 'internal scratch']
  #allocation2 [shape = 'f32[18,18,36]{2,1,0:T(8,128)}', space=vmem, size = 0x36000, scoped, tag = 'scratch operand']
  #allocation3 [shape = 'f32[18,18,48]{2,1,0:T(8,128)}', space=vmem, size = 0x36000, scoped, tag = 'scratch operand']
  %s0 = inlined_call_operand.vmem [shape: f32[2,4,256], index: 0, kind: input, shape index: {}]
  %s1 = inlined_call_operand.vmem [shape: f32[2,32,256], index: 1, kind: input, shape index: {}]
  %s2 = inlined_call_operand.vmem [shape: f32[2,32,256], index: 2, kind: input, shape index: {}]
  %s3 = inlined_call_operand.vmem [shape: f32[2,32,256], index: 3, kind: input, shape index: {}]
  %s4 = inlined_call_operand.vmem [shape: bf16[324,128], index: 4, kind: input, shape index: {}]
  %s5 = inlined_call_operand.vmem [shape: f32[1,128], index: 5, kind: input, shape index: {}]
  %s6 = inlined_call_operand.vmem [shape: bf16[32,48], index: 6, kind: input, shape index: {}]
  %s7 = inlined_call_operand.vmem [shape: f32[1,48], index: 7, kind: input, shape index: {}]
  %s8 = inlined_call_operand.vmem [shape: bf16[32,32], index: 8, kind: input, shape index: {}]
  %s9 = inlined_call_operand.vmem [shape: f32[1,32], index: 9, kind: input, shape index: {}]
  %s10 = inlined_call_operand.vmem [shape: bf16[32,16], index: 10, kind: input, shape index: {}]
  %s11 = inlined_call_operand.vmem [shape: f32[1,16], index: 11, kind: input, shape index: {}]
  %s12 = inlined_call_operand.vmem [shape: bf16[432,96], index: 12, kind: input, shape index: {}]
  %s13 = inlined_call_operand.vmem [shape: f32[1,96], index: 13, kind: input, shape index: {}]
  %s14 = inlined_call_operand.vmem [shape: f32[2,32,256], index: 14, kind: output, shape index: {0}]
  %s15 = inlined_call_operand.vmem [shape: f32[2,32,256], index: 15, kind: output, shape index: {1}]
  %s16 = inlined_call_operand.vmem [shape: f32[2,32,256], index: 16, kind: output, shape index: {2}]
  %17 = xla_tuple %s14, %s15, %s16
  %s18 = sld [smem:[#allocation0]]
  $region105: #{sa_convlstm_cell_forward.1} parent=0
    _
  %s20 = ssub.s32 1, %s18
  %s21 = scalar_select 0, %s20, %s18
  loop: start=0, step=1, limit=4
  $region2: #{sa_convlstm_cell_forward.1} parent=0 // loop_pre_header
    _
  $region3: #{sa_convlstm_cell_forward.1} parent=0 // loop_header
    %s23 = sphi 0, %s27
    %p24 = scmp.ge.s32.totalorder %s23, 4
    %s33 = sphi 0, %s35
    %s36 = sphi 0, %s33
    %s37 = sphi 0, %s36
    %s53 = sphi 0, %s37
    %s59 = sphi 0, %s61
    %s62 = sphi 0, %s59
    %s63 = sphi 0, %s62
    %s79 = sphi 0, %s63
    %s85 = sphi 0, %s87
    %s88 = sphi 0, %s85
    %s89 = sphi 0, %s88
    %s105 = sphi 0, %s89
    %s111 = sphi 0, %s113
    %s114 = sphi 0, %s111
    %s115 = sphi 0, %s114
    %s131 = sphi 0, %s115
    %s135 = sphi 0, %s135
    %s137 = sphi 0, %s135
    %s138 = sphi 0, %s137
    %s152 = sphi 0, %s138
    %s156 = sphi 0, %s156
    %s158 = sphi 0, %s156
    %s159 = sphi 0, %s158
    %s173 = sphi 0, %s159
    %s177 = sphi 0, %s177
    %s179 = sphi 0, %s177
    %s180 = sphi 0, %s179
    %s194 = sphi 0, %s180
    %s198 = sphi 0, %s198
    %s200 = sphi 0, %s198
    %s201 = sphi 0, %s200
    %s215 = sphi 0, %s201
    %s219 = sphi 0, %s219
    %s221 = sphi 0, %s219
    %s222 = sphi 0, %s221
    %s236 = sphi 0, %s222
    %s240 = sphi 0, %s240
    %s242 = sphi 0, %s240
    %s243 = sphi 0, %s242
    %s257 = sphi 0, %s243
    %s261 = sphi 0, %s261
    %s263 = sphi 0, %s261
    %s264 = sphi 0, %s263
    %s278 = sphi 0, %s264
    %s282 = sphi 0, %s282
    %s284 = sphi 0, %s282
    %s285 = sphi 0, %s284
    %s299 = sphi 0, %s285
    %s303 = sphi 0, %s303
    %s305 = sphi 0, %s303
    %s306 = sphi 0, %s305
    %s320 = sphi 0, %s306
    %s324 = sphi 0, %s324
    %s326 = sphi 0, %s324
    %s327 = sphi 0, %s326
    %s341 = sphi 0, %s327
    %s347 = sphi 0, %s349
    %s350 = sphi 0, %s347
    %s351 = sphi 0, %s350
    %s367 = sphi 0, %s351
    %s373 = sphi 0, %s375
    %s376 = sphi 0, %s373
    %s377 = sphi 0, %s376
    %s393 = sphi 0, %s377
    %s399 = sphi 0, %s401
    %s402 = sphi 0, %s399
    %s403 = sphi 0, %s402
    %s419 = sphi 0, %s403
  $region4: #{sa_convlstm_cell_forward.1} parent=0 // loop_header_branch
    %26 = sbr.rel (%p24) target = $region8
  $region5: #{sa_convlstm_cell_forward.1} parent=0 // loop_body
    %s28 = ssub.s32 %s23, 1
    %s29 = ssub.s32 %s23, 2
    %s30 = sadd.s32 %s23, 1
    %s31 = ssub.s32 %s23, %s30
    %p32 = scmp.eq.s32.totalorder %s31, 0
    %s34 = sadd.s32 %s33, 1
    %s35 = scalar_select %p32, %s33, %s34
    %p38 = pneg %p32
    %p39 = scmp.eq.s32.totalorder %s23, 1
    %p40 = por %p38, %p39
    %p41 = scmp.ne.s32.totalorder %s33, %s36
    %p42 = scmp.eq.s32.totalorder %s23, 0
    %p43 = por %p41, %p42
    %p44 = scmp.ne.s32.totalorder %s33, %s36
    %p45 = scmp.eq.s32.totalorder %s28, 1
    %p46 = por %p44, %p45
    %p47 = scmp.ne.s32.totalorder %s36, %s37
    %p48 = scmp.eq.s32.totalorder %s28, 0
    %p49 = por %p47, %p48
    %p50 = scmp.ne.s32.totalorder %s36, %s37
    %p51 = scmp.eq.s32.totalorder %s29, 1
    %p52 = por %p50, %p51
    %p54 = scmp.ne.s32.totalorder %s37, %s53
    %p55 = scmp.eq.s32.totalorder %s29, 0
    %p56 = por %p54, %p55
    %s57 = ssub.s32 %s23, %s30
    %p58 = scmp.eq.s32.totalorder %s57, 0
    %s60 = sadd.s32 %s59, 1
    %s61 = scalar_select %p58, %s59, %s60
    %p64 = pneg %p58
    %p65 = scmp.eq.s32.totalorder %s23, 1
    %p66 = por %p64, %p65
    %p67 = scmp.ne.s32.totalorder %s59, %s62
    %p68 = scmp.eq.s32.totalorder %s23, 0
    %p69 = por %p67, %p68
    %p70 = scmp.ne.s32.totalorder %s59, %s62
    %p71 = scmp.eq.s32.totalorder %s28, 1
    %p72 = por %p70, %p71
    %p73 = scmp.ne.s32.totalorder %s62, %s63
    %p74 = scmp.eq.s32.totalorder %s28, 0
    %p75 = por %p73, %p74
    %p76 = scmp.ne.s32.totalorder %s62, %s63
    %p77 = scmp.eq.s32.totalorder %s29, 1
    %p78 = por %p76, %p77
    %p80 = scmp.ne.s32.totalorder %s63, %s79
    %p81 = scmp.eq.s32.totalorder %s29, 0
    %p82 = por %p80, %p81
    %s83 = ssub.s32 %s23, %s30
    %p84 = scmp.eq.s32.totalorder %s83, 0
    %s86 = sadd.s32 %s85, 1
    %s87 = scalar_select %p84, %s85, %s86
    %p90 = pneg %p84
    %p91 = scmp.eq.s32.totalorder %s23, 1
    %p92 = por %p90, %p91
    %p93 = scmp.ne.s32.totalorder %s85, %s88
    %p94 = scmp.eq.s32.totalorder %s23, 0
    %p95 = por %p93, %p94
    %p96 = scmp.ne.s32.totalorder %s85, %s88
    %p97 = scmp.eq.s32.totalorder %s28, 1
    %p98 = por %p96, %p97
    %p99 = scmp.ne.s32.totalorder %s88, %s89
    %p100 = scmp.eq.s32.totalorder %s28, 0
    %p101 = por %p99, %p100
    %p102 = scmp.ne.s32.totalorder %s88, %s89
    %p103 = scmp.eq.s32.totalorder %s29, 1
    %p104 = por %p102, %p103
    %p106 = scmp.ne.s32.totalorder %s89, %s105
    %p107 = scmp.eq.s32.totalorder %s29, 0
    %p108 = por %p106, %p107
    %s109 = ssub.s32 %s23, %s30
    %p110 = scmp.eq.s32.totalorder %s109, 0
    %s112 = sadd.s32 %s111, 1
    %s113 = scalar_select %p110, %s111, %s112
    %p116 = pneg %p110
    %p117 = scmp.eq.s32.totalorder %s23, 1
    %p118 = por %p116, %p117
    %p119 = scmp.ne.s32.totalorder %s111, %s114
    %p120 = scmp.eq.s32.totalorder %s23, 0
    %p121 = por %p119, %p120
    %p122 = scmp.ne.s32.totalorder %s111, %s114
    %p123 = scmp.eq.s32.totalorder %s28, 1
    %p124 = por %p122, %p123
    %p125 = scmp.ne.s32.totalorder %s114, %s115
    %p126 = scmp.eq.s32.totalorder %s28, 0
    %p127 = por %p125, %p126
    %p128 = scmp.ne.s32.totalorder %s114, %s115
    %p129 = scmp.eq.s32.totalorder %s29, 1
    %p130 = por %p128, %p129
    %p132 = scmp.ne.s32.totalorder %s115, %s131
    %p133 = scmp.eq.s32.totalorder %s29, 0
    %p134 = por %p132, %p133
    %s136 = sadd.s32 %s135, 1
    %p139 = scmp.eq.s32.totalorder %s23, 1
    %p140 = scmp.ne.s32.totalorder %s135, %s137
    %p141 = scmp.eq.s32.totalorder %s23, 0
    %p142 = por %p140, %p141
    %p143 = scmp.ne.s32.totalorder %s135, %s137
    %p144 = scmp.eq.s32.totalorder %s28, 1
    %p145 = por %p143, %p144
    %p146 = scmp.ne.s32.totalorder %s137, %s138
    %p147 = scmp.eq.s32.totalorder %s28, 0
    %p148 = por %p146, %p147
    %p149 = scmp.ne.s32.totalorder %s137, %s138
    %p150 = scmp.eq.s32.totalorder %s29, 1
    %p151 = por %p149, %p150
    %p153 = scmp.ne.s32.totalorder %s138, %s152
    %p154 = scmp.eq.s32.totalorder %s29, 0
    %p155 = por %p153, %p154
    %s157 = sadd.s32 %s156, 1
    %p160 = scmp.eq.s32.totalorder %s23, 1
    %p161 = scmp.ne.s32.totalorder %s156, %s158
    %p162 = scmp.eq.s32.totalorder %s23, 0
    %p163 = por %p161, %p162
    %p164 = scmp.ne.s32.totalorder %s156, %s158
    %p165 = scmp.eq.s32.totalorder %s28, 1
    %p166 = por %p164, %p165
    %p167 = scmp.ne.s32.totalorder %s158, %s159
    %p168 = scmp.eq.s32.totalorder %s28, 0
    %p169 = por %p167, %p168
    %p170 = scmp.ne.s32.totalorder %s158, %s159
    %p171 = scmp.eq.s32.totalorder %s29, 1
    %p172 = por %p170, %p171
    %p174 = scmp.ne.s32.totalorder %s159, %s173
    %p175 = scmp.eq.s32.totalorder %s29, 0
    %p176 = por %p174, %p175
    %s178 = sadd.s32 %s177, 1
    %p181 = scmp.eq.s32.totalorder %s23, 1
    %p182 = scmp.ne.s32.totalorder %s177, %s179
    %p183 = scmp.eq.s32.totalorder %s23, 0
    %p184 = por %p182, %p183
    %p185 = scmp.ne.s32.totalorder %s177, %s179
    %p186 = scmp.eq.s32.totalorder %s28, 1
    %p187 = por %p185, %p186
    %p188 = scmp.ne.s32.totalorder %s179, %s180
    %p189 = scmp.eq.s32.totalorder %s28, 0
    %p190 = por %p188, %p189
    %p191 = scmp.ne.s32.totalorder %s179, %s180
    %p192 = scmp.eq.s32.totalorder %s29, 1
    %p193 = por %p191, %p192
    %p195 = scmp.ne.s32.totalorder %s180, %s194
    %p196 = scmp.eq.s32.totalorder %s29, 0
    %p197 = por %p195, %p196
    %s199 = sadd.s32 %s198, 1
    %p202 = scmp.eq.s32.totalorder %s23, 1
    %p203 = scmp.ne.s32.totalorder %s198, %s200
    %p204 = scmp.eq.s32.totalorder %s23, 0
    %p205 = por %p203, %p204
    %p206 = scmp.ne.s32.totalorder %s198, %s200
    %p207 = scmp.eq.s32.totalorder %s28, 1
    %p208 = por %p206, %p207
    %p209 = scmp.ne.s32.totalorder %s200, %s201
    %p210 = scmp.eq.s32.totalorder %s28, 0
    %p211 = por %p209, %p210
    %p212 = scmp.ne.s32.totalorder %s200, %s201
    %p213 = scmp.eq.s32.totalorder %s29, 1
    %p214 = por %p212, %p213
    %p216 = scmp.ne.s32.totalorder %s201, %s215
    %p217 = scmp.eq.s32.totalorder %s29, 0
    %p218 = por %p216, %p217
    %s220 = sadd.s32 %s219, 1
    %p223 = scmp.eq.s32.totalorder %s23, 1
    %p224 = scmp.ne.s32.totalorder %s219, %s221
    %p225 = scmp.eq.s32.totalorder %s23, 0
    %p226 = por %p224, %p225
    %p227 = scmp.ne.s32.totalorder %s219, %s221
    %p228 = scmp.eq.s32.totalorder %s28, 1
    %p229 = por %p227, %p228
    %p230 = scmp.ne.s32.totalorder %s221, %s222
    %p231 = scmp.eq.s32.totalorder %s28, 0
    %p232 = por %p230, %p231
    %p233 = scmp.ne.s32.totalorder %s221, %s222
    %p234 = scmp.eq.s32.totalorder %s29, 1
    %p235 = por %p233, %p234
    %p237 = scmp.ne.s32.totalorder %s222, %s236
    %p238 = scmp.eq.s32.totalorder %s29, 0
    %p239 = por %p237, %p238
    %s241 = sadd.s32 %s240, 1
    %p244 = scmp.eq.s32.totalorder %s23, 1
    %p245 = scmp.ne.s32.totalorder %s240, %s242
    %p246 = scmp.eq.s32.totalorder %s23, 0
    %p247 = por %p245, %p246
    %p248 = scmp.ne.s32.totalorder %s240, %s242
    %p249 = scmp.eq.s32.totalorder %s28, 1
    %p250 = por %p248, %p249
    %p251 = scmp.ne.s32.totalorder %s242, %s243
    %p252 = scmp.eq.s32.totalorder %s28, 0
    %p253 = por %p251, %p252
    %p254 = scmp.ne.s32.totalorder %s242, %s243
    %p255 = scmp.eq.s32.totalorder %s29, 1
    %p256 = por %p254, %p255
    %p258 = scmp.ne.s32.totalorder %s243, %s257
    %p259 = scmp.eq.s32.totalorder %s29, 0
    %p260 = por %p258, %p259
    %s262 = sadd.s32 %s261, 1
    %p265 = scmp.eq.s32.totalorder %s23, 1
    %p266 = scmp.ne.s32.totalorder %s261, %s263
    %p267 = scmp.eq.s32.totalorder %s23, 0
    %p268 = por %p266, %p267
    %p269 = scmp.ne.s32.totalorder %s261, %s263
    %p270 = scmp.eq.s32.totalorder %s28, 1
    %p271 = por %p269, %p270
    %p272 = scmp.ne.s32.totalorder %s263, %s264
    %p273 = scmp.eq.s32.totalorder %s28, 0
    %p274 = por %p272, %p273
    %p275 = scmp.ne.s32.totalorder %s263, %s264
    %p276 = scmp.eq.s32.totalorder %s29, 1
    %p277 = por %p275, %p276
    %p279 = scmp.ne.s32.totalorder %s264, %s278
    %p280 = scmp.eq.s32.totalorder %s29, 0
    %p281 = por %p279, %p280
    %s283 = sadd.s32 %s282, 1
    %p286 = scmp.eq.s32.totalorder %s23, 1
    %p287 = scmp.ne.s32.totalorder %s282, %s284
    %p288 = scmp.eq.s32.totalorder %s23, 0
    %p289 = por %p287, %p288
    %p290 = scmp.ne.s32.totalorder %s282, %s284
    %p291 = scmp.eq.s32.totalorder %s28, 1
    %p292 = por %p290, %p291
    %p293 = scmp.ne.s32.totalorder %s284, %s285
    %p294 = scmp.eq.s32.totalorder %s28, 0
    %p295 = por %p293, %p294
    %p296 = scmp.ne.s32.totalorder %s284, %s285
    %p297 = scmp.eq.s32.totalorder %s29, 1
    %p298 = por %p296, %p297
    %p300 = scmp.ne.s32.totalorder %s285, %s299
    %p301 = scmp.eq.s32.totalorder %s29, 0
    %p302 = por %p300, %p301
    %s304 = sadd.s32 %s303, 1
    %p307 = scmp.eq.s32.totalorder %s23, 1
    %p308 = scmp.ne.s32.totalorder %s303, %s305
    %p309 = scmp.eq.s32.totalorder %s23, 0
    %p310 = por %p308, %p309
    %p311 = scmp.ne.s32.totalorder %s303, %s305
    %p312 = scmp.eq.s32.totalorder %s28, 1
    %p313 = por %p311, %p312
    %p314 = scmp.ne.s32.totalorder %s305, %s306
    %p315 = scmp.eq.s32.totalorder %s28, 0
    %p316 = por %p314, %p315
    %p317 = scmp.ne.s32.totalorder %s305, %s306
    %p318 = scmp.eq.s32.totalorder %s29, 1
    %p319 = por %p317, %p318
    %p321 = scmp.ne.s32.totalorder %s306, %s320
    %p322 = scmp.eq.s32.totalorder %s29, 0
    %p323 = por %p321, %p322
    %s325 = sadd.s32 %s324, 1
    %p328 = scmp.eq.s32.totalorder %s23, 1
    %p329 = scmp.ne.s32.totalorder %s324, %s326
    %p330 = scmp.eq.s32.totalorder %s23, 0
    %p331 = por %p329, %p330
    %p332 = scmp.ne.s32.totalorder %s324, %s326
    %p333 = scmp.eq.s32.totalorder %s28, 1
    %p334 = por %p332, %p333
    %p335 = scmp.ne.s32.totalorder %s326, %s327
    %p336 = scmp.eq.s32.totalorder %s28, 0
    %p337 = por %p335, %p336
    %p338 = scmp.ne.s32.totalorder %s326, %s327
    %p339 = scmp.eq.s32.totalorder %s29, 1
    %p340 = por %p338, %p339
    %p342 = scmp.ne.s32.totalorder %s327, %s341
    %p343 = scmp.eq.s32.totalorder %s29, 0
    %p344 = por %p342, %p343
    %s345 = ssub.s32 %s23, %s30
    %p346 = scmp.eq.s32.totalorder %s345, 0
    %s348 = sadd.s32 %s347, 1
    %s349 = scalar_select %p346, %s347, %s348
    %p352 = pneg %p346
    %p353 = scmp.eq.s32.totalorder %s23, 1
    %p354 = por %p352, %p353
    %p355 = scmp.ne.s32.totalorder %s347, %s350
    %p356 = scmp.eq.s32.totalorder %s23, 0
    %p357 = por %p355, %p356
    %p358 = scmp.ne.s32.totalorder %s347, %s350
    %p359 = scmp.eq.s32.totalorder %s28, 1
    %p360 = por %p358, %p359
    %p361 = scmp.ne.s32.totalorder %s350, %s351
    %p362 = scmp.eq.s32.totalorder %s28, 0
    %p363 = por %p361, %p362
    %p364 = scmp.ne.s32.totalorder %s350, %s351
    %p365 = scmp.eq.s32.totalorder %s29, 1
    %p366 = por %p364, %p365
    %p368 = scmp.ne.s32.totalorder %s351, %s367
    %p369 = scmp.eq.s32.totalorder %s29, 0
    %p370 = por %p368, %p369
    %s371 = ssub.s32 %s23, %s30
    %p372 = scmp.eq.s32.totalorder %s371, 0
    %s374 = sadd.s32 %s373, 1
    %s375 = scalar_select %p372, %s373, %s374
    %p378 = pneg %p372
    %p379 = scmp.eq.s32.totalorder %s23, 1
    %p380 = por %p378, %p379
    %p381 = scmp.ne.s32.totalorder %s373, %s376
    %p382 = scmp.eq.s32.totalorder %s23, 0
    %p383 = por %p381, %p382
    %p384 = scmp.ne.s32.totalorder %s373, %s376
    %p385 = scmp.eq.s32.totalorder %s28, 1
    %p386 = por %p384, %p385
    %p387 = scmp.ne.s32.totalorder %s376, %s377
    %p388 = scmp.eq.s32.totalorder %s28, 0
    %p389 = por %p387, %p388
    %p390 = scmp.ne.s32.totalorder %s376, %s377
    %p391 = scmp.eq.s32.totalorder %s29, 1
    %p392 = por %p390, %p391
    %p394 = scmp.ne.s32.totalorder %s377, %s393
    %p395 = scmp.eq.s32.totalorder %s29, 0
    %p396 = por %p394, %p395
    %s397 = ssub.s32 %s23, %s30
    %p398 = scmp.eq.s32.totalorder %s397, 0
    %s400 = sadd.s32 %s399, 1
    %s401 = scalar_select %p398, %s399, %s400
    %p404 = pneg %p398
    %p405 = scmp.eq.s32.totalorder %s23, 1
    %p406 = por %p404, %p405
    %p407 = scmp.ne.s32.totalorder %s399, %s402
    %p408 = scmp.eq.s32.totalorder %s23, 0
    %p409 = por %p407, %p408
    %p410 = scmp.ne.s32.totalorder %s399, %s402
    %p411 = scmp.eq.s32.totalorder %s28, 1
    %p412 = por %p410, %p411
    %p413 = scmp.ne.s32.totalorder %s402, %s403
    %p414 = scmp.eq.s32.totalorder %s28, 0
    %p415 = por %p413, %p414
    %p416 = scmp.ne.s32.totalorder %s402, %s403
    %p417 = scmp.eq.s32.totalorder %s29, 1
    %p418 = por %p416, %p417
    %p420 = scmp.ne.s32.totalorder %s403, %s419
    %p421 = scmp.eq.s32.totalorder %s29, 0
    %p422 = por %p420, %p421
    %p423 = scmp.le.s32.totalorder 1, %s23
    %p424 = scmp.lt.s32.totalorder %s23, 3
    %p425 = pnand %p423, %p424
    %p426 = pneg %p425
    // Predicated region
    $region9: #{sa_convlstm_cell_forward.1} parent=5 // pred_check
      _
    $region10: #{sa_convlstm_cell_forward.1} parent=5 // pred_check_branch
      %428 = sbr.rel (%p425) target = $region12
    $region11: #{sa_convlstm_cell_forward.1} parent=5 // pred_region
      %s429 = ssub.s32 %s23, 1
      // Predicated region
      $region13: #{sa_convlstm_cell_forward.1} parent=11 // pred_check
        %p430 = pneg %p148
      $region14: #{sa_convlstm_cell_forward.1} parent=11 // pred_check_branch
        %432 = sbr.rel (%p430) target = $region16
      $region15: #{sa_convlstm_cell_forward.1} parent=11 // pred_region
        _
      $region16: #{sa_convlstm_cell_forward.1} parent=11 // pred_fallthru
        _
      // Predicated region
      $region17: #{sa_convlstm_cell_forward.1} parent=11 // pred_check
        %p433 = pneg %p169
      $region18: #{sa_convlstm_cell_forward.1} parent=11 // pred_check_branch
        %435 = sbr.rel (%p433) target = $region20
      $region19: #{sa_convlstm_cell_forward.1} parent=11 // pred_region
        _
      $region20: #{sa_convlstm_cell_forward.1} parent=11 // pred_fallthru
        _
      // Predicated region
      $region21: #{sa_convlstm_cell_forward.1} parent=11 // pred_check
        %p436 = pneg %p190
      $region22: #{sa_convlstm_cell_forward.1} parent=11 // pred_check_branch
        %438 = sbr.rel (%p436) target = $region24
      $region23: #{sa_convlstm_cell_forward.1} parent=11 // pred_region
        _
      $region24: #{sa_convlstm_cell_forward.1} parent=11 // pred_fallthru
        _
      // Predicated region
      $region25: #{sa_convlstm_cell_forward.1} parent=11 // pred_check
        %p439 = pneg %p211
      $region26: #{sa_convlstm_cell_forward.1} parent=11 // pred_check_branch
        %441 = sbr.rel (%p439) target = $region28
      $region27: #{sa_convlstm_cell_forward.1} parent=11 // pred_region
        _
      $region28: #{sa_convlstm_cell_forward.1} parent=11 // pred_fallthru
        _
      // Predicated region
      $region29: #{sa_convlstm_cell_forward.1} parent=11 // pred_check
        %p442 = pneg %p232
      $region30: #{sa_convlstm_cell_forward.1} parent=11 // pred_check_branch
        %444 = sbr.rel (%p442) target = $region32
      $region31: #{sa_convlstm_cell_forward.1} parent=11 // pred_region
        _
      $region32: #{sa_convlstm_cell_forward.1} parent=11 // pred_fallthru
        _
      // Predicated region
      $region33: #{sa_convlstm_cell_forward.1} parent=11 // pred_check
        %p445 = pneg %p253
      $region34: #{sa_convlstm_cell_forward.1} parent=11 // pred_check_branch
        %447 = sbr.rel (%p445) target = $region36
      $region35: #{sa_convlstm_cell_forward.1} parent=11 // pred_region
        _
      $region36: #{sa_convlstm_cell_forward.1} parent=11 // pred_fallthru
        _
      // Predicated region
      $region37: #{sa_convlstm_cell_forward.1} parent=11 // pred_check
        %p448 = pneg %p274
      $region38: #{sa_convlstm_cell_forward.1} parent=11 // pred_check_branch
        %450 = sbr.rel (%p448) target = $region40
      $region39: #{sa_convlstm_cell_forward.1} parent=11 // pred_region
        _
      $region40: #{sa_convlstm_cell_forward.1} parent=11 // pred_fallthru
        _
      // Predicated region
      $region41: #{sa_convlstm_cell_forward.1} parent=11 // pred_check
        %p451 = pneg %p295
      $region42: #{sa_convlstm_cell_forward.1} parent=11 // pred_check_branch
        %453 = sbr.rel (%p451) target = $region44
      $region43: #{sa_convlstm_cell_forward.1} parent=11 // pred_region
        _
      $region44: #{sa_convlstm_cell_forward.1} parent=11 // pred_fallthru
        _
      // Predicated region
      $region45: #{sa_convlstm_cell_forward.1} parent=11 // pred_check
        %p454 = pneg %p316
      $region46: #{sa_convlstm_cell_forward.1} parent=11 // pred_check_branch
        %456 = sbr.rel (%p454) target = $region48
      $region47: #{sa_convlstm_cell_forward.1} parent=11 // pred_region
        _
      $region48: #{sa_convlstm_cell_forward.1} parent=11 // pred_fallthru
        _
      // Predicated region
      $region49: #{sa_convlstm_cell_forward.1} parent=11 // pred_check
        %p457 = pneg %p337
      $region50: #{sa_convlstm_cell_forward.1} parent=11 // pred_check_branch
        %459 = sbr.rel (%p457) target = $region52
      $region51: #{sa_convlstm_cell_forward.1} parent=11 // pred_region
        _
      $region52: #{sa_convlstm_cell_forward.1} parent=11 // pred_fallthru
        _
    $region12: #{sa_convlstm_cell_forward.1} parent=5 // pred_fallthru
      _
    %p460 = scmp.lt.s32.totalorder %s23, 2
    // Predicated region
    $region53: #{sa_convlstm_cell_forward.1} parent=5 // pred_check
      %p461 = pneg %p460
    $region54: #{sa_convlstm_cell_forward.1} parent=5 // pred_check_branch
      %463 = sbr.rel (%p461) target = $region56
    $region55: #{sa_convlstm_cell_forward.1} parent=5 // pred_region
      // Predicated region
      $region57: #{sa_convlstm_cell_forward.1} parent=55 // pred_check
        %p464 = pneg %p43
      $region58: #{sa_convlstm_cell_forward.1} parent=55 // pred_check_branch
        %466 = sbr.rel (%p464) target = $region60
      $region59: #{sa_convlstm_cell_forward.1} parent=55 // pred_region
        %p467 = scmp.lt.s32.totalorder %s23, 1
        %s468 = scalar_select %p467, %s23, 1
        %s469 = smul.addr %s468, 2
        %s470 = smul.addr %s469, 4
        %s471 = scalar_lea.vmem %s0, %s470
      $region60: #{sa_convlstm_cell_forward.1} parent=55 // pred_fallthru
        _
      // Predicated region
      $region61: #{sa_convlstm_cell_forward.1} parent=55 // pred_check
        %p472 = pneg %p69
      $region62: #{sa_convlstm_cell_forward.1} parent=55 // pred_check_branch
        %474 = sbr.rel (%p472) target = $region64
      $region63: #{sa_convlstm_cell_forward.1} parent=55 // pred_region
        %p475 = scmp.lt.s32.totalorder %s23, 1
        %s476 = scalar_select %p475, %s23, 1
        %s477 = smul.addr %s476, 8
        %s478 = smul.addr %s477, 8
        %s479 = scalar_lea.vmem %s1, %s478
      $region64: #{sa_convlstm_cell_forward.1} parent=55 // pred_fallthru
        _
      // Predicated region
      $region65: #{sa_convlstm_cell_forward.1} parent=55 // pred_check
        %p480 = pneg %p95
      $region66: #{sa_convlstm_cell_forward.1} parent=55 // pred_check_branch
        %482 = sbr.rel (%p480) target = $region68
      $region67: #{sa_convlstm_cell_forward.1} parent=55 // pred_region
        %p483 = scmp.lt.s32.totalorder %s23, 1
        %s484 = scalar_select %p483, %s23, 1
        %s485 = smul.addr %s484, 8
        %s486 = smul.addr %s485, 8
        %s487 = scalar_lea.vmem %s2, %s486
      $region68: #{sa_convlstm_cell_forward.1} parent=55 // pred_fallthru
        _
      // Predicated region
      $region69: #{sa_convlstm_cell_forward.1} parent=55 // pred_check
        %p488 = pneg %p121
      $region70: #{sa_convlstm_cell_forward.1} parent=55 // pred_check_branch
        %490 = sbr.rel (%p488) target = $region72
      $region71: #{sa_convlstm_cell_forward.1} parent=55 // pred_region
        %p491 = scmp.lt.s32.totalorder %s23, 1
        %s492 = scalar_select %p491, %s23, 1
        %s493 = smul.addr %s492, 8
        %s494 = smul.addr %s493, 8
        %s495 = scalar_lea.vmem %s3, %s494
      $region72: #{sa_convlstm_cell_forward.1} parent=55 // pred_fallthru
        _
    $region56: #{sa_convlstm_cell_forward.1} parent=5 // pred_fallthru
      _
    %p496 = scmp.le.s32.totalorder 1, %s23
    %p497 = scmp.lt.s32.totalorder %s23, 3
    %p498 = pnand %p496, %p497
    %p499 = pneg %p498
    // Predicated region
    $region73: #{sa_convlstm_cell_forward.1} parent=5 // pred_check
      _
    $region74: #{sa_convlstm_cell_forward.1} parent=5 // pred_check_branch
      %501 = sbr.rel (%p498) target = $region76
    $region75: #{sa_convlstm_cell_forward.1} parent=5 // pred_region
      %s502 = ssub.s32 %s23, 1
      %p503 = scmp.lt.s32.totalorder %s28, 1
      %s504 = scalar_select %p503, %s28, 1
      %s505 = smul.addr %s504, 2
      %s506 = smul.addr %s505, 4
      %s507 = scalar_lea.vmem %s0, %s506
      %p508 = pneg %p49
      %p509 = pneg %p46
      %p510 = scmp.lt.s32.totalorder %s28, 1
      %s511 = scalar_select %p510, %s28, 1
      %s512 = smul.addr %s511, 8
      %s513 = smul.addr %s512, 8
      %s514 = scalar_lea.vmem %s1, %s513
      %p515 = pneg %p75
      %p516 = pneg %p72
      %p517 = scmp.lt.s32.totalorder %s28, 1
      %s518 = scalar_select %p517, %s28, 1
      %s519 = smul.addr %s518, 8
      %s520 = smul.addr %s519, 8
      %s521 = scalar_lea.vmem %s2, %s520
      %p522 = pneg %p101
      %p523 = pneg %p98
      %p524 = scmp.lt.s32.totalorder %s28, 1
      %s525 = scalar_select %p524, %s28, 1
      %s526 = smul.addr %s525, 8
      %s527 = smul.addr %s526, 8
      %s528 = scalar_lea.vmem %s3, %s527
      %p529 = pneg %p127
      %p530 = pneg %p124
      %p531 = pneg %p148
      %p532 = pneg %p145
      %p533 = pneg %p169
      %p534 = pneg %p166
      %p535 = pneg %p190
      %p536 = pneg %p187
      %p537 = pneg %p211
      %p538 = pneg %p208
      %p539 = pneg %p232
      %p540 = pneg %p229
      %p541 = pneg %p253
      %p542 = pneg %p250
      %p543 = pneg %p274
      %p544 = pneg %p271
      %p545 = pneg %p295
      %p546 = pneg %p292
      %p547 = pneg %p316
      %p548 = pneg %p313
      %p549 = pneg %p337
      %p550 = pneg %p334
      %p551 = pneg %p363
      %p552 = pneg %p360
      %p553 = scmp.lt.s32.totalorder %s28, 1
      %s554 = scalar_select %p553, %s28, 1
      %s555 = smul.addr %s554, 8
      %s556 = smul.addr %s555, 8
      %s557 = scalar_lea.vmem %s14, %s556
      %p558 = pneg %p389
      %p559 = pneg %p386
      %p560 = scmp.lt.s32.totalorder %s28, 1
      %s561 = scalar_select %p560, %s28, 1
      %s562 = smul.addr %s561, 8
      %s563 = smul.addr %s562, 8
      %s564 = scalar_lea.vmem %s15, %s563
      %p565 = pneg %p415
      %p566 = pneg %p412
      %p567 = scmp.lt.s32.totalorder %s28, 1
      %s568 = scalar_select %p567, %s28, 1
      %s569 = smul.addr %s568, 8
      %s570 = smul.addr %s569, 8
      %s571 = scalar_lea.vmem %s16, %s570
      %p572 = scmp.lt.s32.totalorder %s28, 1
      %s573 = scalar_select %p572, %s28, 1
      %s574 = smul.addr %s573, 2
      %s575 = smul.addr %s574, 4
      %s576 = scalar_lea.vmem %s0, %s575
      %p577 = scmp.lt.s32.totalorder %s28, 1
      %s578 = scalar_select %p577, %s28, 1
      %s579 = smul.addr %s578, 8
      %s580 = smul.addr %s579, 8
      %s581 = scalar_lea.vmem %s1, %s580
      %p582 = scmp.lt.s32.totalorder %s28, 1
      %s583 = scalar_select %p582, %s28, 1
      %s584 = smul.addr %s583, 8
      %s585 = smul.addr %s584, 8
      %s586 = scalar_lea.vmem %s2, %s585
      %p587 = scmp.lt.s32.totalorder %s28, 1
      %s588 = scalar_select %p587, %s28, 1
      %s589 = smul.addr %s588, 8
      %s590 = smul.addr %s589, 8
      %s591 = scalar_lea.vmem %s3, %s590
      %p592 = scmp.lt.s32.totalorder %s28, 1
      %s593 = scalar_select %p592, %s28, 1
      %s594 = smul.addr %s593, 8
      %s595 = smul.addr %s594, 8
      %s596 = scalar_lea.vmem %s14, %s595
      %p597 = scmp.lt.s32.totalorder %s28, 1
      %s598 = scalar_select %p597, %s28, 1
      %s599 = smul.addr %s598, 8
      %s600 = smul.addr %s599, 8
      %s601 = scalar_lea.vmem %s15, %s600
      %p602 = scmp.lt.s32.totalorder %s28, 1
      %s603 = scalar_select %p602, %s28, 1
      %s604 = smul.addr %s603, 8
      %s605 = smul.addr %s604, 8
      %s606 = scalar_lea.vmem %s16, %s605
      %v608 = vld [vmem:[%s576] sm:$0xff]
      %v609 = vld [vmem:[%s581] sm:$0xff]
      %v610 = vld [vmem:[%s581 + $0x8] sm:$0xff]
      %v611 = vld [vmem:[%s581 + $0x10] sm:$0xff]
      %v612 = vld [vmem:[%s581 + $0x18] sm:$0xff]
      %v613 = vld [vmem:[%s581 + $0x20] sm:$0xff]
      %v614 = vld [vmem:[%s581 + $0x28] sm:$0xff]
      %v615 = vld [vmem:[%s581 + $0x30] sm:$0xff]
      %v616 = vld [vmem:[%s581 + $0x38] sm:$0xff]
      %v618 = vcombine.high %v608, %v608
      %vm628 = vcmask 1043456
      %v629 = vrot.slane %v609, 4
      %v630 = vrot.slane %v610, 4
      %v631 = vrot.slane %v611, 4
      %v632 = vsel %vm628, %v629, %v631
      %v633 = vrot.slane %v612, 4
      %v634 = vsel %vm628, %v630, %v633
      %v635 = vrot.slane %v613, 4
      %v636 = vsel %vm628, %v631, %v635
      %v637 = vrot.slane %v614, 4
      %v638 = vsel %vm628, %v633, %v637
      %v639 = vrot.slane %v615, 4
      %v640 = vsel %vm628, %v635, %v639
      %v641 = vrot.slane %v616, 4
      %v642 = vsel %vm628, %v637, %v641
      %v653 = vsel %vm628, %v608, %v629
      %v654 = vsel %vm628, %v618, %v630
      %655 = vxpose.xlu0.b32.start [1/16] %v653, 128
      %656 = vxpose.xlu0.b32.cont [2/16] %v632, 128
      %657 = vxpose.xlu0.b32.cont [3/16] %v636, 128
      %658 = vxpose.xlu0.b32.cont [4/16] %v640, 128
      %659 = vxpose.xlu0.b32.cont [5/16] %v639, 128
      %660 = vxpose.xlu0.b32.cont [6/16] 0.0, 128
      %661 = vxpose.xlu0.b32.cont [7/16] 0.0, 128
      %662 = vxpose.xlu0.b32.cont [8/16] 0.0, 128
      %663 = vxpose.xlu0.b32.cont [9/16] 0.0, 128
      %664 = vxpose.xlu0.b32.cont [10/16] 0.0, 128
      %665 = vxpose.xlu0.b32.cont [11/16] 0.0, 128
      %666 = vxpose.xlu0.b32.cont [12/16] 0.0, 128
      %667 = vxpose.xlu0.b32.cont [13/16] 0.0, 128
      %668 = vxpose.xlu0.b32.cont [14/16] 0.0, 128
      %669 = vxpose.xlu0.b32.cont [15/16] 0.0, 128
      %670 = vxpose.xlu0.b32.end [16/16] 0.0, 128
      %v671 = vpop.trf.xlu0
      %v672 = vpop.trf.xlu0
      %v673 = vpop.trf.xlu0
      %v674 = vpop.trf.xlu0
      %v675 = vpop.trf.xlu0
      %v676 = vpop.trf.xlu0
      %v677 = vpop.trf.xlu0
      %v678 = vpop.trf.xlu0
      %v679 = vpop.trf.xlu0
      %v680 = vpop.trf.xlu0
      %v681 = vpop.trf.xlu0
      %v682 = vpop.trf.xlu0
      %v683 = vpop.trf.xlu0
      %v684 = vpop.trf.xlu0
      %v685 = vpop.trf.xlu0
      %v686 = vpop.trf.xlu0
      %687 = vxpose.xlu0.b32.start [1/16] %v654, 128
      %688 = vxpose.xlu0.b32.cont [2/16] %v634, 128
      %689 = vxpose.xlu0.b32.cont [3/16] %v638, 128
      %690 = vxpose.xlu0.b32.cont [4/16] %v642, 128
      %691 = vxpose.xlu0.b32.cont [5/16] %v641, 128
      %692 = vxpose.xlu0.b32.cont [6/16] 0.0, 128
      %693 = vxpose.xlu0.b32.cont [7/16] 0.0, 128
      %694 = vxpose.xlu0.b32.cont [8/16] 0.0, 128
      %695 = vxpose.xlu0.b32.cont [9/16] 0.0, 128
      %696 = vxpose.xlu0.b32.cont [10/16] 0.0, 128
      %697 = vxpose.xlu0.b32.cont [11/16] 0.0, 128
      %698 = vxpose.xlu0.b32.cont [12/16] 0.0, 128
      %699 = vxpose.xlu0.b32.cont [13/16] 0.0, 128
      %700 = vxpose.xlu0.b32.cont [14/16] 0.0, 128
      %701 = vxpose.xlu0.b32.cont [15/16] 0.0, 128
      %702 = vxpose.xlu0.b32.end [16/16] 0.0, 128
      %v703 = vpop.trf.xlu0
      %v704 = vpop.trf.xlu0
      %v705 = vpop.trf.xlu0
      %v706 = vpop.trf.xlu0
      %v707 = vpop.trf.xlu0
      %v708 = vpop.trf.xlu0
      %v709 = vpop.trf.xlu0
      %v710 = vpop.trf.xlu0
      %v711 = vpop.trf.xlu0
      %v712 = vpop.trf.xlu0
      %v713 = vpop.trf.xlu0
      %v714 = vpop.trf.xlu0
      %v715 = vpop.trf.xlu0
      %v716 = vpop.trf.xlu0
      %v717 = vpop.trf.xlu0
      %v718 = vpop.trf.xlu0
      %vm719 = vcmask 293888
      %720 = vst.msk [vmem:[#allocation2] sm:$0xff] %vm719, 0.0
      %721 = vst.msk [vmem:[#allocation2 + $0x8] sm:$0xff] %vm719, 0.0
      %vm722 = vcmask 287744
      %723 = vst.msk [vmem:[#allocation2 + $0x10] sm:$0x3] %vm722, 0.0
      %724 = vst.msk [vmem:[#allocation2 + $0x18] sm:$0xff] %vm719, 0.0
      %725 = vst.msk [vmem:[#allocation2 + $0x20] sm:$0xff] %vm719, 0.0
      %726 = vst.msk [vmem:[#allocation2 + $0x28] sm:$0x3] %vm722, 0.0
      %727 = vst.msk [vmem:[#allocation2 + $0x30] sm:$0xff] %vm719, 0.0
      %728 = vst.msk [vmem:[#allocation2 + $0x38] sm:$0xff] %vm719, 0.0
      %729 = vst.msk [vmem:[#allocation2 + $0x40] sm:$0x3] %vm722, 0.0
      %730 = vst.msk [vmem:[#allocation2 + $0x48] sm:$0xff] %vm719, 0.0
      %731 = vst.msk [vmem:[#allocation2 + $0x50] sm:$0xff] %vm719, 0.0
      %732 = vst.msk [vmem:[#allocation2 + $0x58] sm:$0x3] %vm722, 0.0
      %733 = vst.msk [vmem:[#allocation2 + $0x60] sm:$0xff] %vm719, 0.0
      %734 = vst.msk [vmem:[#allocation2 + $0x68] sm:$0xff] %vm719, 0.0
      %735 = vst.msk [vmem:[#allocation2 + $0x70] sm:$0x3] %vm722, 0.0
      %736 = vst.msk [vmem:[#allocation2 + $0x78] sm:$0xff] %vm719, 0.0
      %737 = vst.msk [vmem:[#allocation2 + $0x80] sm:$0xff] %vm719, 0.0
      %738 = vst.msk [vmem:[#allocation2 + $0x88] sm:$0x3] %vm722, 0.0
      %739 = vst.msk [vmem:[#allocation2 + $0x90] sm:$0xff] %vm719, 0.0
      %740 = vst.msk [vmem:[#allocation2 + $0x98] sm:$0xff] %vm719, 0.0
      %741 = vst.msk [vmem:[#allocation2 + $0xa0] sm:$0x3] %vm722, 0.0
      %742 = vst.msk [vmem:[#allocation2 + $0xa8] sm:$0xff] %vm719, 0.0
      %743 = vst.msk [vmem:[#allocation2 + $0xb0] sm:$0xff] %vm719, 0.0
      %744 = vst.msk [vmem:[#allocation2 + $0xb8] sm:$0x3] %vm722, 0.0
      %745 = vst.msk [vmem:[#allocation2 + $0xc0] sm:$0xff] %vm719, 0.0
      %746 = vst.msk [vmem:[#allocation2 + $0xc8] sm:$0xff] %vm719, 0.0
      %747 = vst.msk [vmem:[#allocation2 + $0xd0] sm:$0x3] %vm722, 0.0
      %748 = vst.msk [vmem:[#allocation2 + $0xd8] sm:$0xff] %vm719, 0.0
      %749 = vst.msk [vmem:[#allocation2 + $0xe0] sm:$0xff] %vm719, 0.0
      %750 = vst.msk [vmem:[#allocation2 + $0xe8] sm:$0x3] %vm722, 0.0
      %751 = vst.msk [vmem:[#allocation2 + $0xf0] sm:$0xff] %vm719, 0.0
      %752 = vst.msk [vmem:[#allocation2 + $0xf8] sm:$0xff] %vm719, 0.0
      %753 = vst.msk [vmem:[#allocation2 + $0x100] sm:$0x3] %vm722, 0.0
      %754 = vst.msk [vmem:[#allocation2 + $0x108] sm:$0xff] %vm719, 0.0
      %755 = vst.msk [vmem:[#allocation2 + $0x110] sm:$0xff] %vm719, 0.0
      %756 = vst.msk [vmem:[#allocation2 + $0x118] sm:$0x3] %vm722, 0.0
      %757 = vst.msk [vmem:[#allocation2 + $0x120] sm:$0xff] %vm719, 0.0
      %758 = vst.msk [vmem:[#allocation2 + $0x128] sm:$0xff] %vm719, 0.0
      %759 = vst.msk [vmem:[#allocation2 + $0x130] sm:$0x3] %vm722, 0.0
      %760 = vst.msk [vmem:[#allocation2 + $0x138] sm:$0xff] %vm719, 0.0
      %761 = vst.msk [vmem:[#allocation2 + $0x140] sm:$0xff] %vm719, 0.0
      %762 = vst.msk [vmem:[#allocation2 + $0x148] sm:$0x3] %vm722, 0.0
      %763 = vst.msk [vmem:[#allocation2 + $0x150] sm:$0xff] %vm719, 0.0
      %764 = vst.msk [vmem:[#allocation2 + $0x158] sm:$0xff] %vm719, 0.0
      %765 = vst.msk [vmem:[#allocation2 + $0x160] sm:$0x3] %vm722, 0.0
      %766 = vst.msk [vmem:[#allocation2 + $0x168] sm:$0xff] %vm719, 0.0
      %767 = vst.msk [vmem:[#allocation2 + $0x170] sm:$0xff] %vm719, 0.0
      %768 = vst.msk [vmem:[#allocation2 + $0x178] sm:$0x3] %vm722, 0.0
      %769 = vst.msk [vmem:[#allocation2 + $0x180] sm:$0xff] %vm719, 0.0
      %770 = vst.msk [vmem:[#allocation2 + $0x188] sm:$0xff] %vm719, 0.0
      %771 = vst.msk [vmem:[#allocation2 + $0x190] sm:$0x3] %vm722, 0.0
      %772 = vst.msk [vmem:[#allocation2 + $0x198] sm:$0xff] %vm719, 0.0
      %773 = vst.msk [vmem:[#allocation2 + $0x1a0] sm:$0xff] %vm719, 0.0
      %774 = vst.msk [vmem:[#allocation2 + $0x1a8] sm:$0x3] %vm722, 0.0
      %s775 = scalar_lea.vmem [#allocation2], 24
      %776 = vst.msk [vmem:[%s775 + $0x1] sm:$0xff] %vm719, %v671
      %777 = vst.msk [vmem:[%s775 + $0x9] sm:$0xff] %vm719, %v672
      %778 = vst.msk [vmem:[%s775 + $0x19] sm:$0xff] %vm719, %v673
      %779 = vst.msk [vmem:[%s775 + $0x21] sm:$0xff] %vm719, %v674
      %780 = vst.msk [vmem:[%s775 + $0x31] sm:$0xff] %vm719, %v675
      %781 = vst.msk [vmem:[%s775 + $0x39] sm:$0xff] %vm719, %v676
      %782 = vst.msk [vmem:[%s775 + $0x49] sm:$0xff] %vm719, %v677
      %783 = vst.msk [vmem:[%s775 + $0x51] sm:$0xff] %vm719, %v678
      %784 = vst.msk [vmem:[%s775 + $0x61] sm:$0xff] %vm719, %v679
      %785 = vst.msk [vmem:[%s775 + $0x69] sm:$0xff] %vm719, %v680
      %786 = vst.msk [vmem:[%s775 + $0x79] sm:$0xff] %vm719, %v681
      %787 = vst.msk [vmem:[%s775 + $0x81] sm:$0xff] %vm719, %v682
      %788 = vst.msk [vmem:[%s775 + $0x91] sm:$0xff] %vm719, %v683
      %789 = vst.msk [vmem:[%s775 + $0x99] sm:$0xff] %vm719, %v684
      %790 = vst.msk [vmem:[%s775 + $0xa9] sm:$0xff] %vm719, %v685
      %791 = vst.msk [vmem:[%s775 + $0xb1] sm:$0xff] %vm719, %v686
      %792 = vst.msk [vmem:[%s775 + $0xc1] sm:$0xff] %vm719, %v703
      %793 = vst.msk [vmem:[%s775 + $0xc9] sm:$0xff] %vm719, %v704
      %794 = vst.msk [vmem:[%s775 + $0xd9] sm:$0xff] %vm719, %v705
      %795 = vst.msk [vmem:[%s775 + $0xe1] sm:$0xff] %vm719, %v706
      %796 = vst.msk [vmem:[%s775 + $0xf1] sm:$0xff] %vm719, %v707
      %797 = vst.msk [vmem:[%s775 + $0xf9] sm:$0xff] %vm719, %v708
      %798 = vst.msk [vmem:[%s775 + $0x109] sm:$0xff] %vm719, %v709
      %799 = vst.msk [vmem:[%s775 + $0x111] sm:$0xff] %vm719, %v710
      %800 = vst.msk [vmem:[%s775 + $0x121] sm:$0xff] %vm719, %v711
      %801 = vst.msk [vmem:[%s775 + $0x129] sm:$0xff] %vm719, %v712
      %802 = vst.msk [vmem:[%s775 + $0x139] sm:$0xff] %vm719, %v713
      %803 = vst.msk [vmem:[%s775 + $0x141] sm:$0xff] %vm719, %v714
      %804 = vst.msk [vmem:[%s775 + $0x151] sm:$0xff] %vm719, %v715
      %805 = vst.msk [vmem:[%s775 + $0x159] sm:$0xff] %vm719, %v716
      %806 = vst.msk [vmem:[%s775 + $0x169] sm:$0xff] %vm719, %v717
      %807 = vst.msk [vmem:[%s775 + $0x171] sm:$0xff] %vm719, %v718
      %v808 = vld [vmem:[#allocation2] sm:$0xff]
      %v809 = vld [vmem:[#allocation2 + $0x8] sm:$0xff]
      %v810 = vld [vmem:[#allocation2 + $0x10] sm:$0x3]
      %v811 = vld [vmem:[#allocation2 + $0x18] sm:$0xff]
      %v812 = vld [vmem:[#allocation2 + $0x20] sm:$0xff]
      %v813 = vld [vmem:[#allocation2 + $0x28] sm:$0x3]
      %v814 = vld [vmem:[#allocation2 + $0x30] sm:$0xff]
      %v815 = vld [vmem:[#allocation2 + $0x38] sm:$0xff]
      %v816 = vld [vmem:[#allocation2 + $0x40] sm:$0x3]
      %v817 = vld [vmem:[#allocation2 + $0x48] sm:$0xff]
      %v818 = vld [vmem:[#allocation2 + $0x50] sm:$0xff]
      %v819 = vld [vmem:[#allocation2 + $0x58] sm:$0x3]
      %v820 = vld [vmem:[#allocation2 + $0x60] sm:$0xff]
      %v821 = vld [vmem:[#allocation2 + $0x68] sm:$0xff]
      %v822 = vld [vmem:[#allocation2 + $0x70] sm:$0x3]
      %v823 = vld [vmem:[#allocation2 + $0x78] sm:$0xff]
      %v824 = vld [vmem:[#allocation2 + $0x80] sm:$0xff]
      %v825 = vld [vmem:[#allocation2 + $0x88] sm:$0x3]
      %v826 = vld [vmem:[#allocation2 + $0x90] sm:$0xff]
      %v827 = vld [vmem:[#allocation2 + $0x98] sm:$0xff]
      %v828 = vld [vmem:[#allocation2 + $0xa0] sm:$0x3]
      %v829 = vld [vmem:[#allocation2 + $0xa8] sm:$0xff]
      %v830 = vld [vmem:[#allocation2 + $0xb0] sm:$0xff]
      %v831 = vld [vmem:[#allocation2 + $0xb8] sm:$0x3]
      %v832 = vld [vmem:[#allocation2 + $0xc0] sm:$0xff]
      %v833 = vld [vmem:[#allocation2 + $0xc8] sm:$0xff]
      %v834 = vld [vmem:[#allocation2 + $0xd0] sm:$0x3]
      %v835 = vld [vmem:[#allocation2 + $0xd8] sm:$0xff]
      %v836 = vld [vmem:[#allocation2 + $0xe0] sm:$0xff]
      %v837 = vld [vmem:[#allocation2 + $0xe8] sm:$0x3]
      %v838 = vld [vmem:[#allocation2 + $0xf0] sm:$0xff]
      %v839 = vld [vmem:[#allocation2 + $0xf8] sm:$0xff]
      %v840 = vld [vmem:[#allocation2 + $0x100] sm:$0x3]
      %v841 = vld [vmem:[#allocation2 + $0x108] sm:$0xff]
      %v842 = vld [vmem:[#allocation2 + $0x110] sm:$0xff]
      %v843 = vld [vmem:[#allocation2 + $0x118] sm:$0x3]
      %v844 = vld [vmem:[#allocation2 + $0x120] sm:$0xff]
      %v845 = vld [vmem:[#allocation2 + $0x128] sm:$0xff]
      %v846 = vld [vmem:[#allocation2 + $0x130] sm:$0x3]
      %v847 = vld [vmem:[#allocation2 + $0x138] sm:$0xff]
      %v848 = vld [vmem:[#allocation2 + $0x140] sm:$0xff]
      %v849 = vld [vmem:[#allocation2 + $0x148] sm:$0x3]
      %v850 = vld [vmem:[#allocation2 + $0x150] sm:$0xff]
      %v851 = vld [vmem:[#allocation2 + $0x158] sm:$0xff]
      %v852 = vld [vmem:[#allocation2 + $0x160] sm:$0x3]
      %v853 = vld [vmem:[#allocation2 + $0x168] sm:$0xff]
      %v854 = vld [vmem:[#allocation2 + $0x170] sm:$0xff]
      %v855 = vld [vmem:[#allocation2 + $0x178] sm:$0x3]
      %v856 = vld [vmem:[#allocation2 + $0x180] sm:$0xff]
      %v857 = vld [vmem:[#allocation2 + $0x188] sm:$0xff]
      %v858 = vld [vmem:[#allocation2 + $0x190] sm:$0x3]
      %v859 = vld [vmem:[#allocation2 + $0x198] sm:$0xff]
      %v860 = vld [vmem:[#allocation2 + $0x1a0] sm:$0xff]
      %v861 = vld [vmem:[#allocation2 + $0x1a8] sm:$0x3]
      %vm910 = vcmask 1046528
      %v911 = vrot.slane %v808, 1
      %v912 = vrot.slane %v809, 1
      %v913 = vsel %vm910, %v911, %v912
      %v914 = vrot.slane %v810, 1
      %v915 = vsel %vm910, %v912, %v914
      %v916 = vrot.slane %v811, 1
      %v917 = vrot.slane %v812, 1
      %v918 = vsel %vm910, %v916, %v917
      %v919 = vrot.slane %v813, 1
      %v920 = vsel %vm910, %v917, %v919
      %v921 = vrot.slane %v814, 1
      %v922 = vrot.slane %v815, 1
      %v923 = vsel %vm910, %v921, %v922
      %v924 = vrot.slane %v816, 1
      %v925 = vsel %vm910, %v922, %v924
      %v926 = vrot.slane %v817, 1
      %v927 = vrot.slane %v818, 1
      %v928 = vsel %vm910, %v926, %v927
      %v929 = vrot.slane %v819, 1
      %v930 = vsel %vm910, %v927, %v929
      %v931 = vrot.slane %v820, 1
      %v932 = vrot.slane %v821, 1
      %v933 = vsel %vm910, %v931, %v932
      %v934 = vrot.slane %v822, 1
      %v935 = vsel %vm910, %v932, %v934
      %v936 = vrot.slane %v823, 1
      %v937 = vrot.slane %v824, 1
      %v938 = vsel %vm910, %v936, %v937
      %v939 = vrot.slane %v825, 1
      %v940 = vsel %vm910, %v937, %v939
      %v941 = vrot.slane %v826, 1
      %v942 = vrot.slane %v827, 1
      %v943 = vsel %vm910, %v941, %v942
      %v944 = vrot.slane %v828, 1
      %v945 = vsel %vm910, %v942, %v944
      %v946 = vrot.slane %v829, 1
      %v947 = vrot.slane %v830, 1
      %v948 = vsel %vm910, %v946, %v947
      %v949 = vrot.slane %v831, 1
      %v950 = vsel %vm910, %v947, %v949
      %v951 = vrot.slane %v832, 1
      %v952 = vrot.slane %v833, 1
      %v953 = vsel %vm910, %v951, %v952
      %v954 = vrot.slane %v834, 1
      %v955 = vsel %vm910, %v952, %v954
      %v956 = vrot.slane %v835, 1
      %v957 = vrot.slane %v836, 1
      %v958 = vsel %vm910, %v956, %v957
      %v959 = vrot.slane %v837, 1
      %v960 = vsel %vm910, %v957, %v959
      %v961 = vrot.slane %v838, 1
      %v962 = vrot.slane %v839, 1
      %v963 = vsel %vm910, %v961, %v962
      %v964 = vrot.slane %v840, 1
      %v965 = vsel %vm910, %v962, %v964
      %v966 = vrot.slane %v841, 1
      %v967 = vrot.slane %v842, 1
      %v968 = vsel %vm910, %v966, %v967
      %v969 = vrot.slane %v843, 1
      %v970 = vsel %vm910, %v967, %v969
      %v971 = vrot.slane %v844, 1
      %v972 = vrot.slane %v845, 1
      %v973 = vsel %vm910, %v971, %v972
      %v974 = vrot.slane %v846, 1
      %v975 = vsel %vm910, %v972, %v974
      %v976 = vrot.slane %v847, 1
      %v977 = vrot.slane %v848, 1
      %v978 = vsel %vm910, %v976, %v977
      %v979 = vrot.slane %v849, 1
      %v980 = vsel %vm910, %v977, %v979
      %v981 = vrot.slane %v850, 1
      %v982 = vrot.slane %v851, 1
      %v983 = vsel %vm910, %v981, %v982
      %v984 = vrot.slane %v852, 1
      %v985 = vsel %vm910, %v982, %v984
      %v986 = vrot.slane %v853, 1
      %v987 = vrot.slane %v854, 1
      %v988 = vsel %vm910, %v986, %v987
      %v989 = vrot.slane %v855, 1
      %v990 = vsel %vm910, %v987, %v989
      %vm991 = vcmask 1045504
      %v992 = vrot.slane %v808, 2
      %v993 = vrot.slane %v809, 2
      %v994 = vsel %vm991, %v992, %v993
      %v995 = vrot.slane %v810, 2
      %v996 = vsel %vm991, %v993, %v995
      %v997 = vrot.slane %v811, 2
      %v998 = vrot.slane %v812, 2
      %v999 = vsel %vm991, %v997, %v998
      %v1000 = vrot.slane %v813, 2
      %v1001 = vsel %vm991, %v998, %v1000
      %v1002 = vrot.slane %v814, 2
      %v1003 = vrot.slane %v815, 2
      %v1004 = vsel %vm991, %v1002, %v1003
      %v1005 = vrot.slane %v816, 2
      %v1006 = vsel %vm991, %v1003, %v1005
      %v1007 = vrot.slane %v817, 2
      %v1008 = vrot.slane %v818, 2
      %v1009 = vsel %vm991, %v1007, %v1008
      %v1010 = vrot.slane %v819, 2
      %v1011 = vsel %vm991, %v1008, %v1010
      %v1012 = vrot.slane %v820, 2
      %v1013 = vrot.slane %v821, 2
      %v1014 = vsel %vm991, %v1012, %v1013
      %v1015 = vrot.slane %v822, 2
      %v1016 = vsel %vm991, %v1013, %v1015
      %v1017 = vrot.slane %v823, 2
      %v1018 = vrot.slane %v824, 2
      %v1019 = vsel %vm991, %v1017, %v1018
      %v1020 = vrot.slane %v825, 2
      %v1021 = vsel %vm991, %v1018, %v1020
      %v1022 = vrot.slane %v826, 2
      %v1023 = vrot.slane %v827, 2
      %v1024 = vsel %vm991, %v1022, %v1023
      %v1025 = vrot.slane %v828, 2
      %v1026 = vsel %vm991, %v1023, %v1025
      %v1027 = vrot.slane %v829, 2
      %v1028 = vrot.slane %v830, 2
      %v1029 = vsel %vm991, %v1027, %v1028
      %v1030 = vrot.slane %v831, 2
      %v1031 = vsel %vm991, %v1028, %v1030
      %v1032 = vrot.slane %v832, 2
      %v1033 = vrot.slane %v833, 2
      %v1034 = vsel %vm991, %v1032, %v1033
      %v1035 = vrot.slane %v834, 2
      %v1036 = vsel %vm991, %v1033, %v1035
      %v1037 = vrot.slane %v835, 2
      %v1038 = vrot.slane %v836, 2
      %v1039 = vsel %vm991, %v1037, %v1038
      %v1040 = vrot.slane %v837, 2
      %v1041 = vsel %vm991, %v1038, %v1040
      %v1042 = vrot.slane %v838, 2
      %v1043 = vrot.slane %v839, 2
      %v1044 = vsel %vm991, %v1042, %v1043
      %v1045 = vrot.slane %v840, 2
      %v1046 = vsel %vm991, %v1043, %v1045
      %v1047 = vrot.slane %v841, 2
      %v1048 = vrot.slane %v842, 2
      %v1049 = vsel %vm991, %v1047, %v1048
      %v1050 = vrot.slane %v843, 2
      %v1051 = vsel %vm991, %v1048, %v1050
      %v1052 = vrot.slane %v844, 2
      %v1053 = vrot.slane %v845, 2
      %v1054 = vsel %vm991, %v1052, %v1053
      %v1055 = vrot.slane %v846, 2
      %v1056 = vsel %vm991, %v1053, %v1055
      %v1057 = vrot.slane %v847, 2
      %v1058 = vrot.slane %v848, 2
      %v1059 = vsel %vm991, %v1057, %v1058
      %v1060 = vrot.slane %v849, 2
      %v1061 = vsel %vm991, %v1058, %v1060
      %v1062 = vrot.slane %v850, 2
      %v1063 = vrot.slane %v851, 2
      %v1064 = vsel %vm991, %v1062, %v1063
      %v1065 = vrot.slane %v852, 2
      %v1066 = vsel %vm991, %v1063, %v1065
      %v1067 = vrot.slane %v853, 2
      %v1068 = vrot.slane %v854, 2
      %v1069 = vsel %vm991, %v1067, %v1068
      %v1070 = vrot.slane %v855, 2
      %v1071 = vsel %vm991, %v1068, %v1070
      %v1075 = vrot.slane %v856, 1
      %v1076 = vrot.slane %v857, 1
      %v1077 = vsel %vm910, %v1075, %v1076
      %v1078 = vrot.slane %v858, 1
      %v1079 = vsel %vm910, %v1076, %v1078
      %v1080 = vrot.slane %v856, 2
      %v1081 = vrot.slane %v857, 2
      %v1082 = vsel %vm991, %v1080, %v1081
      %v1083 = vrot.slane %v858, 2
      %v1084 = vsel %vm991, %v1081, %v1083
      %v1088 = vrot.slane %v859, 1
      %v1089 = vrot.slane %v860, 1
      %v1090 = vsel %vm910, %v1088, %v1089
      %v1091 = vrot.slane %v861, 1
      %v1092 = vsel %vm910, %v1089, %v1091
      %v1093 = vrot.slane %v859, 2
      %v1094 = vrot.slane %v860, 2
      %v1095 = vsel %vm991, %v1093, %v1094
      %v1096 = vrot.slane %v861, 2
      %v1097 = vsel %vm991, %v1094, %v1096
      %1098 = vrot.lane.b32.xlu0 %v913, 36
      %v1099 = vpop.permute.xlu0 %1098
      %1100 = vrot.lane.b32.xlu0 %v915, 36
      %v1101 = vpop.permute.xlu0 %1100
      %1102 = vrot.lane.b32.xlu0 %v918, 36
      %v1103 = vpop.permute.xlu0 %1102
      %1104 = vrot.lane.b32.xlu0 %v920, 36
      %v1105 = vpop.permute.xlu0 %1104
      %1106 = vrot.lane.b32.xlu0 %v923, 36
      %v1107 = vpop.permute.xlu0 %1106
      %1108 = vrot.lane.b32.xlu0 %v925, 36
      %v1109 = vpop.permute.xlu0 %1108
      %1110 = vrot.lane.b32.xlu0 %v928, 36
      %v1111 = vpop.permute.xlu0 %1110
      %1112 = vrot.lane.b32.xlu0 %v930, 36
      %v1113 = vpop.permute.xlu0 %1112
      %1114 = vrot.lane.b32.xlu0 %v933, 36
      %v1115 = vpop.permute.xlu0 %1114
      %1116 = vrot.lane.b32.xlu0 %v935, 36
      %v1117 = vpop.permute.xlu0 %1116
      %1118 = vrot.lane.b32.xlu0 %v938, 36
      %v1119 = vpop.permute.xlu0 %1118
      %1120 = vrot.lane.b32.xlu0 %v940, 36
      %v1121 = vpop.permute.xlu0 %1120
      %1122 = vrot.lane.b32.xlu0 %v943, 36
      %v1123 = vpop.permute.xlu0 %1122
      %1124 = vrot.lane.b32.xlu0 %v945, 36
      %v1125 = vpop.permute.xlu0 %1124
      %1126 = vrot.lane.b32.xlu0 %v948, 36
      %v1127 = vpop.permute.xlu0 %1126
      %1128 = vrot.lane.b32.xlu0 %v950, 36
      %v1129 = vpop.permute.xlu0 %1128
      %1130 = vrot.lane.b32.xlu0 %v953, 36
      %v1131 = vpop.permute.xlu0 %1130
      %1132 = vrot.lane.b32.xlu0 %v955, 36
      %v1133 = vpop.permute.xlu0 %1132
      %1134 = vrot.lane.b32.xlu0 %v958, 36
      %v1135 = vpop.permute.xlu0 %1134
      %1136 = vrot.lane.b32.xlu0 %v960, 36
      %v1137 = vpop.permute.xlu0 %1136
      %1138 = vrot.lane.b32.xlu0 %v963, 36
      %v1139 = vpop.permute.xlu0 %1138
      %1140 = vrot.lane.b32.xlu0 %v965, 36
      %v1141 = vpop.permute.xlu0 %1140
      %1142 = vrot.lane.b32.xlu0 %v968, 36
      %v1143 = vpop.permute.xlu0 %1142
      %1144 = vrot.lane.b32.xlu0 %v970, 36
      %v1145 = vpop.permute.xlu0 %1144
      %1146 = vrot.lane.b32.xlu0 %v973, 36
      %v1147 = vpop.permute.xlu0 %1146
      %1148 = vrot.lane.b32.xlu0 %v975, 36
      %v1149 = vpop.permute.xlu0 %1148
      %1150 = vrot.lane.b32.xlu0 %v978, 36
      %v1151 = vpop.permute.xlu0 %1150
      %1152 = vrot.lane.b32.xlu0 %v980, 36
      %v1153 = vpop.permute.xlu0 %1152
      %1154 = vrot.lane.b32.xlu0 %v983, 36
      %v1155 = vpop.permute.xlu0 %1154
      %1156 = vrot.lane.b32.xlu0 %v985, 36
      %v1157 = vpop.permute.xlu0 %1156
      %1158 = vrot.lane.b32.xlu0 %v988, 36
      %v1159 = vpop.permute.xlu0 %1158
      %1160 = vrot.lane.b32.xlu0 %v990, 36
      %v1161 = vpop.permute.xlu0 %1160
      %1194 = vrot.lane.b32.xlu0 %v994, 72
      %v1195 = vpop.permute.xlu0 %1194
      %1196 = vrot.lane.b32.xlu0 %v996, 72
      %v1197 = vpop.permute.xlu0 %1196
      %1198 = vrot.lane.b32.xlu0 %v999, 72
      %v1199 = vpop.permute.xlu0 %1198
      %1200 = vrot.lane.b32.xlu0 %v1001, 72
      %v1201 = vpop.permute.xlu0 %1200
      %1202 = vrot.lane.b32.xlu0 %v1004, 72
      %v1203 = vpop.permute.xlu0 %1202
      %1204 = vrot.lane.b32.xlu0 %v1006, 72
      %v1205 = vpop.permute.xlu0 %1204
      %1206 = vrot.lane.b32.xlu0 %v1009, 72
      %v1207 = vpop.permute.xlu0 %1206
      %1208 = vrot.lane.b32.xlu0 %v1011, 72
      %v1209 = vpop.permute.xlu0 %1208
      %1210 = vrot.lane.b32.xlu0 %v1014, 72
      %v1211 = vpop.permute.xlu0 %1210
      %1212 = vrot.lane.b32.xlu0 %v1016, 72
      %v1213 = vpop.permute.xlu0 %1212
      %1214 = vrot.lane.b32.xlu0 %v1019, 72
      %v1215 = vpop.permute.xlu0 %1214
      %1216 = vrot.lane.b32.xlu0 %v1021, 72
      %v1217 = vpop.permute.xlu0 %1216
      %1218 = vrot.lane.b32.xlu0 %v1024, 72
      %v1219 = vpop.permute.xlu0 %1218
      %1220 = vrot.lane.b32.xlu0 %v1026, 72
      %v1221 = vpop.permute.xlu0 %1220
      %1222 = vrot.lane.b32.xlu0 %v1029, 72
      %v1223 = vpop.permute.xlu0 %1222
      %1224 = vrot.lane.b32.xlu0 %v1031, 72
      %v1225 = vpop.permute.xlu0 %1224
      %1226 = vrot.lane.b32.xlu0 %v1034, 72
      %v1227 = vpop.permute.xlu0 %1226
      %1228 = vrot.lane.b32.xlu0 %v1036, 72
      %v1229 = vpop.permute.xlu0 %1228
      %1230 = vrot.lane.b32.xlu0 %v1039, 72
      %v1231 = vpop.permute.xlu0 %1230
      %1232 = vrot.lane.b32.xlu0 %v1041, 72
      %v1233 = vpop.permute.xlu0 %1232
      %1234 = vrot.lane.b32.xlu0 %v1044, 72
      %v1235 = vpop.permute.xlu0 %1234
      %1236 = vrot.lane.b32.xlu0 %v1046, 72
      %v1237 = vpop.permute.xlu0 %1236
      %1238 = vrot.lane.b32.xlu0 %v1049, 72
      %v1239 = vpop.permute.xlu0 %1238
      %1240 = vrot.lane.b32.xlu0 %v1051, 72
      %v1241 = vpop.permute.xlu0 %1240
      %1242 = vrot.lane.b32.xlu0 %v1054, 72
      %v1243 = vpop.permute.xlu0 %1242
      %1244 = vrot.lane.b32.xlu0 %v1056, 72
      %v1245 = vpop.permute.xlu0 %1244
      %1246 = vrot.lane.b32.xlu0 %v1059, 72
      %v1247 = vpop.permute.xlu0 %1246
      %1248 = vrot.lane.b32.xlu0 %v1061, 72
      %v1249 = vpop.permute.xlu0 %1248
      %1250 = vrot.lane.b32.xlu0 %v1064, 72
      %v1251 = vpop.permute.xlu0 %1250
      %1252 = vrot.lane.b32.xlu0 %v1066, 72
      %v1253 = vpop.permute.xlu0 %1252
      %1254 = vrot.lane.b32.xlu0 %v1069, 72
      %v1255 = vpop.permute.xlu0 %1254
      %1256 = vrot.lane.b32.xlu0 %v1071, 72
      %v1257 = vpop.permute.xlu0 %1256
      %1290 = vrot.lane.b32.xlu0 %v811, 108
      %v1291 = vpop.permute.xlu0 %1290
      %1292 = vrot.lane.b32.xlu0 %v812, 108
      %v1293 = vpop.permute.xlu0 %1292
      %1294 = vrot.lane.b32.xlu0 %v814, 108
      %v1295 = vpop.permute.xlu0 %1294
      %1296 = vrot.lane.b32.xlu0 %v815, 108
      %v1297 = vpop.permute.xlu0 %1296
      %1298 = vrot.lane.b32.xlu0 %v817, 108
      %v1299 = vpop.permute.xlu0 %1298
      %1300 = vrot.lane.b32.xlu0 %v818, 108
      %v1301 = vpop.permute.xlu0 %1300
      %1302 = vrot.lane.b32.xlu0 %v820, 108
      %v1303 = vpop.permute.xlu0 %1302
      %1304 = vrot.lane.b32.xlu0 %v821, 108
      %v1305 = vpop.permute.xlu0 %1304
      %1306 = vrot.lane.b32.xlu0 %v823, 108
      %v1307 = vpop.permute.xlu0 %1306
      %1308 = vrot.lane.b32.xlu0 %v824, 108
      %v1309 = vpop.permute.xlu0 %1308
      %1310 = vrot.lane.b32.xlu0 %v826, 108
      %v1311 = vpop.permute.xlu0 %1310
      %1312 = vrot.lane.b32.xlu0 %v827, 108
      %v1313 = vpop.permute.xlu0 %1312
      %1314 = vrot.lane.b32.xlu0 %v829, 108
      %v1315 = vpop.permute.xlu0 %1314
      %1316 = vrot.lane.b32.xlu0 %v830, 108
      %v1317 = vpop.permute.xlu0 %1316
      %1318 = vrot.lane.b32.xlu0 %v832, 108
      %v1319 = vpop.permute.xlu0 %1318
      %1320 = vrot.lane.b32.xlu0 %v833, 108
      %v1321 = vpop.permute.xlu0 %1320
      %1322 = vrot.lane.b32.xlu0 %v835, 108
      %v1323 = vpop.permute.xlu0 %1322
      %1324 = vrot.lane.b32.xlu0 %v836, 108
      %v1325 = vpop.permute.xlu0 %1324
      %1326 = vrot.lane.b32.xlu0 %v838, 108
      %v1327 = vpop.permute.xlu0 %1326
      %1328 = vrot.lane.b32.xlu0 %v839, 108
      %v1329 = vpop.permute.xlu0 %1328
      %1330 = vrot.lane.b32.xlu0 %v841, 108
      %v1331 = vpop.permute.xlu0 %1330
      %1332 = vrot.lane.b32.xlu0 %v842, 108
      %v1333 = vpop.permute.xlu0 %1332
      %1334 = vrot.lane.b32.xlu0 %v844, 108
      %v1335 = vpop.permute.xlu0 %1334
      %1336 = vrot.lane.b32.xlu0 %v845, 108
      %v1337 = vpop.permute.xlu0 %1336
      %1338 = vrot.lane.b32.xlu0 %v847, 108
      %v1339 = vpop.permute.xlu0 %1338
      %1340 = vrot.lane.b32.xlu0 %v848, 108
      %v1341 = vpop.permute.xlu0 %1340
      %1342 = vrot.lane.b32.xlu0 %v850, 108
      %v1343 = vpop.permute.xlu0 %1342
      %1344 = vrot.lane.b32.xlu0 %v851, 108
      %v1345 = vpop.permute.xlu0 %1344
      %1346 = vrot.lane.b32.xlu0 %v853, 108
      %v1347 = vpop.permute.xlu0 %1346
      %1348 = vrot.lane.b32.xlu0 %v854, 108
      %v1349 = vpop.permute.xlu0 %1348
      %1350 = vrot.lane.b32.xlu0 %v856, 108
      %v1351 = vpop.permute.xlu0 %1350
      %1352 = vrot.lane.b32.xlu0 %v857, 108
      %v1353 = vpop.permute.xlu0 %1352
      %1386 = vrot.lane.b32.xlu0 %v918, 16
      %v1387 = vpop.permute.xlu0 %1386
      %1388 = vrot.lane.b32.xlu0 %v920, 16
      %v1389 = vpop.permute.xlu0 %1388
      %1390 = vrot.lane.b32.xlu0 %v923, 16
      %v1391 = vpop.permute.xlu0 %1390
      %1392 = vrot.lane.b32.xlu0 %v925, 16
      %v1393 = vpop.permute.xlu0 %1392
      %1394 = vrot.lane.b32.xlu0 %v928, 16
      %v1395 = vpop.permute.xlu0 %1394
      %1396 = vrot.lane.b32.xlu0 %v930, 16
      %v1397 = vpop.permute.xlu0 %1396
      %1398 = vrot.lane.b32.xlu0 %v933, 16
      %v1399 = vpop.permute.xlu0 %1398
      %1400 = vrot.lane.b32.xlu0 %v935, 16
      %v1401 = vpop.permute.xlu0 %1400
      %1402 = vrot.lane.b32.xlu0 %v938, 16
      %v1403 = vpop.permute.xlu0 %1402
      %1404 = vrot.lane.b32.xlu0 %v940, 16
      %v1405 = vpop.permute.xlu0 %1404
      %1406 = vrot.lane.b32.xlu0 %v943, 16
      %v1407 = vpop.permute.xlu0 %1406
      %1408 = vrot.lane.b32.xlu0 %v945, 16
      %v1409 = vpop.permute.xlu0 %1408
      %1410 = vrot.lane.b32.xlu0 %v948, 16
      %v1411 = vpop.permute.xlu0 %1410
      %1412 = vrot.lane.b32.xlu0 %v950, 16
      %v1413 = vpop.permute.xlu0 %1412
      %1414 = vrot.lane.b32.xlu0 %v953, 16
      %v1415 = vpop.permute.xlu0 %1414
      %1416 = vrot.lane.b32.xlu0 %v955, 16
      %v1417 = vpop.permute.xlu0 %1416
      %1418 = vrot.lane.b32.xlu0 %v958, 16
      %v1419 = vpop.permute.xlu0 %1418
      %1420 = vrot.lane.b32.xlu0 %v960, 16
      %v1421 = vpop.permute.xlu0 %1420
      %1422 = vrot.lane.b32.xlu0 %v963, 16
      %v1423 = vpop.permute.xlu0 %1422
      %1424 = vrot.lane.b32.xlu0 %v965, 16
      %v1425 = vpop.permute.xlu0 %1424
      %1426 = vrot.lane.b32.xlu0 %v968, 16
      %v1427 = vpop.permute.xlu0 %1426
      %1428 = vrot.lane.b32.xlu0 %v970, 16
      %v1429 = vpop.permute.xlu0 %1428
      %1430 = vrot.lane.b32.xlu0 %v973, 16
      %v1431 = vpop.permute.xlu0 %1430
      %1432 = vrot.lane.b32.xlu0 %v975, 16
      %v1433 = vpop.permute.xlu0 %1432
      %1434 = vrot.lane.b32.xlu0 %v978, 16
      %v1435 = vpop.permute.xlu0 %1434
      %1436 = vrot.lane.b32.xlu0 %v980, 16
      %v1437 = vpop.permute.xlu0 %1436
      %1438 = vrot.lane.b32.xlu0 %v983, 16
      %v1439 = vpop.permute.xlu0 %1438
      %1440 = vrot.lane.b32.xlu0 %v985, 16
      %v1441 = vpop.permute.xlu0 %1440
      %1442 = vrot.lane.b32.xlu0 %v988, 16
      %v1443 = vpop.permute.xlu0 %1442
      %1444 = vrot.lane.b32.xlu0 %v990, 16
      %v1445 = vpop.permute.xlu0 %1444
      %1446 = vrot.lane.b32.xlu0 %v1077, 16
      %v1447 = vpop.permute.xlu0 %1446
      %1448 = vrot.lane.b32.xlu0 %v1079, 16
      %v1449 = vpop.permute.xlu0 %1448
      %1482 = vrot.lane.b32.xlu0 %v999, 52
      %v1483 = vpop.permute.xlu0 %1482
      %1484 = vrot.lane.b32.xlu0 %v1001, 52
      %v1485 = vpop.permute.xlu0 %1484
      %1486 = vrot.lane.b32.xlu0 %v1004, 52
      %v1487 = vpop.permute.xlu0 %1486
      %1488 = vrot.lane.b32.xlu0 %v1006, 52
      %v1489 = vpop.permute.xlu0 %1488
      %1490 = vrot.lane.b32.xlu0 %v1009, 52
      %v1491 = vpop.permute.xlu0 %1490
      %1492 = vrot.lane.b32.xlu0 %v1011, 52
      %v1493 = vpop.permute.xlu0 %1492
      %1494 = vrot.lane.b32.xlu0 %v1014, 52
      %v1495 = vpop.permute.xlu0 %1494
      %1496 = vrot.lane.b32.xlu0 %v1016, 52
      %v1497 = vpop.permute.xlu0 %1496
      %1498 = vrot.lane.b32.xlu0 %v1019, 52
      %v1499 = vpop.permute.xlu0 %1498
      %1500 = vrot.lane.b32.xlu0 %v1021, 52
      %v1501 = vpop.permute.xlu0 %1500
      %1502 = vrot.lane.b32.xlu0 %v1024, 52
      %v1503 = vpop.permute.xlu0 %1502
      %1504 = vrot.lane.b32.xlu0 %v1026, 52
      %v1505 = vpop.permute.xlu0 %1504
      %1506 = vrot.lane.b32.xlu0 %v1029, 52
      %v1507 = vpop.permute.xlu0 %1506
      %1508 = vrot.lane.b32.xlu0 %v1031, 52
      %v1509 = vpop.permute.xlu0 %1508
      %1510 = vrot.lane.b32.xlu0 %v1034, 52
      %v1511 = vpop.permute.xlu0 %1510
      %1512 = vrot.lane.b32.xlu0 %v1036, 52
      %v1513 = vpop.permute.xlu0 %1512
      %1514 = vrot.lane.b32.xlu0 %v1039, 52
      %v1515 = vpop.permute.xlu0 %1514
      %1516 = vrot.lane.b32.xlu0 %v1041, 52
      %v1517 = vpop.permute.xlu0 %1516
      %1518 = vrot.lane.b32.xlu0 %v1044, 52
      %v1519 = vpop.permute.xlu0 %1518
      %1520 = vrot.lane.b32.xlu0 %v1046, 52
      %v1521 = vpop.permute.xlu0 %1520
      %1522 = vrot.lane.b32.xlu0 %v1049, 52
      %v1523 = vpop.permute.xlu0 %1522
      %1524 = vrot.lane.b32.xlu0 %v1051, 52
      %v1525 = vpop.permute.xlu0 %1524
      %1526 = vrot.lane.b32.xlu0 %v1054, 52
      %v1527 = vpop.permute.xlu0 %1526
      %1528 = vrot.lane.b32.xlu0 %v1056, 52
      %v1529 = vpop.permute.xlu0 %1528
      %1530 = vrot.lane.b32.xlu0 %v1059, 52
      %v1531 = vpop.permute.xlu0 %1530
      %1532 = vrot.lane.b32.xlu0 %v1061, 52
      %v1533 = vpop.permute.xlu0 %1532
      %1534 = vrot.lane.b32.xlu0 %v1064, 52
      %v1535 = vpop.permute.xlu0 %1534
      %1536 = vrot.lane.b32.xlu0 %v1066, 52
      %v1537 = vpop.permute.xlu0 %1536
      %1538 = vrot.lane.b32.xlu0 %v1069, 52
      %v1539 = vpop.permute.xlu0 %1538
      %1540 = vrot.lane.b32.xlu0 %v1071, 52
      %v1541 = vpop.permute.xlu0 %1540
      %1542 = vrot.lane.b32.xlu0 %v1082, 52
      %v1543 = vpop.permute.xlu0 %1542
      %1544 = vrot.lane.b32.xlu0 %v1084, 52
      %v1545 = vpop.permute.xlu0 %1544
      %1578 = vrot.lane.b32.xlu0 %v814, 88
      %v1579 = vpop.permute.xlu0 %1578
      %1580 = vrot.lane.b32.xlu0 %v815, 88
      %v1581 = vpop.permute.xlu0 %1580
      %1582 = vrot.lane.b32.xlu0 %v817, 88
      %v1583 = vpop.permute.xlu0 %1582
      %1584 = vrot.lane.b32.xlu0 %v818, 88
      %v1585 = vpop.permute.xlu0 %1584
      %1586 = vrot.lane.b32.xlu0 %v820, 88
      %v1587 = vpop.permute.xlu0 %1586
      %1588 = vrot.lane.b32.xlu0 %v821, 88
      %v1589 = vpop.permute.xlu0 %1588
      %1590 = vrot.lane.b32.xlu0 %v823, 88
      %v1591 = vpop.permute.xlu0 %1590
      %1592 = vrot.lane.b32.xlu0 %v824, 88
      %v1593 = vpop.permute.xlu0 %1592
      %1594 = vrot.lane.b32.xlu0 %v826, 88
      %v1595 = vpop.permute.xlu0 %1594
      %1596 = vrot.lane.b32.xlu0 %v827, 88
      %v1597 = vpop.permute.xlu0 %1596
      %1598 = vrot.lane.b32.xlu0 %v829, 88
      %v1599 = vpop.permute.xlu0 %1598
      %1600 = vrot.lane.b32.xlu0 %v830, 88
      %v1601 = vpop.permute.xlu0 %1600
      %1602 = vrot.lane.b32.xlu0 %v832, 88
      %v1603 = vpop.permute.xlu0 %1602
      %1604 = vrot.lane.b32.xlu0 %v833, 88
      %v1605 = vpop.permute.xlu0 %1604
      %1606 = vrot.lane.b32.xlu0 %v835, 88
      %v1607 = vpop.permute.xlu0 %1606
      %1608 = vrot.lane.b32.xlu0 %v836, 88
      %v1609 = vpop.permute.xlu0 %1608
      %1610 = vrot.lane.b32.xlu0 %v838, 88
      %v1611 = vpop.permute.xlu0 %1610
      %1612 = vrot.lane.b32.xlu0 %v839, 88
      %v1613 = vpop.permute.xlu0 %1612
      %1614 = vrot.lane.b32.xlu0 %v841, 88
      %v1615 = vpop.permute.xlu0 %1614
      %1616 = vrot.lane.b32.xlu0 %v842, 88
      %v1617 = vpop.permute.xlu0 %1616
      %1618 = vrot.lane.b32.xlu0 %v844, 88
      %v1619 = vpop.permute.xlu0 %1618
      %1620 = vrot.lane.b32.xlu0 %v845, 88
      %v1621 = vpop.permute.xlu0 %1620
      %1622 = vrot.lane.b32.xlu0 %v847, 88
      %v1623 = vpop.permute.xlu0 %1622
      %1624 = vrot.lane.b32.xlu0 %v848, 88
      %v1625 = vpop.permute.xlu0 %1624
      %1626 = vrot.lane.b32.xlu0 %v850, 88
      %v1627 = vpop.permute.xlu0 %1626
      %1628 = vrot.lane.b32.xlu0 %v851, 88
      %v1629 = vpop.permute.xlu0 %1628
      %1630 = vrot.lane.b32.xlu0 %v853, 88
      %v1631 = vpop.permute.xlu0 %1630
      %1632 = vrot.lane.b32.xlu0 %v854, 88
      %v1633 = vpop.permute.xlu0 %1632
      %1634 = vrot.lane.b32.xlu0 %v856, 88
      %v1635 = vpop.permute.xlu0 %1634
      %1636 = vrot.lane.b32.xlu0 %v857, 88
      %v1637 = vpop.permute.xlu0 %1636
      %1638 = vrot.lane.b32.xlu0 %v859, 88
      %v1639 = vpop.permute.xlu0 %1638
      %1640 = vrot.lane.b32.xlu0 %v860, 88
      %v1641 = vpop.permute.xlu0 %1640
      %1674 = vrot.lane.b32.xlu0 %v923, 124
      %v1675 = vpop.permute.xlu0 %1674
      %1676 = vrot.lane.b32.xlu0 %v925, 124
      %v1677 = vpop.permute.xlu0 %1676
      %1678 = vrot.lane.b32.xlu0 %v928, 124
      %v1679 = vpop.permute.xlu0 %1678
      %1680 = vrot.lane.b32.xlu0 %v930, 124
      %v1681 = vpop.permute.xlu0 %1680
      %1682 = vrot.lane.b32.xlu0 %v933, 124
      %v1683 = vpop.permute.xlu0 %1682
      %1684 = vrot.lane.b32.xlu0 %v935, 124
      %v1685 = vpop.permute.xlu0 %1684
      %1686 = vrot.lane.b32.xlu0 %v938, 124
      %v1687 = vpop.permute.xlu0 %1686
      %1688 = vrot.lane.b32.xlu0 %v940, 124
      %v1689 = vpop.permute.xlu0 %1688
      %1690 = vrot.lane.b32.xlu0 %v943, 124
      %v1691 = vpop.permute.xlu0 %1690
      %1692 = vrot.lane.b32.xlu0 %v945, 124
      %v1693 = vpop.permute.xlu0 %1692
      %1694 = vrot.lane.b32.xlu0 %v948, 124
      %v1695 = vpop.permute.xlu0 %1694
      %1696 = vrot.lane.b32.xlu0 %v950, 124
      %v1697 = vpop.permute.xlu0 %1696
      %1698 = vrot.lane.b32.xlu0 %v953, 124
      %v1699 = vpop.permute.xlu0 %1698
      %1700 = vrot.lane.b32.xlu0 %v955, 124
      %v1701 = vpop.permute.xlu0 %1700
      %1702 = vrot.lane.b32.xlu0 %v958, 124
      %v1703 = vpop.permute.xlu0 %1702
      %1704 = vrot.lane.b32.xlu0 %v960, 124
      %v1705 = vpop.permute.xlu0 %1704
      %1706 = vrot.lane.b32.xlu0 %v963, 124
      %v1707 = vpop.permute.xlu0 %1706
      %1708 = vrot.lane.b32.xlu0 %v965, 124
      %v1709 = vpop.permute.xlu0 %1708
      %1710 = vrot.lane.b32.xlu0 %v968, 124
      %v1711 = vpop.permute.xlu0 %1710
      %1712 = vrot.lane.b32.xlu0 %v970, 124
      %v1713 = vpop.permute.xlu0 %1712
      %1714 = vrot.lane.b32.xlu0 %v973, 124
      %v1715 = vpop.permute.xlu0 %1714
      %1716 = vrot.lane.b32.xlu0 %v975, 124
      %v1717 = vpop.permute.xlu0 %1716
      %1718 = vrot.lane.b32.xlu0 %v978, 124
      %v1719 = vpop.permute.xlu0 %1718
      %1720 = vrot.lane.b32.xlu0 %v980, 124
      %v1721 = vpop.permute.xlu0 %1720
      %1722 = vrot.lane.b32.xlu0 %v983, 124
      %v1723 = vpop.permute.xlu0 %1722
      %1724 = vrot.lane.b32.xlu0 %v985, 124
      %v1725 = vpop.permute.xlu0 %1724
      %1726 = vrot.lane.b32.xlu0 %v988, 124
      %v1727 = vpop.permute.xlu0 %1726
      %1728 = vrot.lane.b32.xlu0 %v990, 124
      %v1729 = vpop.permute.xlu0 %1728
      %1730 = vrot.lane.b32.xlu0 %v1077, 124
      %v1731 = vpop.permute.xlu0 %1730
      %1732 = vrot.lane.b32.xlu0 %v1079, 124
      %v1733 = vpop.permute.xlu0 %1732
      %1734 = vrot.lane.b32.xlu0 %v1090, 124
      %v1735 = vpop.permute.xlu0 %1734
      %1736 = vrot.lane.b32.xlu0 %v1092, 124
      %v1737 = vpop.permute.xlu0 %1736
      %1770 = vrot.lane.b32.xlu0 %v1004, 32
      %v1771 = vpop.permute.xlu0 %1770
      %1772 = vrot.lane.b32.xlu0 %v1006, 32
      %v1773 = vpop.permute.xlu0 %1772
      %1774 = vrot.lane.b32.xlu0 %v1009, 32
      %v1775 = vpop.permute.xlu0 %1774
      %1776 = vrot.lane.b32.xlu0 %v1011, 32
      %v1777 = vpop.permute.xlu0 %1776
      %1778 = vrot.lane.b32.xlu0 %v1014, 32
      %v1779 = vpop.permute.xlu0 %1778
      %1780 = vrot.lane.b32.xlu0 %v1016, 32
      %v1781 = vpop.permute.xlu0 %1780
      %1782 = vrot.lane.b32.xlu0 %v1019, 32
      %v1783 = vpop.permute.xlu0 %1782
      %1784 = vrot.lane.b32.xlu0 %v1021, 32
      %v1785 = vpop.permute.xlu0 %1784
      %1786 = vrot.lane.b32.xlu0 %v1024, 32
      %v1787 = vpop.permute.xlu0 %1786
      %1788 = vrot.lane.b32.xlu0 %v1026, 32
      %v1789 = vpop.permute.xlu0 %1788
      %1790 = vrot.lane.b32.xlu0 %v1029, 32
      %v1791 = vpop.permute.xlu0 %1790
      %1792 = vrot.lane.b32.xlu0 %v1031, 32
      %v1793 = vpop.permute.xlu0 %1792
      %1794 = vrot.lane.b32.xlu0 %v1034, 32
      %v1795 = vpop.permute.xlu0 %1794
      %1796 = vrot.lane.b32.xlu0 %v1036, 32
      %v1797 = vpop.permute.xlu0 %1796
      %1798 = vrot.lane.b32.xlu0 %v1039, 32
      %v1799 = vpop.permute.xlu0 %1798
      %1800 = vrot.lane.b32.xlu0 %v1041, 32
      %v1801 = vpop.permute.xlu0 %1800
      %1802 = vrot.lane.b32.xlu0 %v1044, 32
      %v1803 = vpop.permute.xlu0 %1802
      %1804 = vrot.lane.b32.xlu0 %v1046, 32
      %v1805 = vpop.permute.xlu0 %1804
      %1806 = vrot.lane.b32.xlu0 %v1049, 32
      %v1807 = vpop.permute.xlu0 %1806
      %1808 = vrot.lane.b32.xlu0 %v1051, 32
      %v1809 = vpop.permute.xlu0 %1808
      %1810 = vrot.lane.b32.xlu0 %v1054, 32
      %v1811 = vpop.permute.xlu0 %1810
      %1812 = vrot.lane.b32.xlu0 %v1056, 32
      %v1813 = vpop.permute.xlu0 %1812
      %1814 = vrot.lane.b32.xlu0 %v1059, 32
      %v1815 = vpop.permute.xlu0 %1814
      %1816 = vrot.lane.b32.xlu0 %v1061, 32
      %v1817 = vpop.permute.xlu0 %1816
      %1818 = vrot.lane.b32.xlu0 %v1064, 32
      %v1819 = vpop.permute.xlu0 %1818
      %1820 = vrot.lane.b32.xlu0 %v1066, 32
      %v1821 = vpop.permute.xlu0 %1820
      %1822 = vrot.lane.b32.xlu0 %v1069, 32
      %v1823 = vpop.permute.xlu0 %1822
      %1824 = vrot.lane.b32.xlu0 %v1071, 32
      %v1825 = vpop.permute.xlu0 %1824
      %1826 = vrot.lane.b32.xlu0 %v1082, 32
      %v1827 = vpop.permute.xlu0 %1826
      %1828 = vrot.lane.b32.xlu0 %v1084, 32
      %v1829 = vpop.permute.xlu0 %1828
      %1830 = vrot.lane.b32.xlu0 %v1095, 32
      %v1831 = vpop.permute.xlu0 %1830
      %1832 = vrot.lane.b32.xlu0 %v1097, 32
      %v1833 = vpop.permute.xlu0 %1832
      %v1866 = vsel %vm719, %v808, %v1099
      %v1867 = vsel %vm719, %v809, %v1101
      %v1868 = vsel %vm719, %v811, %v1103
      %v1869 = vsel %vm719, %v812, %v1105
      %v1870 = vsel %vm719, %v814, %v1107
      %v1871 = vsel %vm719, %v815, %v1109
      %v1872 = vsel %vm719, %v817, %v1111
      %v1873 = vsel %vm719, %v818, %v1113
      %v1874 = vsel %vm719, %v820, %v1115
      %v1875 = vsel %vm719, %v821, %v1117
      %v1876 = vsel %vm719, %v823, %v1119
      %v1877 = vsel %vm719, %v824, %v1121
      %v1878 = vsel %vm719, %v826, %v1123
      %v1879 = vsel %vm719, %v827, %v1125
      %v1880 = vsel %vm719, %v829, %v1127
      %v1881 = vsel %vm719, %v830, %v1129
      %v1882 = vsel %vm719, %v832, %v1131
      %v1883 = vsel %vm719, %v833, %v1133
      %v1884 = vsel %vm719, %v835, %v1135
      %v1885 = vsel %vm719, %v836, %v1137
      %v1886 = vsel %vm719, %v838, %v1139
      %v1887 = vsel %vm719, %v839, %v1141
      %v1888 = vsel %vm719, %v841, %v1143
      %v1889 = vsel %vm719, %v842, %v1145
      %v1890 = vsel %vm719, %v844, %v1147
      %v1891 = vsel %vm719, %v845, %v1149
      %v1892 = vsel %vm719, %v847, %v1151
      %v1893 = vsel %vm719, %v848, %v1153
      %v1894 = vsel %vm719, %v850, %v1155
      %v1895 = vsel %vm719, %v851, %v1157
      %v1896 = vsel %vm719, %v853, %v1159
      %v1897 = vsel %vm719, %v854, %v1161
      %vm1898 = vcmask 588800
      %v1899 = vsel %vm1898, %v1866, %v1195
      %v1900 = vsel %vm1898, %v1867, %v1197
      %v1901 = vsel %vm1898, %v1868, %v1199
      %v1902 = vsel %vm1898, %v1869, %v1201
      %v1903 = vsel %vm1898, %v1870, %v1203
      %v1904 = vsel %vm1898, %v1871, %v1205
      %v1905 = vsel %vm1898, %v1872, %v1207
      %v1906 = vsel %vm1898, %v1873, %v1209
      %v1907 = vsel %vm1898, %v1874, %v1211
      %v1908 = vsel %vm1898, %v1875, %v1213
      %v1909 = vsel %vm1898, %v1876, %v1215
      %v1910 = vsel %vm1898, %v1877, %v1217
      %v1911 = vsel %vm1898, %v1878, %v1219
      %v1912 = vsel %vm1898, %v1879, %v1221
      %v1913 = vsel %vm1898, %v1880, %v1223
      %v1914 = vsel %vm1898, %v1881, %v1225
      %v1915 = vsel %vm1898, %v1882, %v1227
      %v1916 = vsel %vm1898, %v1883, %v1229
      %v1917 = vsel %vm1898, %v1884, %v1231
      %v1918 = vsel %vm1898, %v1885, %v1233
      %v1919 = vsel %vm1898, %v1886, %v1235
      %v1920 = vsel %vm1898, %v1887, %v1237
      %v1921 = vsel %vm1898, %v1888, %v1239
      %v1922 = vsel %vm1898, %v1889, %v1241
      %v1923 = vsel %vm1898, %v1890, %v1243
      %v1924 = vsel %vm1898, %v1891, %v1245
      %v1925 = vsel %vm1898, %v1892, %v1247
      %v1926 = vsel %vm1898, %v1893, %v1249
      %v1927 = vsel %vm1898, %v1894, %v1251
      %v1928 = vsel %vm1898, %v1895, %v1253
      %v1929 = vsel %vm1898, %v1896, %v1255
      %v1930 = vsel %vm1898, %v1897, %v1257
      %vm1931 = vcmask 883712
      %v1932 = vsel %vm1931, %v1899, %v1291
      %v1933 = vsel %vm1931, %v1900, %v1293
      %v1934 = vsel %vm1931, %v1901, %v1295
      %v1935 = vsel %vm1931, %v1902, %v1297
      %v1936 = vsel %vm1931, %v1903, %v1299
      %v1937 = vsel %vm1931, %v1904, %v1301
      %v1938 = vsel %vm1931, %v1905, %v1303
      %v1939 = vsel %vm1931, %v1906, %v1305
      %v1940 = vsel %vm1931, %v1907, %v1307
      %v1941 = vsel %vm1931, %v1908, %v1309
      %v1942 = vsel %vm1931, %v1909, %v1311
      %v1943 = vsel %vm1931, %v1910, %v1313
      %v1944 = vsel %vm1931, %v1911, %v1315
      %v1945 = vsel %vm1931, %v1912, %v1317
      %v1946 = vsel %vm1931, %v1913, %v1319
      %v1947 = vsel %vm1931, %v1914, %v1321
      %v1948 = vsel %vm1931, %v1915, %v1323
      %v1949 = vsel %vm1931, %v1916, %v1325
      %v1950 = vsel %vm1931, %v1917, %v1327
      %v1951 = vsel %vm1931, %v1918, %v1329
      %v1952 = vsel %vm1931, %v1919, %v1331
      %v1953 = vsel %vm1931, %v1920, %v1333
      %v1954 = vsel %vm1931, %v1921, %v1335
      %v1955 = vsel %vm1931, %v1922, %v1337
      %v1956 = vsel %vm1931, %v1923, %v1339
      %v1957 = vsel %vm1931, %v1924, %v1341
      %v1958 = vsel %vm1931, %v1925, %v1343
      %v1959 = vsel %vm1931, %v1926, %v1345
      %v1960 = vsel %vm1931, %v1927, %v1347
      %v1961 = vsel %vm1931, %v1928, %v1349
      %v1962 = vsel %vm1931, %v1929, %v1351
      %v1963 = vsel %vm1931, %v1930, %v1353
      %vm1964 = vcmask 130048
      %v1965 = vsel %vm1964, %v1291, %v1387
      %v1966 = vsel %vm1964, %v1293, %v1389
      %v1967 = vsel %vm1964, %v1295, %v1391
      %v1968 = vsel %vm1964, %v1297, %v1393
      %v1969 = vsel %vm1964, %v1299, %v1395
      %v1970 = vsel %vm1964, %v1301, %v1397
      %v1971 = vsel %vm1964, %v1303, %v1399
      %v1972 = vsel %vm1964, %v1305, %v1401
      %v1973 = vsel %vm1964, %v1307, %v1403
      %v1974 = vsel %vm1964, %v1309, %v1405
      %v1975 = vsel %vm1964, %v1311, %v1407
      %v1976 = vsel %vm1964, %v1313, %v1409
      %v1977 = vsel %vm1964, %v1315, %v1411
      %v1978 = vsel %vm1964, %v1317, %v1413
      %v1979 = vsel %vm1964, %v1319, %v1415
      %v1980 = vsel %vm1964, %v1321, %v1417
      %v1981 = vsel %vm1964, %v1323, %v1419
      %v1982 = vsel %vm1964, %v1325, %v1421
      %v1983 = vsel %vm1964, %v1327, %v1423
      %v1984 = vsel %vm1964, %v1329, %v1425
      %v1985 = vsel %vm1964, %v1331, %v1427
      %v1986 = vsel %vm1964, %v1333, %v1429
      %v1987 = vsel %vm1964, %v1335, %v1431
      %v1988 = vsel %vm1964, %v1337, %v1433
      %v1989 = vsel %vm1964, %v1339, %v1435
      %v1990 = vsel %vm1964, %v1341, %v1437
      %v1991 = vsel %vm1964, %v1343, %v1439
      %v1992 = vsel %vm1964, %v1345, %v1441
      %v1993 = vsel %vm1964, %v1347, %v1443
      %v1994 = vsel %vm1964, %v1349, %v1445
      %v1995 = vsel %vm1964, %v1351, %v1447
      %v1996 = vsel %vm1964, %v1353, %v1449
      %vm1997 = vcmask 424960
      %v1998 = vsel %vm1997, %v1965, %v1483
      %v1999 = vsel %vm1997, %v1966, %v1485
      %v2000 = vsel %vm1997, %v1967, %v1487
      %v2001 = vsel %vm1997, %v1968, %v1489
      %v2002 = vsel %vm1997, %v1969, %v1491
      %v2003 = vsel %vm1997, %v1970, %v1493
      %v2004 = vsel %vm1997, %v1971, %v1495
      %v2005 = vsel %vm1997, %v1972, %v1497
      %v2006 = vsel %vm1997, %v1973, %v1499
      %v2007 = vsel %vm1997, %v1974, %v1501
      %v2008 = vsel %vm1997, %v1975, %v1503
      %v2009 = vsel %vm1997, %v1976, %v1505
      %v2010 = vsel %vm1997, %v1977, %v1507
      %v2011 = vsel %vm1997, %v1978, %v1509
      %v2012 = vsel %vm1997, %v1979, %v1511
      %v2013 = vsel %vm1997, %v1980, %v1513
      %v2014 = vsel %vm1997, %v1981, %v1515
      %v2015 = vsel %vm1997, %v1982, %v1517
      %v2016 = vsel %vm1997, %v1983, %v1519
      %v2017 = vsel %vm1997, %v1984, %v1521
      %v2018 = vsel %vm1997, %v1985, %v1523
      %v2019 = vsel %vm1997, %v1986, %v1525
      %v2020 = vsel %vm1997, %v1987, %v1527
      %v2021 = vsel %vm1997, %v1988, %v1529
      %v2022 = vsel %vm1997, %v1989, %v1531
      %v2023 = vsel %vm1997, %v1990, %v1533
      %v2024 = vsel %vm1997, %v1991, %v1535
      %v2025 = vsel %vm1997, %v1992, %v1537
      %v2026 = vsel %vm1997, %v1993, %v1539
      %v2027 = vsel %vm1997, %v1994, %v1541
      %v2028 = vsel %vm1997, %v1995, %v1543
      %v2029 = vsel %vm1997, %v1996, %v1545
      %vm2030 = vcmask 719872
      %v2031 = vsel %vm2030, %v1998, %v1579
      %v2032 = vsel %vm2030, %v1999, %v1581
      %v2033 = vsel %vm2030, %v2000, %v1583
      %v2034 = vsel %vm2030, %v2001, %v1585
      %v2035 = vsel %vm2030, %v2002, %v1587
      %v2036 = vsel %vm2030, %v2003, %v1589
      %v2037 = vsel %vm2030, %v2004, %v1591
      %v2038 = vsel %vm2030, %v2005, %v1593
      %v2039 = vsel %vm2030, %v2006, %v1595
      %v2040 = vsel %vm2030, %v2007, %v1597
      %v2041 = vsel %vm2030, %v2008, %v1599
      %v2042 = vsel %vm2030, %v2009, %v1601
      %v2043 = vsel %vm2030, %v2010, %v1603
      %v2044 = vsel %vm2030, %v2011, %v1605
      %v2045 = vsel %vm2030, %v2012, %v1607
      %v2046 = vsel %vm2030, %v2013, %v1609
      %v2047 = vsel %vm2030, %v2014, %v1611
      %v2048 = vsel %vm2030, %v2015, %v1613
      %v2049 = vsel %vm2030, %v2016, %v1615
      %v2050 = vsel %vm2030, %v2017, %v1617
      %v2051 = vsel %vm2030, %v2018, %v1619
      %v2052 = vsel %vm2030, %v2019, %v1621
      %v2053 = vsel %vm2030, %v2020, %v1623
      %v2054 = vsel %vm2030, %v2021, %v1625
      %v2055 = vsel %vm2030, %v2022, %v1627
      %v2056 = vsel %vm2030, %v2023, %v1629
      %v2057 = vsel %vm2030, %v2024, %v1631
      %v2058 = vsel %vm2030, %v2025, %v1633
      %v2059 = vsel %vm2030, %v2026, %v1635
      %v2060 = vsel %vm2030, %v2027, %v1637
      %v2061 = vsel %vm2030, %v2028, %v1639
      %v2062 = vsel %vm2030, %v2029, %v1641
      %vm2063 = vcmask 1014784
      %v2064 = vsel %vm2063, %v2031, %v1675
      %v2065 = vsel %vm2063, %v2032, %v1677
      %v2066 = vsel %vm2063, %v2033, %v1679
      %v2067 = vsel %vm2063, %v2034, %v1681
      %v2068 = vsel %vm2063, %v2035, %v1683
      %v2069 = vsel %vm2063, %v2036, %v1685
      %v2070 = vsel %vm2063, %v2037, %v1687
      %v2071 = vsel %vm2063, %v2038, %v1689
      %v2072 = vsel %vm2063, %v2039, %v1691
      %v2073 = vsel %vm2063, %v2040, %v1693
      %v2074 = vsel %vm2063, %v2041, %v1695
      %v2075 = vsel %vm2063, %v2042, %v1697
      %v2076 = vsel %vm2063, %v2043, %v1699
      %v2077 = vsel %vm2063, %v2044, %v1701
      %v2078 = vsel %vm2063, %v2045, %v1703
      %v2079 = vsel %vm2063, %v2046, %v1705
      %v2080 = vsel %vm2063, %v2047, %v1707
      %v2081 = vsel %vm2063, %v2048, %v1709
      %v2082 = vsel %vm2063, %v2049, %v1711
      %v2083 = vsel %vm2063, %v2050, %v1713
      %v2084 = vsel %vm2063, %v2051, %v1715
      %v2085 = vsel %vm2063, %v2052, %v1717
      %v2086 = vsel %vm2063, %v2053, %v1719
      %v2087 = vsel %vm2063, %v2054, %v1721
      %v2088 = vsel %vm2063, %v2055, %v1723
      %v2089 = vsel %vm2063, %v2056, %v1725
      %v2090 = vsel %vm2063, %v2057, %v1727
      %v2091 = vsel %vm2063, %v2058, %v1729
      %v2092 = vsel %vm2063, %v2059, %v1731
      %v2093 = vsel %vm2063, %v2060, %v1733
      %v2094 = vsel %vm2063, %v2061, %v1735
      %v2095 = vsel %vm2063, %v2062, %v1737
      %vm2096 = vcmask 261120
      %v2097 = vsel %vm2096, %v1675, %v1771
      %v2098 = vsel %vm2096, %v1677, %v1773
      %v2099 = vsel %vm2096, %v1679, %v1775
      %v2100 = vsel %vm2096, %v1681, %v1777
      %v2101 = vsel %vm2096, %v1683, %v1779
      %v2102 = vsel %vm2096, %v1685, %v1781
      %v2103 = vsel %vm2096, %v1687, %v1783
      %v2104 = vsel %vm2096, %v1689, %v1785
      %v2105 = vsel %vm2096, %v1691, %v1787
      %v2106 = vsel %vm2096, %v1693, %v1789
      %v2107 = vsel %vm2096, %v1695, %v1791
      %v2108 = vsel %vm2096, %v1697, %v1793
      %v2109 = vsel %vm2096, %v1699, %v1795
      %v2110 = vsel %vm2096, %v1701, %v1797
      %v2111 = vsel %vm2096, %v1703, %v1799
      %v2112 = vsel %vm2096, %v1705, %v1801
      %v2113 = vsel %vm2096, %v1707, %v1803
      %v2114 = vsel %vm2096, %v1709, %v1805
      %v2115 = vsel %vm2096, %v1711, %v1807
      %v2116 = vsel %vm2096, %v1713, %v1809
      %v2117 = vsel %vm2096, %v1715, %v1811
      %v2118 = vsel %vm2096, %v1717, %v1813
      %v2119 = vsel %vm2096, %v1719, %v1815
      %v2120 = vsel %vm2096, %v1721, %v1817
      %v2121 = vsel %vm2096, %v1723, %v1819
      %v2122 = vsel %vm2096, %v1725, %v1821
      %v2123 = vsel %vm2096, %v1727, %v1823
      %v2124 = vsel %vm2096, %v1729, %v1825
      %v2125 = vsel %vm2096, %v1731, %v1827
      %v2126 = vsel %vm2096, %v1733, %v1829
      %v2127 = vsel %vm2096, %v1735, %v1831
      %v2128 = vsel %vm2096, %v1737, %v1833
      %v2129 = vpack.c.bf16 %v1933, %v1932
      %v2130 = vpack.c.bf16 %v2065, %v2064
      %v2131 = vpack.c.bf16 %v2098, %v2097
      %v2132 = vpack.c.bf16 %v1935, %v1934
      %v2133 = vpack.c.bf16 %v2067, %v2066
      %v2134 = vpack.c.bf16 %v2100, %v2099
      %v2135 = vpack.c.bf16 %v1937, %v1936
      %v2136 = vpack.c.bf16 %v2069, %v2068
      %v2137 = vpack.c.bf16 %v2102, %v2101
      %v2138 = vpack.c.bf16 %v1939, %v1938
      %v2139 = vpack.c.bf16 %v2071, %v2070
      %v2140 = vpack.c.bf16 %v2104, %v2103
      %v2141 = vpack.c.bf16 %v1941, %v1940
      %v2142 = vpack.c.bf16 %v2073, %v2072
      %v2143 = vpack.c.bf16 %v2106, %v2105
      %v2144 = vpack.c.bf16 %v1943, %v1942
      %v2145 = vpack.c.bf16 %v2075, %v2074
      %v2146 = vpack.c.bf16 %v2108, %v2107
      %v2147 = vpack.c.bf16 %v1945, %v1944
      %v2148 = vpack.c.bf16 %v2077, %v2076
      %v2149 = vpack.c.bf16 %v2110, %v2109
      %v2150 = vpack.c.bf16 %v1947, %v1946
      %v2151 = vpack.c.bf16 %v2079, %v2078
      %v2152 = vpack.c.bf16 %v2112, %v2111
      %v2153 = vpack.c.bf16 %v1949, %v1948
      %v2154 = vpack.c.bf16 %v2081, %v2080
      %v2155 = vpack.c.bf16 %v2114, %v2113
      %v2156 = vpack.c.bf16 %v1951, %v1950
      %v2157 = vpack.c.bf16 %v2083, %v2082
      %v2158 = vpack.c.bf16 %v2116, %v2115
      %v2159 = vpack.c.bf16 %v1953, %v1952
      %v2160 = vpack.c.bf16 %v2085, %v2084
      %v2161 = vpack.c.bf16 %v2118, %v2117
      %v2162 = vpack.c.bf16 %v1955, %v1954
      %v2163 = vpack.c.bf16 %v2087, %v2086
      %v2164 = vpack.c.bf16 %v2120, %v2119
      %v2165 = vpack.c.bf16 %v1957, %v1956
      %v2166 = vpack.c.bf16 %v2089, %v2088
      %v2167 = vpack.c.bf16 %v2122, %v2121
      %v2168 = vpack.c.bf16 %v1959, %v1958
      %v2169 = vpack.c.bf16 %v2091, %v2090
      %v2170 = vpack.c.bf16 %v2124, %v2123
      %v2171 = vpack.c.bf16 %v1961, %v1960
      %v2172 = vpack.c.bf16 %v2093, %v2092
      %v2173 = vpack.c.bf16 %v2126, %v2125
      %v2174 = vpack.c.bf16 %v1963, %v1962
      %v2175 = vpack.c.bf16 %v2095, %v2094
      %v2176 = vpack.c.bf16 %v2128, %v2127
      %v2177 = vld [vmem:[%s4] sm:$0xf]
      %v2178 = vld [vmem:[%s4 + $0x4] sm:$0xf]
      %v2179 = vld [vmem:[%s4 + $0x8] sm:$0xf]
      %v2180 = vld [vmem:[%s4 + $0xc] sm:$0xf]
      %v2181 = vld [vmem:[%s4 + $0x10] sm:$0xf]
      %v2182 = vld [vmem:[%s4 + $0x14] sm:$0xf]
      %v2183 = vld [vmem:[%s4 + $0x18] sm:$0xf]
      %v2184 = vld [vmem:[%s4 + $0x1c] sm:$0xf]
      %v2185 = vld [vmem:[%s4 + $0x20] sm:$0xf]
      %v2186 = vld [vmem:[%s4 + $0x24] sm:$0xf]
      %v2187 = vld [vmem:[%s4 + $0x28] sm:$0xf]
      %v2188 = vld [vmem:[%s4 + $0x2c] sm:$0xf]
      %v2189 = vld [vmem:[%s4 + $0x30] sm:$0xf]
      %v2190 = vld [vmem:[%s4 + $0x34] sm:$0xf]
      %v2191 = vld [vmem:[%s4 + $0x38] sm:$0xf]
      %v2192 = vld [vmem:[%s4 + $0x3c] sm:$0xf]
      %v2193 = vld [vmem:[%s4 + $0x40] sm:$0xf]
      %v2194 = vld [vmem:[%s4 + $0x44] sm:$0xf]
      %v2195 = vld [vmem:[%s4 + $0x48] sm:$0xf]
      %v2196 = vld [vmem:[%s4 + $0x4c] sm:$0xf]
      %v2197 = vld [vmem:[%s4 + $0x50] sm:$0xf]
      %v2198 = vld [vmem:[%s4 + $0x54] sm:$0xf]
      %v2199 = vld [vmem:[%s4 + $0x58] sm:$0xf]
      %v2200 = vld [vmem:[%s4 + $0x5c] sm:$0xf]
      %v2201 = vld [vmem:[%s4 + $0x60] sm:$0xf]
      %v2202 = vld [vmem:[%s4 + $0x64] sm:$0xf]
      %v2203 = vld [vmem:[%s4 + $0x68] sm:$0xf]
      %v2204 = vld [vmem:[%s4 + $0x6c] sm:$0xf]
      %v2205 = vld [vmem:[%s4 + $0x70] sm:$0xf]
      %v2206 = vld [vmem:[%s4 + $0x74] sm:$0xf]
      %v2207 = vld [vmem:[%s4 + $0x78] sm:$0xf]
      %v2208 = vld [vmem:[%s4 + $0x7c] sm:$0xf]
      %v2209 = vld [vmem:[%s4 + $0x80] sm:$0xf]
      %v2210 = vld [vmem:[%s4 + $0x84] sm:$0xf]
      %v2211 = vld [vmem:[%s4 + $0x88] sm:$0xf]
      %v2212 = vld [vmem:[%s4 + $0x8c] sm:$0xf]
      %v2213 = vld [vmem:[%s4 + $0x90] sm:$0xf]
      %v2214 = vld [vmem:[%s4 + $0x94] sm:$0xf]
      %v2215 = vld [vmem:[%s4 + $0x98] sm:$0xf]
      %v2216 = vld [vmem:[%s4 + $0x9c] sm:$0xf]
      %v2217 = vld [vmem:[%s4 + $0xa0] sm:$0x3]
      %v2218 = vld [vmem:[%s5] sm:$0x1]
      %v2220 = vlaneseq
      %v2221 = vshrl.u32 %v2220, 7
      %v2222 = vsub.s32 0, %v2221
      %v2223 = vrot.slane %v2218, %v2222
      %v2266 = vunpack.c.l.b16 %v2177
      %v2267 = vunpack.c.l.b16 %v2178
      %v2268 = vunpack.c.l.b16 %v2179
      %v2269 = vunpack.c.l.b16 %v2180
      %v2270 = vunpack.c.l.b16 %v2181
      %v2271 = vunpack.c.l.b16 %v2182
      %v2272 = vunpack.c.l.b16 %v2183
      %v2273 = vunpack.c.l.b16 %v2184
      %v2274 = vunpack.c.l.b16 %v2185
      %v2275 = vunpack.c.l.b16 %v2186
      %v2276 = vunpack.c.l.b16 %v2187
      %v2277 = vunpack.c.l.b16 %v2188
      %v2278 = vunpack.c.l.b16 %v2189
      %v2279 = vunpack.c.l.b16 %v2190
      %v2280 = vunpack.c.l.b16 %v2191
      %v2281 = vunpack.c.l.b16 %v2192
      %v2282 = vunpack.c.l.b16 %v2193
      %v2283 = vunpack.c.l.b16 %v2194
      %v2284 = vunpack.c.l.b16 %v2195
      %v2285 = vunpack.c.l.b16 %v2196
      %v2286 = vunpack.c.l.b16 %v2197
      %v2287 = vunpack.c.l.b16 %v2198
      %v2288 = vunpack.c.l.b16 %v2199
      %v2289 = vunpack.c.l.b16 %v2200
      %v2290 = vunpack.c.l.b16 %v2201
      %v2291 = vunpack.c.l.b16 %v2202
      %v2292 = vunpack.c.l.b16 %v2203
      %v2293 = vunpack.c.l.b16 %v2204
      %v2294 = vunpack.c.l.b16 %v2205
      %v2295 = vunpack.c.l.b16 %v2206
      %v2296 = vunpack.c.l.b16 %v2207
      %v2297 = vunpack.c.l.b16 %v2208
      %v2298 = vunpack.c.l.b16 %v2209
      %v2299 = vunpack.c.l.b16 %v2210
      %v2300 = vunpack.c.l.b16 %v2211
      %v2301 = vunpack.c.l.b16 %v2212
      %v2302 = vunpack.c.l.b16 %v2213
      %v2303 = vunpack.c.l.b16 %v2214
      %v2304 = vunpack.c.l.b16 %v2215
      %v2305 = vunpack.c.l.b16 %v2216
      %v2306 = vunpack.c.l.b16 %v2217
      %v2307 = vpack.c.b16 %v2267, %v2266
      %v2308 = vpack.c.b16 %v2269, %v2268
      %v2309 = vpack.c.b16 %v2271, %v2270
      %v2310 = vpack.c.b16 %v2273, %v2272
      %v2311 = vpack.c.b16 %v2275, %v2274
      %v2312 = vpack.c.b16 %v2277, %v2276
      %v2313 = vpack.c.b16 %v2279, %v2278
      %v2314 = vpack.c.b16 %v2281, %v2280
      %v2315 = vpack.c.b16 %v2283, %v2282
      %v2316 = vpack.c.b16 %v2285, %v2284
      %v2317 = vpack.c.b16 %v2287, %v2286
      %v2318 = vpack.c.b16 %v2289, %v2288
      %v2319 = vpack.c.b16 %v2291, %v2290
      %v2320 = vpack.c.b16 %v2293, %v2292
      %v2321 = vpack.c.b16 %v2295, %v2294
      %v2322 = vpack.c.b16 %v2297, %v2296
      %v2323 = vpack.c.b16 %v2299, %v2298
      %v2324 = vpack.c.b16 %v2301, %v2300
      %v2325 = vpack.c.b16 %v2303, %v2302
      %v2326 = vpack.c.b16 %v2305, %v2304
      %v2327 = vpack.c.b16 %v2306, %v2306
      %vm2348 = vcmask 556032
      %v2350 = vsel %vm2348, %v2131, 0
      %v2353 = vsel %vm2348, %v2134, 0
      %v2356 = vsel %vm2348, %v2137, 0
      %v2359 = vsel %vm2348, %v2140, 0
      %v2362 = vsel %vm2348, %v2143, 0
      %v2365 = vsel %vm2348, %v2146, 0
      %v2368 = vsel %vm2348, %v2149, 0
      %v2371 = vsel %vm2348, %v2152, 0
      %v2374 = vsel %vm2348, %v2155, 0
      %v2377 = vsel %vm2348, %v2158, 0
      %v2380 = vsel %vm2348, %v2161, 0
      %v2383 = vsel %vm2348, %v2164, 0
      %v2386 = vsel %vm2348, %v2167, 0
      %v2389 = vsel %vm2348, %v2170, 0
      %v2392 = vsel %vm2348, %v2173, 0
      %v2395 = vsel %vm2348, %v2176, 0
      %vm2397 = vcmask 1041408
      %v2399 = vsel %vm2397, %v2327, 0
      %2401 = vmatprep.subr.bf16.mxu0 0
      %2402 = vmatpush1.bf16.msra.mxu0 %v2307
      %2403 = vmatprep.subr.bf16.mxu0 0
      %2404 = vmatpush1.bf16.msra.mxu0 %v2308
      %2405 = vmatprep.subr.bf16.mxu0 0
      %2406 = vmatpush1.bf16.msra.mxu0 %v2309
      %2407 = vmatprep.subr.bf16.mxu0 0
      %2408 = vmatpush1.bf16.msra.mxu0 %v2310
      %2409 = vmatprep.subr.bf16.mxu0 0
      %2410 = vmatpush1.bf16.msra.mxu0 %v2311
      %2411 = vmatprep.subr.bf16.mxu0 0
      %2412 = vmatpush1.bf16.msra.mxu0 %v2312
      %2413 = vmatprep.subr.bf16.mxu0 0
      %2414 = vmatpush1.bf16.msra.mxu0 %v2313
      %2415 = vmatprep.subr.bf16.mxu0 0
      %2416 = vmatpush1.bf16.msra.mxu0 %v2314
      %2417 = vmatprep.subr.bf16.mxu0 0
      %2418 = vmatpush1.bf16.msra.mxu0 %v2315
      %2419 = vmatprep.subr.bf16.mxu0 0
      %2420 = vmatpush1.bf16.msra.mxu0 %v2316
      %2421 = vmatprep.subr.bf16.mxu0 0
      %2422 = vmatpush1.bf16.msra.mxu0 %v2317
      %2423 = vmatprep.subr.bf16.mxu0 0
      %2424 = vmatpush1.bf16.msra.mxu0 %v2318
      %2425 = vmatprep.subr.bf16.mxu0 0
      %2426 = vmatpush1.bf16.msra.mxu0 %v2319
      %2427 = vmatprep.subr.bf16.mxu0 0
      %2428 = vmatpush1.bf16.msra.mxu0 %v2320
      %2429 = vmatprep.subr.bf16.mxu0 0
      %2430 = vmatpush1.bf16.msra.mxu0 %v2321
      %2431 = vmatprep.subr.bf16.mxu0 0
      %2432 = vmatpush1.bf16.msra.mxu0 %v2322
      %2433 = vmatprep.mubr.bf16.mxu0 %v2130
      %2434 = vmatmul.mubr.bf16.gmra.mrb[0].mxu0 %v2129
      %v2435 = vpop.f32.mrb[0].mxu0
      %v2436 = vadd.f32 %v2223, %v2435
      %v2437 = vpop.f32.mrb[0].mxu0
      %v2438 = vpop.f32.mrb[0].mxu0
      %v2439 = vadd.f32 %v2223, %v2438
      %v2440 = vpop.f32.mrb[0].mxu0
      %2441 = vmatprep.mubr.bf16.mxu0 %v2133
      %2442 = vmatmul.mubr.bf16.gmra.mrb[0].mxu0 %v2132
      %v2443 = vpop.f32.mrb[0].mxu0
      %v2444 = vadd.f32 %v2223, %v2443
      %v2445 = vpop.f32.mrb[0].mxu0
      %v2446 = vpop.f32.mrb[0].mxu0
      %v2447 = vadd.f32 %v2223, %v2446
      %v2448 = vpop.f32.mrb[0].mxu0
      %2449 = vmatprep.mubr.bf16.mxu0 %v2136
      %2450 = vmatmul.mubr.bf16.gmra.mrb[0].mxu0 %v2135
      %v2451 = vpop.f32.mrb[0].mxu0
      %v2452 = vadd.f32 %v2223, %v2451
      %v2453 = vpop.f32.mrb[0].mxu0
      %v2454 = vpop.f32.mrb[0].mxu0
      %v2455 = vadd.f32 %v2223, %v2454
      %v2456 = vpop.f32.mrb[0].mxu0
      %2457 = vmatprep.mubr.bf16.mxu0 %v2139
      %2458 = vmatmul.mubr.bf16.gmra.mrb[0].mxu0 %v2138
      %v2459 = vpop.f32.mrb[0].mxu0
      %v2460 = vadd.f32 %v2223, %v2459
      %v2461 = vpop.f32.mrb[0].mxu0
      %v2462 = vpop.f32.mrb[0].mxu0
      %v2463 = vadd.f32 %v2223, %v2462
      %v2464 = vpop.f32.mrb[0].mxu0
      %2465 = vmatprep.mubr.bf16.mxu0 %v2142
      %2466 = vmatmul.mubr.bf16.gmra.mrb[0].mxu0 %v2141
      %v2467 = vpop.f32.mrb[0].mxu0
      %v2468 = vadd.f32 %v2223, %v2467
      %v2469 = vpop.f32.mrb[0].mxu0
      %v2470 = vpop.f32.mrb[0].mxu0
      %v2471 = vadd.f32 %v2223, %v2470
      %v2472 = vpop.f32.mrb[0].mxu0
      %2473 = vmatprep.mubr.bf16.mxu0 %v2145
      %2474 = vmatmul.mubr.bf16.gmra.mrb[0].mxu0 %v2144
      %v2475 = vpop.f32.mrb[0].mxu0
      %v2476 = vadd.f32 %v2223, %v2475
      %v2477 = vpop.f32.mrb[0].mxu0
      %v2478 = vpop.f32.mrb[0].mxu0
      %v2479 = vadd.f32 %v2223, %v2478
      %v2480 = vpop.f32.mrb[0].mxu0
      %2481 = vmatprep.mubr.bf16.mxu0 %v2148
      %2482 = vmatmul.mubr.bf16.gmra.mrb[0].mxu0 %v2147
      %v2483 = vpop.f32.mrb[0].mxu0
      %v2484 = vadd.f32 %v2223, %v2483
      %v2485 = vpop.f32.mrb[0].mxu0
      %v2486 = vpop.f32.mrb[0].mxu0
      %v2487 = vadd.f32 %v2223, %v2486
      %v2488 = vpop.f32.mrb[0].mxu0
      %2489 = vmatprep.mubr.bf16.mxu0 %v2151
      %2490 = vmatmul.mubr.bf16.gmra.mrb[0].mxu0 %v2150
      %v2491 = vpop.f32.mrb[0].mxu0
      %v2492 = vadd.f32 %v2223, %v2491
      %v2493 = vpop.f32.mrb[0].mxu0
      %v2494 = vpop.f32.mrb[0].mxu0
      %v2495 = vadd.f32 %v2223, %v2494
      %v2496 = vpop.f32.mrb[0].mxu0
      %2497 = vmatprep.mubr.bf16.mxu0 %v2154
      %2498 = vmatmul.mubr.bf16.gmra.mrb[0].mxu0 %v2153
      %v2499 = vpop.f32.mrb[0].mxu0
      %v2500 = vadd.f32 %v2223, %v2499
      %v2501 = vpop.f32.mrb[0].mxu0
      %v2502 = vpop.f32.mrb[0].mxu0
      %v2503 = vadd.f32 %v2223, %v2502
      %v2504 = vpop.f32.mrb[0].mxu0
      %2505 = vmatprep.mubr.bf16.mxu0 %v2157
      %2506 = vmatmul.mubr.bf16.gmra.mrb[0].mxu0 %v2156
      %v2507 = vpop.f32.mrb[0].mxu0
      %v2508 = vadd.f32 %v2223, %v2507
      %v2509 = vpop.f32.mrb[0].mxu0
      %v2510 = vpop.f32.mrb[0].mxu0
      %v2511 = vadd.f32 %v2223, %v2510
      %v2512 = vpop.f32.mrb[0].mxu0
      %2513 = vmatprep.mubr.bf16.mxu0 %v2160
      %2514 = vmatmul.mubr.bf16.gmra.mrb[0].mxu0 %v2159
      %v2515 = vpop.f32.mrb[0].mxu0
      %v2516 = vadd.f32 %v2223, %v2515
      %v2517 = vpop.f32.mrb[0].mxu0
      %v2518 = vpop.f32.mrb[0].mxu0
      %v2519 = vadd.f32 %v2223, %v2518
      %v2520 = vpop.f32.mrb[0].mxu0
      %2521 = vmatprep.mubr.bf16.mxu0 %v2163
      %2522 = vmatmul.mubr.bf16.gmra.mrb[0].mxu0 %v2162
      %v2523 = vpop.f32.mrb[0].mxu0
      %v2524 = vadd.f32 %v2223, %v2523
      %v2525 = vpop.f32.mrb[0].mxu0
      %v2526 = vpop.f32.mrb[0].mxu0
      %v2527 = vadd.f32 %v2223, %v2526
      %v2528 = vpop.f32.mrb[0].mxu0
      %2529 = vmatprep.mubr.bf16.mxu0 %v2166
      %2530 = vmatmul.mubr.bf16.gmra.mrb[0].mxu0 %v2165
      %v2531 = vpop.f32.mrb[0].mxu0
      %v2532 = vadd.f32 %v2223, %v2531
      %v2533 = vpop.f32.mrb[0].mxu0
      %v2534 = vpop.f32.mrb[0].mxu0
      %v2535 = vadd.f32 %v2223, %v2534
      %v2536 = vpop.f32.mrb[0].mxu0
      %2537 = vmatprep.mubr.bf16.mxu0 %v2169
      %2538 = vmatmul.mubr.bf16.gmra.mrb[0].mxu0 %v2168
      %v2539 = vpop.f32.mrb[0].mxu0
      %v2540 = vadd.f32 %v2223, %v2539
      %v2541 = vpop.f32.mrb[0].mxu0
      %v2542 = vpop.f32.mrb[0].mxu0
      %v2543 = vadd.f32 %v2223, %v2542
      %v2544 = vpop.f32.mrb[0].mxu0
      %2545 = vmatprep.mubr.bf16.mxu0 %v2172
      %2546 = vmatmul.mubr.bf16.gmra.mrb[0].mxu0 %v2171
      %v2547 = vpop.f32.mrb[0].mxu0
      %v2548 = vadd.f32 %v2223, %v2547
      %v2549 = vpop.f32.mrb[0].mxu0
      %v2550 = vpop.f32.mrb[0].mxu0
      %v2551 = vadd.f32 %v2223, %v2550
      %v2552 = vpop.f32.mrb[0].mxu0
      %2553 = vmatprep.mubr.bf16.mxu0 %v2175
      %2554 = vmatmul.mubr.bf16.gmra.mrb[0].mxu0 %v2174
      %v2555 = vpop.f32.mrb[0].mxu0
      %v2556 = vadd.f32 %v2223, %v2555
      %v2557 = vpop.f32.mrb[0].mxu0
      %v2558 = vpop.f32.mrb[0].mxu0
      %v2559 = vadd.f32 %v2223, %v2558
      %v2560 = vpop.f32.mrb[0].mxu0
      %2561 = vdwg.mxu0
      %2562 = vmatprep.subr.bf16.mxu0 0
      %2563 = vmatpush1.bf16.msra.mxu0 %v2323
      %2564 = vmatprep.subr.bf16.mxu0 0
      %2565 = vmatpush1.bf16.msra.mxu0 %v2324
      %2566 = vmatprep.subr.bf16.mxu0 0
      %2567 = vmatpush1.bf16.msra.mxu0 %v2325
      %2568 = vmatprep.subr.bf16.mxu0 0
      %2569 = vmatpush1.bf16.msra.mxu0 %v2326
      %2570 = vmatprep.subr.bf16.mxu0 0
      %2571 = vmatpush1.bf16.msra.mxu0 %v2399
      %2572 = vmatprep.subr.bf16.mxu0 0
      %2573 = vmatpush1.bf16.msra.mxu0 0
      %2574 = vmatprep.subr.bf16.mxu0 0
      %2575 = vmatpush1.bf16.msra.mxu0 0
      %2576 = vmatprep.subr.bf16.mxu0 0
      %2577 = vmatpush1.bf16.msra.mxu0 0
      %2578 = vmatprep.subr.bf16.mxu0 0
      %2579 = vmatpush1.bf16.msra.mxu0 0
      %2580 = vmatprep.subr.bf16.mxu0 0
      %2581 = vmatpush1.bf16.msra.mxu0 0
      %2582 = vmatprep.subr.bf16.mxu0 0
      %2583 = vmatpush1.bf16.msra.mxu0 0
      %2584 = vmatprep.subr.bf16.mxu0 0
      %2585 = vmatpush1.bf16.msra.mxu0 0
      %2586 = vmatprep.subr.bf16.mxu0 0
      %2587 = vmatpush1.bf16.msra.mxu0 0
      %2588 = vmatprep.subr.bf16.mxu0 0
      %2589 = vmatpush1.bf16.msra.mxu0 0
      %2590 = vmatprep.subr.bf16.mxu0 0
      %2591 = vmatpush1.bf16.msra.mxu0 0
      %2592 = vmatprep.subr.bf16.mxu0 0
      %2593 = vmatpush1.bf16.msra.mxu0 0
      %2594 = vmatprep.mubr.bf16.mxu0 0
      %2595 = vmatmul.mubr.bf16.gmra.mrb[0].mxu0 %v2350
      %v2596 = vpop.f32.mrb[0].mxu0
      %v2597 = vadd.f32 %v2436, %v2596
      %v2598 = vpop.f32.mrb[0].mxu0
      %v2599 = vpop.f32.mrb[0].mxu0
      %v2600 = vadd.f32 %v2439, %v2599
      %v2601 = vpop.f32.mrb[0].mxu0
      %2602 = vmatprep.mubr.bf16.mxu0 0
      %2603 = vmatmul.mubr.bf16.gmra.mrb[0].mxu0 %v2353
      %v2604 = vpop.f32.mrb[0].mxu0
      %v2605 = vadd.f32 %v2444, %v2604
      %v2606 = vpop.f32.mrb[0].mxu0
      %v2607 = vpop.f32.mrb[0].mxu0
      %v2608 = vadd.f32 %v2447, %v2607
      %v2609 = vpop.f32.mrb[0].mxu0
      %2610 = vmatprep.mubr.bf16.mxu0 0
      %2611 = vmatmul.mubr.bf16.gmra.mrb[0].mxu0 %v2356
      %v2612 = vpop.f32.mrb[0].mxu0
      %v2613 = vadd.f32 %v2452, %v2612
      %v2614 = vpop.f32.mrb[0].mxu0
      %v2615 = vpop.f32.mrb[0].mxu0
      %v2616 = vadd.f32 %v2455, %v2615
      %v2617 = vpop.f32.mrb[0].mxu0
      %2618 = vmatprep.mubr.bf16.mxu0 0
      %2619 = vmatmul.mubr.bf16.gmra.mrb[0].mxu0 %v2359
      %v2620 = vpop.f32.mrb[0].mxu0
      %v2621 = vadd.f32 %v2460, %v2620
      %v2622 = vpop.f32.mrb[0].mxu0
      %v2623 = vpop.f32.mrb[0].mxu0
      %v2624 = vadd.f32 %v2463, %v2623
      %v2625 = vpop.f32.mrb[0].mxu0
      %2626 = vmatprep.mubr.bf16.mxu0 0
      %2627 = vmatmul.mubr.bf16.gmra.mrb[0].mxu0 %v2362
      %v2628 = vpop.f32.mrb[0].mxu0
      %v2629 = vadd.f32 %v2468, %v2628
      %v2630 = vpop.f32.mrb[0].mxu0
      %v2631 = vpop.f32.mrb[0].mxu0
      %v2632 = vadd.f32 %v2471, %v2631
      %v2633 = vpop.f32.mrb[0].mxu0
      %2634 = vmatprep.mubr.bf16.mxu0 0
      %2635 = vmatmul.mubr.bf16.gmra.mrb[0].mxu0 %v2365
      %v2636 = vpop.f32.mrb[0].mxu0
      %v2637 = vadd.f32 %v2476, %v2636
      %v2638 = vpop.f32.mrb[0].mxu0
      %v2639 = vpop.f32.mrb[0].mxu0
      %v2640 = vadd.f32 %v2479, %v2639
      %v2641 = vpop.f32.mrb[0].mxu0
      %2642 = vmatprep.mubr.bf16.mxu0 0
      %2643 = vmatmul.mubr.bf16.gmra.mrb[0].mxu0 %v2368
      %v2644 = vpop.f32.mrb[0].mxu0
      %v2645 = vadd.f32 %v2484, %v2644
      %v2646 = vpop.f32.mrb[0].mxu0
      %v2647 = vpop.f32.mrb[0].mxu0
      %v2648 = vadd.f32 %v2487, %v2647
      %v2649 = vpop.f32.mrb[0].mxu0
      %2650 = vmatprep.mubr.bf16.mxu0 0
      %2651 = vmatmul.mubr.bf16.gmra.mrb[0].mxu0 %v2371
      %v2652 = vpop.f32.mrb[0].mxu0
      %v2653 = vadd.f32 %v2492, %v2652
      %v2654 = vpop.f32.mrb[0].mxu0
      %v2655 = vpop.f32.mrb[0].mxu0
      %v2656 = vadd.f32 %v2495, %v2655
      %v2657 = vpop.f32.mrb[0].mxu0
      %2658 = vmatprep.mubr.bf16.mxu0 0
      %2659 = vmatmul.mubr.bf16.gmra.mrb[0].mxu0 %v2374
      %v2660 = vpop.f32.mrb[0].mxu0
      %v2661 = vadd.f32 %v2500, %v2660
      %v2662 = vpop.f32.mrb[0].mxu0
      %v2663 = vpop.f32.mrb[0].mxu0
      %v2664 = vadd.f32 %v2503, %v2663
      %v2665 = vpop.f32.mrb[0].mxu0
      %2666 = vmatprep.mubr.bf16.mxu0 0
      %2667 = vmatmul.mubr.bf16.gmra.mrb[0].mxu0 %v2377
      %v2668 = vpop.f32.mrb[0].mxu0
      %v2669 = vadd.f32 %v2508, %v2668
      %v2670 = vpop.f32.mrb[0].mxu0
      %v2671 = vpop.f32.mrb[0].mxu0
      %v2672 = vadd.f32 %v2511, %v2671
      %v2673 = vpop.f32.mrb[0].mxu0
      %2674 = vmatprep.mubr.bf16.mxu0 0
      %2675 = vmatmul.mubr.bf16.gmra.mrb[0].mxu0 %v2380
      %v2676 = vpop.f32.mrb[0].mxu0
      %v2677 = vadd.f32 %v2516, %v2676
      %v2678 = vpop.f32.mrb[0].mxu0
      %v2679 = vpop.f32.mrb[0].mxu0
      %v2680 = vadd.f32 %v2519, %v2679
      %v2681 = vpop.f32.mrb[0].mxu0
      %2682 = vmatprep.mubr.bf16.mxu0 0
      %2683 = vmatmul.mubr.bf16.gmra.mrb[0].mxu0 %v2383
      %v2684 = vpop.f32.mrb[0].mxu0
      %v2685 = vadd.f32 %v2524, %v2684
      %v2686 = vpop.f32.mrb[0].mxu0
      %v2687 = vpop.f32.mrb[0].mxu0
      %v2688 = vadd.f32 %v2527, %v2687
      %v2689 = vpop.f32.mrb[0].mxu0
      %2690 = vmatprep.mubr.bf16.mxu0 0
      %2691 = vmatmul.mubr.bf16.gmra.mrb[0].mxu0 %v2386
      %v2692 = vpop.f32.mrb[0].mxu0
      %v2693 = vadd.f32 %v2532, %v2692
      %v2694 = vpop.f32.mrb[0].mxu0
      %v2695 = vpop.f32.mrb[0].mxu0
      %v2696 = vadd.f32 %v2535, %v2695
      %v2697 = vpop.f32.mrb[0].mxu0
      %2698 = vmatprep.mubr.bf16.mxu0 0
      %2699 = vmatmul.mubr.bf16.gmra.mrb[0].mxu0 %v2389
      %v2700 = vpop.f32.mrb[0].mxu0
      %v2701 = vadd.f32 %v2540, %v2700
      %v2702 = vpop.f32.mrb[0].mxu0
      %v2703 = vpop.f32.mrb[0].mxu0
      %v2704 = vadd.f32 %v2543, %v2703
      %v2705 = vpop.f32.mrb[0].mxu0
      %2706 = vmatprep.mubr.bf16.mxu0 0
      %2707 = vmatmul.mubr.bf16.gmra.mrb[0].mxu0 %v2392
      %v2708 = vpop.f32.mrb[0].mxu0
      %v2709 = vadd.f32 %v2548, %v2708
      %v2710 = vpop.f32.mrb[0].mxu0
      %v2711 = vpop.f32.mrb[0].mxu0
      %v2712 = vadd.f32 %v2551, %v2711
      %v2713 = vpop.f32.mrb[0].mxu0
      %2714 = vmatprep.mubr.bf16.mxu0 0
      %2715 = vmatmul.mubr.bf16.gmra.mrb[0].mxu0 %v2395
      %v2716 = vpop.f32.mrb[0].mxu0
      %v2717 = vadd.f32 %v2556, %v2716
      %v2718 = vpop.f32.mrb[0].mxu0
      %v2719 = vpop.f32.mrb[0].mxu0
      %v2720 = vadd.f32 %v2559, %v2719
      %v2721 = vpop.f32.mrb[0].mxu0
      %2722 = vdwg.mxu0
      %v2723 = vxor.u32 %v2597, 2147483648
      %v2724 = vxor.u32 %v2600, 2147483648
      %v2725 = vxor.u32 %v2605, 2147483648
      %v2726 = vxor.u32 %v2608, 2147483648
      %v2727 = vxor.u32 %v2613, 2147483648
      %v2728 = vxor.u32 %v2616, 2147483648
      %v2729 = vxor.u32 %v2621, 2147483648
      %v2730 = vxor.u32 %v2624, 2147483648
      %v2731 = vxor.u32 %v2629, 2147483648
      %v2732 = vxor.u32 %v2632, 2147483648
      %v2733 = vxor.u32 %v2637, 2147483648
      %v2734 = vxor.u32 %v2640, 2147483648
      %v2735 = vxor.u32 %v2645, 2147483648
      %v2736 = vxor.u32 %v2648, 2147483648
      %v2737 = vxor.u32 %v2653, 2147483648
      %v2738 = vxor.u32 %v2656, 2147483648
      %v2739 = vxor.u32 %v2661, 2147483648
      %v2740 = vxor.u32 %v2664, 2147483648
      %v2741 = vxor.u32 %v2669, 2147483648
      %v2742 = vxor.u32 %v2672, 2147483648
      %v2743 = vxor.u32 %v2677, 2147483648
      %v2744 = vxor.u32 %v2680, 2147483648
      %v2745 = vxor.u32 %v2685, 2147483648
      %v2746 = vxor.u32 %v2688, 2147483648
      %v2747 = vxor.u32 %v2693, 2147483648
      %v2748 = vxor.u32 %v2696, 2147483648
      %v2749 = vxor.u32 %v2701, 2147483648
      %v2750 = vxor.u32 %v2704, 2147483648
      %v2751 = vxor.u32 %v2709, 2147483648
      %v2752 = vxor.u32 %v2712, 2147483648
      %v2753 = vxor.u32 %v2717, 2147483648
      %v2754 = vxor.u32 %v2720, 2147483648
      %v2755 = vmul.f32 %v2723, 1.442695
      %v2756 = vpow.pop %v2755
      %v2757 = vmul.f32 %v2724, 1.442695
      %v2758 = vpow.pop %v2757
      %v2759 = vmul.f32 %v2725, 1.442695
      %v2760 = vpow.pop %v2759
      %v2761 = vmul.f32 %v2726, 1.442695
      %v2762 = vpow.pop %v2761
      %v2763 = vmul.f32 %v2727, 1.442695
      %v2764 = vpow.pop %v2763
      %v2765 = vmul.f32 %v2728, 1.442695
      %v2766 = vpow.pop %v2765
      %v2767 = vmul.f32 %v2729, 1.442695
      %v2768 = vpow.pop %v2767
      %v2769 = vmul.f32 %v2730, 1.442695
      %v2770 = vpow.pop %v2769
      %v2771 = vmul.f32 %v2731, 1.442695
      %v2772 = vpow.pop %v2771
      %v2773 = vmul.f32 %v2732, 1.442695
      %v2774 = vpow.pop %v2773
      %v2775 = vmul.f32 %v2733, 1.442695
      %v2776 = vpow.pop %v2775
      %v2777 = vmul.f32 %v2734, 1.442695
      %v2778 = vpow.pop %v2777
      %v2779 = vmul.f32 %v2735, 1.442695
      %v2780 = vpow.pop %v2779
      %v2781 = vmul.f32 %v2736, 1.442695
      %v2782 = vpow.pop %v2781
      %v2783 = vmul.f32 %v2737, 1.442695
      %v2784 = vpow.pop %v2783
      %v2785 = vmul.f32 %v2738, 1.442695
      %v2786 = vpow.pop %v2785
      %v2787 = vmul.f32 %v2739, 1.442695
      %v2788 = vpow.pop %v2787
      %v2789 = vmul.f32 %v2740, 1.442695
      %v2790 = vpow.pop %v2789
      %v2791 = vmul.f32 %v2741, 1.442695
      %v2792 = vpow.pop %v2791
      %v2793 = vmul.f32 %v2742, 1.442695
      %v2794 = vpow.pop %v2793
      %v2795 = vmul.f32 %v2743, 1.442695
      %v2796 = vpow.pop %v2795
      %v2797 = vmul.f32 %v2744, 1.442695
      %v2798 = vpow.pop %v2797
      %v2799 = vmul.f32 %v2745, 1.442695
      %v2800 = vpow.pop %v2799
      %v2801 = vmul.f32 %v2746, 1.442695
      %v2802 = vpow.pop %v2801
      %v2803 = vmul.f32 %v2747, 1.442695
      %v2804 = vpow.pop %v2803
      %v2805 = vmul.f32 %v2748, 1.442695
      %v2806 = vpow.pop %v2805
      %v2807 = vmul.f32 %v2749, 1.442695
      %v2808 = vpow.pop %v2807
      %v2809 = vmul.f32 %v2750, 1.442695
      %v2810 = vpow.pop %v2809
      %v2811 = vmul.f32 %v2751, 1.442695
      %v2812 = vpow.pop %v2811
      %v2813 = vmul.f32 %v2752, 1.442695
      %v2814 = vpow.pop %v2813
      %v2815 = vmul.f32 %v2753, 1.442695
      %v2816 = vpow.pop %v2815
      %v2817 = vmul.f32 %v2754, 1.442695
      %v2818 = vpow.pop %v2817
      %v2819 = vadd.f32 %v2756, 1.0
      %v2820 = vadd.f32 %v2758, 1.0
      %v2821 = vadd.f32 %v2760, 1.0
      %v2822 = vadd.f32 %v2762, 1.0
      %v2823 = vadd.f32 %v2764, 1.0
      %v2824 = vadd.f32 %v2766, 1.0
      %v2825 = vadd.f32 %v2768, 1.0
      %v2826 = vadd.f32 %v2770, 1.0
      %v2827 = vadd.f32 %v2772, 1.0
      %v2828 = vadd.f32 %v2774, 1.0
      %v2829 = vadd.f32 %v2776, 1.0
      %v2830 = vadd.f32 %v2778, 1.0
      %v2831 = vadd.f32 %v2780, 1.0
      %v2832 = vadd.f32 %v2782, 1.0
      %v2833 = vadd.f32 %v2784, 1.0
      %v2834 = vadd.f32 %v2786, 1.0
      %v2835 = vadd.f32 %v2788, 1.0
      %v2836 = vadd.f32 %v2790, 1.0
      %v2837 = vadd.f32 %v2792, 1.0
      %v2838 = vadd.f32 %v2794, 1.0
      %v2839 = vadd.f32 %v2796, 1.0
      %v2840 = vadd.f32 %v2798, 1.0
      %v2841 = vadd.f32 %v2800, 1.0
      %v2842 = vadd.f32 %v2802, 1.0
      %v2843 = vadd.f32 %v2804, 1.0
      %v2844 = vadd.f32 %v2806, 1.0
      %v2845 = vadd.f32 %v2808, 1.0
      %v2846 = vadd.f32 %v2810, 1.0
      %v2847 = vadd.f32 %v2812, 1.0
      %v2848 = vadd.f32 %v2814, 1.0
      %v2849 = vadd.f32 %v2816, 1.0
      %v2850 = vadd.f32 %v2818, 1.0
      %v2851 = vrcp.pop %v2819
      %v2852 = vmul.f32 1.0, %v2851
      %v2853 = vrcp.pop %v2820
      %v2854 = vmul.f32 1.0, %v2853
      %v2855 = vrcp.pop %v2821
      %v2856 = vmul.f32 1.0, %v2855
      %v2857 = vrcp.pop %v2822
      %v2858 = vmul.f32 1.0, %v2857
      %v2859 = vrcp.pop %v2823
      %v2860 = vmul.f32 1.0, %v2859
      %v2861 = vrcp.pop %v2824
      %v2862 = vmul.f32 1.0, %v2861
      %v2863 = vrcp.pop %v2825
      %v2864 = vmul.f32 1.0, %v2863
      %v2865 = vrcp.pop %v2826
      %v2866 = vmul.f32 1.0, %v2865
      %v2867 = vrcp.pop %v2827
      %v2868 = vmul.f32 1.0, %v2867
      %v2869 = vrcp.pop %v2828
      %v2870 = vmul.f32 1.0, %v2869
      %v2871 = vrcp.pop %v2829
      %v2872 = vmul.f32 1.0, %v2871
      %v2873 = vrcp.pop %v2830
      %v2874 = vmul.f32 1.0, %v2873
      %v2875 = vrcp.pop %v2831
      %v2876 = vmul.f32 1.0, %v2875
      %v2877 = vrcp.pop %v2832
      %v2878 = vmul.f32 1.0, %v2877
      %v2879 = vrcp.pop %v2833
      %v2880 = vmul.f32 1.0, %v2879
      %v2881 = vrcp.pop %v2834
      %v2882 = vmul.f32 1.0, %v2881
      %v2883 = vrcp.pop %v2835
      %v2884 = vmul.f32 1.0, %v2883
      %v2885 = vrcp.pop %v2836
      %v2886 = vmul.f32 1.0, %v2885
      %v2887 = vrcp.pop %v2837
      %v2888 = vmul.f32 1.0, %v2887
      %v2889 = vrcp.pop %v2838
      %v2890 = vmul.f32 1.0, %v2889
      %v2891 = vrcp.pop %v2839
      %v2892 = vmul.f32 1.0, %v2891
      %v2893 = vrcp.pop %v2840
      %v2894 = vmul.f32 1.0, %v2893
      %v2895 = vrcp.pop %v2841
      %v2896 = vmul.f32 1.0, %v2895
      %v2897 = vrcp.pop %v2842
      %v2898 = vmul.f32 1.0, %v2897
      %v2899 = vrcp.pop %v2843
      %v2900 = vmul.f32 1.0, %v2899
      %v2901 = vrcp.pop %v2844
      %v2902 = vmul.f32 1.0, %v2901
      %v2903 = vrcp.pop %v2845
      %v2904 = vmul.f32 1.0, %v2903
      %v2905 = vrcp.pop %v2846
      %v2906 = vmul.f32 1.0, %v2905
      %v2907 = vrcp.pop %v2847
      %v2908 = vmul.f32 1.0, %v2907
      %v2909 = vrcp.pop %v2848
      %v2910 = vmul.f32 1.0, %v2909
      %v2911 = vrcp.pop %v2849
      %v2912 = vmul.f32 1.0, %v2911
      %v2913 = vrcp.pop %v2850
      %v2914 = vmul.f32 1.0, %v2913
      %v2915 = vtanh.pop %v2597
      %v2916 = vtanh.pop %v2600
      %v2917 = vtanh.pop %v2605
      %v2918 = vtanh.pop %v2608
      %v2919 = vtanh.pop %v2613
      %v2920 = vtanh.pop %v2616
      %v2921 = vtanh.pop %v2621
      %v2922 = vtanh.pop %v2624
      %v2923 = vtanh.pop %v2629
      %v2924 = vtanh.pop %v2632
      %v2925 = vtanh.pop %v2637
      %v2926 = vtanh.pop %v2640
      %v2927 = vtanh.pop %v2645
      %v2928 = vtanh.pop %v2648
      %v2929 = vtanh.pop %v2653
      %v2930 = vtanh.pop %v2656
      %v2931 = vtanh.pop %v2661
      %v2932 = vtanh.pop %v2664
      %v2933 = vtanh.pop %v2669
      %v2934 = vtanh.pop %v2672
      %v2935 = vtanh.pop %v2677
      %v2936 = vtanh.pop %v2680
      %v2937 = vtanh.pop %v2685
      %v2938 = vtanh.pop %v2688
      %v2939 = vtanh.pop %v2693
      %v2940 = vtanh.pop %v2696
      %v2941 = vtanh.pop %v2701
      %v2942 = vtanh.pop %v2704
      %v2943 = vtanh.pop %v2709
      %v2944 = vtanh.pop %v2712
      %v2945 = vtanh.pop %v2717
      %v2946 = vtanh.pop %v2720
      %v2947 = vld [vmem:[%s586] sm:$0xff]
      %v2948 = vld [vmem:[%s586 + $0x8] sm:$0xff]
      %v2949 = vld [vmem:[%s586 + $0x10] sm:$0xff]
      %v2950 = vld [vmem:[%s586 + $0x18] sm:$0xff]
      %v2951 = vld [vmem:[%s586 + $0x20] sm:$0xff]
      %v2952 = vld [vmem:[%s586 + $0x28] sm:$0xff]
      %v2953 = vld [vmem:[%s586 + $0x30] sm:$0xff]
      %v2954 = vld [vmem:[%s586 + $0x38] sm:$0xff]
      %2955 = vxpose.xlu0.b32.start [1/16] %v2947, 128
      %2956 = vxpose.xlu0.b32.cont [2/16] %v2949, 128
      %2957 = vxpose.xlu0.b32.cont [3/16] %v2951, 128
      %2958 = vxpose.xlu0.b32.cont [4/16] %v2953, 128
      %2959 = vxpose.xlu0.b32.cont [5/16] 0.0, 128
      %2960 = vxpose.xlu0.b32.cont [6/16] 0.0, 128
      %2961 = vxpose.xlu0.b32.cont [7/16] 0.0, 128
      %2962 = vxpose.xlu0.b32.cont [8/16] 0.0, 128
      %2963 = vxpose.xlu0.b32.cont [9/16] 0.0, 128
      %2964 = vxpose.xlu0.b32.cont [10/16] 0.0, 128
      %2965 = vxpose.xlu0.b32.cont [11/16] 0.0, 128
      %2966 = vxpose.xlu0.b32.cont [12/16] 0.0, 128
      %2967 = vxpose.xlu0.b32.cont [13/16] 0.0, 128
      %2968 = vxpose.xlu0.b32.cont [14/16] 0.0, 128
      %2969 = vxpose.xlu0.b32.cont [15/16] 0.0, 128
      %2970 = vxpose.xlu0.b32.end [16/16] 0.0, 128
      %v2971 = vpop.trf.xlu0
      %v2972 = vpop.trf.xlu0
      %v2973 = vpop.trf.xlu0
      %v2974 = vpop.trf.xlu0
      %v2975 = vpop.trf.xlu0
      %v2976 = vpop.trf.xlu0
      %v2977 = vpop.trf.xlu0
      %v2978 = vpop.trf.xlu0
      %v2979 = vpop.trf.xlu0
      %v2980 = vpop.trf.xlu0
      %v2981 = vpop.trf.xlu0
      %v2982 = vpop.trf.xlu0
      %v2983 = vpop.trf.xlu0
      %v2984 = vpop.trf.xlu0
      %v2985 = vpop.trf.xlu0
      %v2986 = vpop.trf.xlu0
      %2987 = vxpose.xlu0.b32.start [1/16] %v2948, 128
      %2988 = vxpose.xlu0.b32.cont [2/16] %v2950, 128
      %2989 = vxpose.xlu0.b32.cont [3/16] %v2952, 128
      %2990 = vxpose.xlu0.b32.cont [4/16] %v2954, 128
      %2991 = vxpose.xlu0.b32.cont [5/16] 0.0, 128
      %2992 = vxpose.xlu0.b32.cont [6/16] 0.0, 128
      %2993 = vxpose.xlu0.b32.cont [7/16] 0.0, 128
      %2994 = vxpose.xlu0.b32.cont [8/16] 0.0, 128
      %2995 = vxpose.xlu0.b32.cont [9/16] 0.0, 128
      %2996 = vxpose.xlu0.b32.cont [10/16] 0.0, 128
      %2997 = vxpose.xlu0.b32.cont [11/16] 0.0, 128
      %2998 = vxpose.xlu0.b32.cont [12/16] 0.0, 128
      %2999 = vxpose.xlu0.b32.cont [13/16] 0.0, 128
      %3000 = vxpose.xlu0.b32.cont [14/16] 0.0, 128
      %3001 = vxpose.xlu0.b32.cont [15/16] 0.0, 128
      %3002 = vxpose.xlu0.b32.end [16/16] 0.0, 128
      %v3003 = vpop.trf.xlu0
      %v3004 = vpop.trf.xlu0
      %v3005 = vpop.trf.xlu0
      %v3006 = vpop.trf.xlu0
      %v3007 = vpop.trf.xlu0
      %v3008 = vpop.trf.xlu0
      %v3009 = vpop.trf.xlu0
      %v3010 = vpop.trf.xlu0
      %v3011 = vpop.trf.xlu0
      %v3012 = vpop.trf.xlu0
      %v3013 = vpop.trf.xlu0
      %v3014 = vpop.trf.xlu0
      %v3015 = vpop.trf.xlu0
      %v3016 = vpop.trf.xlu0
      %v3017 = vpop.trf.xlu0
      %v3018 = vpop.trf.xlu0
      %3051 = vrot.lane.b32.xlu0 %v2971, 32
      %v3052 = vpop.permute.xlu0 %3051
      %3053 = vrot.lane.b32.xlu0 %v2972, 32
      %v3054 = vpop.permute.xlu0 %3053
      %3055 = vrot.lane.b32.xlu0 %v2973, 32
      %v3056 = vpop.permute.xlu0 %3055
      %3057 = vrot.lane.b32.xlu0 %v2974, 32
      %v3058 = vpop.permute.xlu0 %3057
      %3059 = vrot.lane.b32.xlu0 %v2975, 32
      %v3060 = vpop.permute.xlu0 %3059
      %3061 = vrot.lane.b32.xlu0 %v2976, 32
      %v3062 = vpop.permute.xlu0 %3061
      %3063 = vrot.lane.b32.xlu0 %v2977, 32
      %v3064 = vpop.permute.xlu0 %3063
      %3065 = vrot.lane.b32.xlu0 %v2978, 32
      %v3066 = vpop.permute.xlu0 %3065
      %3067 = vrot.lane.b32.xlu0 %v2979, 32
      %v3068 = vpop.permute.xlu0 %3067
      %3069 = vrot.lane.b32.xlu0 %v2980, 32
      %v3070 = vpop.permute.xlu0 %3069
      %3071 = vrot.lane.b32.xlu0 %v2981, 32
      %v3072 = vpop.permute.xlu0 %3071
      %3073 = vrot.lane.b32.xlu0 %v2982, 32
      %v3074 = vpop.permute.xlu0 %3073
      %3075 = vrot.lane.b32.xlu0 %v2983, 32
      %v3076 = vpop.permute.xlu0 %3075
      %3077 = vrot.lane.b32.xlu0 %v2984, 32
      %v3078 = vpop.permute.xlu0 %3077
      %3079 = vrot.lane.b32.xlu0 %v2985, 32
      %v3080 = vpop.permute.xlu0 %3079
      %3081 = vrot.lane.b32.xlu0 %v2986, 32
      %v3082 = vpop.permute.xlu0 %3081
      %3083 = vrot.lane.b32.xlu0 %v3003, 32
      %v3084 = vpop.permute.xlu0 %3083
      %3085 = vrot.lane.b32.xlu0 %v3004, 32
      %v3086 = vpop.permute.xlu0 %3085
      %3087 = vrot.lane.b32.xlu0 %v3005, 32
      %v3088 = vpop.permute.xlu0 %3087
      %3089 = vrot.lane.b32.xlu0 %v3006, 32
      %v3090 = vpop.permute.xlu0 %3089
      %3091 = vrot.lane.b32.xlu0 %v3007, 32
      %v3092 = vpop.permute.xlu0 %3091
      %3093 = vrot.lane.b32.xlu0 %v3008, 32
      %v3094 = vpop.permute.xlu0 %3093
      %3095 = vrot.lane.b32.xlu0 %v3009, 32
      %v3096 = vpop.permute.xlu0 %3095
      %3097 = vrot.lane.b32.xlu0 %v3010, 32
      %v3098 = vpop.permute.xlu0 %3097
      %3099 = vrot.lane.b32.xlu0 %v3011, 32
      %v3100 = vpop.permute.xlu0 %3099
      %3101 = vrot.lane.b32.xlu0 %v3012, 32
      %v3102 = vpop.permute.xlu0 %3101
      %3103 = vrot.lane.b32.xlu0 %v3013, 32
      %v3104 = vpop.permute.xlu0 %3103
      %3105 = vrot.lane.b32.xlu0 %v3014, 32
      %v3106 = vpop.permute.xlu0 %3105
      %3107 = vrot.lane.b32.xlu0 %v3015, 32
      %v3108 = vpop.permute.xlu0 %3107
      %3109 = vrot.lane.b32.xlu0 %v3016, 32
      %v3110 = vpop.permute.xlu0 %3109
      %3111 = vrot.lane.b32.xlu0 %v3017, 32
      %v3112 = vpop.permute.xlu0 %3111
      %3113 = vrot.lane.b32.xlu0 %v3018, 32
      %v3114 = vpop.permute.xlu0 %3113
      %v3147 = vmul.f32 %v2852, %v3052
      %v3148 = vmul.f32 %v2854, %v3054
      %v3149 = vmul.f32 %v2856, %v3056
      %v3150 = vmul.f32 %v2858, %v3058
      %v3151 = vmul.f32 %v2860, %v3060
      %v3152 = vmul.f32 %v2862, %v3062
      %v3153 = vmul.f32 %v2864, %v3064
      %v3154 = vmul.f32 %v2866, %v3066
      %v3155 = vmul.f32 %v2868, %v3068
      %v3156 = vmul.f32 %v2870, %v3070
      %v3157 = vmul.f32 %v2872, %v3072
      %v3158 = vmul.f32 %v2874, %v3074
      %v3159 = vmul.f32 %v2876, %v3076
      %v3160 = vmul.f32 %v2878, %v3078
      %v3161 = vmul.f32 %v2880, %v3080
      %v3162 = vmul.f32 %v2882, %v3082
      %v3163 = vmul.f32 %v2884, %v3084
      %v3164 = vmul.f32 %v2886, %v3086
      %v3165 = vmul.f32 %v2888, %v3088
      %v3166 = vmul.f32 %v2890, %v3090
      %v3167 = vmul.f32 %v2892, %v3092
      %v3168 = vmul.f32 %v2894, %v3094
      %v3169 = vmul.f32 %v2896, %v3096
      %v3170 = vmul.f32 %v2898, %v3098
      %v3171 = vmul.f32 %v2900, %v3100
      %v3172 = vmul.f32 %v2902, %v3102
      %v3173 = vmul.f32 %v2904, %v3104
      %v3174 = vmul.f32 %v2906, %v3106
      %v3175 = vmul.f32 %v2908, %v3108
      %v3176 = vmul.f32 %v2910, %v3110
      %v3177 = vmul.f32 %v2912, %v3112
      %v3178 = vmul.f32 %v2914, %v3114
      %3211 = vrot.lane.b32.xlu0 %v2915, 32
      %v3212 = vpop.permute.xlu0 %3211
      %3213 = vrot.lane.b32.xlu0 %v2916, 32
      %v3214 = vpop.permute.xlu0 %3213
      %3215 = vrot.lane.b32.xlu0 %v2917, 32
      %v3216 = vpop.permute.xlu0 %3215
      %3217 = vrot.lane.b32.xlu0 %v2918, 32
      %v3218 = vpop.permute.xlu0 %3217
      %3219 = vrot.lane.b32.xlu0 %v2919, 32
      %v3220 = vpop.permute.xlu0 %3219
      %3221 = vrot.lane.b32.xlu0 %v2920, 32
      %v3222 = vpop.permute.xlu0 %3221
      %3223 = vrot.lane.b32.xlu0 %v2921, 32
      %v3224 = vpop.permute.xlu0 %3223
      %3225 = vrot.lane.b32.xlu0 %v2922, 32
      %v3226 = vpop.permute.xlu0 %3225
      %3227 = vrot.lane.b32.xlu0 %v2923, 32
      %v3228 = vpop.permute.xlu0 %3227
      %3229 = vrot.lane.b32.xlu0 %v2924, 32
      %v3230 = vpop.permute.xlu0 %3229
      %3231 = vrot.lane.b32.xlu0 %v2925, 32
      %v3232 = vpop.permute.xlu0 %3231
      %3233 = vrot.lane.b32.xlu0 %v2926, 32
      %v3234 = vpop.permute.xlu0 %3233
      %3235 = vrot.lane.b32.xlu0 %v2927, 32
      %v3236 = vpop.permute.xlu0 %3235
      %3237 = vrot.lane.b32.xlu0 %v2928, 32
      %v3238 = vpop.permute.xlu0 %3237
      %3239 = vrot.lane.b32.xlu0 %v2929, 32
      %v3240 = vpop.permute.xlu0 %3239
      %3241 = vrot.lane.b32.xlu0 %v2930, 32
      %v3242 = vpop.permute.xlu0 %3241
      %3243 = vrot.lane.b32.xlu0 %v2931, 32
      %v3244 = vpop.permute.xlu0 %3243
      %3245 = vrot.lane.b32.xlu0 %v2932, 32
      %v3246 = vpop.permute.xlu0 %3245
      %3247 = vrot.lane.b32.xlu0 %v2933, 32
      %v3248 = vpop.permute.xlu0 %3247
      %3249 = vrot.lane.b32.xlu0 %v2934, 32
      %v3250 = vpop.permute.xlu0 %3249
      %3251 = vrot.lane.b32.xlu0 %v2935, 32
      %v3252 = vpop.permute.xlu0 %3251
      %3253 = vrot.lane.b32.xlu0 %v2936, 32
      %v3254 = vpop.permute.xlu0 %3253
      %3255 = vrot.lane.b32.xlu0 %v2937, 32
      %v3256 = vpop.permute.xlu0 %3255
      %3257 = vrot.lane.b32.xlu0 %v2938, 32
      %v3258 = vpop.permute.xlu0 %3257
      %3259 = vrot.lane.b32.xlu0 %v2939, 32
      %v3260 = vpop.permute.xlu0 %3259
      %3261 = vrot.lane.b32.xlu0 %v2940, 32
      %v3262 = vpop.permute.xlu0 %3261
      %3263 = vrot.lane.b32.xlu0 %v2941, 32
      %v3264 = vpop.permute.xlu0 %3263
      %3265 = vrot.lane.b32.xlu0 %v2942, 32
      %v3266 = vpop.permute.xlu0 %3265
      %3267 = vrot.lane.b32.xlu0 %v2943, 32
      %v3268 = vpop.permute.xlu0 %3267
      %3269 = vrot.lane.b32.xlu0 %v2944, 32
      %v3270 = vpop.permute.xlu0 %3269
      %3271 = vrot.lane.b32.xlu0 %v2945, 32
      %v3272 = vpop.permute.xlu0 %3271
      %3273 = vrot.lane.b32.xlu0 %v2946, 32
      %v3274 = vpop.permute.xlu0 %3273
      %v3307 = vmul.f32 %v2852, %v3212
      %v3308 = vmul.f32 %v2854, %v3214
      %v3309 = vmul.f32 %v2856, %v3216
      %v3310 = vmul.f32 %v2858, %v3218
      %v3311 = vmul.f32 %v2860, %v3220
      %v3312 = vmul.f32 %v2862, %v3222
      %v3313 = vmul.f32 %v2864, %v3224
      %v3314 = vmul.f32 %v2866, %v3226
      %v3315 = vmul.f32 %v2868, %v3228
      %v3316 = vmul.f32 %v2870, %v3230
      %v3317 = vmul.f32 %v2872, %v3232
      %v3318 = vmul.f32 %v2874, %v3234
      %v3319 = vmul.f32 %v2876, %v3236
      %v3320 = vmul.f32 %v2878, %v3238
      %v3321 = vmul.f32 %v2880, %v3240
      %v3322 = vmul.f32 %v2882, %v3242
      %v3323 = vmul.f32 %v2884, %v3244
      %v3324 = vmul.f32 %v2886, %v3246
      %v3325 = vmul.f32 %v2888, %v3248
      %v3326 = vmul.f32 %v2890, %v3250
      %v3327 = vmul.f32 %v2892, %v3252
      %v3328 = vmul.f32 %v2894, %v3254
      %v3329 = vmul.f32 %v2896, %v3256
      %v3330 = vmul.f32 %v2898, %v3258
      %v3331 = vmul.f32 %v2900, %v3260
      %v3332 = vmul.f32 %v2902, %v3262
      %v3333 = vmul.f32 %v2904, %v3264
      %v3334 = vmul.f32 %v2906, %v3266
      %v3335 = vmul.f32 %v2908, %v3268
      %v3336 = vmul.f32 %v2910, %v3270
      %v3337 = vmul.f32 %v2912, %v3272
      %v3338 = vmul.f32 %v2914, %v3274
      %3371 = vrot.lane.b32.xlu0 %v3307, 32
      %v3372 = vpop.permute.xlu0 %3371
      %3373 = vrot.lane.b32.xlu0 %v3308, 32
      %v3374 = vpop.permute.xlu0 %3373
      %3375 = vrot.lane.b32.xlu0 %v3309, 32
      %v3376 = vpop.permute.xlu0 %3375
      %3377 = vrot.lane.b32.xlu0 %v3310, 32
      %v3378 = vpop.permute.xlu0 %3377
      %3379 = vrot.lane.b32.xlu0 %v3311, 32
      %v3380 = vpop.permute.xlu0 %3379
      %3381 = vrot.lane.b32.xlu0 %v3312, 32
      %v3382 = vpop.permute.xlu0 %3381
      %3383 = vrot.lane.b32.xlu0 %v3313, 32
      %v3384 = vpop.permute.xlu0 %3383
      %3385 = vrot.lane.b32.xlu0 %v3314, 32
      %v3386 = vpop.permute.xlu0 %3385
      %3387 = vrot.lane.b32.xlu0 %v3315, 32
      %v3388 = vpop.permute.xlu0 %3387
      %3389 = vrot.lane.b32.xlu0 %v3316, 32
      %v3390 = vpop.permute.xlu0 %3389
      %3391 = vrot.lane.b32.xlu0 %v3317, 32
      %v3392 = vpop.permute.xlu0 %3391
      %3393 = vrot.lane.b32.xlu0 %v3318, 32
      %v3394 = vpop.permute.xlu0 %3393
      %3395 = vrot.lane.b32.xlu0 %v3319, 32
      %v3396 = vpop.permute.xlu0 %3395
      %3397 = vrot.lane.b32.xlu0 %v3320, 32
      %v3398 = vpop.permute.xlu0 %3397
      %3399 = vrot.lane.b32.xlu0 %v3321, 32
      %v3400 = vpop.permute.xlu0 %3399
      %3401 = vrot.lane.b32.xlu0 %v3322, 32
      %v3402 = vpop.permute.xlu0 %3401
      %3403 = vrot.lane.b32.xlu0 %v3323, 32
      %v3404 = vpop.permute.xlu0 %3403
      %3405 = vrot.lane.b32.xlu0 %v3324, 32
      %v3406 = vpop.permute.xlu0 %3405
      %3407 = vrot.lane.b32.xlu0 %v3325, 32
      %v3408 = vpop.permute.xlu0 %3407
      %3409 = vrot.lane.b32.xlu0 %v3326, 32
      %v3410 = vpop.permute.xlu0 %3409
      %3411 = vrot.lane.b32.xlu0 %v3327, 32
      %v3412 = vpop.permute.xlu0 %3411
      %3413 = vrot.lane.b32.xlu0 %v3328, 32
      %v3414 = vpop.permute.xlu0 %3413
      %3415 = vrot.lane.b32.xlu0 %v3329, 32
      %v3416 = vpop.permute.xlu0 %3415
      %3417 = vrot.lane.b32.xlu0 %v3330, 32
      %v3418 = vpop.permute.xlu0 %3417
      %3419 = vrot.lane.b32.xlu0 %v3331, 32
      %v3420 = vpop.permute.xlu0 %3419
      %3421 = vrot.lane.b32.xlu0 %v3332, 32
      %v3422 = vpop.permute.xlu0 %3421
      %3423 = vrot.lane.b32.xlu0 %v3333, 32
      %v3424 = vpop.permute.xlu0 %3423
      %3425 = vrot.lane.b32.xlu0 %v3334, 32
      %v3426 = vpop.permute.xlu0 %3425
      %3427 = vrot.lane.b32.xlu0 %v3335, 32
      %v3428 = vpop.permute.xlu0 %3427
      %3429 = vrot.lane.b32.xlu0 %v3336, 32
      %v3430 = vpop.permute.xlu0 %3429
      %3431 = vrot.lane.b32.xlu0 %v3337, 32
      %v3432 = vpop.permute.xlu0 %3431
      %3433 = vrot.lane.b32.xlu0 %v3338, 32
      %v3434 = vpop.permute.xlu0 %3433
      %v3467 = vadd.f32 %v3147, %v3372
      %v3468 = vadd.f32 %v3148, %v3374
      %v3469 = vadd.f32 %v3149, %v3376
      %v3470 = vadd.f32 %v3150, %v3378
      %v3471 = vadd.f32 %v3151, %v3380
      %v3472 = vadd.f32 %v3152, %v3382
      %v3473 = vadd.f32 %v3153, %v3384
      %v3474 = vadd.f32 %v3154, %v3386
      %v3475 = vadd.f32 %v3155, %v3388
      %v3476 = vadd.f32 %v3156, %v3390
      %v3477 = vadd.f32 %v3157, %v3392
      %v3478 = vadd.f32 %v3158, %v3394
      %v3479 = vadd.f32 %v3159, %v3396
      %v3480 = vadd.f32 %v3160, %v3398
      %v3481 = vadd.f32 %v3161, %v3400
      %v3482 = vadd.f32 %v3162, %v3402
      %v3483 = vadd.f32 %v3163, %v3404
      %v3484 = vadd.f32 %v3164, %v3406
      %v3485 = vadd.f32 %v3165, %v3408
      %v3486 = vadd.f32 %v3166, %v3410
      %v3487 = vadd.f32 %v3167, %v3412
      %v3488 = vadd.f32 %v3168, %v3414
      %v3489 = vadd.f32 %v3169, %v3416
      %v3490 = vadd.f32 %v3170, %v3418
      %v3491 = vadd.f32 %v3171, %v3420
      %v3492 = vadd.f32 %v3172, %v3422
      %v3493 = vadd.f32 %v3173, %v3424
      %v3494 = vadd.f32 %v3174, %v3426
      %v3495 = vadd.f32 %v3175, %v3428
      %v3496 = vadd.f32 %v3176, %v3430
      %v3497 = vadd.f32 %v3177, %v3432
      %v3498 = vadd.f32 %v3178, %v3434
      %v3499 = vtanh.pop %v3467
      %v3500 = vtanh.pop %v3468
      %v3501 = vtanh.pop %v3469
      %v3502 = vtanh.pop %v3470
      %v3503 = vtanh.pop %v3471
      %v3504 = vtanh.pop %v3472
      %v3505 = vtanh.pop %v3473
      %v3506 = vtanh.pop %v3474
      %v3507 = vtanh.pop %v3475
      %v3508 = vtanh.pop %v3476
      %v3509 = vtanh.pop %v3477
      %v3510 = vtanh.pop %v3478
      %v3511 = vtanh.pop %v3479
      %v3512 = vtanh.pop %v3480
      %v3513 = vtanh.pop %v3481
      %v3514 = vtanh.pop %v3482
      %v3515 = vtanh.pop %v3483
      %v3516 = vtanh.pop %v3484
      %v3517 = vtanh.pop %v3485
      %v3518 = vtanh.pop %v3486
      %v3519 = vtanh.pop %v3487
      %v3520 = vtanh.pop %v3488
      %v3521 = vtanh.pop %v3489
      %v3522 = vtanh.pop %v3490
      %v3523 = vtanh.pop %v3491
      %v3524 = vtanh.pop %v3492
      %v3525 = vtanh.pop %v3493
      %v3526 = vtanh.pop %v3494
      %v3527 = vtanh.pop %v3495
      %v3528 = vtanh.pop %v3496
      %v3529 = vtanh.pop %v3497
      %v3530 = vtanh.pop %v3498
      %3563 = vrot.lane.b32.xlu0 %v3499, 32
      %v3564 = vpop.permute.xlu0 %3563
      %3565 = vrot.lane.b32.xlu0 %v3500, 32
      %v3566 = vpop.permute.xlu0 %3565
      %3567 = vrot.lane.b32.xlu0 %v3501, 32
      %v3568 = vpop.permute.xlu0 %3567
      %3569 = vrot.lane.b32.xlu0 %v3502, 32
      %v3570 = vpop.permute.xlu0 %3569
      %3571 = vrot.lane.b32.xlu0 %v3503, 32
      %v3572 = vpop.permute.xlu0 %3571
      %3573 = vrot.lane.b32.xlu0 %v3504, 32
      %v3574 = vpop.permute.xlu0 %3573
      %3575 = vrot.lane.b32.xlu0 %v3505, 32
      %v3576 = vpop.permute.xlu0 %3575
      %3577 = vrot.lane.b32.xlu0 %v3506, 32
      %v3578 = vpop.permute.xlu0 %3577
      %3579 = vrot.lane.b32.xlu0 %v3507, 32
      %v3580 = vpop.permute.xlu0 %3579
      %3581 = vrot.lane.b32.xlu0 %v3508, 32
      %v3582 = vpop.permute.xlu0 %3581
      %3583 = vrot.lane.b32.xlu0 %v3509, 32
      %v3584 = vpop.permute.xlu0 %3583
      %3585 = vrot.lane.b32.xlu0 %v3510, 32
      %v3586 = vpop.permute.xlu0 %3585
      %3587 = vrot.lane.b32.xlu0 %v3511, 32
      %v3588 = vpop.permute.xlu0 %3587
      %3589 = vrot.lane.b32.xlu0 %v3512, 32
      %v3590 = vpop.permute.xlu0 %3589
      %3591 = vrot.lane.b32.xlu0 %v3513, 32
      %v3592 = vpop.permute.xlu0 %3591
      %3593 = vrot.lane.b32.xlu0 %v3514, 32
      %v3594 = vpop.permute.xlu0 %3593
      %3595 = vrot.lane.b32.xlu0 %v3515, 32
      %v3596 = vpop.permute.xlu0 %3595
      %3597 = vrot.lane.b32.xlu0 %v3516, 32
      %v3598 = vpop.permute.xlu0 %3597
      %3599 = vrot.lane.b32.xlu0 %v3517, 32
      %v3600 = vpop.permute.xlu0 %3599
      %3601 = vrot.lane.b32.xlu0 %v3518, 32
      %v3602 = vpop.permute.xlu0 %3601
      %3603 = vrot.lane.b32.xlu0 %v3519, 32
      %v3604 = vpop.permute.xlu0 %3603
      %3605 = vrot.lane.b32.xlu0 %v3520, 32
      %v3606 = vpop.permute.xlu0 %3605
      %3607 = vrot.lane.b32.xlu0 %v3521, 32
      %v3608 = vpop.permute.xlu0 %3607
      %3609 = vrot.lane.b32.xlu0 %v3522, 32
      %v3610 = vpop.permute.xlu0 %3609
      %3611 = vrot.lane.b32.xlu0 %v3523, 32
      %v3612 = vpop.permute.xlu0 %3611
      %3613 = vrot.lane.b32.xlu0 %v3524, 32
      %v3614 = vpop.permute.xlu0 %3613
      %3615 = vrot.lane.b32.xlu0 %v3525, 32
      %v3616 = vpop.permute.xlu0 %3615
      %3617 = vrot.lane.b32.xlu0 %v3526, 32
      %v3618 = vpop.permute.xlu0 %3617
      %3619 = vrot.lane.b32.xlu0 %v3527, 32
      %v3620 = vpop.permute.xlu0 %3619
      %3621 = vrot.lane.b32.xlu0 %v3528, 32
      %v3622 = vpop.permute.xlu0 %3621
      %3623 = vrot.lane.b32.xlu0 %v3529, 32
      %v3624 = vpop.permute.xlu0 %3623
      %3625 = vrot.lane.b32.xlu0 %v3530, 32
      %v3626 = vpop.permute.xlu0 %3625
      %v3659 = vmul.f32 %v2852, %v3564
      %v3660 = vmul.f32 %v2854, %v3566
      %v3661 = vmul.f32 %v2856, %v3568
      %v3662 = vmul.f32 %v2858, %v3570
      %v3663 = vmul.f32 %v2860, %v3572
      %v3664 = vmul.f32 %v2862, %v3574
      %v3665 = vmul.f32 %v2864, %v3576
      %v3666 = vmul.f32 %v2866, %v3578
      %v3667 = vmul.f32 %v2868, %v3580
      %v3668 = vmul.f32 %v2870, %v3582
      %v3669 = vmul.f32 %v2872, %v3584
      %v3670 = vmul.f32 %v2874, %v3586
      %v3671 = vmul.f32 %v2876, %v3588
      %v3672 = vmul.f32 %v2878, %v3590
      %v3673 = vmul.f32 %v2880, %v3592
      %v3674 = vmul.f32 %v2882, %v3594
      %v3675 = vmul.f32 %v2884, %v3596
      %v3676 = vmul.f32 %v2886, %v3598
      %v3677 = vmul.f32 %v2888, %v3600
      %v3678 = vmul.f32 %v2890, %v3602
      %v3679 = vmul.f32 %v2892, %v3604
      %v3680 = vmul.f32 %v2894, %v3606
      %v3681 = vmul.f32 %v2896, %v3608
      %v3682 = vmul.f32 %v2898, %v3610
      %v3683 = vmul.f32 %v2900, %v3612
      %v3684 = vmul.f32 %v2902, %v3614
      %v3685 = vmul.f32 %v2904, %v3616
      %v3686 = vmul.f32 %v2906, %v3618
      %v3687 = vmul.f32 %v2908, %v3620
      %v3688 = vmul.f32 %v2910, %v3622
      %v3689 = vmul.f32 %v2912, %v3624
      %v3690 = vmul.f32 %v2914, %v3626
      %v3691 = vld [vmem:[%s591] sm:$0xff]
      %v3692 = vld [vmem:[%s591 + $0x8] sm:$0xff]
      %v3693 = vld [vmem:[%s591 + $0x10] sm:$0xff]
      %v3694 = vld [vmem:[%s591 + $0x18] sm:$0xff]
      %v3695 = vld [vmem:[%s591 + $0x20] sm:$0xff]
      %v3696 = vld [vmem:[%s591 + $0x28] sm:$0xff]
      %v3697 = vld [vmem:[%s591 + $0x30] sm:$0xff]
      %v3698 = vld [vmem:[%s591 + $0x38] sm:$0xff]
      %3699 = vxpose.xlu0.b32.start [1/16] %v3691, 128
      %3700 = vxpose.xlu0.b32.cont [2/16] %v3693, 128
      %3701 = vxpose.xlu0.b32.cont [3/16] %v3695, 128
      %3702 = vxpose.xlu0.b32.cont [4/16] %v3697, 128
      %3703 = vxpose.xlu0.b32.cont [5/16] 0.0, 128
      %3704 = vxpose.xlu0.b32.cont [6/16] 0.0, 128
      %3705 = vxpose.xlu0.b32.cont [7/16] 0.0, 128
      %3706 = vxpose.xlu0.b32.cont [8/16] 0.0, 128
      %3707 = vxpose.xlu0.b32.cont [9/16] 0.0, 128
      %3708 = vxpose.xlu0.b32.cont [10/16] 0.0, 128
      %3709 = vxpose.xlu0.b32.cont [11/16] 0.0, 128
      %3710 = vxpose.xlu0.b32.cont [12/16] 0.0, 128
      %3711 = vxpose.xlu0.b32.cont [13/16] 0.0, 128
      %3712 = vxpose.xlu0.b32.cont [14/16] 0.0, 128
      %3713 = vxpose.xlu0.b32.cont [15/16] 0.0, 128
      %3714 = vxpose.xlu0.b32.end [16/16] 0.0, 128
      %v3715 = vpop.trf.xlu0
      %v3716 = vpop.trf.xlu0
      %v3717 = vpop.trf.xlu0
      %v3718 = vpop.trf.xlu0
      %v3719 = vpop.trf.xlu0
      %v3720 = vpop.trf.xlu0
      %v3721 = vpop.trf.xlu0
      %v3722 = vpop.trf.xlu0
      %v3723 = vpop.trf.xlu0
      %v3724 = vpop.trf.xlu0
      %v3725 = vpop.trf.xlu0
      %v3726 = vpop.trf.xlu0
      %v3727 = vpop.trf.xlu0
      %v3728 = vpop.trf.xlu0
      %v3729 = vpop.trf.xlu0
      %v3730 = vpop.trf.xlu0
      %3731 = vxpose.xlu0.b32.start [1/16] %v3692, 128
      %3732 = vxpose.xlu0.b32.cont [2/16] %v3694, 128
      %3733 = vxpose.xlu0.b32.cont [3/16] %v3696, 128
      %3734 = vxpose.xlu0.b32.cont [4/16] %v3698, 128
      %3735 = vxpose.xlu0.b32.cont [5/16] 0.0, 128
      %3736 = vxpose.xlu0.b32.cont [6/16] 0.0, 128
      %3737 = vxpose.xlu0.b32.cont [7/16] 0.0, 128
      %3738 = vxpose.xlu0.b32.cont [8/16] 0.0, 128
      %3739 = vxpose.xlu0.b32.cont [9/16] 0.0, 128
      %3740 = vxpose.xlu0.b32.cont [10/16] 0.0, 128
      %3741 = vxpose.xlu0.b32.cont [11/16] 0.0, 128
      %3742 = vxpose.xlu0.b32.cont [12/16] 0.0, 128
      %3743 = vxpose.xlu0.b32.cont [13/16] 0.0, 128
      %3744 = vxpose.xlu0.b32.cont [14/16] 0.0, 128
      %3745 = vxpose.xlu0.b32.cont [15/16] 0.0, 128
      %3746 = vxpose.xlu0.b32.end [16/16] 0.0, 128
      %v3747 = vpop.trf.xlu0
      %v3748 = vpop.trf.xlu0
      %v3749 = vpop.trf.xlu0
      %v3750 = vpop.trf.xlu0
      %v3751 = vpop.trf.xlu0
      %v3752 = vpop.trf.xlu0
      %v3753 = vpop.trf.xlu0
      %v3754 = vpop.trf.xlu0
      %v3755 = vpop.trf.xlu0
      %v3756 = vpop.trf.xlu0
      %v3757 = vpop.trf.xlu0
      %v3758 = vpop.trf.xlu0
      %v3759 = vpop.trf.xlu0
      %v3760 = vpop.trf.xlu0
      %v3761 = vpop.trf.xlu0
      %v3762 = vpop.trf.xlu0
      %v3763 = vpack.c.bf16 %v3660, %v3659
      %v3764 = vpack.c.bf16 %v3662, %v3661
      %v3765 = vpack.c.bf16 %v3664, %v3663
      %v3766 = vpack.c.bf16 %v3666, %v3665
      %v3767 = vpack.c.bf16 %v3668, %v3667
      %v3768 = vpack.c.bf16 %v3670, %v3669
      %v3769 = vpack.c.bf16 %v3672, %v3671
      %v3770 = vpack.c.bf16 %v3674, %v3673
      %v3771 = vpack.c.bf16 %v3676, %v3675
      %v3772 = vpack.c.bf16 %v3678, %v3677
      %v3773 = vpack.c.bf16 %v3680, %v3679
      %v3774 = vpack.c.bf16 %v3682, %v3681
      %v3775 = vpack.c.bf16 %v3684, %v3683
      %v3776 = vpack.c.bf16 %v3686, %v3685
      %v3777 = vpack.c.bf16 %v3688, %v3687
      %v3778 = vpack.c.bf16 %v3690, %v3689
      %v3779 = vld [vmem:[%s6] sm:$0xf]
      %v3780 = vld [vmem:[%s6 + $0x4] sm:$0xf]
      %v3781 = vld [vmem:[%s6 + $0x8] sm:$0xf]
      %v3782 = vld [vmem:[%s6 + $0xc] sm:$0xf]
      %v3783 = vld [vmem:[%s7] sm:$0x1]
      %v3785 = vlaneseq
      %v3786 = vshrl.u32 %v3785, 7
      %v3787 = vsub.s32 0, %v3786
      %v3788 = vrot.slane %v3783, %v3787
      %3806 = vrot.lane.b32.xlu0 %v3763, 64
      %v3807 = vpop.permute.xlu0 %3806
      %3808 = vrot.lane.b32.xlu0 %v3764, 64
      %v3809 = vpop.permute.xlu0 %3808
      %3810 = vrot.lane.b32.xlu0 %v3765, 64
      %v3811 = vpop.permute.xlu0 %3810
      %3812 = vrot.lane.b32.xlu0 %v3766, 64
      %v3813 = vpop.permute.xlu0 %3812
      %3814 = vrot.lane.b32.xlu0 %v3767, 64
      %v3815 = vpop.permute.xlu0 %3814
      %3816 = vrot.lane.b32.xlu0 %v3768, 64
      %v3817 = vpop.permute.xlu0 %3816
      %3818 = vrot.lane.b32.xlu0 %v3769, 64
      %v3819 = vpop.permute.xlu0 %3818
      %3820 = vrot.lane.b32.xlu0 %v3770, 64
      %v3821 = vpop.permute.xlu0 %3820
      %3822 = vrot.lane.b32.xlu0 %v3771, 64
      %v3823 = vpop.permute.xlu0 %3822
      %3824 = vrot.lane.b32.xlu0 %v3772, 64
      %v3825 = vpop.permute.xlu0 %3824
      %3826 = vrot.lane.b32.xlu0 %v3773, 64
      %v3827 = vpop.permute.xlu0 %3826
      %3828 = vrot.lane.b32.xlu0 %v3774, 64
      %v3829 = vpop.permute.xlu0 %3828
      %3830 = vrot.lane.b32.xlu0 %v3775, 64
      %v3831 = vpop.permute.xlu0 %3830
      %3832 = vrot.lane.b32.xlu0 %v3776, 64
      %v3833 = vpop.permute.xlu0 %3832
      %3834 = vrot.lane.b32.xlu0 %v3777, 64
      %v3835 = vpop.permute.xlu0 %3834
      %3836 = vrot.lane.b32.xlu0 %v3778, 64
      %v3837 = vpop.permute.xlu0 %3836
      %v3842 = vunpack.c.l.b16 %v3779
      %v3843 = vunpack.c.l.b16 %v3780
      %v3844 = vunpack.c.l.b16 %v3781
      %v3845 = vunpack.c.l.b16 %v3782
      %v3846 = vpack.c.b16 %v3843, %v3842
      %v3847 = vpack.c.b16 %v3845, %v3844
      %v3851 = vsel %vm2096, %v3807, 0
      %v3854 = vsel %vm2096, %v3809, 0
      %v3857 = vsel %vm2096, %v3811, 0
      %v3860 = vsel %vm2096, %v3813, 0
      %v3863 = vsel %vm2096, %v3815, 0
      %v3866 = vsel %vm2096, %v3817, 0
      %v3869 = vsel %vm2096, %v3819, 0
      %v3872 = vsel %vm2096, %v3821, 0
      %v3875 = vsel %vm2096, %v3823, 0
      %v3878 = vsel %vm2096, %v3825, 0
      %v3881 = vsel %vm2096, %v3827, 0
      %v3884 = vsel %vm2096, %v3829, 0
      %v3887 = vsel %vm2096, %v3831, 0
      %v3890 = vsel %vm2096, %v3833, 0
      %v3893 = vsel %vm2096, %v3835, 0
      %v3896 = vsel %vm2096, %v3837, 0
      %3898 = vmatprep.subr.bf16.mxu0 0
      %3899 = vmatpush1.bf16.msra.mxu0 %v3846
      %3900 = vmatprep.subr.bf16.mxu0 0
      %3901 = vmatpush1.bf16.msra.mxu0 %v3847
      %3902 = vmatprep.subr.bf16.mxu0 0
      %3903 = vmatpush1.bf16.msra.mxu0 0
      %3904 = vmatprep.subr.bf16.mxu0 0
      %3905 = vmatpush1.bf16.msra.mxu0 0
      %3906 = vmatprep.subr.bf16.mxu0 0
      %3907 = vmatpush1.bf16.msra.mxu0 0
      %3908 = vmatprep.subr.bf16.mxu0 0
      %3909 = vmatpush1.bf16.msra.mxu0 0
      %3910 = vmatprep.subr.bf16.mxu0 0
      %3911 = vmatpush1.bf16.msra.mxu0 0
      %3912 = vmatprep.subr.bf16.mxu0 0
      %3913 = vmatpush1.bf16.msra.mxu0 0
      %3914 = vmatprep.subr.bf16.mxu0 0
      %3915 = vmatpush1.bf16.msra.mxu0 0
      %3916 = vmatprep.subr.bf16.mxu0 0
      %3917 = vmatpush1.bf16.msra.mxu0 0
      %3918 = vmatprep.subr.bf16.mxu0 0
      %3919 = vmatpush1.bf16.msra.mxu0 0
      %3920 = vmatprep.subr.bf16.mxu0 0
      %3921 = vmatpush1.bf16.msra.mxu0 0
      %3922 = vmatprep.subr.bf16.mxu0 0
      %3923 = vmatpush1.bf16.msra.mxu0 0
      %3924 = vmatprep.subr.bf16.mxu0 0
      %3925 = vmatpush1.bf16.msra.mxu0 0
      %3926 = vmatprep.subr.bf16.mxu0 0
      %3927 = vmatpush1.bf16.msra.mxu0 0
      %3928 = vmatprep.subr.bf16.mxu0 0
      %3929 = vmatpush1.bf16.msra.mxu0 0
      %3930 = vmatprep.mubr.bf16.mxu0 0
      %3931 = vmatmul.mubr.bf16.gmra.mrb[0].mxu0 %v3851
      %v3932 = vpop.f32.mrb[0].mxu0
      %v3933 = vadd.f32 %v3788, %v3932
      %v3934 = vpop.f32.mrb[0].mxu0
      %v3935 = vpop.f32.mrb[0].mxu0
      %v3936 = vadd.f32 %v3788, %v3935
      %v3937 = vpop.f32.mrb[0].mxu0
      %3938 = vmatprep.mubr.bf16.mxu0 0
      %3939 = vmatmul.mubr.bf16.gmra.mrb[0].mxu0 %v3854
      %v3940 = vpop.f32.mrb[0].mxu0
      %v3941 = vadd.f32 %v3788, %v3940
      %v3942 = vpop.f32.mrb[0].mxu0
      %v3943 = vpop.f32.mrb[0].mxu0
      %v3944 = vadd.f32 %v3788, %v3943
      %v3945 = vpop.f32.mrb[0].mxu0
      %3946 = vmatprep.mubr.bf16.mxu0 0
      %3947 = vmatmul.mubr.bf16.gmra.mrb[0].mxu0 %v3857
      %v3948 = vpop.f32.mrb[0].mxu0
      %v3949 = vadd.f32 %v3788, %v3948
      %v3950 = vpop.f32.mrb[0].mxu0
      %v3951 = vpop.f32.mrb[0].mxu0
      %v3952 = vadd.f32 %v3788, %v3951
      %v3953 = vpop.f32.mrb[0].mxu0
      %3954 = vmatprep.mubr.bf16.mxu0 0
      %3955 = vmatmul.mubr.bf16.gmra.mrb[0].mxu0 %v3860
      %v3956 = vpop.f32.mrb[0].mxu0
      %v3957 = vadd.f32 %v3788, %v3956
      %v3958 = vpop.f32.mrb[0].mxu0
      %v3959 = vpop.f32.mrb[0].mxu0
      %v3960 = vadd.f32 %v3788, %v3959
      %v3961 = vpop.f32.mrb[0].mxu0
      %3962 = vmatprep.mubr.bf16.mxu0 0
      %3963 = vmatmul.mubr.bf16.gmra.mrb[0].mxu0 %v3863
      %v3964 = vpop.f32.mrb[0].mxu0
      %v3965 = vadd.f32 %v3788, %v3964
      %v3966 = vpop.f32.mrb[0].mxu0
      %v3967 = vpop.f32.mrb[0].mxu0
      %v3968 = vadd.f32 %v3788, %v3967
      %v3969 = vpop.f32.mrb[0].mxu0
      %3970 = vmatprep.mubr.bf16.mxu0 0
      %3971 = vmatmul.mubr.bf16.gmra.mrb[0].mxu0 %v3866
      %v3972 = vpop.f32.mrb[0].mxu0
      %v3973 = vadd.f32 %v3788, %v3972
      %v3974 = vpop.f32.mrb[0].mxu0
      %v3975 = vpop.f32.mrb[0].mxu0
      %v3976 = vadd.f32 %v3788, %v3975
      %v3977 = vpop.f32.mrb[0].mxu0
      %3978 = vmatprep.mubr.bf16.mxu0 0
      %3979 = vmatmul.mubr.bf16.gmra.mrb[0].mxu0 %v3869
      %v3980 = vpop.f32.mrb[0].mxu0
      %v3981 = vadd.f32 %v3788, %v3980
      %v3982 = vpop.f32.mrb[0].mxu0
      %v3983 = vpop.f32.mrb[0].mxu0
      %v3984 = vadd.f32 %v3788, %v3983
      %v3985 = vpop.f32.mrb[0].mxu0
      %3986 = vmatprep.mubr.bf16.mxu0 0
      %3987 = vmatmul.mubr.bf16.gmra.mrb[0].mxu0 %v3872
      %v3988 = vpop.f32.mrb[0].mxu0
      %v3989 = vadd.f32 %v3788, %v3988
      %v3990 = vpop.f32.mrb[0].mxu0
      %v3991 = vpop.f32.mrb[0].mxu0
      %v3992 = vadd.f32 %v3788, %v3991
      %v3993 = vpop.f32.mrb[0].mxu0
      %3994 = vmatprep.mubr.bf16.mxu0 0
      %3995 = vmatmul.mubr.bf16.gmra.mrb[0].mxu0 %v3875
      %v3996 = vpop.f32.mrb[0].mxu0
      %v3997 = vadd.f32 %v3788, %v3996
      %v3998 = vpop.f32.mrb[0].mxu0
      %v3999 = vpop.f32.mrb[0].mxu0
      %v4000 = vadd.f32 %v3788, %v3999
      %v4001 = vpop.f32.mrb[0].mxu0
      %4002 = vmatprep.mubr.bf16.mxu0 0
      %4003 = vmatmul.mubr.bf16.gmra.mrb[0].mxu0 %v3878
      %v4004 = vpop.f32.mrb[0].mxu0
      %v4005 = vadd.f32 %v3788, %v4004
      %v4006 = vpop.f32.mrb[0].mxu0
      %v4007 = vpop.f32.mrb[0].mxu0
      %v4008 = vadd.f32 %v3788, %v4007
      %v4009 = vpop.f32.mrb[0].mxu0
      %4010 = vmatprep.mubr.bf16.mxu0 0
      %4011 = vmatmul.mubr.bf16.gmra.mrb[0].mxu0 %v3881
      %v4012 = vpop.f32.mrb[0].mxu0
      %v4013 = vadd.f32 %v3788, %v4012
      %v4014 = vpop.f32.mrb[0].mxu0
      %v4015 = vpop.f32.mrb[0].mxu0
      %v4016 = vadd.f32 %v3788, %v4015
      %v4017 = vpop.f32.mrb[0].mxu0
      %4018 = vmatprep.mubr.bf16.mxu0 0
      %4019 = vmatmul.mubr.bf16.gmra.mrb[0].mxu0 %v3884
      %v4020 = vpop.f32.mrb[0].mxu0
      %v4021 = vadd.f32 %v3788, %v4020
      %v4022 = vpop.f32.mrb[0].mxu0
      %v4023 = vpop.f32.mrb[0].mxu0
      %v4024 = vadd.f32 %v3788, %v4023
      %v4025 = vpop.f32.mrb[0].mxu0
      %4026 = vmatprep.mubr.bf16.mxu0 0
      %4027 = vmatmul.mubr.bf16.gmra.mrb[0].mxu0 %v3887
      %v4028 = vpop.f32.mrb[0].mxu0
      %v4029 = vadd.f32 %v3788, %v4028
      %v4030 = vpop.f32.mrb[0].mxu0
      %v4031 = vpop.f32.mrb[0].mxu0
      %v4032 = vadd.f32 %v3788, %v4031
      %v4033 = vpop.f32.mrb[0].mxu0
      %4034 = vmatprep.mubr.bf16.mxu0 0
      %4035 = vmatmul.mubr.bf16.gmra.mrb[0].mxu0 %v3890
      %v4036 = vpop.f32.mrb[0].mxu0
      %v4037 = vadd.f32 %v3788, %v4036
      %v4038 = vpop.f32.mrb[0].mxu0
      %v4039 = vpop.f32.mrb[0].mxu0
      %v4040 = vadd.f32 %v3788, %v4039
      %v4041 = vpop.f32.mrb[0].mxu0
      %4042 = vmatprep.mubr.bf16.mxu0 0
      %4043 = vmatmul.mubr.bf16.gmra.mrb[0].mxu0 %v3893
      %v4044 = vpop.f32.mrb[0].mxu0
      %v4045 = vadd.f32 %v3788, %v4044
      %v4046 = vpop.f32.mrb[0].mxu0
      %v4047 = vpop.f32.mrb[0].mxu0
      %v4048 = vadd.f32 %v3788, %v4047
      %v4049 = vpop.f32.mrb[0].mxu0
      %4050 = vmatprep.mubr.bf16.mxu0 0
      %4051 = vmatmul.mubr.bf16.gmra.mrb[0].mxu0 %v3896
      %v4052 = vpop.f32.mrb[0].mxu0
      %v4053 = vadd.f32 %v3788, %v4052
      %v4054 = vpop.f32.mrb[0].mxu0
      %v4055 = vpop.f32.mrb[0].mxu0
      %v4056 = vadd.f32 %v3788, %v4055
      %v4057 = vpop.f32.mrb[0].mxu0
      %4058 = vdwg.mxu0
      %v4059 = vpack.c.bf16 %v3716, %v3715
      %v4060 = vpack.c.bf16 %v3718, %v3717
      %v4061 = vpack.c.bf16 %v3720, %v3719
      %v4062 = vpack.c.bf16 %v3722, %v3721
      %v4063 = vpack.c.bf16 %v3724, %v3723
      %v4064 = vpack.c.bf16 %v3726, %v3725
      %v4065 = vpack.c.bf16 %v3728, %v3727
      %v4066 = vpack.c.bf16 %v3730, %v3729
      %v4067 = vpack.c.bf16 %v3748, %v3747
      %v4068 = vpack.c.bf16 %v3750, %v3749
      %v4069 = vpack.c.bf16 %v3752, %v3751
      %v4070 = vpack.c.bf16 %v3754, %v3753
      %v4071 = vpack.c.bf16 %v3756, %v3755
      %v4072 = vpack.c.bf16 %v3758, %v3757
      %v4073 = vpack.c.bf16 %v3760, %v3759
      %v4074 = vpack.c.bf16 %v3762, %v3761
      %v4075 = vld [vmem:[%s8] sm:$0xf]
      %v4076 = vld [vmem:[%s8 + $0x4] sm:$0xf]
      %v4077 = vld [vmem:[%s8 + $0x8] sm:$0xf]
      %v4078 = vld [vmem:[%s8 + $0xc] sm:$0xf]
      %v4079 = vld [vmem:[%s9] sm:$0x1]
      %v4081 = vlaneseq
      %v4082 = vshrl.u32 %v4081, 7
      %v4083 = vsub.s32 0, %v4082
      %v4084 = vrot.slane %v4079, %v4083
      %v4090 = vunpack.c.l.b16 %v4075
      %v4091 = vunpack.c.l.b16 %v4076
      %v4092 = vunpack.c.l.b16 %v4077
      %v4093 = vunpack.c.l.b16 %v4078
      %v4094 = vpack.c.b16 %v4091, %v4090
      %v4095 = vpack.c.b16 %v4093, %v4092
      %v4099 = vsel %vm2096, %v4059, 0
      %v4102 = vsel %vm2096, %v4060, 0
      %v4105 = vsel %vm2096, %v4061, 0
      %v4108 = vsel %vm2096, %v4062, 0
      %v4111 = vsel %vm2096, %v4063, 0
      %v4114 = vsel %vm2096, %v4064, 0
      %v4117 = vsel %vm2096, %v4065, 0
      %v4120 = vsel %vm2096, %v4066, 0
      %v4123 = vsel %vm2096, %v4067, 0
      %v4126 = vsel %vm2096, %v4068, 0
      %v4129 = vsel %vm2096, %v4069, 0
      %v4132 = vsel %vm2096, %v4070, 0
      %v4135 = vsel %vm2096, %v4071, 0
      %v4138 = vsel %vm2096, %v4072, 0
      %v4141 = vsel %vm2096, %v4073, 0
      %v4144 = vsel %vm2096, %v4074, 0
      %4146 = vmatprep.subr.bf16.mxu0 0
      %4147 = vmatpush1.bf16.msra.mxu0 %v4094
      %4148 = vmatprep.subr.bf16.mxu0 0
      %4149 = vmatpush1.bf16.msra.mxu0 %v4095
      %4150 = vmatprep.subr.bf16.mxu0 0
      %4151 = vmatpush1.bf16.msra.mxu0 0
      %4152 = vmatprep.subr.bf16.mxu0 0
      %4153 = vmatpush1.bf16.msra.mxu0 0
      %4154 = vmatprep.subr.bf16.mxu0 0
      %4155 = vmatpush1.bf16.msra.mxu0 0
      %4156 = vmatprep.subr.bf16.mxu0 0
      %4157 = vmatpush1.bf16.msra.mxu0 0
      %4158 = vmatprep.subr.bf16.mxu0 0
      %4159 = vmatpush1.bf16.msra.mxu0 0
      %4160 = vmatprep.subr.bf16.mxu0 0
      %4161 = vmatpush1.bf16.msra.mxu0 0
      %4162 = vmatprep.subr.bf16.mxu0 0
      %4163 = vmatpush1.bf16.msra.mxu0 0
      %4164 = vmatprep.subr.bf16.mxu0 0
      %4165 = vmatpush1.bf16.msra.mxu0 0
      %4166 = vmatprep.subr.bf16.mxu0 0
      %4167 = vmatpush1.bf16.msra.mxu0 0
      %4168 = vmatprep.subr.bf16.mxu0 0
      %4169 = vmatpush1.bf16.msra.mxu0 0
      %4170 = vmatprep.subr.bf16.mxu0 0
      %4171 = vmatpush1.bf16.msra.mxu0 0
      %4172 = vmatprep.subr.bf16.mxu0 0
      %4173 = vmatpush1.bf16.msra.mxu0 0
      %4174 = vmatprep.subr.bf16.mxu0 0
      %4175 = vmatpush1.bf16.msra.mxu0 0
      %4176 = vmatprep.subr.bf16.mxu0 0
      %4177 = vmatpush1.bf16.msra.mxu0 0
      %4178 = vmatprep.mubr.bf16.mxu0 0
      %4179 = vmatmul.mubr.bf16.gmra.mrb[0].mxu0 %v4099
      %v4180 = vpop.f32.mrb[0].mxu0
      %v4181 = vadd.f32 %v4084, %v4180
      %v4182 = vpop.f32.mrb[0].mxu0
      %v4183 = vpop.f32.mrb[0].mxu0
      %v4184 = vadd.f32 %v4084, %v4183
      %v4185 = vpop.f32.mrb[0].mxu0
      %4186 = vmatprep.mubr.bf16.mxu0 0
      %4187 = vmatmul.mubr.bf16.gmra.mrb[0].mxu0 %v4102
      %v4188 = vpop.f32.mrb[0].mxu0
      %v4189 = vadd.f32 %v4084, %v4188
      %v4190 = vpop.f32.mrb[0].mxu0
      %v4191 = vpop.f32.mrb[0].mxu0
      %v4192 = vadd.f32 %v4084, %v4191
      %v4193 = vpop.f32.mrb[0].mxu0
      %4194 = vmatprep.mubr.bf16.mxu0 0
      %4195 = vmatmul.mubr.bf16.gmra.mrb[0].mxu0 %v4105
      %v4196 = vpop.f32.mrb[0].mxu0
      %v4197 = vadd.f32 %v4084, %v4196
      %v4198 = vpop.f32.mrb[0].mxu0
      %v4199 = vpop.f32.mrb[0].mxu0
      %v4200 = vadd.f32 %v4084, %v4199
      %v4201 = vpop.f32.mrb[0].mxu0
      %4202 = vmatprep.mubr.bf16.mxu0 0
      %4203 = vmatmul.mubr.bf16.gmra.mrb[0].mxu0 %v4108
      %v4204 = vpop.f32.mrb[0].mxu0
      %v4205 = vadd.f32 %v4084, %v4204
      %v4206 = vpop.f32.mrb[0].mxu0
      %v4207 = vpop.f32.mrb[0].mxu0
      %v4208 = vadd.f32 %v4084, %v4207
      %v4209 = vpop.f32.mrb[0].mxu0
      %4210 = vmatprep.mubr.bf16.mxu0 0
      %4211 = vmatmul.mubr.bf16.gmra.mrb[0].mxu0 %v4111
      %v4212 = vpop.f32.mrb[0].mxu0
      %v4213 = vadd.f32 %v4084, %v4212
      %v4214 = vpop.f32.mrb[0].mxu0
      %v4215 = vpop.f32.mrb[0].mxu0
      %v4216 = vadd.f32 %v4084, %v4215
      %v4217 = vpop.f32.mrb[0].mxu0
      %4218 = vmatprep.mubr.bf16.mxu0 0
      %4219 = vmatmul.mubr.bf16.gmra.mrb[0].mxu0 %v4114
      %v4220 = vpop.f32.mrb[0].mxu0
      %v4221 = vadd.f32 %v4084, %v4220
      %v4222 = vpop.f32.mrb[0].mxu0
      %v4223 = vpop.f32.mrb[0].mxu0
      %v4224 = vadd.f32 %v4084, %v4223
      %v4225 = vpop.f32.mrb[0].mxu0
      %4226 = vmatprep.mubr.bf16.mxu0 0
      %4227 = vmatmul.mubr.bf16.gmra.mrb[0].mxu0 %v4117
      %v4228 = vpop.f32.mrb[0].mxu0
      %v4229 = vadd.f32 %v4084, %v4228
      %v4230 = vpop.f32.mrb[0].mxu0
      %v4231 = vpop.f32.mrb[0].mxu0
      %v4232 = vadd.f32 %v4084, %v4231
      %v4233 = vpop.f32.mrb[0].mxu0
      %4234 = vmatprep.mubr.bf16.mxu0 0
      %4235 = vmatmul.mubr.bf16.gmra.mrb[0].mxu0 %v4120
      %v4236 = vpop.f32.mrb[0].mxu0
      %v4237 = vadd.f32 %v4084, %v4236
      %v4238 = vpop.f32.mrb[0].mxu0
      %v4239 = vpop.f32.mrb[0].mxu0
      %v4240 = vadd.f32 %v4084, %v4239
      %v4241 = vpop.f32.mrb[0].mxu0
      %4242 = vmatprep.mubr.bf16.mxu0 0
      %4243 = vmatmul.mubr.bf16.gmra.mrb[0].mxu0 %v4123
      %v4244 = vpop.f32.mrb[0].mxu0
      %v4245 = vadd.f32 %v4084, %v4244
      %v4246 = vpop.f32.mrb[0].mxu0
      %v4247 = vpop.f32.mrb[0].mxu0
      %v4248 = vadd.f32 %v4084, %v4247
      %v4249 = vpop.f32.mrb[0].mxu0
      %4250 = vmatprep.mubr.bf16.mxu0 0
      %4251 = vmatmul.mubr.bf16.gmra.mrb[0].mxu0 %v4126
      %v4252 = vpop.f32.mrb[0].mxu0
      %v4253 = vadd.f32 %v4084, %v4252
      %v4254 = vpop.f32.mrb[0].mxu0
      %v4255 = vpop.f32.mrb[0].mxu0
      %v4256 = vadd.f32 %v4084, %v4255
      %v4257 = vpop.f32.mrb[0].mxu0
      %4258 = vmatprep.mubr.bf16.mxu0 0
      %4259 = vmatmul.mubr.bf16.gmra.mrb[0].mxu0 %v4129
      %v4260 = vpop.f32.mrb[0].mxu0
      %v4261 = vadd.f32 %v4084, %v4260
      %v4262 = vpop.f32.mrb[0].mxu0
      %v4263 = vpop.f32.mrb[0].mxu0
      %v4264 = vadd.f32 %v4084, %v4263
      %v4265 = vpop.f32.mrb[0].mxu0
      %4266 = vmatprep.mubr.bf16.mxu0 0
      %4267 = vmatmul.mubr.bf16.gmra.mrb[0].mxu0 %v4132
      %v4268 = vpop.f32.mrb[0].mxu0
      %v4269 = vadd.f32 %v4084, %v4268
      %v4270 = vpop.f32.mrb[0].mxu0
      %v4271 = vpop.f32.mrb[0].mxu0
      %v4272 = vadd.f32 %v4084, %v4271
      %v4273 = vpop.f32.mrb[0].mxu0
      %4274 = vmatprep.mubr.bf16.mxu0 0
      %4275 = vmatmul.mubr.bf16.gmra.mrb[0].mxu0 %v4135
      %v4276 = vpop.f32.mrb[0].mxu0
      %v4277 = vadd.f32 %v4084, %v4276
      %v4278 = vpop.f32.mrb[0].mxu0
      %v4279 = vpop.f32.mrb[0].mxu0
      %v4280 = vadd.f32 %v4084, %v4279
      %v4281 = vpop.f32.mrb[0].mxu0
      %4282 = vmatprep.mubr.bf16.mxu0 0
      %4283 = vmatmul.mubr.bf16.gmra.mrb[0].mxu0 %v4138
      %v4284 = vpop.f32.mrb[0].mxu0
      %v4285 = vadd.f32 %v4084, %v4284
      %v4286 = vpop.f32.mrb[0].mxu0
      %v4287 = vpop.f32.mrb[0].mxu0
      %v4288 = vadd.f32 %v4084, %v4287
      %v4289 = vpop.f32.mrb[0].mxu0
      %4290 = vmatprep.mubr.bf16.mxu0 0
      %4291 = vmatmul.mubr.bf16.gmra.mrb[0].mxu0 %v4141
      %v4292 = vpop.f32.mrb[0].mxu0
      %v4293 = vadd.f32 %v4084, %v4292
      %v4294 = vpop.f32.mrb[0].mxu0
      %v4295 = vpop.f32.mrb[0].mxu0
      %v4296 = vadd.f32 %v4084, %v4295
      %v4297 = vpop.f32.mrb[0].mxu0
      %4298 = vmatprep.mubr.bf16.mxu0 0
      %4299 = vmatmul.mubr.bf16.gmra.mrb[0].mxu0 %v4144
      %v4300 = vpop.f32.mrb[0].mxu0
      %v4301 = vadd.f32 %v4084, %v4300
      %v4302 = vpop.f32.mrb[0].mxu0
      %v4303 = vpop.f32.mrb[0].mxu0
      %v4304 = vadd.f32 %v4084, %v4303
      %v4305 = vpop.f32.mrb[0].mxu0
      %4306 = vdwg.mxu0
      %v4307 = vmul.f32 %v3933, 0.25
      %v4308 = vmul.f32 %v3936, 0.25
      %v4309 = vmul.f32 %v3941, 0.25
      %v4310 = vmul.f32 %v3944, 0.25
      %v4311 = vmul.f32 %v3949, 0.25
      %v4312 = vmul.f32 %v3952, 0.25
      %v4313 = vmul.f32 %v3957, 0.25
      %v4314 = vmul.f32 %v3960, 0.25
      %v4315 = vmul.f32 %v3965, 0.25
      %v4316 = vmul.f32 %v3968, 0.25
      %v4317 = vmul.f32 %v3973, 0.25
      %v4318 = vmul.f32 %v3976, 0.25
      %v4319 = vmul.f32 %v3981, 0.25
      %v4320 = vmul.f32 %v3984, 0.25
      %v4321 = vmul.f32 %v3989, 0.25
      %v4322 = vmul.f32 %v3992, 0.25
      %v4323 = vmul.f32 %v3997, 0.25
      %v4324 = vmul.f32 %v4000, 0.25
      %v4325 = vmul.f32 %v4005, 0.25
      %v4326 = vmul.f32 %v4008, 0.25
      %v4327 = vmul.f32 %v4013, 0.25
      %v4328 = vmul.f32 %v4016, 0.25
      %v4329 = vmul.f32 %v4021, 0.25
      %v4330 = vmul.f32 %v4024, 0.25
      %v4331 = vmul.f32 %v4029, 0.25
      %v4332 = vmul.f32 %v4032, 0.25
      %v4333 = vmul.f32 %v4037, 0.25
      %v4334 = vmul.f32 %v4040, 0.25
      %v4335 = vmul.f32 %v4045, 0.25
      %v4336 = vmul.f32 %v4048, 0.25
      %v4337 = vmul.f32 %v4053, 0.25
      %v4338 = vmul.f32 %v4056, 0.25
      %v4339 = vpack.c.bf16 %v4308, %v4307
      %v4340 = vpack.c.bf16 %v4310, %v4309
      %v4341 = vpack.c.bf16 %v4312, %v4311
      %v4342 = vpack.c.bf16 %v4314, %v4313
      %v4343 = vpack.c.bf16 %v4316, %v4315
      %v4344 = vpack.c.bf16 %v4318, %v4317
      %v4345 = vpack.c.bf16 %v4320, %v4319
      %v4346 = vpack.c.bf16 %v4322, %v4321
      %v4347 = vpack.c.bf16 %v4324, %v4323
      %v4348 = vpack.c.bf16 %v4326, %v4325
      %v4349 = vpack.c.bf16 %v4328, %v4327
      %v4350 = vpack.c.bf16 %v4330, %v4329
      %v4351 = vpack.c.bf16 %v4332, %v4331
      %v4352 = vpack.c.bf16 %v4334, %v4333
      %v4353 = vpack.c.bf16 %v4336, %v4335
      %v4354 = vpack.c.bf16 %v4338, %v4337
      %v4355 = vpack.c.bf16 %v3936, %v3933
      %v4356 = vpack.c.bf16 %v3944, %v3941
      %v4357 = vpack.c.bf16 %v3952, %v3949
      %v4358 = vpack.c.bf16 %v3960, %v3957
      %v4359 = vpack.c.bf16 %v3968, %v3965
      %v4360 = vpack.c.bf16 %v3976, %v3973
      %v4361 = vpack.c.bf16 %v3984, %v3981
      %v4362 = vpack.c.bf16 %v3992, %v3989
      %v4363 = vpack.c.bf16 %v4000, %v3997
      %v4364 = vpack.c.bf16 %v4008, %v4005
      %v4365 = vpack.c.bf16 %v4016, %v4013
      %v4366 = vpack.c.bf16 %v4024, %v4021
      %v4367 = vpack.c.bf16 %v4032, %v4029
      %v4368 = vpack.c.bf16 %v4040, %v4037
      %v4369 = vpack.c.bf16 %v4048, %v4045
      %v4370 = vpack.c.bf16 %v4056, %v4053
      %v4371 = vpack.c.bf16 %v4184, %v4181
      %v4372 = vpack.c.bf16 %v4192, %v4189
      %v4373 = vpack.c.bf16 %v4200, %v4197
      %v4374 = vpack.c.bf16 %v4208, %v4205
      %v4375 = vpack.c.bf16 %v4216, %v4213
      %v4376 = vpack.c.bf16 %v4224, %v4221
      %v4377 = vpack.c.bf16 %v4232, %v4229
      %v4378 = vpack.c.bf16 %v4240, %v4237
      %v4379 = vpack.c.bf16 %v4248, %v4245
      %v4380 = vpack.c.bf16 %v4256, %v4253
      %v4381 = vpack.c.bf16 %v4264, %v4261
      %v4382 = vpack.c.bf16 %v4272, %v4269
      %v4383 = vpack.c.bf16 %v4280, %v4277
      %v4384 = vpack.c.bf16 %v4288, %v4285
      %v4385 = vpack.c.bf16 %v4296, %v4293
      %v4386 = vpack.c.bf16 %v4304, %v4301
      %4403 = vrot.lane.b32.xlu0 %v4371, 16
      %v4404 = vpop.permute.xlu0 %4403
      %4405 = vrot.lane.b32.xlu0 %v4372, 16
      %v4406 = vpop.permute.xlu0 %4405
      %4407 = vrot.lane.b32.xlu0 %v4373, 16
      %v4408 = vpop.permute.xlu0 %4407
      %4409 = vrot.lane.b32.xlu0 %v4374, 16
      %v4410 = vpop.permute.xlu0 %4409
      %4411 = vrot.lane.b32.xlu0 %v4375, 16
      %v4412 = vpop.permute.xlu0 %4411
      %4413 = vrot.lane.b32.xlu0 %v4376, 16
      %v4414 = vpop.permute.xlu0 %4413
      %4415 = vrot.lane.b32.xlu0 %v4377, 16
      %v4416 = vpop.permute.xlu0 %4415
      %4417 = vrot.lane.b32.xlu0 %v4378, 16
      %v4418 = vpop.permute.xlu0 %4417
      %4419 = vrot.lane.b32.xlu0 %v4379, 16
      %v4420 = vpop.permute.xlu0 %4419
      %4421 = vrot.lane.b32.xlu0 %v4380, 16
      %v4422 = vpop.permute.xlu0 %4421
      %4423 = vrot.lane.b32.xlu0 %v4381, 16
      %v4424 = vpop.permute.xlu0 %4423
      %4425 = vrot.lane.b32.xlu0 %v4382, 16
      %v4426 = vpop.permute.xlu0 %4425
      %4427 = vrot.lane.b32.xlu0 %v4383, 16
      %v4428 = vpop.permute.xlu0 %4427
      %4429 = vrot.lane.b32.xlu0 %v4384, 16
      %v4430 = vpop.permute.xlu0 %4429
      %4431 = vrot.lane.b32.xlu0 %v4385, 16
      %v4432 = vpop.permute.xlu0 %4431
      %4433 = vrot.lane.b32.xlu0 %v4386, 16
      %v4434 = vpop.permute.xlu0 %4433
      %4451 = vrot.lane.b32.xlu0 %v4355, 112
      %v4452 = vpop.permute.xlu0 %4451
      %4453 = vrot.lane.b32.xlu0 %v4356, 112
      %v4454 = vpop.permute.xlu0 %4453
      %4455 = vrot.lane.b32.xlu0 %v4357, 112
      %v4456 = vpop.permute.xlu0 %4455
      %4457 = vrot.lane.b32.xlu0 %v4358, 112
      %v4458 = vpop.permute.xlu0 %4457
      %4459 = vrot.lane.b32.xlu0 %v4359, 112
      %v4460 = vpop.permute.xlu0 %4459
      %4461 = vrot.lane.b32.xlu0 %v4360, 112
      %v4462 = vpop.permute.xlu0 %4461
      %4463 = vrot.lane.b32.xlu0 %v4361, 112
      %v4464 = vpop.permute.xlu0 %4463
      %4465 = vrot.lane.b32.xlu0 %v4362, 112
      %v4466 = vpop.permute.xlu0 %4465
      %4467 = vrot.lane.b32.xlu0 %v4363, 112
      %v4468 = vpop.permute.xlu0 %4467
      %4469 = vrot.lane.b32.xlu0 %v4364, 112
      %v4470 = vpop.permute.xlu0 %4469
      %4471 = vrot.lane.b32.xlu0 %v4365, 112
      %v4472 = vpop.permute.xlu0 %4471
      %4473 = vrot.lane.b32.xlu0 %v4366, 112
      %v4474 = vpop.permute.xlu0 %4473
      %4475 = vrot.lane.b32.xlu0 %v4367, 112
      %v4476 = vpop.permute.xlu0 %4475
      %4477 = vrot.lane.b32.xlu0 %v4368, 112
      %v4478 = vpop.permute.xlu0 %4477
      %4479 = vrot.lane.b32.xlu0 %v4369, 112
      %v4480 = vpop.permute.xlu0 %4479
      %4481 = vrot.lane.b32.xlu0 %v4370, 112
      %v4482 = vpop.permute.xlu0 %4481
      %4483 = vrot.lane.b32.xlu0 %v4404, 112
      %v4484 = vpop.permute.xlu0 %4483
      %4485 = vrot.lane.b32.xlu0 %v4406, 112
      %v4486 = vpop.permute.xlu0 %4485
      %4487 = vrot.lane.b32.xlu0 %v4408, 112
      %v4488 = vpop.permute.xlu0 %4487
      %4489 = vrot.lane.b32.xlu0 %v4410, 112
      %v4490 = vpop.permute.xlu0 %4489
      %4491 = vrot.lane.b32.xlu0 %v4412, 112
      %v4492 = vpop.permute.xlu0 %4491
      %4493 = vrot.lane.b32.xlu0 %v4414, 112
      %v4494 = vpop.permute.xlu0 %4493
      %4495 = vrot.lane.b32.xlu0 %v4416, 112
      %v4496 = vpop.permute.xlu0 %4495
      %4497 = vrot.lane.b32.xlu0 %v4418, 112
      %v4498 = vpop.permute.xlu0 %4497
      %4499 = vrot.lane.b32.xlu0 %v4420, 112
      %v4500 = vpop.permute.xlu0 %4499
      %4501 = vrot.lane.b32.xlu0 %v4422, 112
      %v4502 = vpop.permute.xlu0 %4501
      %4503 = vrot.lane.b32.xlu0 %v4424, 112
      %v4504 = vpop.permute.xlu0 %4503
      %4505 = vrot.lane.b32.xlu0 %v4426, 112
      %v4506 = vpop.permute.xlu0 %4505
      %4507 = vrot.lane.b32.xlu0 %v4428, 112
      %v4508 = vpop.permute.xlu0 %4507
      %4509 = vrot.lane.b32.xlu0 %v4430, 112
      %v4510 = vpop.permute.xlu0 %4509
      %4511 = vrot.lane.b32.xlu0 %v4432, 112
      %v4512 = vpop.permute.xlu0 %4511
      %4513 = vrot.lane.b32.xlu0 %v4434, 112
      %v4514 = vpop.permute.xlu0 %4513
      %v4516 = vsel %vm1964, %v4339, 0
      %v4519 = vsel %vm1964, %v4340, 0
      %v4522 = vsel %vm1964, %v4341, 0
      %v4525 = vsel %vm1964, %v4342, 0
      %v4528 = vsel %vm1964, %v4343, 0
      %v4531 = vsel %vm1964, %v4344, 0
      %v4534 = vsel %vm1964, %v4345, 0
      %v4537 = vsel %vm1964, %v4346, 0
      %v4540 = vsel %vm1964, %v4347, 0
      %v4543 = vsel %vm1964, %v4348, 0
      %v4546 = vsel %vm1964, %v4349, 0
      %v4549 = vsel %vm1964, %v4350, 0
      %v4552 = vsel %vm1964, %v4351, 0
      %v4555 = vsel %vm1964, %v4352, 0
      %v4558 = vsel %vm1964, %v4353, 0
      %v4561 = vsel %vm1964, %v4354, 0
      %v4564 = vsel %vm1964, %v4452, 0
      %v4567 = vsel %vm1964, %v4454, 0
      %v4570 = vsel %vm1964, %v4456, 0
      %v4573 = vsel %vm1964, %v4458, 0
      %v4576 = vsel %vm1964, %v4460, 0
      %v4579 = vsel %vm1964, %v4462, 0
      %v4582 = vsel %vm1964, %v4464, 0
      %v4585 = vsel %vm1964, %v4466, 0
      %v4588 = vsel %vm1964, %v4468, 0
      %v4591 = vsel %vm1964, %v4470, 0
      %v4594 = vsel %vm1964, %v4472, 0
      %v4597 = vsel %vm1964, %v4474, 0
      %v4600 = vsel %vm1964, %v4476, 0
      %v4603 = vsel %vm1964, %v4478, 0
      %v4606 = vsel %vm1964, %v4480, 0
      %v4609 = vsel %vm1964, %v4482, 0
      %v4612 = vsel %vm1964, %v4484, 0
      %v4615 = vsel %vm1964, %v4486, 0
      %v4618 = vsel %vm1964, %v4488, 0
      %v4621 = vsel %vm1964, %v4490, 0
      %v4624 = vsel %vm1964, %v4492, 0
      %v4627 = vsel %vm1964, %v4494, 0
      %v4630 = vsel %vm1964, %v4496, 0
      %v4633 = vsel %vm1964, %v4498, 0
      %v4636 = vsel %vm1964, %v4500, 0
      %v4639 = vsel %vm1964, %v4502, 0
      %v4642 = vsel %vm1964, %v4504, 0
      %v4645 = vsel %vm1964, %v4506, 0
      %v4648 = vsel %vm1964, %v4508, 0
      %v4651 = vsel %vm1964, %v4510, 0
      %v4654 = vsel %vm1964, %v4512, 0
      %v4657 = vsel %vm1964, %v4514, 0
      %4659 = vmatprep.subr.bf16.mxu0 0
      %4660 = vmatpush1.bf16.xpose.msra.mxu0 %v4564
      %4661 = vmatprep.subr.bf16.mxu0 0
      %4662 = vmatpush1.bf16.xpose.msra.mxu0 %v4567
      %4663 = vmatprep.subr.bf16.mxu0 0
      %4664 = vmatpush1.bf16.xpose.msra.mxu0 %v4570
      %4665 = vmatprep.subr.bf16.mxu0 0
      %4666 = vmatpush1.bf16.xpose.msra.mxu0 %v4573
      %4667 = vmatprep.subr.bf16.mxu0 0
      %4668 = vmatpush1.bf16.xpose.msra.mxu0 %v4576
      %4669 = vmatprep.subr.bf16.mxu0 0
      %4670 = vmatpush1.bf16.xpose.msra.mxu0 %v4579
      %4671 = vmatprep.subr.bf16.mxu0 0
      %4672 = vmatpush1.bf16.xpose.msra.mxu0 %v4582
      %4673 = vmatprep.subr.bf16.mxu0 0
      %4674 = vmatpush1.bf16.xpose.msra.mxu0 %v4585
      %4675 = vmatprep.subr.bf16.mxu0 0
      %4676 = vmatpush1.bf16.xpose.msra.mxu0 %v4588
      %4677 = vmatprep.subr.bf16.mxu0 0
      %4678 = vmatpush1.bf16.xpose.msra.mxu0 %v4591
      %4679 = vmatprep.subr.bf16.mxu0 0
      %4680 = vmatpush1.bf16.xpose.msra.mxu0 %v4594
      %4681 = vmatprep.subr.bf16.mxu0 0
      %4682 = vmatpush1.bf16.xpose.msra.mxu0 %v4597
      %4683 = vmatprep.subr.bf16.mxu0 0
      %4684 = vmatpush1.bf16.xpose.msra.mxu0 %v4600
      %4685 = vmatprep.subr.bf16.mxu0 0
      %4686 = vmatpush1.bf16.xpose.msra.mxu0 %v4603
      %4687 = vmatprep.subr.bf16.mxu0 0
      %4688 = vmatpush1.bf16.xpose.msra.mxu0 %v4606
      %4689 = vmatprep.subr.bf16.mxu0 0
      %4690 = vmatpush1.bf16.xpose.msra.mxu0 %v4609
      %4691 = vmatprep.mubr.bf16.mxu0 0
      %4692 = vmatmul.mubr.bf16.gmra.mrb[0].mxu0 %v4516
      %v4693 = vpop.f32.mrb[0].mxu0
      %v4694 = vadd.f32 0.0, %v4693
      %v4695 = vpop.f32.mrb[0].mxu0
      %v4696 = vadd.f32 0.0, %v4695
      %v4697 = vpop.f32.mrb[0].mxu0
      %v4698 = vadd.f32 0.0, %v4697
      %v4699 = vpop.f32.mrb[0].mxu0
      %v4700 = vadd.f32 0.0, %v4699
      %4701 = vmatprep.mubr.bf16.mxu0 0
      %4702 = vmatmul.mubr.bf16.gmra.mrb[0].mxu0 %v4519
      %v4703 = vpop.f32.mrb[0].mxu0
      %v4704 = vadd.f32 0.0, %v4703
      %v4705 = vpop.f32.mrb[0].mxu0
      %v4706 = vadd.f32 0.0, %v4705
      %v4707 = vpop.f32.mrb[0].mxu0
      %v4708 = vadd.f32 0.0, %v4707
      %v4709 = vpop.f32.mrb[0].mxu0
      %v4710 = vadd.f32 0.0, %v4709
      %4711 = vmatprep.mubr.bf16.mxu0 0
      %4712 = vmatmul.mubr.bf16.gmra.mrb[0].mxu0 %v4522
      %v4713 = vpop.f32.mrb[0].mxu0
      %v4714 = vadd.f32 0.0, %v4713
      %v4715 = vpop.f32.mrb[0].mxu0
      %v4716 = vadd.f32 0.0, %v4715
      %v4717 = vpop.f32.mrb[0].mxu0
      %v4718 = vadd.f32 0.0, %v4717
      %v4719 = vpop.f32.mrb[0].mxu0
      %v4720 = vadd.f32 0.0, %v4719
      %4721 = vmatprep.mubr.bf16.mxu0 0
      %4722 = vmatmul.mubr.bf16.gmra.mrb[0].mxu0 %v4525
      %v4723 = vpop.f32.mrb[0].mxu0
      %v4724 = vadd.f32 0.0, %v4723
      %v4725 = vpop.f32.mrb[0].mxu0
      %v4726 = vadd.f32 0.0, %v4725
      %v4727 = vpop.f32.mrb[0].mxu0
      %v4728 = vadd.f32 0.0, %v4727
      %v4729 = vpop.f32.mrb[0].mxu0
      %v4730 = vadd.f32 0.0, %v4729
      %4731 = vmatprep.mubr.bf16.mxu0 0
      %4732 = vmatmul.mubr.bf16.gmra.mrb[0].mxu0 %v4528
      %v4733 = vpop.f32.mrb[0].mxu0
      %v4734 = vadd.f32 0.0, %v4733
      %v4735 = vpop.f32.mrb[0].mxu0
      %v4736 = vadd.f32 0.0, %v4735
      %v4737 = vpop.f32.mrb[0].mxu0
      %v4738 = vadd.f32 0.0, %v4737
      %v4739 = vpop.f32.mrb[0].mxu0
      %v4740 = vadd.f32 0.0, %v4739
      %4741 = vmatprep.mubr.bf16.mxu0 0
      %4742 = vmatmul.mubr.bf16.gmra.mrb[0].mxu0 %v4531
      %v4743 = vpop.f32.mrb[0].mxu0
      %v4744 = vadd.f32 0.0, %v4743
      %v4745 = vpop.f32.mrb[0].mxu0
      %v4746 = vadd.f32 0.0, %v4745
      %v4747 = vpop.f32.mrb[0].mxu0
      %v4748 = vadd.f32 0.0, %v4747
      %v4749 = vpop.f32.mrb[0].mxu0
      %v4750 = vadd.f32 0.0, %v4749
      %4751 = vmatprep.mubr.bf16.mxu0 0
      %4752 = vmatmul.mubr.bf16.gmra.mrb[0].mxu0 %v4534
      %v4753 = vpop.f32.mrb[0].mxu0
      %v4754 = vadd.f32 0.0, %v4753
      %v4755 = vpop.f32.mrb[0].mxu0
      %v4756 = vadd.f32 0.0, %v4755
      %v4757 = vpop.f32.mrb[0].mxu0
      %v4758 = vadd.f32 0.0, %v4757
      %v4759 = vpop.f32.mrb[0].mxu0
      %v4760 = vadd.f32 0.0, %v4759
      %4761 = vmatprep.mubr.bf16.mxu0 0
      %4762 = vmatmul.mubr.bf16.gmra.mrb[0].mxu0 %v4537
      %v4763 = vpop.f32.mrb[0].mxu0
      %v4764 = vadd.f32 0.0, %v4763
      %v4765 = vpop.f32.mrb[0].mxu0
      %v4766 = vadd.f32 0.0, %v4765
      %v4767 = vpop.f32.mrb[0].mxu0
      %v4768 = vadd.f32 0.0, %v4767
      %v4769 = vpop.f32.mrb[0].mxu0
      %v4770 = vadd.f32 0.0, %v4769
      %4771 = vmatprep.mubr.bf16.mxu0 0
      %4772 = vmatmul.mubr.bf16.gmra.mrb[0].mxu0 %v4540
      %v4773 = vpop.f32.mrb[0].mxu0
      %v4774 = vadd.f32 0.0, %v4773
      %v4775 = vpop.f32.mrb[0].mxu0
      %v4776 = vadd.f32 0.0, %v4775
      %v4777 = vpop.f32.mrb[0].mxu0
      %v4778 = vadd.f32 0.0, %v4777
      %v4779 = vpop.f32.mrb[0].mxu0
      %v4780 = vadd.f32 0.0, %v4779
      %4781 = vmatprep.mubr.bf16.mxu0 0
      %4782 = vmatmul.mubr.bf16.gmra.mrb[0].mxu0 %v4543
      %v4783 = vpop.f32.mrb[0].mxu0
      %v4784 = vadd.f32 0.0, %v4783
      %v4785 = vpop.f32.mrb[0].mxu0
      %v4786 = vadd.f32 0.0, %v4785
      %v4787 = vpop.f32.mrb[0].mxu0
      %v4788 = vadd.f32 0.0, %v4787
      %v4789 = vpop.f32.mrb[0].mxu0
      %v4790 = vadd.f32 0.0, %v4789
      %4791 = vmatprep.mubr.bf16.mxu0 0
      %4792 = vmatmul.mubr.bf16.gmra.mrb[0].mxu0 %v4546
      %v4793 = vpop.f32.mrb[0].mxu0
      %v4794 = vadd.f32 0.0, %v4793
      %v4795 = vpop.f32.mrb[0].mxu0
      %v4796 = vadd.f32 0.0, %v4795
      %v4797 = vpop.f32.mrb[0].mxu0
      %v4798 = vadd.f32 0.0, %v4797
      %v4799 = vpop.f32.mrb[0].mxu0
      %v4800 = vadd.f32 0.0, %v4799
      %4801 = vmatprep.mubr.bf16.mxu0 0
      %4802 = vmatmul.mubr.bf16.gmra.mrb[0].mxu0 %v4549
      %v4803 = vpop.f32.mrb[0].mxu0
      %v4804 = vadd.f32 0.0, %v4803
      %v4805 = vpop.f32.mrb[0].mxu0
      %v4806 = vadd.f32 0.0, %v4805
      %v4807 = vpop.f32.mrb[0].mxu0
      %v4808 = vadd.f32 0.0, %v4807
      %v4809 = vpop.f32.mrb[0].mxu0
      %v4810 = vadd.f32 0.0, %v4809
      %4811 = vmatprep.mubr.bf16.mxu0 0
      %4812 = vmatmul.mubr.bf16.gmra.mrb[0].mxu0 %v4552
      %v4813 = vpop.f32.mrb[0].mxu0
      %v4814 = vadd.f32 0.0, %v4813
      %v4815 = vpop.f32.mrb[0].mxu0
      %v4816 = vadd.f32 0.0, %v4815
      %v4817 = vpop.f32.mrb[0].mxu0
      %v4818 = vadd.f32 0.0, %v4817
      %v4819 = vpop.f32.mrb[0].mxu0
      %v4820 = vadd.f32 0.0, %v4819
      %4821 = vmatprep.mubr.bf16.mxu0 0
      %4822 = vmatmul.mubr.bf16.gmra.mrb[0].mxu0 %v4555
      %v4823 = vpop.f32.mrb[0].mxu0
      %v4824 = vadd.f32 0.0, %v4823
      %v4825 = vpop.f32.mrb[0].mxu0
      %v4826 = vadd.f32 0.0, %v4825
      %v4827 = vpop.f32.mrb[0].mxu0
      %v4828 = vadd.f32 0.0, %v4827
      %v4829 = vpop.f32.mrb[0].mxu0
      %v4830 = vadd.f32 0.0, %v4829
      %4831 = vmatprep.mubr.bf16.mxu0 0
      %4832 = vmatmul.mubr.bf16.gmra.mrb[0].mxu0 %v4558
      %v4833 = vpop.f32.mrb[0].mxu0
      %v4834 = vadd.f32 0.0, %v4833
      %v4835 = vpop.f32.mrb[0].mxu0
      %v4836 = vadd.f32 0.0, %v4835
      %v4837 = vpop.f32.mrb[0].mxu0
      %v4838 = vadd.f32 0.0, %v4837
      %v4839 = vpop.f32.mrb[0].mxu0
      %v4840 = vadd.f32 0.0, %v4839
      %4841 = vmatprep.mubr.bf16.mxu0 0
      %4842 = vmatmul.mubr.bf16.gmra.mrb[0].mxu0 %v4561
      %v4843 = vpop.f32.mrb[0].mxu0
      %v4844 = vadd.f32 0.0, %v4843
      %v4845 = vpop.f32.mrb[0].mxu0
      %v4846 = vadd.f32 0.0, %v4845
      %v4847 = vpop.f32.mrb[0].mxu0
      %v4848 = vadd.f32 0.0, %v4847
      %v4849 = vpop.f32.mrb[0].mxu0
      %v4850 = vadd.f32 0.0, %v4849
      %4851 = vdwg.mxu0
      %4852 = vmatprep.subr.bf16.mxu0 0
      %4853 = vmatpush1.bf16.xpose.msra.mxu0 %v4612
      %4854 = vmatprep.subr.bf16.mxu0 0
      %4855 = vmatpush1.bf16.xpose.msra.mxu0 %v4615
      %4856 = vmatprep.subr.bf16.mxu0 0
      %4857 = vmatpush1.bf16.xpose.msra.mxu0 %v4618
      %4858 = vmatprep.subr.bf16.mxu0 0
      %4859 = vmatpush1.bf16.xpose.msra.mxu0 %v4621
      %4860 = vmatprep.subr.bf16.mxu0 0
      %4861 = vmatpush1.bf16.xpose.msra.mxu0 %v4624
      %4862 = vmatprep.subr.bf16.mxu0 0
      %4863 = vmatpush1.bf16.xpose.msra.mxu0 %v4627
      %4864 = vmatprep.subr.bf16.mxu0 0
      %4865 = vmatpush1.bf16.xpose.msra.mxu0 %v4630
      %4866 = vmatprep.subr.bf16.mxu0 0
      %4867 = vmatpush1.bf16.xpose.msra.mxu0 %v4633
      %4868 = vmatprep.subr.bf16.mxu0 0
      %4869 = vmatpush1.bf16.xpose.msra.mxu0 %v4636
      %4870 = vmatprep.subr.bf16.mxu0 0
      %4871 = vmatpush1.bf16.xpose.msra.mxu0 %v4639
      %4872 = vmatprep.subr.bf16.mxu0 0
      %4873 = vmatpush1.bf16.xpose.msra.mxu0 %v4642
      %4874 = vmatprep.subr.bf16.mxu0 0
      %4875 = vmatpush1.bf16.xpose.msra.mxu0 %v4645
      %4876 = vmatprep.subr.bf16.mxu0 0
      %4877 = vmatpush1.bf16.xpose.msra.mxu0 %v4648
      %4878 = vmatprep.subr.bf16.mxu0 0
      %4879 = vmatpush1.bf16.xpose.msra.mxu0 %v4651
      %4880 = vmatprep.subr.bf16.mxu0 0
      %4881 = vmatpush1.bf16.xpose.msra.mxu0 %v4654
      %4882 = vmatprep.subr.bf16.mxu0 0
      %4883 = vmatpush1.bf16.xpose.msra.mxu0 %v4657
      %4884 = vmatprep.mubr.bf16.mxu0 0
      %4885 = vmatmul.mubr.bf16.gmra.mrb[0].mxu0 %v4516
      %v4886 = vpop.f32.mrb[0].mxu0
      %v4887 = vadd.f32 0.0, %v4886
      %v4888 = vpop.f32.mrb[0].mxu0
      %v4889 = vadd.f32 0.0, %v4888
      %v4890 = vpop.f32.mrb[0].mxu0
      %v4891 = vadd.f32 0.0, %v4890
      %v4892 = vpop.f32.mrb[0].mxu0
      %v4893 = vadd.f32 0.0, %v4892
      %4894 = vmatprep.mubr.bf16.mxu0 0
      %4895 = vmatmul.mubr.bf16.gmra.mrb[0].mxu0 %v4519
      %v4896 = vpop.f32.mrb[0].mxu0
      %v4897 = vadd.f32 0.0, %v4896
      %v4898 = vpop.f32.mrb[0].mxu0
      %v4899 = vadd.f32 0.0, %v4898
      %v4900 = vpop.f32.mrb[0].mxu0
      %v4901 = vadd.f32 0.0, %v4900
      %v4902 = vpop.f32.mrb[0].mxu0
      %v4903 = vadd.f32 0.0, %v4902
      %4904 = vmatprep.mubr.bf16.mxu0 0
      %4905 = vmatmul.mubr.bf16.gmra.mrb[0].mxu0 %v4522
      %v4906 = vpop.f32.mrb[0].mxu0
      %v4907 = vadd.f32 0.0, %v4906
      %v4908 = vpop.f32.mrb[0].mxu0
      %v4909 = vadd.f32 0.0, %v4908
      %v4910 = vpop.f32.mrb[0].mxu0
      %v4911 = vadd.f32 0.0, %v4910
      %v4912 = vpop.f32.mrb[0].mxu0
      %v4913 = vadd.f32 0.0, %v4912
      %4914 = vmatprep.mubr.bf16.mxu0 0
      %4915 = vmatmul.mubr.bf16.gmra.mrb[0].mxu0 %v4525
      %v4916 = vpop.f32.mrb[0].mxu0
      %v4917 = vadd.f32 0.0, %v4916
      %v4918 = vpop.f32.mrb[0].mxu0
      %v4919 = vadd.f32 0.0, %v4918
      %v4920 = vpop.f32.mrb[0].mxu0
      %v4921 = vadd.f32 0.0, %v4920
      %v4922 = vpop.f32.mrb[0].mxu0
      %v4923 = vadd.f32 0.0, %v4922
      %4924 = vmatprep.mubr.bf16.mxu0 0
      %4925 = vmatmul.mubr.bf16.gmra.mrb[0].mxu0 %v4528
      %v4926 = vpop.f32.mrb[0].mxu0
      %v4927 = vadd.f32 0.0, %v4926
      %v4928 = vpop.f32.mrb[0].mxu0
      %v4929 = vadd.f32 0.0, %v4928
      %v4930 = vpop.f32.mrb[0].mxu0
      %v4931 = vadd.f32 0.0, %v4930
      %v4932 = vpop.f32.mrb[0].mxu0
      %v4933 = vadd.f32 0.0, %v4932
      %4934 = vmatprep.mubr.bf16.mxu0 0
      %4935 = vmatmul.mubr.bf16.gmra.mrb[0].mxu0 %v4531
      %v4936 = vpop.f32.mrb[0].mxu0
      %v4937 = vadd.f32 0.0, %v4936
      %v4938 = vpop.f32.mrb[0].mxu0
      %v4939 = vadd.f32 0.0, %v4938
      %v4940 = vpop.f32.mrb[0].mxu0
      %v4941 = vadd.f32 0.0, %v4940
      %v4942 = vpop.f32.mrb[0].mxu0
      %v4943 = vadd.f32 0.0, %v4942
      %4944 = vmatprep.mubr.bf16.mxu0 0
      %4945 = vmatmul.mubr.bf16.gmra.mrb[0].mxu0 %v4534
      %v4946 = vpop.f32.mrb[0].mxu0
      %v4947 = vadd.f32 0.0, %v4946
      %v4948 = vpop.f32.mrb[0].mxu0
      %v4949 = vadd.f32 0.0, %v4948
      %v4950 = vpop.f32.mrb[0].mxu0
      %v4951 = vadd.f32 0.0, %v4950
      %v4952 = vpop.f32.mrb[0].mxu0
      %v4953 = vadd.f32 0.0, %v4952
      %4954 = vmatprep.mubr.bf16.mxu0 0
      %4955 = vmatmul.mubr.bf16.gmra.mrb[0].mxu0 %v4537
      %v4956 = vpop.f32.mrb[0].mxu0
      %v4957 = vadd.f32 0.0, %v4956
      %v4958 = vpop.f32.mrb[0].mxu0
      %v4959 = vadd.f32 0.0, %v4958
      %v4960 = vpop.f32.mrb[0].mxu0
      %v4961 = vadd.f32 0.0, %v4960
      %v4962 = vpop.f32.mrb[0].mxu0
      %v4963 = vadd.f32 0.0, %v4962
      %4964 = vmatprep.mubr.bf16.mxu0 0
      %4965 = vmatmul.mubr.bf16.gmra.mrb[0].mxu0 %v4540
      %v4966 = vpop.f32.mrb[0].mxu0
      %v4967 = vadd.f32 0.0, %v4966
      %v4968 = vpop.f32.mrb[0].mxu0
      %v4969 = vadd.f32 0.0, %v4968
      %v4970 = vpop.f32.mrb[0].mxu0
      %v4971 = vadd.f32 0.0, %v4970
      %v4972 = vpop.f32.mrb[0].mxu0
      %v4973 = vadd.f32 0.0, %v4972
      %4974 = vmatprep.mubr.bf16.mxu0 0
      %4975 = vmatmul.mubr.bf16.gmra.mrb[0].mxu0 %v4543
      %v4976 = vpop.f32.mrb[0].mxu0
      %v4977 = vadd.f32 0.0, %v4976
      %v4978 = vpop.f32.mrb[0].mxu0
      %v4979 = vadd.f32 0.0, %v4978
      %v4980 = vpop.f32.mrb[0].mxu0
      %v4981 = vadd.f32 0.0, %v4980
      %v4982 = vpop.f32.mrb[0].mxu0
      %v4983 = vadd.f32 0.0, %v4982
      %4984 = vmatprep.mubr.bf16.mxu0 0
      %4985 = vmatmul.mubr.bf16.gmra.mrb[0].mxu0 %v4546
      %v4986 = vpop.f32.mrb[0].mxu0
      %v4987 = vadd.f32 0.0, %v4986
      %v4988 = vpop.f32.mrb[0].mxu0
      %v4989 = vadd.f32 0.0, %v4988
      %v4990 = vpop.f32.mrb[0].mxu0
      %v4991 = vadd.f32 0.0, %v4990
      %v4992 = vpop.f32.mrb[0].mxu0
      %v4993 = vadd.f32 0.0, %v4992
      %4994 = vmatprep.mubr.bf16.mxu0 0
      %4995 = vmatmul.mubr.bf16.gmra.mrb[0].mxu0 %v4549
      %v4996 = vpop.f32.mrb[0].mxu0
      %v4997 = vadd.f32 0.0, %v4996
      %v4998 = vpop.f32.mrb[0].mxu0
      %v4999 = vadd.f32 0.0, %v4998
      %v5000 = vpop.f32.mrb[0].mxu0
      %v5001 = vadd.f32 0.0, %v5000
      %v5002 = vpop.f32.mrb[0].mxu0
      %v5003 = vadd.f32 0.0, %v5002
      %5004 = vmatprep.mubr.bf16.mxu0 0
      %5005 = vmatmul.mubr.bf16.gmra.mrb[0].mxu0 %v4552
      %v5006 = vpop.f32.mrb[0].mxu0
      %v5007 = vadd.f32 0.0, %v5006
      %v5008 = vpop.f32.mrb[0].mxu0
      %v5009 = vadd.f32 0.0, %v5008
      %v5010 = vpop.f32.mrb[0].mxu0
      %v5011 = vadd.f32 0.0, %v5010
      %v5012 = vpop.f32.mrb[0].mxu0
      %v5013 = vadd.f32 0.0, %v5012
      %5014 = vmatprep.mubr.bf16.mxu0 0
      %5015 = vmatmul.mubr.bf16.gmra.mrb[0].mxu0 %v4555
      %v5016 = vpop.f32.mrb[0].mxu0
      %v5017 = vadd.f32 0.0, %v5016
      %v5018 = vpop.f32.mrb[0].mxu0
      %v5019 = vadd.f32 0.0, %v5018
      %v5020 = vpop.f32.mrb[0].mxu0
      %v5021 = vadd.f32 0.0, %v5020
      %v5022 = vpop.f32.mrb[0].mxu0
      %v5023 = vadd.f32 0.0, %v5022
      %5024 = vmatprep.mubr.bf16.mxu0 0
      %5025 = vmatmul.mubr.bf16.gmra.mrb[0].mxu0 %v4558
      %v5026 = vpop.f32.mrb[0].mxu0
      %v5027 = vadd.f32 0.0, %v5026
      %v5028 = vpop.f32.mrb[0].mxu0
      %v5029 = vadd.f32 0.0, %v5028
      %v5030 = vpop.f32.mrb[0].mxu0
      %v5031 = vadd.f32 0.0, %v5030
      %v5032 = vpop.f32.mrb[0].mxu0
      %v5033 = vadd.f32 0.0, %v5032
      %5034 = vmatprep.mubr.bf16.mxu0 0
      %5035 = vmatmul.mubr.bf16.gmra.mrb[0].mxu0 %v4561
      %v5036 = vpop.f32.mrb[0].mxu0
      %v5037 = vadd.f32 0.0, %v5036
      %v5038 = vpop.f32.mrb[0].mxu0
      %v5039 = vadd.f32 0.0, %v5038
      %v5040 = vpop.f32.mrb[0].mxu0
      %v5041 = vadd.f32 0.0, %v5040
      %v5042 = vpop.f32.mrb[0].mxu0
      %v5043 = vadd.f32 0.0, %v5042
      %5044 = vdwg.mxu0
      %v5045 = vmax.f32 %v4694, %v4696
      %5046 = vmax.xlane.f32.xlu0 %v5045
      %v5047 = vpop.xlane.xlu0 %5046
      %v5048 = vmax.f32 %v4698, %v4700
      %5049 = vmax.xlane.f32.xlu0 %v5048
      %v5050 = vpop.xlane.xlu0 %5049
      %v5051 = vmax.f32 %v4704, %v4706
      %5052 = vmax.xlane.f32.xlu0 %v5051
      %v5053 = vpop.xlane.xlu0 %5052
      %v5054 = vmax.f32 %v4708, %v4710
      %5055 = vmax.xlane.f32.xlu0 %v5054
      %v5056 = vpop.xlane.xlu0 %5055
      %v5057 = vmax.f32 %v4714, %v4716
      %5058 = vmax.xlane.f32.xlu0 %v5057
      %v5059 = vpop.xlane.xlu0 %5058
      %v5060 = vmax.f32 %v4718, %v4720
      %5061 = vmax.xlane.f32.xlu0 %v5060
      %v5062 = vpop.xlane.xlu0 %5061
      %v5063 = vmax.f32 %v4724, %v4726
      %5064 = vmax.xlane.f32.xlu0 %v5063
      %v5065 = vpop.xlane.xlu0 %5064
      %v5066 = vmax.f32 %v4728, %v4730
      %5067 = vmax.xlane.f32.xlu0 %v5066
      %v5068 = vpop.xlane.xlu0 %5067
      %v5069 = vmax.f32 %v4734, %v4736
      %5070 = vmax.xlane.f32.xlu0 %v5069
      %v5071 = vpop.xlane.xlu0 %5070
      %v5072 = vmax.f32 %v4738, %v4740
      %5073 = vmax.xlane.f32.xlu0 %v5072
      %v5074 = vpop.xlane.xlu0 %5073
      %v5075 = vmax.f32 %v4744, %v4746
      %5076 = vmax.xlane.f32.xlu0 %v5075
      %v5077 = vpop.xlane.xlu0 %5076
      %v5078 = vmax.f32 %v4748, %v4750
      %5079 = vmax.xlane.f32.xlu0 %v5078
      %v5080 = vpop.xlane.xlu0 %5079
      %v5081 = vmax.f32 %v4754, %v4756
      %5082 = vmax.xlane.f32.xlu0 %v5081
      %v5083 = vpop.xlane.xlu0 %5082
      %v5084 = vmax.f32 %v4758, %v4760
      %5085 = vmax.xlane.f32.xlu0 %v5084
      %v5086 = vpop.xlane.xlu0 %5085
      %v5087 = vmax.f32 %v4764, %v4766
      %5088 = vmax.xlane.f32.xlu0 %v5087
      %v5089 = vpop.xlane.xlu0 %5088
      %v5090 = vmax.f32 %v4768, %v4770
      %5091 = vmax.xlane.f32.xlu0 %v5090
      %v5092 = vpop.xlane.xlu0 %5091
      %v5093 = vmax.f32 %v4774, %v4776
      %5094 = vmax.xlane.f32.xlu0 %v5093
      %v5095 = vpop.xlane.xlu0 %5094
      %v5096 = vmax.f32 %v4778, %v4780
      %5097 = vmax.xlane.f32.xlu0 %v5096
      %v5098 = vpop.xlane.xlu0 %5097
      %v5099 = vmax.f32 %v4784, %v4786
      %5100 = vmax.xlane.f32.xlu0 %v5099
      %v5101 = vpop.xlane.xlu0 %5100
      %v5102 = vmax.f32 %v4788, %v4790
      %5103 = vmax.xlane.f32.xlu0 %v5102
      %v5104 = vpop.xlane.xlu0 %5103
      %v5105 = vmax.f32 %v4794, %v4796
      %5106 = vmax.xlane.f32.xlu0 %v5105
      %v5107 = vpop.xlane.xlu0 %5106
      %v5108 = vmax.f32 %v4798, %v4800
      %5109 = vmax.xlane.f32.xlu0 %v5108
      %v5110 = vpop.xlane.xlu0 %5109
      %v5111 = vmax.f32 %v4804, %v4806
      %5112 = vmax.xlane.f32.xlu0 %v5111
      %v5113 = vpop.xlane.xlu0 %5112
      %v5114 = vmax.f32 %v4808, %v4810
      %5115 = vmax.xlane.f32.xlu0 %v5114
      %v5116 = vpop.xlane.xlu0 %5115
      %v5117 = vmax.f32 %v4814, %v4816
      %5118 = vmax.xlane.f32.xlu0 %v5117
      %v5119 = vpop.xlane.xlu0 %5118
      %v5120 = vmax.f32 %v4818, %v4820
      %5121 = vmax.xlane.f32.xlu0 %v5120
      %v5122 = vpop.xlane.xlu0 %5121
      %v5123 = vmax.f32 %v4824, %v4826
      %5124 = vmax.xlane.f32.xlu0 %v5123
      %v5125 = vpop.xlane.xlu0 %5124
      %v5126 = vmax.f32 %v4828, %v4830
      %5127 = vmax.xlane.f32.xlu0 %v5126
      %v5128 = vpop.xlane.xlu0 %5127
      %v5129 = vmax.f32 %v4834, %v4836
      %5130 = vmax.xlane.f32.xlu0 %v5129
      %v5131 = vpop.xlane.xlu0 %5130
      %v5132 = vmax.f32 %v4838, %v4840
      %5133 = vmax.xlane.f32.xlu0 %v5132
      %v5134 = vpop.xlane.xlu0 %5133
      %v5135 = vmax.f32 %v4844, %v4846
      %5136 = vmax.xlane.f32.xlu0 %v5135
      %v5137 = vpop.xlane.xlu0 %5136
      %v5138 = vmax.f32 %v4848, %v4850
      %5139 = vmax.xlane.f32.xlu0 %v5138
      %v5140 = vpop.xlane.xlu0 %5139
      %v5141 = vsub.f32 %v4694, %v5047
      %v5142 = vsub.f32 %v4696, %v5047
      %v5143 = vsub.f32 %v4698, %v5050
      %v5144 = vsub.f32 %v4700, %v5050
      %v5145 = vsub.f32 %v4704, %v5053
      %v5146 = vsub.f32 %v4706, %v5053
      %v5147 = vsub.f32 %v4708, %v5056
      %v5148 = vsub.f32 %v4710, %v5056
      %v5149 = vsub.f32 %v4714, %v5059
      %v5150 = vsub.f32 %v4716, %v5059
      %v5151 = vsub.f32 %v4718, %v5062
      %v5152 = vsub.f32 %v4720, %v5062
      %v5153 = vsub.f32 %v4724, %v5065
      %v5154 = vsub.f32 %v4726, %v5065
      %v5155 = vsub.f32 %v4728, %v5068
      %v5156 = vsub.f32 %v4730, %v5068
      %v5157 = vsub.f32 %v4734, %v5071
      %v5158 = vsub.f32 %v4736, %v5071
      %v5159 = vsub.f32 %v4738, %v5074
      %v5160 = vsub.f32 %v4740, %v5074
      %v5161 = vsub.f32 %v4744, %v5077
      %v5162 = vsub.f32 %v4746, %v5077
      %v5163 = vsub.f32 %v4748, %v5080
      %v5164 = vsub.f32 %v4750, %v5080
      %v5165 = vsub.f32 %v4754, %v5083
      %v5166 = vsub.f32 %v4756, %v5083
      %v5167 = vsub.f32 %v4758, %v5086
      %v5168 = vsub.f32 %v4760, %v5086
      %v5169 = vsub.f32 %v4764, %v5089
      %v5170 = vsub.f32 %v4766, %v5089
      %v5171 = vsub.f32 %v4768, %v5092
      %v5172 = vsub.f32 %v4770, %v5092
      %v5173 = vsub.f32 %v4774, %v5095
      %v5174 = vsub.f32 %v4776, %v5095
      %v5175 = vsub.f32 %v4778, %v5098
      %v5176 = vsub.f32 %v4780, %v5098
      %v5177 = vsub.f32 %v4784, %v5101
      %v5178 = vsub.f32 %v4786, %v5101
      %v5179 = vsub.f32 %v4788, %v5104
      %v5180 = vsub.f32 %v4790, %v5104
      %v5181 = vsub.f32 %v4794, %v5107
      %v5182 = vsub.f32 %v4796, %v5107
      %v5183 = vsub.f32 %v4798, %v5110
      %v5184 = vsub.f32 %v4800, %v5110
      %v5185 = vsub.f32 %v4804, %v5113
      %v5186 = vsub.f32 %v4806, %v5113
      %v5187 = vsub.f32 %v4808, %v5116
      %v5188 = vsub.f32 %v4810, %v5116
      %v5189 = vsub.f32 %v4814, %v5119
      %v5190 = vsub.f32 %v4816, %v5119
      %v5191 = vsub.f32 %v4818, %v5122
      %v5192 = vsub.f32 %v4820, %v5122
      %v5193 = vsub.f32 %v4824, %v5125
      %v5194 = vsub.f32 %v4826, %v5125
      %v5195 = vsub.f32 %v4828, %v5128
      %v5196 = vsub.f32 %v4830, %v5128
      %v5197 = vsub.f32 %v4834, %v5131
      %v5198 = vsub.f32 %v4836, %v5131
      %v5199 = vsub.f32 %v4838, %v5134
      %v5200 = vsub.f32 %v4840, %v5134
      %v5201 = vsub.f32 %v4844, %v5137
      %v5202 = vsub.f32 %v4846, %v5137
      %v5203 = vsub.f32 %v4848, %v5140
      %v5204 = vsub.f32 %v4850, %v5140
      %v5205 = vmul.f32 %v5141, 1.442695
      %v5206 = vpow.pop %v5205
      %v5207 = vmul.f32 %v5142, 1.442695
      %v5208 = vpow.pop %v5207
      %v5209 = vmul.f32 %v5143, 1.442695
      %v5210 = vpow.pop %v5209
      %v5211 = vmul.f32 %v5144, 1.442695
      %v5212 = vpow.pop %v5211
      %v5213 = vmul.f32 %v5145, 1.442695
      %v5214 = vpow.pop %v5213
      %v5215 = vmul.f32 %v5146, 1.442695
      %v5216 = vpow.pop %v5215
      %v5217 = vmul.f32 %v5147, 1.442695
      %v5218 = vpow.pop %v5217
      %v5219 = vmul.f32 %v5148, 1.442695
      %v5220 = vpow.pop %v5219
      %v5221 = vmul.f32 %v5149, 1.442695
      %v5222 = vpow.pop %v5221
      %v5223 = vmul.f32 %v5150, 1.442695
      %v5224 = vpow.pop %v5223
      %v5225 = vmul.f32 %v5151, 1.442695
      %v5226 = vpow.pop %v5225
      %v5227 = vmul.f32 %v5152, 1.442695
      %v5228 = vpow.pop %v5227
      %v5229 = vmul.f32 %v5153, 1.442695
      %v5230 = vpow.pop %v5229
      %v5231 = vmul.f32 %v5154, 1.442695
      %v5232 = vpow.pop %v5231
      %v5233 = vmul.f32 %v5155, 1.442695
      %v5234 = vpow.pop %v5233
      %v5235 = vmul.f32 %v5156, 1.442695
      %v5236 = vpow.pop %v5235
      %v5237 = vmul.f32 %v5157, 1.442695
      %v5238 = vpow.pop %v5237
      %v5239 = vmul.f32 %v5158, 1.442695
      %v5240 = vpow.pop %v5239
      %v5241 = vmul.f32 %v5159, 1.442695
      %v5242 = vpow.pop %v5241
      %v5243 = vmul.f32 %v5160, 1.442695
      %v5244 = vpow.pop %v5243
      %v5245 = vmul.f32 %v5161, 1.442695
      %v5246 = vpow.pop %v5245
      %v5247 = vmul.f32 %v5162, 1.442695
      %v5248 = vpow.pop %v5247
      %v5249 = vmul.f32 %v5163, 1.442695
      %v5250 = vpow.pop %v5249
      %v5251 = vmul.f32 %v5164, 1.442695
      %v5252 = vpow.pop %v5251
      %v5253 = vmul.f32 %v5165, 1.442695
      %v5254 = vpow.pop %v5253
      %v5255 = vmul.f32 %v5166, 1.442695
      %v5256 = vpow.pop %v5255
      %v5257 = vmul.f32 %v5167, 1.442695
      %v5258 = vpow.pop %v5257
      %v5259 = vmul.f32 %v5168, 1.442695
      %v5260 = vpow.pop %v5259
      %v5261 = vmul.f32 %v5169, 1.442695
      %v5262 = vpow.pop %v5261
      %v5263 = vmul.f32 %v5170, 1.442695
      %v5264 = vpow.pop %v5263
      %v5265 = vmul.f32 %v5171, 1.442695
      %v5266 = vpow.pop %v5265
      %v5267 = vmul.f32 %v5172, 1.442695
      %v5268 = vpow.pop %v5267
      %v5269 = vmul.f32 %v5173, 1.442695
      %v5270 = vpow.pop %v5269
      %v5271 = vmul.f32 %v5174, 1.442695
      %v5272 = vpow.pop %v5271
      %v5273 = vmul.f32 %v5175, 1.442695
      %v5274 = vpow.pop %v5273
      %v5275 = vmul.f32 %v5176, 1.442695
      %v5276 = vpow.pop %v5275
      %v5277 = vmul.f32 %v5177, 1.442695
      %v5278 = vpow.pop %v5277
      %v5279 = vmul.f32 %v5178, 1.442695
      %v5280 = vpow.pop %v5279
      %v5281 = vmul.f32 %v5179, 1.442695
      %v5282 = vpow.pop %v5281
      %v5283 = vmul.f32 %v5180, 1.442695
      %v5284 = vpow.pop %v5283
      %v5285 = vmul.f32 %v5181, 1.442695
      %v5286 = vpow.pop %v5285
      %v5287 = vmul.f32 %v5182, 1.442695
      %v5288 = vpow.pop %v5287
      %v5289 = vmul.f32 %v5183, 1.442695
      %v5290 = vpow.pop %v5289
      %v5291 = vmul.f32 %v5184, 1.442695
      %v5292 = vpow.pop %v5291
      %v5293 = vmul.f32 %v5185, 1.442695
      %v5294 = vpow.pop %v5293
      %v5295 = vmul.f32 %v5186, 1.442695
      %v5296 = vpow.pop %v5295
      %v5297 = vmul.f32 %v5187, 1.442695
      %v5298 = vpow.pop %v5297
      %v5299 = vmul.f32 %v5188, 1.442695
      %v5300 = vpow.pop %v5299
      %v5301 = vmul.f32 %v5189, 1.442695
      %v5302 = vpow.pop %v5301
      %v5303 = vmul.f32 %v5190, 1.442695
      %v5304 = vpow.pop %v5303
      %v5305 = vmul.f32 %v5191, 1.442695
      %v5306 = vpow.pop %v5305
      %v5307 = vmul.f32 %v5192, 1.442695
      %v5308 = vpow.pop %v5307
      %v5309 = vmul.f32 %v5193, 1.442695
      %v5310 = vpow.pop %v5309
      %v5311 = vmul.f32 %v5194, 1.442695
      %v5312 = vpow.pop %v5311
      %v5313 = vmul.f32 %v5195, 1.442695
      %v5314 = vpow.pop %v5313
      %v5315 = vmul.f32 %v5196, 1.442695
      %v5316 = vpow.pop %v5315
      %v5317 = vmul.f32 %v5197, 1.442695
      %v5318 = vpow.pop %v5317
      %v5319 = vmul.f32 %v5198, 1.442695
      %v5320 = vpow.pop %v5319
      %v5321 = vmul.f32 %v5199, 1.442695
      %v5322 = vpow.pop %v5321
      %v5323 = vmul.f32 %v5200, 1.442695
      %v5324 = vpow.pop %v5323
      %v5325 = vmul.f32 %v5201, 1.442695
      %v5326 = vpow.pop %v5325
      %v5327 = vmul.f32 %v5202, 1.442695
      %v5328 = vpow.pop %v5327
      %v5329 = vmul.f32 %v5203, 1.442695
      %v5330 = vpow.pop %v5329
      %v5331 = vmul.f32 %v5204, 1.442695
      %v5332 = vpow.pop %v5331
      %v5333 = vadd.f32 %v5206, %v5208
      %5334 = vadd.xlane.f32.xlu0 %v5333
      %v5335 = vpop.xlane.xlu0 %5334
      %v5336 = vadd.f32 %v5210, %v5212
      %5337 = vadd.xlane.f32.xlu0 %v5336
      %v5338 = vpop.xlane.xlu0 %5337
      %v5339 = vadd.f32 %v5214, %v5216
      %5340 = vadd.xlane.f32.xlu0 %v5339
      %v5341 = vpop.xlane.xlu0 %5340
      %v5342 = vadd.f32 %v5218, %v5220
      %5343 = vadd.xlane.f32.xlu0 %v5342
      %v5344 = vpop.xlane.xlu0 %5343
      %v5345 = vadd.f32 %v5222, %v5224
      %5346 = vadd.xlane.f32.xlu0 %v5345
      %v5347 = vpop.xlane.xlu0 %5346
      %v5348 = vadd.f32 %v5226, %v5228
      %5349 = vadd.xlane.f32.xlu0 %v5348
      %v5350 = vpop.xlane.xlu0 %5349
      %v5351 = vadd.f32 %v5230, %v5232
      %5352 = vadd.xlane.f32.xlu0 %v5351
      %v5353 = vpop.xlane.xlu0 %5352
      %v5354 = vadd.f32 %v5234, %v5236
      %5355 = vadd.xlane.f32.xlu0 %v5354
      %v5356 = vpop.xlane.xlu0 %5355
      %v5357 = vadd.f32 %v5238, %v5240
      %5358 = vadd.xlane.f32.xlu0 %v5357
      %v5359 = vpop.xlane.xlu0 %5358
      %v5360 = vadd.f32 %v5242, %v5244
      %5361 = vadd.xlane.f32.xlu0 %v5360
      %v5362 = vpop.xlane.xlu0 %5361
      %v5363 = vadd.f32 %v5246, %v5248
      %5364 = vadd.xlane.f32.xlu0 %v5363
      %v5365 = vpop.xlane.xlu0 %5364
      %v5366 = vadd.f32 %v5250, %v5252
      %5367 = vadd.xlane.f32.xlu0 %v5366
      %v5368 = vpop.xlane.xlu0 %5367
      %v5369 = vadd.f32 %v5254, %v5256
      %5370 = vadd.xlane.f32.xlu0 %v5369
      %v5371 = vpop.xlane.xlu0 %5370
      %v5372 = vadd.f32 %v5258, %v5260
      %5373 = vadd.xlane.f32.xlu0 %v5372
      %v5374 = vpop.xlane.xlu0 %5373
      %v5375 = vadd.f32 %v5262, %v5264
      %5376 = vadd.xlane.f32.xlu0 %v5375
      %v5377 = vpop.xlane.xlu0 %5376
      %v5378 = vadd.f32 %v5266, %v5268
      %5379 = vadd.xlane.f32.xlu0 %v5378
      %v5380 = vpop.xlane.xlu0 %5379
      %v5381 = vadd.f32 %v5270, %v5272
      %5382 = vadd.xlane.f32.xlu0 %v5381
      %v5383 = vpop.xlane.xlu0 %5382
      %v5384 = vadd.f32 %v5274, %v5276
      %5385 = vadd.xlane.f32.xlu0 %v5384
      %v5386 = vpop.xlane.xlu0 %5385
      %v5387 = vadd.f32 %v5278, %v5280
      %5388 = vadd.xlane.f32.xlu0 %v5387
      %v5389 = vpop.xlane.xlu0 %5388
      %v5390 = vadd.f32 %v5282, %v5284
      %5391 = vadd.xlane.f32.xlu0 %v5390
      %v5392 = vpop.xlane.xlu0 %5391
      %v5393 = vadd.f32 %v5286, %v5288
      %5394 = vadd.xlane.f32.xlu0 %v5393
      %v5395 = vpop.xlane.xlu0 %5394
      %v5396 = vadd.f32 %v5290, %v5292
      %5397 = vadd.xlane.f32.xlu0 %v5396
      %v5398 = vpop.xlane.xlu0 %5397
      %v5399 = vadd.f32 %v5294, %v5296
      %5400 = vadd.xlane.f32.xlu0 %v5399
      %v5401 = vpop.xlane.xlu0 %5400
      %v5402 = vadd.f32 %v5298, %v5300
      %5403 = vadd.xlane.f32.xlu0 %v5402
      %v5404 = vpop.xlane.xlu0 %5403
      %v5405 = vadd.f32 %v5302, %v5304
      %5406 = vadd.xlane.f32.xlu0 %v5405
      %v5407 = vpop.xlane.xlu0 %5406
      %v5408 = vadd.f32 %v5306, %v5308
      %5409 = vadd.xlane.f32.xlu0 %v5408
      %v5410 = vpop.xlane.xlu0 %5409
      %v5411 = vadd.f32 %v5310, %v5312
      %5412 = vadd.xlane.f32.xlu0 %v5411
      %v5413 = vpop.xlane.xlu0 %5412
      %v5414 = vadd.f32 %v5314, %v5316
      %5415 = vadd.xlane.f32.xlu0 %v5414
      %v5416 = vpop.xlane.xlu0 %5415
      %v5417 = vadd.f32 %v5318, %v5320
      %5418 = vadd.xlane.f32.xlu0 %v5417
      %v5419 = vpop.xlane.xlu0 %5418
      %v5420 = vadd.f32 %v5322, %v5324
      %5421 = vadd.xlane.f32.xlu0 %v5420
      %v5422 = vpop.xlane.xlu0 %5421
      %v5423 = vadd.f32 %v5326, %v5328
      %5424 = vadd.xlane.f32.xlu0 %v5423
      %v5425 = vpop.xlane.xlu0 %5424
      %v5426 = vadd.f32 %v5330, %v5332
      %5427 = vadd.xlane.f32.xlu0 %v5426
      %v5428 = vpop.xlane.xlu0 %5427
      %v5429 = vrcp.pop %v5335
      %v5430 = vrcp.pop %v5338
      %v5431 = vrcp.pop %v5341
      %v5432 = vrcp.pop %v5344
      %v5433 = vrcp.pop %v5347
      %v5434 = vrcp.pop %v5350
      %v5435 = vrcp.pop %v5353
      %v5436 = vrcp.pop %v5356
      %v5437 = vrcp.pop %v5359
      %v5438 = vrcp.pop %v5362
      %v5439 = vrcp.pop %v5365
      %v5440 = vrcp.pop %v5368
      %v5441 = vrcp.pop %v5371
      %v5442 = vrcp.pop %v5374
      %v5443 = vrcp.pop %v5377
      %v5444 = vrcp.pop %v5380
      %v5445 = vrcp.pop %v5383
      %v5446 = vrcp.pop %v5386
      %v5447 = vrcp.pop %v5389
      %v5448 = vrcp.pop %v5392
      %v5449 = vrcp.pop %v5395
      %v5450 = vrcp.pop %v5398
      %v5451 = vrcp.pop %v5401
      %v5452 = vrcp.pop %v5404
      %v5453 = vrcp.pop %v5407
      %v5454 = vrcp.pop %v5410
      %v5455 = vrcp.pop %v5413
      %v5456 = vrcp.pop %v5416
      %v5457 = vrcp.pop %v5419
      %v5458 = vrcp.pop %v5422
      %v5459 = vrcp.pop %v5425
      %v5460 = vrcp.pop %v5428
      %v5461 = vmul.f32 %v5206, %v5429
      %v5462 = vmul.f32 %v5208, %v5429
      %v5463 = vmul.f32 %v5210, %v5430
      %v5464 = vmul.f32 %v5212, %v5430
      %v5465 = vmul.f32 %v5214, %v5431
      %v5466 = vmul.f32 %v5216, %v5431
      %v5467 = vmul.f32 %v5218, %v5432
      %v5468 = vmul.f32 %v5220, %v5432
      %v5469 = vmul.f32 %v5222, %v5433
      %v5470 = vmul.f32 %v5224, %v5433
      %v5471 = vmul.f32 %v5226, %v5434
      %v5472 = vmul.f32 %v5228, %v5434
      %v5473 = vmul.f32 %v5230, %v5435
      %v5474 = vmul.f32 %v5232, %v5435
      %v5475 = vmul.f32 %v5234, %v5436
      %v5476 = vmul.f32 %v5236, %v5436
      %v5477 = vmul.f32 %v5238, %v5437
      %v5478 = vmul.f32 %v5240, %v5437
      %v5479 = vmul.f32 %v5242, %v5438
      %v5480 = vmul.f32 %v5244, %v5438
      %v5481 = vmul.f32 %v5246, %v5439
      %v5482 = vmul.f32 %v5248, %v5439
      %v5483 = vmul.f32 %v5250, %v5440
      %v5484 = vmul.f32 %v5252, %v5440
      %v5485 = vmul.f32 %v5254, %v5441
      %v5486 = vmul.f32 %v5256, %v5441
      %v5487 = vmul.f32 %v5258, %v5442
      %v5488 = vmul.f32 %v5260, %v5442
      %v5489 = vmul.f32 %v5262, %v5443
      %v5490 = vmul.f32 %v5264, %v5443
      %v5491 = vmul.f32 %v5266, %v5444
      %v5492 = vmul.f32 %v5268, %v5444
      %v5493 = vmul.f32 %v5270, %v5445
      %v5494 = vmul.f32 %v5272, %v5445
      %v5495 = vmul.f32 %v5274, %v5446
      %v5496 = vmul.f32 %v5276, %v5446
      %v5497 = vmul.f32 %v5278, %v5447
      %v5498 = vmul.f32 %v5280, %v5447
      %v5499 = vmul.f32 %v5282, %v5448
      %v5500 = vmul.f32 %v5284, %v5448
      %v5501 = vmul.f32 %v5286, %v5449
      %v5502 = vmul.f32 %v5288, %v5449
      %v5503 = vmul.f32 %v5290, %v5450
      %v5504 = vmul.f32 %v5292, %v5450
      %v5505 = vmul.f32 %v5294, %v5451
      %v5506 = vmul.f32 %v5296, %v5451
      %v5507 = vmul.f32 %v5298, %v5452
      %v5508 = vmul.f32 %v5300, %v5452
      %v5509 = vmul.f32 %v5302, %v5453
      %v5510 = vmul.f32 %v5304, %v5453
      %v5511 = vmul.f32 %v5306, %v5454
      %v5512 = vmul.f32 %v5308, %v5454
      %v5513 = vmul.f32 %v5310, %v5455
      %v5514 = vmul.f32 %v5312, %v5455
      %v5515 = vmul.f32 %v5314, %v5456
      %v5516 = vmul.f32 %v5316, %v5456
      %v5517 = vmul.f32 %v5318, %v5457
      %v5518 = vmul.f32 %v5320, %v5457
      %v5519 = vmul.f32 %v5322, %v5458
      %v5520 = vmul.f32 %v5324, %v5458
      %v5521 = vmul.f32 %v5326, %v5459
      %v5522 = vmul.f32 %v5328, %v5459
      %v5523 = vmul.f32 %v5330, %v5460
      %v5524 = vmul.f32 %v5332, %v5460
      %v5525 = vpack.c.bf16 %v5463, %v5461
      %v5526 = vpack.c.bf16 %v5464, %v5462
      %v5527 = vpack.c.bf16 %v5467, %v5465
      %v5528 = vpack.c.bf16 %v5468, %v5466
      %v5529 = vpack.c.bf16 %v5471, %v5469
      %v5530 = vpack.c.bf16 %v5472, %v5470
      %v5531 = vpack.c.bf16 %v5475, %v5473
      %v5532 = vpack.c.bf16 %v5476, %v5474
      %v5533 = vpack.c.bf16 %v5479, %v5477
      %v5534 = vpack.c.bf16 %v5480, %v5478
      %v5535 = vpack.c.bf16 %v5483, %v5481
      %v5536 = vpack.c.bf16 %v5484, %v5482
      %v5537 = vpack.c.bf16 %v5487, %v5485
      %v5538 = vpack.c.bf16 %v5488, %v5486
      %v5539 = vpack.c.bf16 %v5491, %v5489
      %v5540 = vpack.c.bf16 %v5492, %v5490
      %v5541 = vpack.c.bf16 %v5495, %v5493
      %v5542 = vpack.c.bf16 %v5496, %v5494
      %v5543 = vpack.c.bf16 %v5499, %v5497
      %v5544 = vpack.c.bf16 %v5500, %v5498
      %v5545 = vpack.c.bf16 %v5503, %v5501
      %v5546 = vpack.c.bf16 %v5504, %v5502
      %v5547 = vpack.c.bf16 %v5507, %v5505
      %v5548 = vpack.c.bf16 %v5508, %v5506
      %v5549 = vpack.c.bf16 %v5511, %v5509
      %v5550 = vpack.c.bf16 %v5512, %v5510
      %v5551 = vpack.c.bf16 %v5515, %v5513
      %v5552 = vpack.c.bf16 %v5516, %v5514
      %v5553 = vpack.c.bf16 %v5519, %v5517
      %v5554 = vpack.c.bf16 %v5520, %v5518
      %v5555 = vpack.c.bf16 %v5523, %v5521
      %v5556 = vpack.c.bf16 %v5524, %v5522
      %v5557 = vmax.f32 %v4887, %v4889
      %5558 = vmax.xlane.f32.xlu0 %v5557
      %v5559 = vpop.xlane.xlu0 %5558
      %v5560 = vmax.f32 %v4891, %v4893
      %5561 = vmax.xlane.f32.xlu0 %v5560
      %v5562 = vpop.xlane.xlu0 %5561
      %v5563 = vmax.f32 %v4897, %v4899
      %5564 = vmax.xlane.f32.xlu0 %v5563
      %v5565 = vpop.xlane.xlu0 %5564
      %v5566 = vmax.f32 %v4901, %v4903
      %5567 = vmax.xlane.f32.xlu0 %v5566
      %v5568 = vpop.xlane.xlu0 %5567
      %v5569 = vmax.f32 %v4907, %v4909
      %5570 = vmax.xlane.f32.xlu0 %v5569
      %v5571 = vpop.xlane.xlu0 %5570
      %v5572 = vmax.f32 %v4911, %v4913
      %5573 = vmax.xlane.f32.xlu0 %v5572
      %v5574 = vpop.xlane.xlu0 %5573
      %v5575 = vmax.f32 %v4917, %v4919
      %5576 = vmax.xlane.f32.xlu0 %v5575
      %v5577 = vpop.xlane.xlu0 %5576
      %v5578 = vmax.f32 %v4921, %v4923
      %5579 = vmax.xlane.f32.xlu0 %v5578
      %v5580 = vpop.xlane.xlu0 %5579
      %v5581 = vmax.f32 %v4927, %v4929
      %5582 = vmax.xlane.f32.xlu0 %v5581
      %v5583 = vpop.xlane.xlu0 %5582
      %v5584 = vmax.f32 %v4931, %v4933
      %5585 = vmax.xlane.f32.xlu0 %v5584
      %v5586 = vpop.xlane.xlu0 %5585
      %v5587 = vmax.f32 %v4937, %v4939
      %5588 = vmax.xlane.f32.xlu0 %v5587
      %v5589 = vpop.xlane.xlu0 %5588
      %v5590 = vmax.f32 %v4941, %v4943
      %5591 = vmax.xlane.f32.xlu0 %v5590
      %v5592 = vpop.xlane.xlu0 %5591
      %v5593 = vmax.f32 %v4947, %v4949
      %5594 = vmax.xlane.f32.xlu0 %v5593
      %v5595 = vpop.xlane.xlu0 %5594
      %v5596 = vmax.f32 %v4951, %v4953
      %5597 = vmax.xlane.f32.xlu0 %v5596
      %v5598 = vpop.xlane.xlu0 %5597
      %v5599 = vmax.f32 %v4957, %v4959
      %5600 = vmax.xlane.f32.xlu0 %v5599
      %v5601 = vpop.xlane.xlu0 %5600
      %v5602 = vmax.f32 %v4961, %v4963
      %5603 = vmax.xlane.f32.xlu0 %v5602
      %v5604 = vpop.xlane.xlu0 %5603
      %v5605 = vmax.f32 %v4967, %v4969
      %5606 = vmax.xlane.f32.xlu0 %v5605
      %v5607 = vpop.xlane.xlu0 %5606
      %v5608 = vmax.f32 %v4971, %v4973
      %5609 = vmax.xlane.f32.xlu0 %v5608
      %v5610 = vpop.xlane.xlu0 %5609
      %v5611 = vmax.f32 %v4977, %v4979
      %5612 = vmax.xlane.f32.xlu0 %v5611
      %v5613 = vpop.xlane.xlu0 %5612
      %v5614 = vmax.f32 %v4981, %v4983
      %5615 = vmax.xlane.f32.xlu0 %v5614
      %v5616 = vpop.xlane.xlu0 %5615
      %v5617 = vmax.f32 %v4987, %v4989
      %5618 = vmax.xlane.f32.xlu0 %v5617
      %v5619 = vpop.xlane.xlu0 %5618
      %v5620 = vmax.f32 %v4991, %v4993
      %5621 = vmax.xlane.f32.xlu0 %v5620
      %v5622 = vpop.xlane.xlu0 %5621
      %v5623 = vmax.f32 %v4997, %v4999
      %5624 = vmax.xlane.f32.xlu0 %v5623
      %v5625 = vpop.xlane.xlu0 %5624
      %v5626 = vmax.f32 %v5001, %v5003
      %5627 = vmax.xlane.f32.xlu0 %v5626
      %v5628 = vpop.xlane.xlu0 %5627
      %v5629 = vmax.f32 %v5007, %v5009
      %5630 = vmax.xlane.f32.xlu0 %v5629
      %v5631 = vpop.xlane.xlu0 %5630
      %v5632 = vmax.f32 %v5011, %v5013
      %5633 = vmax.xlane.f32.xlu0 %v5632
      %v5634 = vpop.xlane.xlu0 %5633
      %v5635 = vmax.f32 %v5017, %v5019
      %5636 = vmax.xlane.f32.xlu0 %v5635
      %v5637 = vpop.xlane.xlu0 %5636
      %v5638 = vmax.f32 %v5021, %v5023
      %5639 = vmax.xlane.f32.xlu0 %v5638
      %v5640 = vpop.xlane.xlu0 %5639
      %v5641 = vmax.f32 %v5027, %v5029
      %5642 = vmax.xlane.f32.xlu0 %v5641
      %v5643 = vpop.xlane.xlu0 %5642
      %v5644 = vmax.f32 %v5031, %v5033
      %5645 = vmax.xlane.f32.xlu0 %v5644
      %v5646 = vpop.xlane.xlu0 %5645
      %v5647 = vmax.f32 %v5037, %v5039
      %5648 = vmax.xlane.f32.xlu0 %v5647
      %v5649 = vpop.xlane.xlu0 %5648
      %v5650 = vmax.f32 %v5041, %v5043
      %5651 = vmax.xlane.f32.xlu0 %v5650
      %v5652 = vpop.xlane.xlu0 %5651
      %v5653 = vsub.f32 %v4887, %v5559
      %v5654 = vsub.f32 %v4889, %v5559
      %v5655 = vsub.f32 %v4891, %v5562
      %v5656 = vsub.f32 %v4893, %v5562
      %v5657 = vsub.f32 %v4897, %v5565
      %v5658 = vsub.f32 %v4899, %v5565
      %v5659 = vsub.f32 %v4901, %v5568
      %v5660 = vsub.f32 %v4903, %v5568
      %v5661 = vsub.f32 %v4907, %v5571
      %v5662 = vsub.f32 %v4909, %v5571
      %v5663 = vsub.f32 %v4911, %v5574
      %v5664 = vsub.f32 %v4913, %v5574
      %v5665 = vsub.f32 %v4917, %v5577
      %v5666 = vsub.f32 %v4919, %v5577
      %v5667 = vsub.f32 %v4921, %v5580
      %v5668 = vsub.f32 %v4923, %v5580
      %v5669 = vsub.f32 %v4927, %v5583
      %v5670 = vsub.f32 %v4929, %v5583
      %v5671 = vsub.f32 %v4931, %v5586
      %v5672 = vsub.f32 %v4933, %v5586
      %v5673 = vsub.f32 %v4937, %v5589
      %v5674 = vsub.f32 %v4939, %v5589
      %v5675 = vsub.f32 %v4941, %v5592
      %v5676 = vsub.f32 %v4943, %v5592
      %v5677 = vsub.f32 %v4947, %v5595
      %v5678 = vsub.f32 %v4949, %v5595
      %v5679 = vsub.f32 %v4951, %v5598
      %v5680 = vsub.f32 %v4953, %v5598
      %v5681 = vsub.f32 %v4957, %v5601
      %v5682 = vsub.f32 %v4959, %v5601
      %v5683 = vsub.f32 %v4961, %v5604
      %v5684 = vsub.f32 %v4963, %v5604
      %v5685 = vsub.f32 %v4967, %v5607
      %v5686 = vsub.f32 %v4969, %v5607
      %v5687 = vsub.f32 %v4971, %v5610
      %v5688 = vsub.f32 %v4973, %v5610
      %v5689 = vsub.f32 %v4977, %v5613
      %v5690 = vsub.f32 %v4979, %v5613
      %v5691 = vsub.f32 %v4981, %v5616
      %v5692 = vsub.f32 %v4983, %v5616
      %v5693 = vsub.f32 %v4987, %v5619
      %v5694 = vsub.f32 %v4989, %v5619
      %v5695 = vsub.f32 %v4991, %v5622
      %v5696 = vsub.f32 %v4993, %v5622
      %v5697 = vsub.f32 %v4997, %v5625
      %v5698 = vsub.f32 %v4999, %v5625
      %v5699 = vsub.f32 %v5001, %v5628
      %v5700 = vsub.f32 %v5003, %v5628
      %v5701 = vsub.f32 %v5007, %v5631
      %v5702 = vsub.f32 %v5009, %v5631
      %v5703 = vsub.f32 %v5011, %v5634
      %v5704 = vsub.f32 %v5013, %v5634
      %v5705 = vsub.f32 %v5017, %v5637
      %v5706 = vsub.f32 %v5019, %v5637
      %v5707 = vsub.f32 %v5021, %v5640
      %v5708 = vsub.f32 %v5023, %v5640
      %v5709 = vsub.f32 %v5027, %v5643
      %v5710 = vsub.f32 %v5029, %v5643
      %v5711 = vsub.f32 %v5031, %v5646
      %v5712 = vsub.f32 %v5033, %v5646
      %v5713 = vsub.f32 %v5037, %v5649
      %v5714 = vsub.f32 %v5039, %v5649
      %v5715 = vsub.f32 %v5041, %v5652
      %v5716 = vsub.f32 %v5043, %v5652
      %v5717 = vmul.f32 %v5653, 1.442695
      %v5718 = vpow.pop %v5717
      %v5719 = vmul.f32 %v5654, 1.442695
      %v5720 = vpow.pop %v5719
      %v5721 = vmul.f32 %v5655, 1.442695
      %v5722 = vpow.pop %v5721
      %v5723 = vmul.f32 %v5656, 1.442695
      %v5724 = vpow.pop %v5723
      %v5725 = vmul.f32 %v5657, 1.442695
      %v5726 = vpow.pop %v5725
      %v5727 = vmul.f32 %v5658, 1.442695
      %v5728 = vpow.pop %v5727
      %v5729 = vmul.f32 %v5659, 1.442695
      %v5730 = vpow.pop %v5729
      %v5731 = vmul.f32 %v5660, 1.442695
      %v5732 = vpow.pop %v5731
      %v5733 = vmul.f32 %v5661, 1.442695
      %v5734 = vpow.pop %v5733
      %v5735 = vmul.f32 %v5662, 1.442695
      %v5736 = vpow.pop %v5735
      %v5737 = vmul.f32 %v5663, 1.442695
      %v5738 = vpow.pop %v5737
      %v5739 = vmul.f32 %v5664, 1.442695
      %v5740 = vpow.pop %v5739
      %v5741 = vmul.f32 %v5665, 1.442695
      %v5742 = vpow.pop %v5741
      %v5743 = vmul.f32 %v5666, 1.442695
      %v5744 = vpow.pop %v5743
      %v5745 = vmul.f32 %v5667, 1.442695
      %v5746 = vpow.pop %v5745
      %v5747 = vmul.f32 %v5668, 1.442695
      %v5748 = vpow.pop %v5747
      %v5749 = vmul.f32 %v5669, 1.442695
      %v5750 = vpow.pop %v5749
      %v5751 = vmul.f32 %v5670, 1.442695
      %v5752 = vpow.pop %v5751
      %v5753 = vmul.f32 %v5671, 1.442695
      %v5754 = vpow.pop %v5753
      %v5755 = vmul.f32 %v5672, 1.442695
      %v5756 = vpow.pop %v5755
      %v5757 = vmul.f32 %v5673, 1.442695
      %v5758 = vpow.pop %v5757
      %v5759 = vmul.f32 %v5674, 1.442695
      %v5760 = vpow.pop %v5759
      %v5761 = vmul.f32 %v5675, 1.442695
      %v5762 = vpow.pop %v5761
      %v5763 = vmul.f32 %v5676, 1.442695
      %v5764 = vpow.pop %v5763
      %v5765 = vmul.f32 %v5677, 1.442695
      %v5766 = vpow.pop %v5765
      %v5767 = vmul.f32 %v5678, 1.442695
      %v5768 = vpow.pop %v5767
      %v5769 = vmul.f32 %v5679, 1.442695
      %v5770 = vpow.pop %v5769
      %v5771 = vmul.f32 %v5680, 1.442695
      %v5772 = vpow.pop %v5771
      %v5773 = vmul.f32 %v5681, 1.442695
      %v5774 = vpow.pop %v5773
      %v5775 = vmul.f32 %v5682, 1.442695
      %v5776 = vpow.pop %v5775
      %v5777 = vmul.f32 %v5683, 1.442695
      %v5778 = vpow.pop %v5777
      %v5779 = vmul.f32 %v5684, 1.442695
      %v5780 = vpow.pop %v5779
      %v5781 = vmul.f32 %v5685, 1.442695
      %v5782 = vpow.pop %v5781
      %v5783 = vmul.f32 %v5686, 1.442695
      %v5784 = vpow.pop %v5783
      %v5785 = vmul.f32 %v5687, 1.442695
      %v5786 = vpow.pop %v5785
      %v5787 = vmul.f32 %v5688, 1.442695
      %v5788 = vpow.pop %v5787
      %v5789 = vmul.f32 %v5689, 1.442695
      %v5790 = vpow.pop %v5789
      %v5791 = vmul.f32 %v5690, 1.442695
      %v5792 = vpow.pop %v5791
      %v5793 = vmul.f32 %v5691, 1.442695
      %v5794 = vpow.pop %v5793
      %v5795 = vmul.f32 %v5692, 1.442695
      %v5796 = vpow.pop %v5795
      %v5797 = vmul.f32 %v5693, 1.442695
      %v5798 = vpow.pop %v5797
      %v5799 = vmul.f32 %v5694, 1.442695
      %v5800 = vpow.pop %v5799
      %v5801 = vmul.f32 %v5695, 1.442695
      %v5802 = vpow.pop %v5801
      %v5803 = vmul.f32 %v5696, 1.442695
      %v5804 = vpow.pop %v5803
      %v5805 = vmul.f32 %v5697, 1.442695
      %v5806 = vpow.pop %v5805
      %v5807 = vmul.f32 %v5698, 1.442695
      %v5808 = vpow.pop %v5807
      %v5809 = vmul.f32 %v5699, 1.442695
      %v5810 = vpow.pop %v5809
      %v5811 = vmul.f32 %v5700, 1.442695
      %v5812 = vpow.pop %v5811
      %v5813 = vmul.f32 %v5701, 1.442695
      %v5814 = vpow.pop %v5813
      %v5815 = vmul.f32 %v5702, 1.442695
      %v5816 = vpow.pop %v5815
      %v5817 = vmul.f32 %v5703, 1.442695
      %v5818 = vpow.pop %v5817
      %v5819 = vmul.f32 %v5704, 1.442695
      %v5820 = vpow.pop %v5819
      %v5821 = vmul.f32 %v5705, 1.442695
      %v5822 = vpow.pop %v5821
      %v5823 = vmul.f32 %v5706, 1.442695
      %v5824 = vpow.pop %v5823
      %v5825 = vmul.f32 %v5707, 1.442695
      %v5826 = vpow.pop %v5825
      %v5827 = vmul.f32 %v5708, 1.442695
      %v5828 = vpow.pop %v5827
      %v5829 = vmul.f32 %v5709, 1.442695
      %v5830 = vpow.pop %v5829
      %v5831 = vmul.f32 %v5710, 1.442695
      %v5832 = vpow.pop %v5831
      %v5833 = vmul.f32 %v5711, 1.442695
      %v5834 = vpow.pop %v5833
      %v5835 = vmul.f32 %v5712, 1.442695
      %v5836 = vpow.pop %v5835
      %v5837 = vmul.f32 %v5713, 1.442695
      %v5838 = vpow.pop %v5837
      %v5839 = vmul.f32 %v5714, 1.442695
      %v5840 = vpow.pop %v5839
      %v5841 = vmul.f32 %v5715, 1.442695
      %v5842 = vpow.pop %v5841
      %v5843 = vmul.f32 %v5716, 1.442695
      %v5844 = vpow.pop %v5843
      %v5845 = vadd.f32 %v5718, %v5720
      %5846 = vadd.xlane.f32.xlu0 %v5845
      %v5847 = vpop.xlane.xlu0 %5846
      %v5848 = vadd.f32 %v5722, %v5724
      %5849 = vadd.xlane.f32.xlu0 %v5848
      %v5850 = vpop.xlane.xlu0 %5849
      %v5851 = vadd.f32 %v5726, %v5728
      %5852 = vadd.xlane.f32.xlu0 %v5851
      %v5853 = vpop.xlane.xlu0 %5852
      %v5854 = vadd.f32 %v5730, %v5732
      %5855 = vadd.xlane.f32.xlu0 %v5854
      %v5856 = vpop.xlane.xlu0 %5855
      %v5857 = vadd.f32 %v5734, %v5736
      %5858 = vadd.xlane.f32.xlu0 %v5857
      %v5859 = vpop.xlane.xlu0 %5858
      %v5860 = vadd.f32 %v5738, %v5740
      %5861 = vadd.xlane.f32.xlu0 %v5860
      %v5862 = vpop.xlane.xlu0 %5861
      %v5863 = vadd.f32 %v5742, %v5744
      %5864 = vadd.xlane.f32.xlu0 %v5863
      %v5865 = vpop.xlane.xlu0 %5864
      %v5866 = vadd.f32 %v5746, %v5748
      %5867 = vadd.xlane.f32.xlu0 %v5866
      %v5868 = vpop.xlane.xlu0 %5867
      %v5869 = vadd.f32 %v5750, %v5752
      %5870 = vadd.xlane.f32.xlu0 %v5869
      %v5871 = vpop.xlane.xlu0 %5870
      %v5872 = vadd.f32 %v5754, %v5756
      %5873 = vadd.xlane.f32.xlu0 %v5872
      %v5874 = vpop.xlane.xlu0 %5873
      %v5875 = vadd.f32 %v5758, %v5760
      %5876 = vadd.xlane.f32.xlu0 %v5875
      %v5877 = vpop.xlane.xlu0 %5876
      %v5878 = vadd.f32 %v5762, %v5764
      %5879 = vadd.xlane.f32.xlu0 %v5878
      %v5880 = vpop.xlane.xlu0 %5879
      %v5881 = vadd.f32 %v5766, %v5768
      %5882 = vadd.xlane.f32.xlu0 %v5881
      %v5883 = vpop.xlane.xlu0 %5882
      %v5884 = vadd.f32 %v5770, %v5772
      %5885 = vadd.xlane.f32.xlu0 %v5884
      %v5886 = vpop.xlane.xlu0 %5885
      %v5887 = vadd.f32 %v5774, %v5776
      %5888 = vadd.xlane.f32.xlu0 %v5887
      %v5889 = vpop.xlane.xlu0 %5888
      %v5890 = vadd.f32 %v5778, %v5780
      %5891 = vadd.xlane.f32.xlu0 %v5890
      %v5892 = vpop.xlane.xlu0 %5891
      %v5893 = vadd.f32 %v5782, %v5784
      %5894 = vadd.xlane.f32.xlu0 %v5893
      %v5895 = vpop.xlane.xlu0 %5894
      %v5896 = vadd.f32 %v5786, %v5788
      %5897 = vadd.xlane.f32.xlu0 %v5896
      %v5898 = vpop.xlane.xlu0 %5897
      %v5899 = vadd.f32 %v5790, %v5792
      %5900 = vadd.xlane.f32.xlu0 %v5899
      %v5901 = vpop.xlane.xlu0 %5900
      %v5902 = vadd.f32 %v5794, %v5796
      %5903 = vadd.xlane.f32.xlu0 %v5902
      %v5904 = vpop.xlane.xlu0 %5903
      %v5905 = vadd.f32 %v5798, %v5800
      %5906 = vadd.xlane.f32.xlu0 %v5905
      %v5907 = vpop.xlane.xlu0 %5906
      %v5908 = vadd.f32 %v5802, %v5804
      %5909 = vadd.xlane.f32.xlu0 %v5908
      %v5910 = vpop.xlane.xlu0 %5909
      %v5911 = vadd.f32 %v5806, %v5808
      %5912 = vadd.xlane.f32.xlu0 %v5911
      %v5913 = vpop.xlane.xlu0 %5912
      %v5914 = vadd.f32 %v5810, %v5812
      %5915 = vadd.xlane.f32.xlu0 %v5914
      %v5916 = vpop.xlane.xlu0 %5915
      %v5917 = vadd.f32 %v5814, %v5816
      %5918 = vadd.xlane.f32.xlu0 %v5917
      %v5919 = vpop.xlane.xlu0 %5918
      %v5920 = vadd.f32 %v5818, %v5820
      %5921 = vadd.xlane.f32.xlu0 %v5920
      %v5922 = vpop.xlane.xlu0 %5921
      %v5923 = vadd.f32 %v5822, %v5824
      %5924 = vadd.xlane.f32.xlu0 %v5923
      %v5925 = vpop.xlane.xlu0 %5924
      %v5926 = vadd.f32 %v5826, %v5828
      %5927 = vadd.xlane.f32.xlu0 %v5926
      %v5928 = vpop.xlane.xlu0 %5927
      %v5929 = vadd.f32 %v5830, %v5832
      %5930 = vadd.xlane.f32.xlu0 %v5929
      %v5931 = vpop.xlane.xlu0 %5930
      %v5932 = vadd.f32 %v5834, %v5836
      %5933 = vadd.xlane.f32.xlu0 %v5932
      %v5934 = vpop.xlane.xlu0 %5933
      %v5935 = vadd.f32 %v5838, %v5840
      %5936 = vadd.xlane.f32.xlu0 %v5935
      %v5937 = vpop.xlane.xlu0 %5936
      %v5938 = vadd.f32 %v5842, %v5844
      %5939 = vadd.xlane.f32.xlu0 %v5938
      %v5940 = vpop.xlane.xlu0 %5939
      %v5941 = vrcp.pop %v5847
      %v5942 = vrcp.pop %v5850
      %v5943 = vrcp.pop %v5853
      %v5944 = vrcp.pop %v5856
      %v5945 = vrcp.pop %v5859
      %v5946 = vrcp.pop %v5862
      %v5947 = vrcp.pop %v5865
      %v5948 = vrcp.pop %v5868
      %v5949 = vrcp.pop %v5871
      %v5950 = vrcp.pop %v5874
      %v5951 = vrcp.pop %v5877
      %v5952 = vrcp.pop %v5880
      %v5953 = vrcp.pop %v5883
      %v5954 = vrcp.pop %v5886
      %v5955 = vrcp.pop %v5889
      %v5956 = vrcp.pop %v5892
      %v5957 = vrcp.pop %v5895
      %v5958 = vrcp.pop %v5898
      %v5959 = vrcp.pop %v5901
      %v5960 = vrcp.pop %v5904
      %v5961 = vrcp.pop %v5907
      %v5962 = vrcp.pop %v5910
      %v5963 = vrcp.pop %v5913
      %v5964 = vrcp.pop %v5916
      %v5965 = vrcp.pop %v5919
      %v5966 = vrcp.pop %v5922
      %v5967 = vrcp.pop %v5925
      %v5968 = vrcp.pop %v5928
      %v5969 = vrcp.pop %v5931
      %v5970 = vrcp.pop %v5934
      %v5971 = vrcp.pop %v5937
      %v5972 = vrcp.pop %v5940
      %v5973 = vmul.f32 %v5718, %v5941
      %v5974 = vmul.f32 %v5720, %v5941
      %v5975 = vmul.f32 %v5722, %v5942
      %v5976 = vmul.f32 %v5724, %v5942
      %v5977 = vmul.f32 %v5726, %v5943
      %v5978 = vmul.f32 %v5728, %v5943
      %v5979 = vmul.f32 %v5730, %v5944
      %v5980 = vmul.f32 %v5732, %v5944
      %v5981 = vmul.f32 %v5734, %v5945
      %v5982 = vmul.f32 %v5736, %v5945
      %v5983 = vmul.f32 %v5738, %v5946
      %v5984 = vmul.f32 %v5740, %v5946
      %v5985 = vmul.f32 %v5742, %v5947
      %v5986 = vmul.f32 %v5744, %v5947
      %v5987 = vmul.f32 %v5746, %v5948
      %v5988 = vmul.f32 %v5748, %v5948
      %v5989 = vmul.f32 %v5750, %v5949
      %v5990 = vmul.f32 %v5752, %v5949
      %v5991 = vmul.f32 %v5754, %v5950
      %v5992 = vmul.f32 %v5756, %v5950
      %v5993 = vmul.f32 %v5758, %v5951
      %v5994 = vmul.f32 %v5760, %v5951
      %v5995 = vmul.f32 %v5762, %v5952
      %v5996 = vmul.f32 %v5764, %v5952
      %v5997 = vmul.f32 %v5766, %v5953
      %v5998 = vmul.f32 %v5768, %v5953
      %v5999 = vmul.f32 %v5770, %v5954
      %v6000 = vmul.f32 %v5772, %v5954
      %v6001 = vmul.f32 %v5774, %v5955
      %v6002 = vmul.f32 %v5776, %v5955
      %v6003 = vmul.f32 %v5778, %v5956
      %v6004 = vmul.f32 %v5780, %v5956
      %v6005 = vmul.f32 %v5782, %v5957
      %v6006 = vmul.f32 %v5784, %v5957
      %v6007 = vmul.f32 %v5786, %v5958
      %v6008 = vmul.f32 %v5788, %v5958
      %v6009 = vmul.f32 %v5790, %v5959
      %v6010 = vmul.f32 %v5792, %v5959
      %v6011 = vmul.f32 %v5794, %v5960
      %v6012 = vmul.f32 %v5796, %v5960
      %v6013 = vmul.f32 %v5798, %v5961
      %v6014 = vmul.f32 %v5800, %v5961
      %v6015 = vmul.f32 %v5802, %v5962
      %v6016 = vmul.f32 %v5804, %v5962
      %v6017 = vmul.f32 %v5806, %v5963
      %v6018 = vmul.f32 %v5808, %v5963
      %v6019 = vmul.f32 %v5810, %v5964
      %v6020 = vmul.f32 %v5812, %v5964
      %v6021 = vmul.f32 %v5814, %v5965
      %v6022 = vmul.f32 %v5816, %v5965
      %v6023 = vmul.f32 %v5818, %v5966
      %v6024 = vmul.f32 %v5820, %v5966
      %v6025 = vmul.f32 %v5822, %v5967
      %v6026 = vmul.f32 %v5824, %v5967
      %v6027 = vmul.f32 %v5826, %v5968
      %v6028 = vmul.f32 %v5828, %v5968
      %v6029 = vmul.f32 %v5830, %v5969
      %v6030 = vmul.f32 %v5832, %v5969
      %v6031 = vmul.f32 %v5834, %v5970
      %v6032 = vmul.f32 %v5836, %v5970
      %v6033 = vmul.f32 %v5838, %v5971
      %v6034 = vmul.f32 %v5840, %v5971
      %v6035 = vmul.f32 %v5842, %v5972
      %v6036 = vmul.f32 %v5844, %v5972
      %v6037 = vpack.c.bf16 %v5975, %v5973
      %v6038 = vpack.c.bf16 %v5976, %v5974
      %v6039 = vpack.c.bf16 %v5979, %v5977
      %v6040 = vpack.c.bf16 %v5980, %v5978
      %v6041 = vpack.c.bf16 %v5983, %v5981
      %v6042 = vpack.c.bf16 %v5984, %v5982
      %v6043 = vpack.c.bf16 %v5987, %v5985
      %v6044 = vpack.c.bf16 %v5988, %v5986
      %v6045 = vpack.c.bf16 %v5991, %v5989
      %v6046 = vpack.c.bf16 %v5992, %v5990
      %v6047 = vpack.c.bf16 %v5995, %v5993
      %v6048 = vpack.c.bf16 %v5996, %v5994
      %v6049 = vpack.c.bf16 %v5999, %v5997
      %v6050 = vpack.c.bf16 %v6000, %v5998
      %v6051 = vpack.c.bf16 %v6003, %v6001
      %v6052 = vpack.c.bf16 %v6004, %v6002
      %v6053 = vpack.c.bf16 %v6007, %v6005
      %v6054 = vpack.c.bf16 %v6008, %v6006
      %v6055 = vpack.c.bf16 %v6011, %v6009
      %v6056 = vpack.c.bf16 %v6012, %v6010
      %v6057 = vpack.c.bf16 %v6015, %v6013
      %v6058 = vpack.c.bf16 %v6016, %v6014
      %v6059 = vpack.c.bf16 %v6019, %v6017
      %v6060 = vpack.c.bf16 %v6020, %v6018
      %v6061 = vpack.c.bf16 %v6023, %v6021
      %v6062 = vpack.c.bf16 %v6024, %v6022
      %v6063 = vpack.c.bf16 %v6027, %v6025
      %v6064 = vpack.c.bf16 %v6028, %v6026
      %v6065 = vpack.c.bf16 %v6031, %v6029
      %v6066 = vpack.c.bf16 %v6032, %v6030
      %v6067 = vpack.c.bf16 %v6035, %v6033
      %v6068 = vpack.c.bf16 %v6036, %v6034
      %6069 = vrot.lane.b32.xlu0 %v4355, 96
      %v6070 = vpop.permute.xlu0 %6069
      %6071 = vrot.lane.b32.xlu0 %v4356, 96
      %v6072 = vpop.permute.xlu0 %6071
      %6073 = vrot.lane.b32.xlu0 %v4357, 96
      %v6074 = vpop.permute.xlu0 %6073
      %6075 = vrot.lane.b32.xlu0 %v4358, 96
      %v6076 = vpop.permute.xlu0 %6075
      %6077 = vrot.lane.b32.xlu0 %v4359, 96
      %v6078 = vpop.permute.xlu0 %6077
      %6079 = vrot.lane.b32.xlu0 %v4360, 96
      %v6080 = vpop.permute.xlu0 %6079
      %6081 = vrot.lane.b32.xlu0 %v4361, 96
      %v6082 = vpop.permute.xlu0 %6081
      %6083 = vrot.lane.b32.xlu0 %v4362, 96
      %v6084 = vpop.permute.xlu0 %6083
      %6085 = vrot.lane.b32.xlu0 %v4363, 96
      %v6086 = vpop.permute.xlu0 %6085
      %6087 = vrot.lane.b32.xlu0 %v4364, 96
      %v6088 = vpop.permute.xlu0 %6087
      %6089 = vrot.lane.b32.xlu0 %v4365, 96
      %v6090 = vpop.permute.xlu0 %6089
      %6091 = vrot.lane.b32.xlu0 %v4366, 96
      %v6092 = vpop.permute.xlu0 %6091
      %6093 = vrot.lane.b32.xlu0 %v4367, 96
      %v6094 = vpop.permute.xlu0 %6093
      %6095 = vrot.lane.b32.xlu0 %v4368, 96
      %v6096 = vpop.permute.xlu0 %6095
      %6097 = vrot.lane.b32.xlu0 %v4369, 96
      %v6098 = vpop.permute.xlu0 %6097
      %6099 = vrot.lane.b32.xlu0 %v4370, 96
      %v6100 = vpop.permute.xlu0 %6099
      %6117 = vmatprep.subr.bf16.mxu0 0
      %6118 = vmatpush1.bf16.msra.mxu0 %v6070
      %6119 = vmatprep.subr.bf16.mxu0 0
      %6120 = vmatpush1.bf16.msra.mxu0 %v6072
      %6121 = vmatprep.subr.bf16.mxu0 0
      %6122 = vmatpush1.bf16.msra.mxu0 %v6074
      %6123 = vmatprep.subr.bf16.mxu0 0
      %6124 = vmatpush1.bf16.msra.mxu0 %v6076
      %6125 = vmatprep.subr.bf16.mxu0 0
      %6126 = vmatpush1.bf16.msra.mxu0 %v6078
      %6127 = vmatprep.subr.bf16.mxu0 0
      %6128 = vmatpush1.bf16.msra.mxu0 %v6080
      %6129 = vmatprep.subr.bf16.mxu0 0
      %6130 = vmatpush1.bf16.msra.mxu0 %v6082
      %6131 = vmatprep.subr.bf16.mxu0 0
      %6132 = vmatpush1.bf16.msra.mxu0 %v6084
      %6133 = vmatprep.subr.bf16.mxu0 0
      %6134 = vmatpush1.bf16.msra.mxu0 %v6086
      %6135 = vmatprep.subr.bf16.mxu0 0
      %6136 = vmatpush1.bf16.msra.mxu0 %v6088
      %6137 = vmatprep.subr.bf16.mxu0 0
      %6138 = vmatpush1.bf16.msra.mxu0 %v6090
      %6139 = vmatprep.subr.bf16.mxu0 0
      %6140 = vmatpush1.bf16.msra.mxu0 %v6092
      %6141 = vmatprep.subr.bf16.mxu0 0
      %6142 = vmatpush1.bf16.msra.mxu0 %v6094
      %6143 = vmatprep.subr.bf16.mxu0 0
      %6144 = vmatpush1.bf16.msra.mxu0 %v6096
      %6145 = vmatprep.subr.bf16.mxu0 0
      %6146 = vmatpush1.bf16.msra.mxu0 %v6098
      %6147 = vmatprep.subr.bf16.mxu0 0
      %6148 = vmatpush1.bf16.msra.mxu0 %v6100
      %6149 = vmatprep.mubr.bf16.mxu0 %v5526
      %6150 = vmatmul.mubr.bf16.gmra.mrb[0].mxu0 %v5525
      %v6151 = vpop.f32.mrb[0].mxu0
      %v6152 = vadd.f32 0.0, %v6151
      %v6153 = vpop.f32.mrb[0].mxu0
      %v6154 = vpop.f32.mrb[0].mxu0
      %v6155 = vadd.f32 0.0, %v6154
      %v6156 = vpop.f32.mrb[0].mxu0
      %6157 = vmatprep.mubr.bf16.mxu0 %v5528
      %6158 = vmatmul.mubr.bf16.gmra.mrb[0].mxu0 %v5527
      %v6159 = vpop.f32.mrb[0].mxu0
      %v6160 = vadd.f32 0.0, %v6159
      %v6161 = vpop.f32.mrb[0].mxu0
      %v6162 = vpop.f32.mrb[0].mxu0
      %v6163 = vadd.f32 0.0, %v6162
      %v6164 = vpop.f32.mrb[0].mxu0
      %6165 = vmatprep.mubr.bf16.mxu0 %v5530
      %6166 = vmatmul.mubr.bf16.gmra.mrb[0].mxu0 %v5529
      %v6167 = vpop.f32.mrb[0].mxu0
      %v6168 = vadd.f32 0.0, %v6167
      %v6169 = vpop.f32.mrb[0].mxu0
      %v6170 = vpop.f32.mrb[0].mxu0
      %v6171 = vadd.f32 0.0, %v6170
      %v6172 = vpop.f32.mrb[0].mxu0
      %6173 = vmatprep.mubr.bf16.mxu0 %v5532
      %6174 = vmatmul.mubr.bf16.gmra.mrb[0].mxu0 %v5531
      %v6175 = vpop.f32.mrb[0].mxu0
      %v6176 = vadd.f32 0.0, %v6175
      %v6177 = vpop.f32.mrb[0].mxu0
      %v6178 = vpop.f32.mrb[0].mxu0
      %v6179 = vadd.f32 0.0, %v6178
      %v6180 = vpop.f32.mrb[0].mxu0
      %6181 = vmatprep.mubr.bf16.mxu0 %v5534
      %6182 = vmatmul.mubr.bf16.gmra.mrb[0].mxu0 %v5533
      %v6183 = vpop.f32.mrb[0].mxu0
      %v6184 = vadd.f32 0.0, %v6183
      %v6185 = vpop.f32.mrb[0].mxu0
      %v6186 = vpop.f32.mrb[0].mxu0
      %v6187 = vadd.f32 0.0, %v6186
      %v6188 = vpop.f32.mrb[0].mxu0
      %6189 = vmatprep.mubr.bf16.mxu0 %v5536
      %6190 = vmatmul.mubr.bf16.gmra.mrb[0].mxu0 %v5535
      %v6191 = vpop.f32.mrb[0].mxu0
      %v6192 = vadd.f32 0.0, %v6191
      %v6193 = vpop.f32.mrb[0].mxu0
      %v6194 = vpop.f32.mrb[0].mxu0
      %v6195 = vadd.f32 0.0, %v6194
      %v6196 = vpop.f32.mrb[0].mxu0
      %6197 = vmatprep.mubr.bf16.mxu0 %v5538
      %6198 = vmatmul.mubr.bf16.gmra.mrb[0].mxu0 %v5537
      %v6199 = vpop.f32.mrb[0].mxu0
      %v6200 = vadd.f32 0.0, %v6199
      %v6201 = vpop.f32.mrb[0].mxu0
      %v6202 = vpop.f32.mrb[0].mxu0
      %v6203 = vadd.f32 0.0, %v6202
      %v6204 = vpop.f32.mrb[0].mxu0
      %6205 = vmatprep.mubr.bf16.mxu0 %v5540
      %6206 = vmatmul.mubr.bf16.gmra.mrb[0].mxu0 %v5539
      %v6207 = vpop.f32.mrb[0].mxu0
      %v6208 = vadd.f32 0.0, %v6207
      %v6209 = vpop.f32.mrb[0].mxu0
      %v6210 = vpop.f32.mrb[0].mxu0
      %v6211 = vadd.f32 0.0, %v6210
      %v6212 = vpop.f32.mrb[0].mxu0
      %6213 = vmatprep.mubr.bf16.mxu0 %v5542
      %6214 = vmatmul.mubr.bf16.gmra.mrb[0].mxu0 %v5541
      %v6215 = vpop.f32.mrb[0].mxu0
      %v6216 = vadd.f32 0.0, %v6215
      %v6217 = vpop.f32.mrb[0].mxu0
      %v6218 = vpop.f32.mrb[0].mxu0
      %v6219 = vadd.f32 0.0, %v6218
      %v6220 = vpop.f32.mrb[0].mxu0
      %6221 = vmatprep.mubr.bf16.mxu0 %v5544
      %6222 = vmatmul.mubr.bf16.gmra.mrb[0].mxu0 %v5543
      %v6223 = vpop.f32.mrb[0].mxu0
      %v6224 = vadd.f32 0.0, %v6223
      %v6225 = vpop.f32.mrb[0].mxu0
      %v6226 = vpop.f32.mrb[0].mxu0
      %v6227 = vadd.f32 0.0, %v6226
      %v6228 = vpop.f32.mrb[0].mxu0
      %6229 = vmatprep.mubr.bf16.mxu0 %v5546
      %6230 = vmatmul.mubr.bf16.gmra.mrb[0].mxu0 %v5545
      %v6231 = vpop.f32.mrb[0].mxu0
      %v6232 = vadd.f32 0.0, %v6231
      %v6233 = vpop.f32.mrb[0].mxu0
      %v6234 = vpop.f32.mrb[0].mxu0
      %v6235 = vadd.f32 0.0, %v6234
      %v6236 = vpop.f32.mrb[0].mxu0
      %6237 = vmatprep.mubr.bf16.mxu0 %v5548
      %6238 = vmatmul.mubr.bf16.gmra.mrb[0].mxu0 %v5547
      %v6239 = vpop.f32.mrb[0].mxu0
      %v6240 = vadd.f32 0.0, %v6239
      %v6241 = vpop.f32.mrb[0].mxu0
      %v6242 = vpop.f32.mrb[0].mxu0
      %v6243 = vadd.f32 0.0, %v6242
      %v6244 = vpop.f32.mrb[0].mxu0
      %6245 = vmatprep.mubr.bf16.mxu0 %v5550
      %6246 = vmatmul.mubr.bf16.gmra.mrb[0].mxu0 %v5549
      %v6247 = vpop.f32.mrb[0].mxu0
      %v6248 = vadd.f32 0.0, %v6247
      %v6249 = vpop.f32.mrb[0].mxu0
      %v6250 = vpop.f32.mrb[0].mxu0
      %v6251 = vadd.f32 0.0, %v6250
      %v6252 = vpop.f32.mrb[0].mxu0
      %6253 = vmatprep.mubr.bf16.mxu0 %v5552
      %6254 = vmatmul.mubr.bf16.gmra.mrb[0].mxu0 %v5551
      %v6255 = vpop.f32.mrb[0].mxu0
      %v6256 = vadd.f32 0.0, %v6255
      %v6257 = vpop.f32.mrb[0].mxu0
      %v6258 = vpop.f32.mrb[0].mxu0
      %v6259 = vadd.f32 0.0, %v6258
      %v6260 = vpop.f32.mrb[0].mxu0
      %6261 = vmatprep.mubr.bf16.mxu0 %v5554
      %6262 = vmatmul.mubr.bf16.gmra.mrb[0].mxu0 %v5553
      %v6263 = vpop.f32.mrb[0].mxu0
      %v6264 = vadd.f32 0.0, %v6263
      %v6265 = vpop.f32.mrb[0].mxu0
      %v6266 = vpop.f32.mrb[0].mxu0
      %v6267 = vadd.f32 0.0, %v6266
      %v6268 = vpop.f32.mrb[0].mxu0
      %6269 = vmatprep.mubr.bf16.mxu0 %v5556
      %6270 = vmatmul.mubr.bf16.gmra.mrb[0].mxu0 %v5555
      %v6271 = vpop.f32.mrb[0].mxu0
      %v6272 = vadd.f32 0.0, %v6271
      %v6273 = vpop.f32.mrb[0].mxu0
      %v6274 = vpop.f32.mrb[0].mxu0
      %v6275 = vadd.f32 0.0, %v6274
      %v6276 = vpop.f32.mrb[0].mxu0
      %6277 = vdwg.mxu0
      %6278 = vrot.lane.b32.xlu0 %v4371, 112
      %v6279 = vpop.permute.xlu0 %6278
      %6280 = vrot.lane.b32.xlu0 %v4372, 112
      %v6281 = vpop.permute.xlu0 %6280
      %6282 = vrot.lane.b32.xlu0 %v4373, 112
      %v6283 = vpop.permute.xlu0 %6282
      %6284 = vrot.lane.b32.xlu0 %v4374, 112
      %v6285 = vpop.permute.xlu0 %6284
      %6286 = vrot.lane.b32.xlu0 %v4375, 112
      %v6287 = vpop.permute.xlu0 %6286
      %6288 = vrot.lane.b32.xlu0 %v4376, 112
      %v6289 = vpop.permute.xlu0 %6288
      %6290 = vrot.lane.b32.xlu0 %v4377, 112
      %v6291 = vpop.permute.xlu0 %6290
      %6292 = vrot.lane.b32.xlu0 %v4378, 112
      %v6293 = vpop.permute.xlu0 %6292
      %6294 = vrot.lane.b32.xlu0 %v4379, 112
      %v6295 = vpop.permute.xlu0 %6294
      %6296 = vrot.lane.b32.xlu0 %v4380, 112
      %v6297 = vpop.permute.xlu0 %6296
      %6298 = vrot.lane.b32.xlu0 %v4381, 112
      %v6299 = vpop.permute.xlu0 %6298
      %6300 = vrot.lane.b32.xlu0 %v4382, 112
      %v6301 = vpop.permute.xlu0 %6300
      %6302 = vrot.lane.b32.xlu0 %v4383, 112
      %v6303 = vpop.permute.xlu0 %6302
      %6304 = vrot.lane.b32.xlu0 %v4384, 112
      %v6305 = vpop.permute.xlu0 %6304
      %6306 = vrot.lane.b32.xlu0 %v4385, 112
      %v6307 = vpop.permute.xlu0 %6306
      %6308 = vrot.lane.b32.xlu0 %v4386, 112
      %v6309 = vpop.permute.xlu0 %6308
      %6326 = vmatprep.subr.bf16.mxu0 0
      %6327 = vmatpush1.bf16.msra.mxu0 %v6279
      %6328 = vmatprep.subr.bf16.mxu0 0
      %6329 = vmatpush1.bf16.msra.mxu0 %v6281
      %6330 = vmatprep.subr.bf16.mxu0 0
      %6331 = vmatpush1.bf16.msra.mxu0 %v6283
      %6332 = vmatprep.subr.bf16.mxu0 0
      %6333 = vmatpush1.bf16.msra.mxu0 %v6285
      %6334 = vmatprep.subr.bf16.mxu0 0
      %6335 = vmatpush1.bf16.msra.mxu0 %v6287
      %6336 = vmatprep.subr.bf16.mxu0 0
      %6337 = vmatpush1.bf16.msra.mxu0 %v6289
      %6338 = vmatprep.subr.bf16.mxu0 0
      %6339 = vmatpush1.bf16.msra.mxu0 %v6291
      %6340 = vmatprep.subr.bf16.mxu0 0
      %6341 = vmatpush1.bf16.msra.mxu0 %v6293
      %6342 = vmatprep.subr.bf16.mxu0 0
      %6343 = vmatpush1.bf16.msra.mxu0 %v6295
      %6344 = vmatprep.subr.bf16.mxu0 0
      %6345 = vmatpush1.bf16.msra.mxu0 %v6297
      %6346 = vmatprep.subr.bf16.mxu0 0
      %6347 = vmatpush1.bf16.msra.mxu0 %v6299
      %6348 = vmatprep.subr.bf16.mxu0 0
      %6349 = vmatpush1.bf16.msra.mxu0 %v6301
      %6350 = vmatprep.subr.bf16.mxu0 0
      %6351 = vmatpush1.bf16.msra.mxu0 %v6303
      %6352 = vmatprep.subr.bf16.mxu0 0
      %6353 = vmatpush1.bf16.msra.mxu0 %v6305
      %6354 = vmatprep.subr.bf16.mxu0 0
      %6355 = vmatpush1.bf16.msra.mxu0 %v6307
      %6356 = vmatprep.subr.bf16.mxu0 0
      %6357 = vmatpush1.bf16.msra.mxu0 %v6309
      %6358 = vmatprep.mubr.bf16.mxu0 %v6038
      %6359 = vmatmul.mubr.bf16.gmra.mrb[0].mxu0 %v6037
      %v6360 = vpop.f32.mrb[0].mxu0
      %v6361 = vadd.f32 0.0, %v6360
      %v6362 = vpop.f32.mrb[0].mxu0
      %v6363 = vpop.f32.mrb[0].mxu0
      %v6364 = vadd.f32 0.0, %v6363
      %v6365 = vpop.f32.mrb[0].mxu0
      %6366 = vmatprep.mubr.bf16.mxu0 %v6040
      %6367 = vmatmul.mubr.bf16.gmra.mrb[0].mxu0 %v6039
      %v6368 = vpop.f32.mrb[0].mxu0
      %v6369 = vadd.f32 0.0, %v6368
      %v6370 = vpop.f32.mrb[0].mxu0
      %v6371 = vpop.f32.mrb[0].mxu0
      %v6372 = vadd.f32 0.0, %v6371
      %v6373 = vpop.f32.mrb[0].mxu0
      %6374 = vmatprep.mubr.bf16.mxu0 %v6042
      %6375 = vmatmul.mubr.bf16.gmra.mrb[0].mxu0 %v6041
      %v6376 = vpop.f32.mrb[0].mxu0
      %v6377 = vadd.f32 0.0, %v6376
      %v6378 = vpop.f32.mrb[0].mxu0
      %v6379 = vpop.f32.mrb[0].mxu0
      %v6380 = vadd.f32 0.0, %v6379
      %v6381 = vpop.f32.mrb[0].mxu0
      %6382 = vmatprep.mubr.bf16.mxu0 %v6044
      %6383 = vmatmul.mubr.bf16.gmra.mrb[0].mxu0 %v6043
      %v6384 = vpop.f32.mrb[0].mxu0
      %v6385 = vadd.f32 0.0, %v6384
      %v6386 = vpop.f32.mrb[0].mxu0
      %v6387 = vpop.f32.mrb[0].mxu0
      %v6388 = vadd.f32 0.0, %v6387
      %v6389 = vpop.f32.mrb[0].mxu0
      %6390 = vmatprep.mubr.bf16.mxu0 %v6046
      %6391 = vmatmul.mubr.bf16.gmra.mrb[0].mxu0 %v6045
      %v6392 = vpop.f32.mrb[0].mxu0
      %v6393 = vadd.f32 0.0, %v6392
      %v6394 = vpop.f32.mrb[0].mxu0
      %v6395 = vpop.f32.mrb[0].mxu0
      %v6396 = vadd.f32 0.0, %v6395
      %v6397 = vpop.f32.mrb[0].mxu0
      %6398 = vmatprep.mubr.bf16.mxu0 %v6048
      %6399 = vmatmul.mubr.bf16.gmra.mrb[0].mxu0 %v6047
      %v6400 = vpop.f32.mrb[0].mxu0
      %v6401 = vadd.f32 0.0, %v6400
      %v6402 = vpop.f32.mrb[0].mxu0
      %v6403 = vpop.f32.mrb[0].mxu0
      %v6404 = vadd.f32 0.0, %v6403
      %v6405 = vpop.f32.mrb[0].mxu0
      %6406 = vmatprep.mubr.bf16.mxu0 %v6050
      %6407 = vmatmul.mubr.bf16.gmra.mrb[0].mxu0 %v6049
      %v6408 = vpop.f32.mrb[0].mxu0
      %v6409 = vadd.f32 0.0, %v6408
      %v6410 = vpop.f32.mrb[0].mxu0
      %v6411 = vpop.f32.mrb[0].mxu0
      %v6412 = vadd.f32 0.0, %v6411
      %v6413 = vpop.f32.mrb[0].mxu0
      %6414 = vmatprep.mubr.bf16.mxu0 %v6052
      %6415 = vmatmul.mubr.bf16.gmra.mrb[0].mxu0 %v6051
      %v6416 = vpop.f32.mrb[0].mxu0
      %v6417 = vadd.f32 0.0, %v6416
      %v6418 = vpop.f32.mrb[0].mxu0
      %v6419 = vpop.f32.mrb[0].mxu0
      %v6420 = vadd.f32 0.0, %v6419
      %v6421 = vpop.f32.mrb[0].mxu0
      %6422 = vmatprep.mubr.bf16.mxu0 %v6054
      %6423 = vmatmul.mubr.bf16.gmra.mrb[0].mxu0 %v6053
      %v6424 = vpop.f32.mrb[0].mxu0
      %v6425 = vadd.f32 0.0, %v6424
      %v6426 = vpop.f32.mrb[0].mxu0
      %v6427 = vpop.f32.mrb[0].mxu0
      %v6428 = vadd.f32 0.0, %v6427
      %v6429 = vpop.f32.mrb[0].mxu0
      %6430 = vmatprep.mubr.bf16.mxu0 %v6056
      %6431 = vmatmul.mubr.bf16.gmra.mrb[0].mxu0 %v6055
      %v6432 = vpop.f32.mrb[0].mxu0
      %v6433 = vadd.f32 0.0, %v6432
      %v6434 = vpop.f32.mrb[0].mxu0
      %v6435 = vpop.f32.mrb[0].mxu0
      %v6436 = vadd.f32 0.0, %v6435
      %v6437 = vpop.f32.mrb[0].mxu0
      %6438 = vmatprep.mubr.bf16.mxu0 %v6058
      %6439 = vmatmul.mubr.bf16.gmra.mrb[0].mxu0 %v6057
      %v6440 = vpop.f32.mrb[0].mxu0
      %v6441 = vadd.f32 0.0, %v6440
      %v6442 = vpop.f32.mrb[0].mxu0
      %v6443 = vpop.f32.mrb[0].mxu0
      %v6444 = vadd.f32 0.0, %v6443
      %v6445 = vpop.f32.mrb[0].mxu0
      %6446 = vmatprep.mubr.bf16.mxu0 %v6060
      %6447 = vmatmul.mubr.bf16.gmra.mrb[0].mxu0 %v6059
      %v6448 = vpop.f32.mrb[0].mxu0
      %v6449 = vadd.f32 0.0, %v6448
      %v6450 = vpop.f32.mrb[0].mxu0
      %v6451 = vpop.f32.mrb[0].mxu0
      %v6452 = vadd.f32 0.0, %v6451
      %v6453 = vpop.f32.mrb[0].mxu0
      %6454 = vmatprep.mubr.bf16.mxu0 %v6062
      %6455 = vmatmul.mubr.bf16.gmra.mrb[0].mxu0 %v6061
      %v6456 = vpop.f32.mrb[0].mxu0
      %v6457 = vadd.f32 0.0, %v6456
      %v6458 = vpop.f32.mrb[0].mxu0
      %v6459 = vpop.f32.mrb[0].mxu0
      %v6460 = vadd.f32 0.0, %v6459
      %v6461 = vpop.f32.mrb[0].mxu0
      %6462 = vmatprep.mubr.bf16.mxu0 %v6064
      %6463 = vmatmul.mubr.bf16.gmra.mrb[0].mxu0 %v6063
      %v6464 = vpop.f32.mrb[0].mxu0
      %v6465 = vadd.f32 0.0, %v6464
      %v6466 = vpop.f32.mrb[0].mxu0
      %v6467 = vpop.f32.mrb[0].mxu0
      %v6468 = vadd.f32 0.0, %v6467
      %v6469 = vpop.f32.mrb[0].mxu0
      %6470 = vmatprep.mubr.bf16.mxu0 %v6066
      %6471 = vmatmul.mubr.bf16.gmra.mrb[0].mxu0 %v6065
      %v6472 = vpop.f32.mrb[0].mxu0
      %v6473 = vadd.f32 0.0, %v6472
      %v6474 = vpop.f32.mrb[0].mxu0
      %v6475 = vpop.f32.mrb[0].mxu0
      %v6476 = vadd.f32 0.0, %v6475
      %v6477 = vpop.f32.mrb[0].mxu0
      %6478 = vmatprep.mubr.bf16.mxu0 %v6068
      %6479 = vmatmul.mubr.bf16.gmra.mrb[0].mxu0 %v6067
      %v6480 = vpop.f32.mrb[0].mxu0
      %v6481 = vadd.f32 0.0, %v6480
      %v6482 = vpop.f32.mrb[0].mxu0
      %v6483 = vpop.f32.mrb[0].mxu0
      %v6484 = vadd.f32 0.0, %v6483
      %v6485 = vpop.f32.mrb[0].mxu0
      %6486 = vdwg.mxu0
      %6519 = vrot.lane.b32.xlu0 %v6361, 16
      %v6520 = vpop.permute.xlu0 %6519
      %6521 = vrot.lane.b32.xlu0 %v6364, 16
      %v6522 = vpop.permute.xlu0 %6521
      %6523 = vrot.lane.b32.xlu0 %v6369, 16
      %v6524 = vpop.permute.xlu0 %6523
      %6525 = vrot.lane.b32.xlu0 %v6372, 16
      %v6526 = vpop.permute.xlu0 %6525
      %6527 = vrot.lane.b32.xlu0 %v6377, 16
      %v6528 = vpop.permute.xlu0 %6527
      %6529 = vrot.lane.b32.xlu0 %v6380, 16
      %v6530 = vpop.permute.xlu0 %6529
      %6531 = vrot.lane.b32.xlu0 %v6385, 16
      %v6532 = vpop.permute.xlu0 %6531
      %6533 = vrot.lane.b32.xlu0 %v6388, 16
      %v6534 = vpop.permute.xlu0 %6533
      %6535 = vrot.lane.b32.xlu0 %v6393, 16
      %v6536 = vpop.permute.xlu0 %6535
      %6537 = vrot.lane.b32.xlu0 %v6396, 16
      %v6538 = vpop.permute.xlu0 %6537
      %6539 = vrot.lane.b32.xlu0 %v6401, 16
      %v6540 = vpop.permute.xlu0 %6539
      %6541 = vrot.lane.b32.xlu0 %v6404, 16
      %v6542 = vpop.permute.xlu0 %6541
      %6543 = vrot.lane.b32.xlu0 %v6409, 16
      %v6544 = vpop.permute.xlu0 %6543
      %6545 = vrot.lane.b32.xlu0 %v6412, 16
      %v6546 = vpop.permute.xlu0 %6545
      %6547 = vrot.lane.b32.xlu0 %v6417, 16
      %v6548 = vpop.permute.xlu0 %6547
      %6549 = vrot.lane.b32.xlu0 %v6420, 16
      %v6550 = vpop.permute.xlu0 %6549
      %6551 = vrot.lane.b32.xlu0 %v6425, 16
      %v6552 = vpop.permute.xlu0 %6551
      %6553 = vrot.lane.b32.xlu0 %v6428, 16
      %v6554 = vpop.permute.xlu0 %6553
      %6555 = vrot.lane.b32.xlu0 %v6433, 16
      %v6556 = vpop.permute.xlu0 %6555
      %6557 = vrot.lane.b32.xlu0 %v6436, 16
      %v6558 = vpop.permute.xlu0 %6557
      %6559 = vrot.lane.b32.xlu0 %v6441, 16
      %v6560 = vpop.permute.xlu0 %6559
      %6561 = vrot.lane.b32.xlu0 %v6444, 16
      %v6562 = vpop.permute.xlu0 %6561
      %6563 = vrot.lane.b32.xlu0 %v6449, 16
      %v6564 = vpop.permute.xlu0 %6563
      %6565 = vrot.lane.b32.xlu0 %v6452, 16
      %v6566 = vpop.permute.xlu0 %6565
      %6567 = vrot.lane.b32.xlu0 %v6457, 16
      %v6568 = vpop.permute.xlu0 %6567
      %6569 = vrot.lane.b32.xlu0 %v6460, 16
      %v6570 = vpop.permute.xlu0 %6569
      %6571 = vrot.lane.b32.xlu0 %v6465, 16
      %v6572 = vpop.permute.xlu0 %6571
      %6573 = vrot.lane.b32.xlu0 %v6468, 16
      %v6574 = vpop.permute.xlu0 %6573
      %6575 = vrot.lane.b32.xlu0 %v6473, 16
      %v6576 = vpop.permute.xlu0 %6575
      %6577 = vrot.lane.b32.xlu0 %v6476, 16
      %v6578 = vpop.permute.xlu0 %6577
      %6579 = vrot.lane.b32.xlu0 %v6481, 16
      %v6580 = vpop.permute.xlu0 %6579
      %6581 = vrot.lane.b32.xlu0 %v6484, 16
      %v6582 = vpop.permute.xlu0 %6581
      %v6615 = vsel %vm1964, %v6152, %v6520
      %v6616 = vsel %vm1964, %v6155, %v6522
      %v6617 = vsel %vm1964, %v6160, %v6524
      %v6618 = vsel %vm1964, %v6163, %v6526
      %v6619 = vsel %vm1964, %v6168, %v6528
      %v6620 = vsel %vm1964, %v6171, %v6530
      %v6621 = vsel %vm1964, %v6176, %v6532
      %v6622 = vsel %vm1964, %v6179, %v6534
      %v6623 = vsel %vm1964, %v6184, %v6536
      %v6624 = vsel %vm1964, %v6187, %v6538
      %v6625 = vsel %vm1964, %v6192, %v6540
      %v6626 = vsel %vm1964, %v6195, %v6542
      %v6627 = vsel %vm1964, %v6200, %v6544
      %v6628 = vsel %vm1964, %v6203, %v6546
      %v6629 = vsel %vm1964, %v6208, %v6548
      %v6630 = vsel %vm1964, %v6211, %v6550
      %v6631 = vsel %vm1964, %v6216, %v6552
      %v6632 = vsel %vm1964, %v6219, %v6554
      %v6633 = vsel %vm1964, %v6224, %v6556
      %v6634 = vsel %vm1964, %v6227, %v6558
      %v6635 = vsel %vm1964, %v6232, %v6560
      %v6636 = vsel %vm1964, %v6235, %v6562
      %v6637 = vsel %vm1964, %v6240, %v6564
      %v6638 = vsel %vm1964, %v6243, %v6566
      %v6639 = vsel %vm1964, %v6248, %v6568
      %v6640 = vsel %vm1964, %v6251, %v6570
      %v6641 = vsel %vm1964, %v6256, %v6572
      %v6642 = vsel %vm1964, %v6259, %v6574
      %v6643 = vsel %vm1964, %v6264, %v6576
      %v6644 = vsel %vm1964, %v6267, %v6578
      %v6645 = vsel %vm1964, %v6272, %v6580
      %v6646 = vsel %vm1964, %v6275, %v6582
      %v6647 = vpack.c.bf16 %v6616, %v6615
      %v6648 = vpack.c.bf16 %v6618, %v6617
      %v6649 = vpack.c.bf16 %v6620, %v6619
      %v6650 = vpack.c.bf16 %v6622, %v6621
      %v6651 = vpack.c.bf16 %v6624, %v6623
      %v6652 = vpack.c.bf16 %v6626, %v6625
      %v6653 = vpack.c.bf16 %v6628, %v6627
      %v6654 = vpack.c.bf16 %v6630, %v6629
      %v6655 = vpack.c.bf16 %v6632, %v6631
      %v6656 = vpack.c.bf16 %v6634, %v6633
      %v6657 = vpack.c.bf16 %v6636, %v6635
      %v6658 = vpack.c.bf16 %v6638, %v6637
      %v6659 = vpack.c.bf16 %v6640, %v6639
      %v6660 = vpack.c.bf16 %v6642, %v6641
      %v6661 = vpack.c.bf16 %v6644, %v6643
      %v6662 = vpack.c.bf16 %v6646, %v6645
      %v6663 = vld [vmem:[%s10] sm:$0xf]
      %v6664 = vld [vmem:[%s10 + $0x4] sm:$0xf]
      %v6665 = vld [vmem:[%s10 + $0x8] sm:$0xf]
      %v6666 = vld [vmem:[%s10 + $0xc] sm:$0xf]
      %v6667 = vld [vmem:[%s11] sm:$0x1]
      %v6669 = vlaneseq
      %v6670 = vshrl.u32 %v6669, 7
      %v6671 = vsub.s32 0, %v6670
      %v6672 = vrot.slane %v6667, %v6671
      %v6678 = vunpack.c.l.b16 %v6663
      %v6679 = vunpack.c.l.b16 %v6664
      %v6680 = vunpack.c.l.b16 %v6665
      %v6681 = vunpack.c.l.b16 %v6666
      %v6682 = vpack.c.b16 %v6679, %v6678
      %v6683 = vpack.c.b16 %v6681, %v6680
      %v6687 = vsel %vm2096, %v6647, 0
      %v6690 = vsel %vm2096, %v6648, 0
      %v6693 = vsel %vm2096, %v6649, 0
      %v6696 = vsel %vm2096, %v6650, 0
      %v6699 = vsel %vm2096, %v6651, 0
      %v6702 = vsel %vm2096, %v6652, 0
      %v6705 = vsel %vm2096, %v6653, 0
      %v6708 = vsel %vm2096, %v6654, 0
      %v6711 = vsel %vm2096, %v6655, 0
      %v6714 = vsel %vm2096, %v6656, 0
      %v6717 = vsel %vm2096, %v6657, 0
      %v6720 = vsel %vm2096, %v6658, 0
      %v6723 = vsel %vm2096, %v6659, 0
      %v6726 = vsel %vm2096, %v6660, 0
      %v6729 = vsel %vm2096, %v6661, 0
      %v6732 = vsel %vm2096, %v6662, 0
      %6734 = vmatprep.subr.bf16.mxu0 0
      %6735 = vmatpush1.bf16.msra.mxu0 %v6682
      %6736 = vmatprep.subr.bf16.mxu0 0
      %6737 = vmatpush1.bf16.msra.mxu0 %v6683
      %6738 = vmatprep.subr.bf16.mxu0 0
      %6739 = vmatpush1.bf16.msra.mxu0 0
      %6740 = vmatprep.subr.bf16.mxu0 0
      %6741 = vmatpush1.bf16.msra.mxu0 0
      %6742 = vmatprep.subr.bf16.mxu0 0
      %6743 = vmatpush1.bf16.msra.mxu0 0
      %6744 = vmatprep.subr.bf16.mxu0 0
      %6745 = vmatpush1.bf16.msra.mxu0 0
      %6746 = vmatprep.subr.bf16.mxu0 0
      %6747 = vmatpush1.bf16.msra.mxu0 0
      %6748 = vmatprep.subr.bf16.mxu0 0
      %6749 = vmatpush1.bf16.msra.mxu0 0
      %6750 = vmatprep.subr.bf16.mxu0 0
      %6751 = vmatpush1.bf16.msra.mxu0 0
      %6752 = vmatprep.subr.bf16.mxu0 0
      %6753 = vmatpush1.bf16.msra.mxu0 0
      %6754 = vmatprep.subr.bf16.mxu0 0
      %6755 = vmatpush1.bf16.msra.mxu0 0
      %6756 = vmatprep.subr.bf16.mxu0 0
      %6757 = vmatpush1.bf16.msra.mxu0 0
      %6758 = vmatprep.subr.bf16.mxu0 0
      %6759 = vmatpush1.bf16.msra.mxu0 0
      %6760 = vmatprep.subr.bf16.mxu0 0
      %6761 = vmatpush1.bf16.msra.mxu0 0
      %6762 = vmatprep.subr.bf16.mxu0 0
      %6763 = vmatpush1.bf16.msra.mxu0 0
      %6764 = vmatprep.subr.bf16.mxu0 0
      %6765 = vmatpush1.bf16.msra.mxu0 0
      %6766 = vmatprep.mubr.bf16.mxu0 0
      %6767 = vmatmul.mubr.bf16.gmra.mrb[0].mxu0 %v6687
      %v6768 = vpop.f32.mrb[0].mxu0
      %v6769 = vadd.f32 %v6672, %v6768
      %v6770 = vpop.f32.mrb[0].mxu0
      %v6771 = vpop.f32.mrb[0].mxu0
      %v6772 = vadd.f32 %v6672, %v6771
      %v6773 = vpop.f32.mrb[0].mxu0
      %6774 = vmatprep.mubr.bf16.mxu0 0
      %6775 = vmatmul.mubr.bf16.gmra.mrb[0].mxu0 %v6690
      %v6776 = vpop.f32.mrb[0].mxu0
      %v6777 = vadd.f32 %v6672, %v6776
      %v6778 = vpop.f32.mrb[0].mxu0
      %v6779 = vpop.f32.mrb[0].mxu0
      %v6780 = vadd.f32 %v6672, %v6779
      %v6781 = vpop.f32.mrb[0].mxu0
      %6782 = vmatprep.mubr.bf16.mxu0 0
      %6783 = vmatmul.mubr.bf16.gmra.mrb[0].mxu0 %v6693
      %v6784 = vpop.f32.mrb[0].mxu0
      %v6785 = vadd.f32 %v6672, %v6784
      %v6786 = vpop.f32.mrb[0].mxu0
      %v6787 = vpop.f32.mrb[0].mxu0
      %v6788 = vadd.f32 %v6672, %v6787
      %v6789 = vpop.f32.mrb[0].mxu0
      %6790 = vmatprep.mubr.bf16.mxu0 0
      %6791 = vmatmul.mubr.bf16.gmra.mrb[0].mxu0 %v6696
      %v6792 = vpop.f32.mrb[0].mxu0
      %v6793 = vadd.f32 %v6672, %v6792
      %v6794 = vpop.f32.mrb[0].mxu0
      %v6795 = vpop.f32.mrb[0].mxu0
      %v6796 = vadd.f32 %v6672, %v6795
      %v6797 = vpop.f32.mrb[0].mxu0
      %6798 = vmatprep.mubr.bf16.mxu0 0
      %6799 = vmatmul.mubr.bf16.gmra.mrb[0].mxu0 %v6699
      %v6800 = vpop.f32.mrb[0].mxu0
      %v6801 = vadd.f32 %v6672, %v6800
      %v6802 = vpop.f32.mrb[0].mxu0
      %v6803 = vpop.f32.mrb[0].mxu0
      %v6804 = vadd.f32 %v6672, %v6803
      %v6805 = vpop.f32.mrb[0].mxu0
      %6806 = vmatprep.mubr.bf16.mxu0 0
      %6807 = vmatmul.mubr.bf16.gmra.mrb[0].mxu0 %v6702
      %v6808 = vpop.f32.mrb[0].mxu0
      %v6809 = vadd.f32 %v6672, %v6808
      %v6810 = vpop.f32.mrb[0].mxu0
      %v6811 = vpop.f32.mrb[0].mxu0
      %v6812 = vadd.f32 %v6672, %v6811
      %v6813 = vpop.f32.mrb[0].mxu0
      %6814 = vmatprep.mubr.bf16.mxu0 0
      %6815 = vmatmul.mubr.bf16.gmra.mrb[0].mxu0 %v6705
      %v6816 = vpop.f32.mrb[0].mxu0
      %v6817 = vadd.f32 %v6672, %v6816
      %v6818 = vpop.f32.mrb[0].mxu0
      %v6819 = vpop.f32.mrb[0].mxu0
      %v6820 = vadd.f32 %v6672, %v6819
      %v6821 = vpop.f32.mrb[0].mxu0
      %6822 = vmatprep.mubr.bf16.mxu0 0
      %6823 = vmatmul.mubr.bf16.gmra.mrb[0].mxu0 %v6708
      %v6824 = vpop.f32.mrb[0].mxu0
      %v6825 = vadd.f32 %v6672, %v6824
      %v6826 = vpop.f32.mrb[0].mxu0
      %v6827 = vpop.f32.mrb[0].mxu0
      %v6828 = vadd.f32 %v6672, %v6827
      %v6829 = vpop.f32.mrb[0].mxu0
      %6830 = vmatprep.mubr.bf16.mxu0 0
      %6831 = vmatmul.mubr.bf16.gmra.mrb[0].mxu0 %v6711
      %v6832 = vpop.f32.mrb[0].mxu0
      %v6833 = vadd.f32 %v6672, %v6832
      %v6834 = vpop.f32.mrb[0].mxu0
      %v6835 = vpop.f32.mrb[0].mxu0
      %v6836 = vadd.f32 %v6672, %v6835
      %v6837 = vpop.f32.mrb[0].mxu0
      %6838 = vmatprep.mubr.bf16.mxu0 0
      %6839 = vmatmul.mubr.bf16.gmra.mrb[0].mxu0 %v6714
      %v6840 = vpop.f32.mrb[0].mxu0
      %v6841 = vadd.f32 %v6672, %v6840
      %v6842 = vpop.f32.mrb[0].mxu0
      %v6843 = vpop.f32.mrb[0].mxu0
      %v6844 = vadd.f32 %v6672, %v6843
      %v6845 = vpop.f32.mrb[0].mxu0
      %6846 = vmatprep.mubr.bf16.mxu0 0
      %6847 = vmatmul.mubr.bf16.gmra.mrb[0].mxu0 %v6717
      %v6848 = vpop.f32.mrb[0].mxu0
      %v6849 = vadd.f32 %v6672, %v6848
      %v6850 = vpop.f32.mrb[0].mxu0
      %v6851 = vpop.f32.mrb[0].mxu0
      %v6852 = vadd.f32 %v6672, %v6851
      %v6853 = vpop.f32.mrb[0].mxu0
      %6854 = vmatprep.mubr.bf16.mxu0 0
      %6855 = vmatmul.mubr.bf16.gmra.mrb[0].mxu0 %v6720
      %v6856 = vpop.f32.mrb[0].mxu0
      %v6857 = vadd.f32 %v6672, %v6856
      %v6858 = vpop.f32.mrb[0].mxu0
      %v6859 = vpop.f32.mrb[0].mxu0
      %v6860 = vadd.f32 %v6672, %v6859
      %v6861 = vpop.f32.mrb[0].mxu0
      %6862 = vmatprep.mubr.bf16.mxu0 0
      %6863 = vmatmul.mubr.bf16.gmra.mrb[0].mxu0 %v6723
      %v6864 = vpop.f32.mrb[0].mxu0
      %v6865 = vadd.f32 %v6672, %v6864
      %v6866 = vpop.f32.mrb[0].mxu0
      %v6867 = vpop.f32.mrb[0].mxu0
      %v6868 = vadd.f32 %v6672, %v6867
      %v6869 = vpop.f32.mrb[0].mxu0
      %6870 = vmatprep.mubr.bf16.mxu0 0
      %6871 = vmatmul.mubr.bf16.gmra.mrb[0].mxu0 %v6726
      %v6872 = vpop.f32.mrb[0].mxu0
      %v6873 = vadd.f32 %v6672, %v6872
      %v6874 = vpop.f32.mrb[0].mxu0
      %v6875 = vpop.f32.mrb[0].mxu0
      %v6876 = vadd.f32 %v6672, %v6875
      %v6877 = vpop.f32.mrb[0].mxu0
      %6878 = vmatprep.mubr.bf16.mxu0 0
      %6879 = vmatmul.mubr.bf16.gmra.mrb[0].mxu0 %v6729
      %v6880 = vpop.f32.mrb[0].mxu0
      %v6881 = vadd.f32 %v6672, %v6880
      %v6882 = vpop.f32.mrb[0].mxu0
      %v6883 = vpop.f32.mrb[0].mxu0
      %v6884 = vadd.f32 %v6672, %v6883
      %v6885 = vpop.f32.mrb[0].mxu0
      %6886 = vmatprep.mubr.bf16.mxu0 0
      %6887 = vmatmul.mubr.bf16.gmra.mrb[0].mxu0 %v6732
      %v6888 = vpop.f32.mrb[0].mxu0
      %v6889 = vadd.f32 %v6672, %v6888
      %v6890 = vpop.f32.mrb[0].mxu0
      %v6891 = vpop.f32.mrb[0].mxu0
      %v6892 = vadd.f32 %v6672, %v6891
      %v6893 = vpop.f32.mrb[0].mxu0
      %6894 = vdwg.mxu0
      %6927 = vrot.lane.b32.xlu0 %v3659, 80
      %v6928 = vpop.permute.xlu0 %6927
      %6929 = vrot.lane.b32.xlu0 %v3660, 80
      %v6930 = vpop.permute.xlu0 %6929
      %6931 = vrot.lane.b32.xlu0 %v3661, 80
      %v6932 = vpop.permute.xlu0 %6931
      %6933 = vrot.lane.b32.xlu0 %v3662, 80
      %v6934 = vpop.permute.xlu0 %6933
      %6935 = vrot.lane.b32.xlu0 %v3663, 80
      %v6936 = vpop.permute.xlu0 %6935
      %6937 = vrot.lane.b32.xlu0 %v3664, 80
      %v6938 = vpop.permute.xlu0 %6937
      %6939 = vrot.lane.b32.xlu0 %v3665, 80
      %v6940 = vpop.permute.xlu0 %6939
      %6941 = vrot.lane.b32.xlu0 %v3666, 80
      %v6942 = vpop.permute.xlu0 %6941
      %6943 = vrot.lane.b32.xlu0 %v3667, 80
      %v6944 = vpop.permute.xlu0 %6943
      %6945 = vrot.lane.b32.xlu0 %v3668, 80
      %v6946 = vpop.permute.xlu0 %6945
      %6947 = vrot.lane.b32.xlu0 %v3669, 80
      %v6948 = vpop.permute.xlu0 %6947
      %6949 = vrot.lane.b32.xlu0 %v3670, 80
      %v6950 = vpop.permute.xlu0 %6949
      %6951 = vrot.lane.b32.xlu0 %v3671, 80
      %v6952 = vpop.permute.xlu0 %6951
      %6953 = vrot.lane.b32.xlu0 %v3672, 80
      %v6954 = vpop.permute.xlu0 %6953
      %6955 = vrot.lane.b32.xlu0 %v3673, 80
      %v6956 = vpop.permute.xlu0 %6955
      %6957 = vrot.lane.b32.xlu0 %v3674, 80
      %v6958 = vpop.permute.xlu0 %6957
      %6959 = vrot.lane.b32.xlu0 %v3675, 80
      %v6960 = vpop.permute.xlu0 %6959
      %6961 = vrot.lane.b32.xlu0 %v3676, 80
      %v6962 = vpop.permute.xlu0 %6961
      %6963 = vrot.lane.b32.xlu0 %v3677, 80
      %v6964 = vpop.permute.xlu0 %6963
      %6965 = vrot.lane.b32.xlu0 %v3678, 80
      %v6966 = vpop.permute.xlu0 %6965
      %6967 = vrot.lane.b32.xlu0 %v3679, 80
      %v6968 = vpop.permute.xlu0 %6967
      %6969 = vrot.lane.b32.xlu0 %v3680, 80
      %v6970 = vpop.permute.xlu0 %6969
      %6971 = vrot.lane.b32.xlu0 %v3681, 80
      %v6972 = vpop.permute.xlu0 %6971
      %6973 = vrot.lane.b32.xlu0 %v3682, 80
      %v6974 = vpop.permute.xlu0 %6973
      %6975 = vrot.lane.b32.xlu0 %v3683, 80
      %v6976 = vpop.permute.xlu0 %6975
      %6977 = vrot.lane.b32.xlu0 %v3684, 80
      %v6978 = vpop.permute.xlu0 %6977
      %6979 = vrot.lane.b32.xlu0 %v3685, 80
      %v6980 = vpop.permute.xlu0 %6979
      %6981 = vrot.lane.b32.xlu0 %v3686, 80
      %v6982 = vpop.permute.xlu0 %6981
      %6983 = vrot.lane.b32.xlu0 %v3687, 80
      %v6984 = vpop.permute.xlu0 %6983
      %6985 = vrot.lane.b32.xlu0 %v3688, 80
      %v6986 = vpop.permute.xlu0 %6985
      %6987 = vrot.lane.b32.xlu0 %v3689, 80
      %v6988 = vpop.permute.xlu0 %6987
      %6989 = vrot.lane.b32.xlu0 %v3690, 80
      %v6990 = vpop.permute.xlu0 %6989
      %v7023 = vsel %vm1964, %v6769, %v6928
      %v7024 = vsel %vm1964, %v6772, %v6930
      %v7025 = vsel %vm1964, %v6777, %v6932
      %v7026 = vsel %vm1964, %v6780, %v6934
      %v7027 = vsel %vm1964, %v6785, %v6936
      %v7028 = vsel %vm1964, %v6788, %v6938
      %v7029 = vsel %vm1964, %v6793, %v6940
      %v7030 = vsel %vm1964, %v6796, %v6942
      %v7031 = vsel %vm1964, %v6801, %v6944
      %v7032 = vsel %vm1964, %v6804, %v6946
      %v7033 = vsel %vm1964, %v6809, %v6948
      %v7034 = vsel %vm1964, %v6812, %v6950
      %v7035 = vsel %vm1964, %v6817, %v6952
      %v7036 = vsel %vm1964, %v6820, %v6954
      %v7037 = vsel %vm1964, %v6825, %v6956
      %v7038 = vsel %vm1964, %v6828, %v6958
      %v7039 = vsel %vm1964, %v6833, %v6960
      %v7040 = vsel %vm1964, %v6836, %v6962
      %v7041 = vsel %vm1964, %v6841, %v6964
      %v7042 = vsel %vm1964, %v6844, %v6966
      %v7043 = vsel %vm1964, %v6849, %v6968
      %v7044 = vsel %vm1964, %v6852, %v6970
      %v7045 = vsel %vm1964, %v6857, %v6972
      %v7046 = vsel %vm1964, %v6860, %v6974
      %v7047 = vsel %vm1964, %v6865, %v6976
      %v7048 = vsel %vm1964, %v6868, %v6978
      %v7049 = vsel %vm1964, %v6873, %v6980
      %v7050 = vsel %vm1964, %v6876, %v6982
      %v7051 = vsel %vm1964, %v6881, %v6984
      %v7052 = vsel %vm1964, %v6884, %v6986
      %v7053 = vsel %vm1964, %v6889, %v6988
      %v7054 = vsel %vm1964, %v6892, %v6990
      %vm7055 = vcmask 392192
      %7056 = vst.msk [vmem:[#allocation3] sm:$0xff] %vm7055, 0.0
      %7057 = vst.msk [vmem:[#allocation3 + $0x8] sm:$0xff] %vm7055, 0.0
      %vm7058 = vcmask 386048
      %7059 = vst.msk [vmem:[#allocation3 + $0x10] sm:$0x3] %vm7058, 0.0
      %7060 = vst.msk [vmem:[#allocation3 + $0x18] sm:$0xff] %vm7055, 0.0
      %7061 = vst.msk [vmem:[#allocation3 + $0x20] sm:$0xff] %vm7055, 0.0
      %7062 = vst.msk [vmem:[#allocation3 + $0x28] sm:$0x3] %vm7058, 0.0
      %7063 = vst.msk [vmem:[#allocation3 + $0x30] sm:$0xff] %vm7055, 0.0
      %7064 = vst.msk [vmem:[#allocation3 + $0x38] sm:$0xff] %vm7055, 0.0
      %7065 = vst.msk [vmem:[#allocation3 + $0x40] sm:$0x3] %vm7058, 0.0
      %7066 = vst.msk [vmem:[#allocation3 + $0x48] sm:$0xff] %vm7055, 0.0
      %7067 = vst.msk [vmem:[#allocation3 + $0x50] sm:$0xff] %vm7055, 0.0
      %7068 = vst.msk [vmem:[#allocation3 + $0x58] sm:$0x3] %vm7058, 0.0
      %7069 = vst.msk [vmem:[#allocation3 + $0x60] sm:$0xff] %vm7055, 0.0
      %7070 = vst.msk [vmem:[#allocation3 + $0x68] sm:$0xff] %vm7055, 0.0
      %7071 = vst.msk [vmem:[#allocation3 + $0x70] sm:$0x3] %vm7058, 0.0
      %7072 = vst.msk [vmem:[#allocation3 + $0x78] sm:$0xff] %vm7055, 0.0
      %7073 = vst.msk [vmem:[#allocation3 + $0x80] sm:$0xff] %vm7055, 0.0
      %7074 = vst.msk [vmem:[#allocation3 + $0x88] sm:$0x3] %vm7058, 0.0
      %7075 = vst.msk [vmem:[#allocation3 + $0x90] sm:$0xff] %vm7055, 0.0
      %7076 = vst.msk [vmem:[#allocation3 + $0x98] sm:$0xff] %vm7055, 0.0
      %7077 = vst.msk [vmem:[#allocation3 + $0xa0] sm:$0x3] %vm7058, 0.0
      %7078 = vst.msk [vmem:[#allocation3 + $0xa8] sm:$0xff] %vm7055, 0.0
      %7079 = vst.msk [vmem:[#allocation3 + $0xb0] sm:$0xff] %vm7055, 0.0
      %7080 = vst.msk [vmem:[#allocation3 + $0xb8] sm:$0x3] %vm7058, 0.0
      %7081 = vst.msk [vmem:[#allocation3 + $0xc0] sm:$0xff] %vm7055, 0.0
      %7082 = vst.msk [vmem:[#allocation3 + $0xc8] sm:$0xff] %vm7055, 0.0
      %7083 = vst.msk [vmem:[#allocation3 + $0xd0] sm:$0x3] %vm7058, 0.0
      %7084 = vst.msk [vmem:[#allocation3 + $0xd8] sm:$0xff] %vm7055, 0.0
      %7085 = vst.msk [vmem:[#allocation3 + $0xe0] sm:$0xff] %vm7055, 0.0
      %7086 = vst.msk [vmem:[#allocation3 + $0xe8] sm:$0x3] %vm7058, 0.0
      %7087 = vst.msk [vmem:[#allocation3 + $0xf0] sm:$0xff] %vm7055, 0.0
      %7088 = vst.msk [vmem:[#allocation3 + $0xf8] sm:$0xff] %vm7055, 0.0
      %7089 = vst.msk [vmem:[#allocation3 + $0x100] sm:$0x3] %vm7058, 0.0
      %7090 = vst.msk [vmem:[#allocation3 + $0x108] sm:$0xff] %vm7055, 0.0
      %7091 = vst.msk [vmem:[#allocation3 + $0x110] sm:$0xff] %vm7055, 0.0
      %7092 = vst.msk [vmem:[#allocation3 + $0x118] sm:$0x3] %vm7058, 0.0
      %7093 = vst.msk [vmem:[#allocation3 + $0x120] sm:$0xff] %vm7055, 0.0
      %7094 = vst.msk [vmem:[#allocation3 + $0x128] sm:$0xff] %vm7055, 0.0
      %7095 = vst.msk [vmem:[#allocation3 + $0x130] sm:$0x3] %vm7058, 0.0
      %7096 = vst.msk [vmem:[#allocation3 + $0x138] sm:$0xff] %vm7055, 0.0
      %7097 = vst.msk [vmem:[#allocation3 + $0x140] sm:$0xff] %vm7055, 0.0
      %7098 = vst.msk [vmem:[#allocation3 + $0x148] sm:$0x3] %vm7058, 0.0
      %7099 = vst.msk [vmem:[#allocation3 + $0x150] sm:$0xff] %vm7055, 0.0
      %7100 = vst.msk [vmem:[#allocation3 + $0x158] sm:$0xff] %vm7055, 0.0
      %7101 = vst.msk [vmem:[#allocation3 + $0x160] sm:$0x3] %vm7058, 0.0
      %7102 = vst.msk [vmem:[#allocation3 + $0x168] sm:$0xff] %vm7055, 0.0
      %7103 = vst.msk [vmem:[#allocation3 + $0x170] sm:$0xff] %vm7055, 0.0
      %7104 = vst.msk [vmem:[#allocation3 + $0x178] sm:$0x3] %vm7058, 0.0
      %7105 = vst.msk [vmem:[#allocation3 + $0x180] sm:$0xff] %vm7055, 0.0
      %7106 = vst.msk [vmem:[#allocation3 + $0x188] sm:$0xff] %vm7055, 0.0
      %7107 = vst.msk [vmem:[#allocation3 + $0x190] sm:$0x3] %vm7058, 0.0
      %7108 = vst.msk [vmem:[#allocation3 + $0x198] sm:$0xff] %vm7055, 0.0
      %7109 = vst.msk [vmem:[#allocation3 + $0x1a0] sm:$0xff] %vm7055, 0.0
      %7110 = vst.msk [vmem:[#allocation3 + $0x1a8] sm:$0x3] %vm7058, 0.0
      %s7111 = scalar_lea.vmem [#allocation3], 24
      %7112 = vst.msk [vmem:[%s7111 + $0x1] sm:$0xff] %vm7055, %v7023
      %7113 = vst.msk [vmem:[%s7111 + $0x9] sm:$0xff] %vm7055, %v7024
      %7114 = vst.msk [vmem:[%s7111 + $0x19] sm:$0xff] %vm7055, %v7025
      %7115 = vst.msk [vmem:[%s7111 + $0x21] sm:$0xff] %vm7055, %v7026
      %7116 = vst.msk [vmem:[%s7111 + $0x31] sm:$0xff] %vm7055, %v7027
      %7117 = vst.msk [vmem:[%s7111 + $0x39] sm:$0xff] %vm7055, %v7028
      %7118 = vst.msk [vmem:[%s7111 + $0x49] sm:$0xff] %vm7055, %v7029
      %7119 = vst.msk [vmem:[%s7111 + $0x51] sm:$0xff] %vm7055, %v7030
      %7120 = vst.msk [vmem:[%s7111 + $0x61] sm:$0xff] %vm7055, %v7031
      %7121 = vst.msk [vmem:[%s7111 + $0x69] sm:$0xff] %vm7055, %v7032
      %7122 = vst.msk [vmem:[%s7111 + $0x79] sm:$0xff] %vm7055, %v7033
      %7123 = vst.msk [vmem:[%s7111 + $0x81] sm:$0xff] %vm7055, %v7034
      %7124 = vst.msk [vmem:[%s7111 + $0x91] sm:$0xff] %vm7055, %v7035
      %7125 = vst.msk [vmem:[%s7111 + $0x99] sm:$0xff] %vm7055, %v7036
      %7126 = vst.msk [vmem:[%s7111 + $0xa9] sm:$0xff] %vm7055, %v7037
      %7127 = vst.msk [vmem:[%s7111 + $0xb1] sm:$0xff] %vm7055, %v7038
      %7128 = vst.msk [vmem:[%s7111 + $0xc1] sm:$0xff] %vm7055, %v7039
      %7129 = vst.msk [vmem:[%s7111 + $0xc9] sm:$0xff] %vm7055, %v7040
      %7130 = vst.msk [vmem:[%s7111 + $0xd9] sm:$0xff] %vm7055, %v7041
      %7131 = vst.msk [vmem:[%s7111 + $0xe1] sm:$0xff] %vm7055, %v7042
      %7132 = vst.msk [vmem:[%s7111 + $0xf1] sm:$0xff] %vm7055, %v7043
      %7133 = vst.msk [vmem:[%s7111 + $0xf9] sm:$0xff] %vm7055, %v7044
      %7134 = vst.msk [vmem:[%s7111 + $0x109] sm:$0xff] %vm7055, %v7045
      %7135 = vst.msk [vmem:[%s7111 + $0x111] sm:$0xff] %vm7055, %v7046
      %7136 = vst.msk [vmem:[%s7111 + $0x121] sm:$0xff] %vm7055, %v7047
      %7137 = vst.msk [vmem:[%s7111 + $0x129] sm:$0xff] %vm7055, %v7048
      %7138 = vst.msk [vmem:[%s7111 + $0x139] sm:$0xff] %vm7055, %v7049
      %7139 = vst.msk [vmem:[%s7111 + $0x141] sm:$0xff] %vm7055, %v7050
      %7140 = vst.msk [vmem:[%s7111 + $0x151] sm:$0xff] %vm7055, %v7051
      %7141 = vst.msk [vmem:[%s7111 + $0x159] sm:$0xff] %vm7055, %v7052
      %7142 = vst.msk [vmem:[%s7111 + $0x169] sm:$0xff] %vm7055, %v7053
      %7143 = vst.msk [vmem:[%s7111 + $0x171] sm:$0xff] %vm7055, %v7054
      %v7144 = vld [vmem:[#allocation3] sm:$0xff]
      %v7145 = vld [vmem:[#allocation3 + $0x8] sm:$0xff]
      %v7146 = vld [vmem:[#allocation3 + $0x10] sm:$0x3]
      %v7147 = vld [vmem:[#allocation3 + $0x18] sm:$0xff]
      %v7148 = vld [vmem:[#allocation3 + $0x20] sm:$0xff]
      %v7149 = vld [vmem:[#allocation3 + $0x28] sm:$0x3]
      %v7150 = vld [vmem:[#allocation3 + $0x30] sm:$0xff]
      %v7151 = vld [vmem:[#allocation3 + $0x38] sm:$0xff]
      %v7152 = vld [vmem:[#allocation3 + $0x40] sm:$0x3]
      %v7153 = vld [vmem:[#allocation3 + $0x48] sm:$0xff]
      %v7154 = vld [vmem:[#allocation3 + $0x50] sm:$0xff]
      %v7155 = vld [vmem:[#allocation3 + $0x58] sm:$0x3]
      %v7156 = vld [vmem:[#allocation3 + $0x60] sm:$0xff]
      %v7157 = vld [vmem:[#allocation3 + $0x68] sm:$0xff]
      %v7158 = vld [vmem:[#allocation3 + $0x70] sm:$0x3]
      %v7159 = vld [vmem:[#allocation3 + $0x78] sm:$0xff]
      %v7160 = vld [vmem:[#allocation3 + $0x80] sm:$0xff]
      %v7161 = vld [vmem:[#allocation3 + $0x88] sm:$0x3]
      %v7162 = vld [vmem:[#allocation3 + $0x90] sm:$0xff]
      %v7163 = vld [vmem:[#allocation3 + $0x98] sm:$0xff]
      %v7164 = vld [vmem:[#allocation3 + $0xa0] sm:$0x3]
      %v7165 = vld [vmem:[#allocation3 + $0xa8] sm:$0xff]
      %v7166 = vld [vmem:[#allocation3 + $0xb0] sm:$0xff]
      %v7167 = vld [vmem:[#allocation3 + $0xb8] sm:$0x3]
      %v7168 = vld [vmem:[#allocation3 + $0xc0] sm:$0xff]
      %v7169 = vld [vmem:[#allocation3 + $0xc8] sm:$0xff]
      %v7170 = vld [vmem:[#allocation3 + $0xd0] sm:$0x3]
      %v7171 = vld [vmem:[#allocation3 + $0xd8] sm:$0xff]
      %v7172 = vld [vmem:[#allocation3 + $0xe0] sm:$0xff]
      %v7173 = vld [vmem:[#allocation3 + $0xe8] sm:$0x3]
      %v7174 = vld [vmem:[#allocation3 + $0xf0] sm:$0xff]
      %v7175 = vld [vmem:[#allocation3 + $0xf8] sm:$0xff]
      %v7176 = vld [vmem:[#allocation3 + $0x100] sm:$0x3]
      %v7177 = vld [vmem:[#allocation3 + $0x108] sm:$0xff]
      %v7178 = vld [vmem:[#allocation3 + $0x110] sm:$0xff]
      %v7179 = vld [vmem:[#allocation3 + $0x118] sm:$0x3]
      %v7180 = vld [vmem:[#allocation3 + $0x120] sm:$0xff]
      %v7181 = vld [vmem:[#allocation3 + $0x128] sm:$0xff]
      %v7182 = vld [vmem:[#allocation3 + $0x130] sm:$0x3]
      %v7183 = vld [vmem:[#allocation3 + $0x138] sm:$0xff]
      %v7184 = vld [vmem:[#allocation3 + $0x140] sm:$0xff]
      %v7185 = vld [vmem:[#allocation3 + $0x148] sm:$0x3]
      %v7186 = vld [vmem:[#allocation3 + $0x150] sm:$0xff]
      %v7187 = vld [vmem:[#allocation3 + $0x158] sm:$0xff]
      %v7188 = vld [vmem:[#allocation3 + $0x160] sm:$0x3]
      %v7189 = vld [vmem:[#allocation3 + $0x168] sm:$0xff]
      %v7190 = vld [vmem:[#allocation3 + $0x170] sm:$0xff]
      %v7191 = vld [vmem:[#allocation3 + $0x178] sm:$0x3]
      %v7192 = vld [vmem:[#allocation3 + $0x180] sm:$0xff]
      %v7193 = vld [vmem:[#allocation3 + $0x188] sm:$0xff]
      %v7194 = vld [vmem:[#allocation3 + $0x190] sm:$0x3]
      %v7195 = vld [vmem:[#allocation3 + $0x198] sm:$0xff]
      %v7196 = vld [vmem:[#allocation3 + $0x1a0] sm:$0xff]
      %v7197 = vld [vmem:[#allocation3 + $0x1a8] sm:$0x3]
      %v7246 = vrot.slane %v7144, 1
      %v7247 = vrot.slane %v7145, 1
      %v7248 = vsel %vm910, %v7246, %v7247
      %v7249 = vrot.slane %v7146, 1
      %v7250 = vsel %vm910, %v7247, %v7249
      %v7251 = vrot.slane %v7147, 1
      %v7252 = vrot.slane %v7148, 1
      %v7253 = vsel %vm910, %v7251, %v7252
      %v7254 = vrot.slane %v7149, 1
      %v7255 = vsel %vm910, %v7252, %v7254
      %v7256 = vrot.slane %v7150, 1
      %v7257 = vrot.slane %v7151, 1
      %v7258 = vsel %vm910, %v7256, %v7257
      %v7259 = vrot.slane %v7152, 1
      %v7260 = vsel %vm910, %v7257, %v7259
      %v7261 = vrot.slane %v7153, 1
      %v7262 = vrot.slane %v7154, 1
      %v7263 = vsel %vm910, %v7261, %v7262
      %v7264 = vrot.slane %v7155, 1
      %v7265 = vsel %vm910, %v7262, %v7264
      %v7266 = vrot.slane %v7156, 1
      %v7267 = vrot.slane %v7157, 1
      %v7268 = vsel %vm910, %v7266, %v7267
      %v7269 = vrot.slane %v7158, 1
      %v7270 = vsel %vm910, %v7267, %v7269
      %v7271 = vrot.slane %v7159, 1
      %v7272 = vrot.slane %v7160, 1
      %v7273 = vsel %vm910, %v7271, %v7272
      %v7274 = vrot.slane %v7161, 1
      %v7275 = vsel %vm910, %v7272, %v7274
      %v7276 = vrot.slane %v7162, 1
      %v7277 = vrot.slane %v7163, 1
      %v7278 = vsel %vm910, %v7276, %v7277
      %v7279 = vrot.slane %v7164, 1
      %v7280 = vsel %vm910, %v7277, %v7279
      %v7281 = vrot.slane %v7165, 1
      %v7282 = vrot.slane %v7166, 1
      %v7283 = vsel %vm910, %v7281, %v7282
      %v7284 = vrot.slane %v7167, 1
      %v7285 = vsel %vm910, %v7282, %v7284
      %v7286 = vrot.slane %v7168, 1
      %v7287 = vrot.slane %v7169, 1
      %v7288 = vsel %vm910, %v7286, %v7287
      %v7289 = vrot.slane %v7170, 1
      %v7290 = vsel %vm910, %v7287, %v7289
      %v7291 = vrot.slane %v7171, 1
      %v7292 = vrot.slane %v7172, 1
      %v7293 = vsel %vm910, %v7291, %v7292
      %v7294 = vrot.slane %v7173, 1
      %v7295 = vsel %vm910, %v7292, %v7294
      %v7296 = vrot.slane %v7174, 1
      %v7297 = vrot.slane %v7175, 1
      %v7298 = vsel %vm910, %v7296, %v7297
      %v7299 = vrot.slane %v7176, 1
      %v7300 = vsel %vm910, %v7297, %v7299
      %v7301 = vrot.slane %v7177, 1
      %v7302 = vrot.slane %v7178, 1
      %v7303 = vsel %vm910, %v7301, %v7302
      %v7304 = vrot.slane %v7179, 1
      %v7305 = vsel %vm910, %v7302, %v7304
      %v7306 = vrot.slane %v7180, 1
      %v7307 = vrot.slane %v7181, 1
      %v7308 = vsel %vm910, %v7306, %v7307
      %v7309 = vrot.slane %v7182, 1
      %v7310 = vsel %vm910, %v7307, %v7309
      %v7311 = vrot.slane %v7183, 1
      %v7312 = vrot.slane %v7184, 1
      %v7313 = vsel %vm910, %v7311, %v7312
      %v7314 = vrot.slane %v7185, 1
      %v7315 = vsel %vm910, %v7312, %v7314
      %v7316 = vrot.slane %v7186, 1
      %v7317 = vrot.slane %v7187, 1
      %v7318 = vsel %vm910, %v7316, %v7317
      %v7319 = vrot.slane %v7188, 1
      %v7320 = vsel %vm910, %v7317, %v7319
      %v7321 = vrot.slane %v7189, 1
      %v7322 = vrot.slane %v7190, 1
      %v7323 = vsel %vm910, %v7321, %v7322
      %v7324 = vrot.slane %v7191, 1
      %v7325 = vsel %vm910, %v7322, %v7324
      %v7326 = vrot.slane %v7144, 2
      %v7327 = vrot.slane %v7145, 2
      %v7328 = vsel %vm991, %v7326, %v7327
      %v7329 = vrot.slane %v7146, 2
      %v7330 = vsel %vm991, %v7327, %v7329
      %v7331 = vrot.slane %v7147, 2
      %v7332 = vrot.slane %v7148, 2
      %v7333 = vsel %vm991, %v7331, %v7332
      %v7334 = vrot.slane %v7149, 2
      %v7335 = vsel %vm991, %v7332, %v7334
      %v7336 = vrot.slane %v7150, 2
      %v7337 = vrot.slane %v7151, 2
      %v7338 = vsel %vm991, %v7336, %v7337
      %v7339 = vrot.slane %v7152, 2
      %v7340 = vsel %vm991, %v7337, %v7339
      %v7341 = vrot.slane %v7153, 2
      %v7342 = vrot.slane %v7154, 2
      %v7343 = vsel %vm991, %v7341, %v7342
      %v7344 = vrot.slane %v7155, 2
      %v7345 = vsel %vm991, %v7342, %v7344
      %v7346 = vrot.slane %v7156, 2
      %v7347 = vrot.slane %v7157, 2
      %v7348 = vsel %vm991, %v7346, %v7347
      %v7349 = vrot.slane %v7158, 2
      %v7350 = vsel %vm991, %v7347, %v7349
      %v7351 = vrot.slane %v7159, 2
      %v7352 = vrot.slane %v7160, 2
      %v7353 = vsel %vm991, %v7351, %v7352
      %v7354 = vrot.slane %v7161, 2
      %v7355 = vsel %vm991, %v7352, %v7354
      %v7356 = vrot.slane %v7162, 2
      %v7357 = vrot.slane %v7163, 2
      %v7358 = vsel %vm991, %v7356, %v7357
      %v7359 = vrot.slane %v7164, 2
      %v7360 = vsel %vm991, %v7357, %v7359
      %v7361 = vrot.slane %v7165, 2
      %v7362 = vrot.slane %v7166, 2
      %v7363 = vsel %vm991, %v7361, %v7362
      %v7364 = vrot.slane %v7167, 2
      %v7365 = vsel %vm991, %v7362, %v7364
      %v7366 = vrot.slane %v7168, 2
      %v7367 = vrot.slane %v7169, 2
      %v7368 = vsel %vm991, %v7366, %v7367
      %v7369 = vrot.slane %v7170, 2
      %v7370 = vsel %vm991, %v7367, %v7369
      %v7371 = vrot.slane %v7171, 2
      %v7372 = vrot.slane %v7172, 2
      %v7373 = vsel %vm991, %v7371, %v7372
      %v7374 = vrot.slane %v7173, 2
      %v7375 = vsel %vm991, %v7372, %v7374
      %v7376 = vrot.slane %v7174, 2
      %v7377 = vrot.slane %v7175, 2
      %v7378 = vsel %vm991, %v7376, %v7377
      %v7379 = vrot.slane %v7176, 2
      %v7380 = vsel %vm991, %v7377, %v7379
      %v7381 = vrot.slane %v7177, 2
      %v7382 = vrot.slane %v7178, 2
      %v7383 = vsel %vm991, %v7381, %v7382
      %v7384 = vrot.slane %v7179, 2
      %v7385 = vsel %vm991, %v7382, %v7384
      %v7386 = vrot.slane %v7180, 2
      %v7387 = vrot.slane %v7181, 2
      %v7388 = vsel %vm991, %v7386, %v7387
      %v7389 = vrot.slane %v7182, 2
      %v7390 = vsel %vm991, %v7387, %v7389
      %v7391 = vrot.slane %v7183, 2
      %v7392 = vrot.slane %v7184, 2
      %v7393 = vsel %vm991, %v7391, %v7392
      %v7394 = vrot.slane %v7185, 2
      %v7395 = vsel %vm991, %v7392, %v7394
      %v7396 = vrot.slane %v7186, 2
      %v7397 = vrot.slane %v7187, 2
      %v7398 = vsel %vm991, %v7396, %v7397
      %v7399 = vrot.slane %v7188, 2
      %v7400 = vsel %vm991, %v7397, %v7399
      %v7401 = vrot.slane %v7189, 2
      %v7402 = vrot.slane %v7190, 2
      %v7403 = vsel %vm991, %v7401, %v7402
      %v7404 = vrot.slane %v7191, 2
      %v7405 = vsel %vm991, %v7402, %v7404
      %v7409 = vrot.slane %v7192, 1
      %v7410 = vrot.slane %v7193, 1
      %v7411 = vsel %vm910, %v7409, %v7410
      %v7412 = vrot.slane %v7194, 1
      %v7413 = vsel %vm910, %v7410, %v7412
      %v7414 = vrot.slane %v7192, 2
      %v7415 = vrot.slane %v7193, 2
      %v7416 = vsel %vm991, %v7414, %v7415
      %v7417 = vrot.slane %v7194, 2
      %v7418 = vsel %vm991, %v7415, %v7417
      %v7422 = vrot.slane %v7195, 1
      %v7423 = vrot.slane %v7196, 1
      %v7424 = vsel %vm910, %v7422, %v7423
      %v7425 = vrot.slane %v7197, 1
      %v7426 = vsel %vm910, %v7423, %v7425
      %v7427 = vrot.slane %v7195, 2
      %v7428 = vrot.slane %v7196, 2
      %v7429 = vsel %vm991, %v7427, %v7428
      %v7430 = vrot.slane %v7197, 2
      %v7431 = vsel %vm991, %v7428, %v7430
      %7464 = vrot.lane.b32.xlu0 %v7248, 48
      %v7465 = vpop.permute.xlu0 %7464
      %7466 = vrot.lane.b32.xlu0 %v7250, 48
      %v7467 = vpop.permute.xlu0 %7466
      %7468 = vrot.lane.b32.xlu0 %v7253, 48
      %v7469 = vpop.permute.xlu0 %7468
      %7470 = vrot.lane.b32.xlu0 %v7255, 48
      %v7471 = vpop.permute.xlu0 %7470
      %7472 = vrot.lane.b32.xlu0 %v7258, 48
      %v7473 = vpop.permute.xlu0 %7472
      %7474 = vrot.lane.b32.xlu0 %v7260, 48
      %v7475 = vpop.permute.xlu0 %7474
      %7476 = vrot.lane.b32.xlu0 %v7263, 48
      %v7477 = vpop.permute.xlu0 %7476
      %7478 = vrot.lane.b32.xlu0 %v7265, 48
      %v7479 = vpop.permute.xlu0 %7478
      %7480 = vrot.lane.b32.xlu0 %v7268, 48
      %v7481 = vpop.permute.xlu0 %7480
      %7482 = vrot.lane.b32.xlu0 %v7270, 48
      %v7483 = vpop.permute.xlu0 %7482
      %7484 = vrot.lane.b32.xlu0 %v7273, 48
      %v7485 = vpop.permute.xlu0 %7484
      %7486 = vrot.lane.b32.xlu0 %v7275, 48
      %v7487 = vpop.permute.xlu0 %7486
      %7488 = vrot.lane.b32.xlu0 %v7278, 48
      %v7489 = vpop.permute.xlu0 %7488
      %7490 = vrot.lane.b32.xlu0 %v7280, 48
      %v7491 = vpop.permute.xlu0 %7490
      %7492 = vrot.lane.b32.xlu0 %v7283, 48
      %v7493 = vpop.permute.xlu0 %7492
      %7494 = vrot.lane.b32.xlu0 %v7285, 48
      %v7495 = vpop.permute.xlu0 %7494
      %7496 = vrot.lane.b32.xlu0 %v7288, 48
      %v7497 = vpop.permute.xlu0 %7496
      %7498 = vrot.lane.b32.xlu0 %v7290, 48
      %v7499 = vpop.permute.xlu0 %7498
      %7500 = vrot.lane.b32.xlu0 %v7293, 48
      %v7501 = vpop.permute.xlu0 %7500
      %7502 = vrot.lane.b32.xlu0 %v7295, 48
      %v7503 = vpop.permute.xlu0 %7502
      %7504 = vrot.lane.b32.xlu0 %v7298, 48
      %v7505 = vpop.permute.xlu0 %7504
      %7506 = vrot.lane.b32.xlu0 %v7300, 48
      %v7507 = vpop.permute.xlu0 %7506
      %7508 = vrot.lane.b32.xlu0 %v7303, 48
      %v7509 = vpop.permute.xlu0 %7508
      %7510 = vrot.lane.b32.xlu0 %v7305, 48
      %v7511 = vpop.permute.xlu0 %7510
      %7512 = vrot.lane.b32.xlu0 %v7308, 48
      %v7513 = vpop.permute.xlu0 %7512
      %7514 = vrot.lane.b32.xlu0 %v7310, 48
      %v7515 = vpop.permute.xlu0 %7514
      %7516 = vrot.lane.b32.xlu0 %v7313, 48
      %v7517 = vpop.permute.xlu0 %7516
      %7518 = vrot.lane.b32.xlu0 %v7315, 48
      %v7519 = vpop.permute.xlu0 %7518
      %7520 = vrot.lane.b32.xlu0 %v7318, 48
      %v7521 = vpop.permute.xlu0 %7520
      %7522 = vrot.lane.b32.xlu0 %v7320, 48
      %v7523 = vpop.permute.xlu0 %7522
      %7524 = vrot.lane.b32.xlu0 %v7323, 48
      %v7525 = vpop.permute.xlu0 %7524
      %7526 = vrot.lane.b32.xlu0 %v7325, 48
      %v7527 = vpop.permute.xlu0 %7526
      %7560 = vrot.lane.b32.xlu0 %v7328, 96
      %v7561 = vpop.permute.xlu0 %7560
      %7562 = vrot.lane.b32.xlu0 %v7330, 96
      %v7563 = vpop.permute.xlu0 %7562
      %7564 = vrot.lane.b32.xlu0 %v7333, 96
      %v7565 = vpop.permute.xlu0 %7564
      %7566 = vrot.lane.b32.xlu0 %v7335, 96
      %v7567 = vpop.permute.xlu0 %7566
      %7568 = vrot.lane.b32.xlu0 %v7338, 96
      %v7569 = vpop.permute.xlu0 %7568
      %7570 = vrot.lane.b32.xlu0 %v7340, 96
      %v7571 = vpop.permute.xlu0 %7570
      %7572 = vrot.lane.b32.xlu0 %v7343, 96
      %v7573 = vpop.permute.xlu0 %7572
      %7574 = vrot.lane.b32.xlu0 %v7345, 96
      %v7575 = vpop.permute.xlu0 %7574
      %7576 = vrot.lane.b32.xlu0 %v7348, 96
      %v7577 = vpop.permute.xlu0 %7576
      %7578 = vrot.lane.b32.xlu0 %v7350, 96
      %v7579 = vpop.permute.xlu0 %7578
      %7580 = vrot.lane.b32.xlu0 %v7353, 96
      %v7581 = vpop.permute.xlu0 %7580
      %7582 = vrot.lane.b32.xlu0 %v7355, 96
      %v7583 = vpop.permute.xlu0 %7582
      %7584 = vrot.lane.b32.xlu0 %v7358, 96
      %v7585 = vpop.permute.xlu0 %7584
      %7586 = vrot.lane.b32.xlu0 %v7360, 96
      %v7587 = vpop.permute.xlu0 %7586
      %7588 = vrot.lane.b32.xlu0 %v7363, 96
      %v7589 = vpop.permute.xlu0 %7588
      %7590 = vrot.lane.b32.xlu0 %v7365, 96
      %v7591 = vpop.permute.xlu0 %7590
      %7592 = vrot.lane.b32.xlu0 %v7368, 96
      %v7593 = vpop.permute.xlu0 %7592
      %7594 = vrot.lane.b32.xlu0 %v7370, 96
      %v7595 = vpop.permute.xlu0 %7594
      %7596 = vrot.lane.b32.xlu0 %v7373, 96
      %v7597 = vpop.permute.xlu0 %7596
      %7598 = vrot.lane.b32.xlu0 %v7375, 96
      %v7599 = vpop.permute.xlu0 %7598
      %7600 = vrot.lane.b32.xlu0 %v7378, 96
      %v7601 = vpop.permute.xlu0 %7600
      %7602 = vrot.lane.b32.xlu0 %v7380, 96
      %v7603 = vpop.permute.xlu0 %7602
      %7604 = vrot.lane.b32.xlu0 %v7383, 96
      %v7605 = vpop.permute.xlu0 %7604
      %7606 = vrot.lane.b32.xlu0 %v7385, 96
      %v7607 = vpop.permute.xlu0 %7606
      %7608 = vrot.lane.b32.xlu0 %v7388, 96
      %v7609 = vpop.permute.xlu0 %7608
      %7610 = vrot.lane.b32.xlu0 %v7390, 96
      %v7611 = vpop.permute.xlu0 %7610
      %7612 = vrot.lane.b32.xlu0 %v7393, 96
      %v7613 = vpop.permute.xlu0 %7612
      %7614 = vrot.lane.b32.xlu0 %v7395, 96
      %v7615 = vpop.permute.xlu0 %7614
      %7616 = vrot.lane.b32.xlu0 %v7398, 96
      %v7617 = vpop.permute.xlu0 %7616
      %7618 = vrot.lane.b32.xlu0 %v7400, 96
      %v7619 = vpop.permute.xlu0 %7618
      %7620 = vrot.lane.b32.xlu0 %v7403, 96
      %v7621 = vpop.permute.xlu0 %7620
      %7622 = vrot.lane.b32.xlu0 %v7405, 96
      %v7623 = vpop.permute.xlu0 %7622
      %7656 = vrot.lane.b32.xlu0 %v7147, 16
      %v7657 = vpop.permute.xlu0 %7656
      %7658 = vrot.lane.b32.xlu0 %v7148, 16
      %v7659 = vpop.permute.xlu0 %7658
      %7660 = vrot.lane.b32.xlu0 %v7150, 16
      %v7661 = vpop.permute.xlu0 %7660
      %7662 = vrot.lane.b32.xlu0 %v7151, 16
      %v7663 = vpop.permute.xlu0 %7662
      %7664 = vrot.lane.b32.xlu0 %v7153, 16
      %v7665 = vpop.permute.xlu0 %7664
      %7666 = vrot.lane.b32.xlu0 %v7154, 16
      %v7667 = vpop.permute.xlu0 %7666
      %7668 = vrot.lane.b32.xlu0 %v7156, 16
      %v7669 = vpop.permute.xlu0 %7668
      %7670 = vrot.lane.b32.xlu0 %v7157, 16
      %v7671 = vpop.permute.xlu0 %7670
      %7672 = vrot.lane.b32.xlu0 %v7159, 16
      %v7673 = vpop.permute.xlu0 %7672
      %7674 = vrot.lane.b32.xlu0 %v7160, 16
      %v7675 = vpop.permute.xlu0 %7674
      %7676 = vrot.lane.b32.xlu0 %v7162, 16
      %v7677 = vpop.permute.xlu0 %7676
      %7678 = vrot.lane.b32.xlu0 %v7163, 16
      %v7679 = vpop.permute.xlu0 %7678
      %7680 = vrot.lane.b32.xlu0 %v7165, 16
      %v7681 = vpop.permute.xlu0 %7680
      %7682 = vrot.lane.b32.xlu0 %v7166, 16
      %v7683 = vpop.permute.xlu0 %7682
      %7684 = vrot.lane.b32.xlu0 %v7168, 16
      %v7685 = vpop.permute.xlu0 %7684
      %7686 = vrot.lane.b32.xlu0 %v7169, 16
      %v7687 = vpop.permute.xlu0 %7686
      %7688 = vrot.lane.b32.xlu0 %v7171, 16
      %v7689 = vpop.permute.xlu0 %7688
      %7690 = vrot.lane.b32.xlu0 %v7172, 16
      %v7691 = vpop.permute.xlu0 %7690
      %7692 = vrot.lane.b32.xlu0 %v7174, 16
      %v7693 = vpop.permute.xlu0 %7692
      %7694 = vrot.lane.b32.xlu0 %v7175, 16
      %v7695 = vpop.permute.xlu0 %7694
      %7696 = vrot.lane.b32.xlu0 %v7177, 16
      %v7697 = vpop.permute.xlu0 %7696
      %7698 = vrot.lane.b32.xlu0 %v7178, 16
      %v7699 = vpop.permute.xlu0 %7698
      %7700 = vrot.lane.b32.xlu0 %v7180, 16
      %v7701 = vpop.permute.xlu0 %7700
      %7702 = vrot.lane.b32.xlu0 %v7181, 16
      %v7703 = vpop.permute.xlu0 %7702
      %7704 = vrot.lane.b32.xlu0 %v7183, 16
      %v7705 = vpop.permute.xlu0 %7704
      %7706 = vrot.lane.b32.xlu0 %v7184, 16
      %v7707 = vpop.permute.xlu0 %7706
      %7708 = vrot.lane.b32.xlu0 %v7186, 16
      %v7709 = vpop.permute.xlu0 %7708
      %7710 = vrot.lane.b32.xlu0 %v7187, 16
      %v7711 = vpop.permute.xlu0 %7710
      %7712 = vrot.lane.b32.xlu0 %v7189, 16
      %v7713 = vpop.permute.xlu0 %7712
      %7714 = vrot.lane.b32.xlu0 %v7190, 16
      %v7715 = vpop.permute.xlu0 %7714
      %7716 = vrot.lane.b32.xlu0 %v7192, 16
      %v7717 = vpop.permute.xlu0 %7716
      %7718 = vrot.lane.b32.xlu0 %v7193, 16
      %v7719 = vpop.permute.xlu0 %7718
      %7752 = vrot.lane.b32.xlu0 %v7253, 64
      %v7753 = vpop.permute.xlu0 %7752
      %7754 = vrot.lane.b32.xlu0 %v7255, 64
      %v7755 = vpop.permute.xlu0 %7754
      %7756 = vrot.lane.b32.xlu0 %v7258, 64
      %v7757 = vpop.permute.xlu0 %7756
      %7758 = vrot.lane.b32.xlu0 %v7260, 64
      %v7759 = vpop.permute.xlu0 %7758
      %7760 = vrot.lane.b32.xlu0 %v7263, 64
      %v7761 = vpop.permute.xlu0 %7760
      %7762 = vrot.lane.b32.xlu0 %v7265, 64
      %v7763 = vpop.permute.xlu0 %7762
      %7764 = vrot.lane.b32.xlu0 %v7268, 64
      %v7765 = vpop.permute.xlu0 %7764
      %7766 = vrot.lane.b32.xlu0 %v7270, 64
      %v7767 = vpop.permute.xlu0 %7766
      %7768 = vrot.lane.b32.xlu0 %v7273, 64
      %v7769 = vpop.permute.xlu0 %7768
      %7770 = vrot.lane.b32.xlu0 %v7275, 64
      %v7771 = vpop.permute.xlu0 %7770
      %7772 = vrot.lane.b32.xlu0 %v7278, 64
      %v7773 = vpop.permute.xlu0 %7772
      %7774 = vrot.lane.b32.xlu0 %v7280, 64
      %v7775 = vpop.permute.xlu0 %7774
      %7776 = vrot.lane.b32.xlu0 %v7283, 64
      %v7777 = vpop.permute.xlu0 %7776
      %7778 = vrot.lane.b32.xlu0 %v7285, 64
      %v7779 = vpop.permute.xlu0 %7778
      %7780 = vrot.lane.b32.xlu0 %v7288, 64
      %v7781 = vpop.permute.xlu0 %7780
      %7782 = vrot.lane.b32.xlu0 %v7290, 64
      %v7783 = vpop.permute.xlu0 %7782
      %7784 = vrot.lane.b32.xlu0 %v7293, 64
      %v7785 = vpop.permute.xlu0 %7784
      %7786 = vrot.lane.b32.xlu0 %v7295, 64
      %v7787 = vpop.permute.xlu0 %7786
      %7788 = vrot.lane.b32.xlu0 %v7298, 64
      %v7789 = vpop.permute.xlu0 %7788
      %7790 = vrot.lane.b32.xlu0 %v7300, 64
      %v7791 = vpop.permute.xlu0 %7790
      %7792 = vrot.lane.b32.xlu0 %v7303, 64
      %v7793 = vpop.permute.xlu0 %7792
      %7794 = vrot.lane.b32.xlu0 %v7305, 64
      %v7795 = vpop.permute.xlu0 %7794
      %7796 = vrot.lane.b32.xlu0 %v7308, 64
      %v7797 = vpop.permute.xlu0 %7796
      %7798 = vrot.lane.b32.xlu0 %v7310, 64
      %v7799 = vpop.permute.xlu0 %7798
      %7800 = vrot.lane.b32.xlu0 %v7313, 64
      %v7801 = vpop.permute.xlu0 %7800
      %7802 = vrot.lane.b32.xlu0 %v7315, 64
      %v7803 = vpop.permute.xlu0 %7802
      %7804 = vrot.lane.b32.xlu0 %v7318, 64
      %v7805 = vpop.permute.xlu0 %7804
      %7806 = vrot.lane.b32.xlu0 %v7320, 64
      %v7807 = vpop.permute.xlu0 %7806
      %7808 = vrot.lane.b32.xlu0 %v7323, 64
      %v7809 = vpop.permute.xlu0 %7808
      %7810 = vrot.lane.b32.xlu0 %v7325, 64
      %v7811 = vpop.permute.xlu0 %7810
      %7812 = vrot.lane.b32.xlu0 %v7411, 64
      %v7813 = vpop.permute.xlu0 %7812
      %7814 = vrot.lane.b32.xlu0 %v7413, 64
      %v7815 = vpop.permute.xlu0 %7814
      %7848 = vrot.lane.b32.xlu0 %v7333, 112
      %v7849 = vpop.permute.xlu0 %7848
      %7850 = vrot.lane.b32.xlu0 %v7335, 112
      %v7851 = vpop.permute.xlu0 %7850
      %7852 = vrot.lane.b32.xlu0 %v7338, 112
      %v7853 = vpop.permute.xlu0 %7852
      %7854 = vrot.lane.b32.xlu0 %v7340, 112
      %v7855 = vpop.permute.xlu0 %7854
      %7856 = vrot.lane.b32.xlu0 %v7343, 112
      %v7857 = vpop.permute.xlu0 %7856
      %7858 = vrot.lane.b32.xlu0 %v7345, 112
      %v7859 = vpop.permute.xlu0 %7858
      %7860 = vrot.lane.b32.xlu0 %v7348, 112
      %v7861 = vpop.permute.xlu0 %7860
      %7862 = vrot.lane.b32.xlu0 %v7350, 112
      %v7863 = vpop.permute.xlu0 %7862
      %7864 = vrot.lane.b32.xlu0 %v7353, 112
      %v7865 = vpop.permute.xlu0 %7864
      %7866 = vrot.lane.b32.xlu0 %v7355, 112
      %v7867 = vpop.permute.xlu0 %7866
      %7868 = vrot.lane.b32.xlu0 %v7358, 112
      %v7869 = vpop.permute.xlu0 %7868
      %7870 = vrot.lane.b32.xlu0 %v7360, 112
      %v7871 = vpop.permute.xlu0 %7870
      %7872 = vrot.lane.b32.xlu0 %v7363, 112
      %v7873 = vpop.permute.xlu0 %7872
      %7874 = vrot.lane.b32.xlu0 %v7365, 112
      %v7875 = vpop.permute.xlu0 %7874
      %7876 = vrot.lane.b32.xlu0 %v7368, 112
      %v7877 = vpop.permute.xlu0 %7876
      %7878 = vrot.lane.b32.xlu0 %v7370, 112
      %v7879 = vpop.permute.xlu0 %7878
      %7880 = vrot.lane.b32.xlu0 %v7373, 112
      %v7881 = vpop.permute.xlu0 %7880
      %7882 = vrot.lane.b32.xlu0 %v7375, 112
      %v7883 = vpop.permute.xlu0 %7882
      %7884 = vrot.lane.b32.xlu0 %v7378, 112
      %v7885 = vpop.permute.xlu0 %7884
      %7886 = vrot.lane.b32.xlu0 %v7380, 112
      %v7887 = vpop.permute.xlu0 %7886
      %7888 = vrot.lane.b32.xlu0 %v7383, 112
      %v7889 = vpop.permute.xlu0 %7888
      %7890 = vrot.lane.b32.xlu0 %v7385, 112
      %v7891 = vpop.permute.xlu0 %7890
      %7892 = vrot.lane.b32.xlu0 %v7388, 112
      %v7893 = vpop.permute.xlu0 %7892
      %7894 = vrot.lane.b32.xlu0 %v7390, 112
      %v7895 = vpop.permute.xlu0 %7894
      %7896 = vrot.lane.b32.xlu0 %v7393, 112
      %v7897 = vpop.permute.xlu0 %7896
      %7898 = vrot.lane.b32.xlu0 %v7395, 112
      %v7899 = vpop.permute.xlu0 %7898
      %7900 = vrot.lane.b32.xlu0 %v7398, 112
      %v7901 = vpop.permute.xlu0 %7900
      %7902 = vrot.lane.b32.xlu0 %v7400, 112
      %v7903 = vpop.permute.xlu0 %7902
      %7904 = vrot.lane.b32.xlu0 %v7403, 112
      %v7905 = vpop.permute.xlu0 %7904
      %7906 = vrot.lane.b32.xlu0 %v7405, 112
      %v7907 = vpop.permute.xlu0 %7906
      %7908 = vrot.lane.b32.xlu0 %v7416, 112
      %v7909 = vpop.permute.xlu0 %7908
      %7910 = vrot.lane.b32.xlu0 %v7418, 112
      %v7911 = vpop.permute.xlu0 %7910
      %7944 = vrot.lane.b32.xlu0 %v7150, 32
      %v7945 = vpop.permute.xlu0 %7944
      %7946 = vrot.lane.b32.xlu0 %v7151, 32
      %v7947 = vpop.permute.xlu0 %7946
      %7948 = vrot.lane.b32.xlu0 %v7153, 32
      %v7949 = vpop.permute.xlu0 %7948
      %7950 = vrot.lane.b32.xlu0 %v7154, 32
      %v7951 = vpop.permute.xlu0 %7950
      %7952 = vrot.lane.b32.xlu0 %v7156, 32
      %v7953 = vpop.permute.xlu0 %7952
      %7954 = vrot.lane.b32.xlu0 %v7157, 32
      %v7955 = vpop.permute.xlu0 %7954
      %7956 = vrot.lane.b32.xlu0 %v7159, 32
      %v7957 = vpop.permute.xlu0 %7956
      %7958 = vrot.lane.b32.xlu0 %v7160, 32
      %v7959 = vpop.permute.xlu0 %7958
      %7960 = vrot.lane.b32.xlu0 %v7162, 32
      %v7961 = vpop.permute.xlu0 %7960
      %7962 = vrot.lane.b32.xlu0 %v7163, 32
      %v7963 = vpop.permute.xlu0 %7962
      %7964 = vrot.lane.b32.xlu0 %v7165, 32
      %v7965 = vpop.permute.xlu0 %7964
      %7966 = vrot.lane.b32.xlu0 %v7166, 32
      %v7967 = vpop.permute.xlu0 %7966
      %7968 = vrot.lane.b32.xlu0 %v7168, 32
      %v7969 = vpop.permute.xlu0 %7968
      %7970 = vrot.lane.b32.xlu0 %v7169, 32
      %v7971 = vpop.permute.xlu0 %7970
      %7972 = vrot.lane.b32.xlu0 %v7171, 32
      %v7973 = vpop.permute.xlu0 %7972
      %7974 = vrot.lane.b32.xlu0 %v7172, 32
      %v7975 = vpop.permute.xlu0 %7974
      %7976 = vrot.lane.b32.xlu0 %v7174, 32
      %v7977 = vpop.permute.xlu0 %7976
      %7978 = vrot.lane.b32.xlu0 %v7175, 32
      %v7979 = vpop.permute.xlu0 %7978
      %7980 = vrot.lane.b32.xlu0 %v7177, 32
      %v7981 = vpop.permute.xlu0 %7980
      %7982 = vrot.lane.b32.xlu0 %v7178, 32
      %v7983 = vpop.permute.xlu0 %7982
      %7984 = vrot.lane.b32.xlu0 %v7180, 32
      %v7985 = vpop.permute.xlu0 %7984
      %7986 = vrot.lane.b32.xlu0 %v7181, 32
      %v7987 = vpop.permute.xlu0 %7986
      %7988 = vrot.lane.b32.xlu0 %v7183, 32
      %v7989 = vpop.permute.xlu0 %7988
      %7990 = vrot.lane.b32.xlu0 %v7184, 32
      %v7991 = vpop.permute.xlu0 %7990
      %7992 = vrot.lane.b32.xlu0 %v7186, 32
      %v7993 = vpop.permute.xlu0 %7992
      %7994 = vrot.lane.b32.xlu0 %v7187, 32
      %v7995 = vpop.permute.xlu0 %7994
      %7996 = vrot.lane.b32.xlu0 %v7189, 32
      %v7997 = vpop.permute.xlu0 %7996
      %7998 = vrot.lane.b32.xlu0 %v7190, 32
      %v7999 = vpop.permute.xlu0 %7998
      %8000 = vrot.lane.b32.xlu0 %v7192, 32
      %v8001 = vpop.permute.xlu0 %8000
      %8002 = vrot.lane.b32.xlu0 %v7193, 32
      %v8003 = vpop.permute.xlu0 %8002
      %8004 = vrot.lane.b32.xlu0 %v7195, 32
      %v8005 = vpop.permute.xlu0 %8004
      %8006 = vrot.lane.b32.xlu0 %v7196, 32
      %v8007 = vpop.permute.xlu0 %8006
      %8040 = vrot.lane.b32.xlu0 %v7258, 80
      %v8041 = vpop.permute.xlu0 %8040
      %8042 = vrot.lane.b32.xlu0 %v7260, 80
      %v8043 = vpop.permute.xlu0 %8042
      %8044 = vrot.lane.b32.xlu0 %v7263, 80
      %v8045 = vpop.permute.xlu0 %8044
      %8046 = vrot.lane.b32.xlu0 %v7265, 80
      %v8047 = vpop.permute.xlu0 %8046
      %8048 = vrot.lane.b32.xlu0 %v7268, 80
      %v8049 = vpop.permute.xlu0 %8048
      %8050 = vrot.lane.b32.xlu0 %v7270, 80
      %v8051 = vpop.permute.xlu0 %8050
      %8052 = vrot.lane.b32.xlu0 %v7273, 80
      %v8053 = vpop.permute.xlu0 %8052
      %8054 = vrot.lane.b32.xlu0 %v7275, 80
      %v8055 = vpop.permute.xlu0 %8054
      %8056 = vrot.lane.b32.xlu0 %v7278, 80
      %v8057 = vpop.permute.xlu0 %8056
      %8058 = vrot.lane.b32.xlu0 %v7280, 80
      %v8059 = vpop.permute.xlu0 %8058
      %8060 = vrot.lane.b32.xlu0 %v7283, 80
      %v8061 = vpop.permute.xlu0 %8060
      %8062 = vrot.lane.b32.xlu0 %v7285, 80
      %v8063 = vpop.permute.xlu0 %8062
      %8064 = vrot.lane.b32.xlu0 %v7288, 80
      %v8065 = vpop.permute.xlu0 %8064
      %8066 = vrot.lane.b32.xlu0 %v7290, 80
      %v8067 = vpop.permute.xlu0 %8066
      %8068 = vrot.lane.b32.xlu0 %v7293, 80
      %v8069 = vpop.permute.xlu0 %8068
      %8070 = vrot.lane.b32.xlu0 %v7295, 80
      %v8071 = vpop.permute.xlu0 %8070
      %8072 = vrot.lane.b32.xlu0 %v7298, 80
      %v8073 = vpop.permute.xlu0 %8072
      %8074 = vrot.lane.b32.xlu0 %v7300, 80
      %v8075 = vpop.permute.xlu0 %8074
      %8076 = vrot.lane.b32.xlu0 %v7303, 80
      %v8077 = vpop.permute.xlu0 %8076
      %8078 = vrot.lane.b32.xlu0 %v7305, 80
      %v8079 = vpop.permute.xlu0 %8078
      %8080 = vrot.lane.b32.xlu0 %v7308, 80
      %v8081 = vpop.permute.xlu0 %8080
      %8082 = vrot.lane.b32.xlu0 %v7310, 80
      %v8083 = vpop.permute.xlu0 %8082
      %8084 = vrot.lane.b32.xlu0 %v7313, 80
      %v8085 = vpop.permute.xlu0 %8084
      %8086 = vrot.lane.b32.xlu0 %v7315, 80
      %v8087 = vpop.permute.xlu0 %8086
      %8088 = vrot.lane.b32.xlu0 %v7318, 80
      %v8089 = vpop.permute.xlu0 %8088
      %8090 = vrot.lane.b32.xlu0 %v7320, 80
      %v8091 = vpop.permute.xlu0 %8090
      %8092 = vrot.lane.b32.xlu0 %v7323, 80
      %v8093 = vpop.permute.xlu0 %8092
      %8094 = vrot.lane.b32.xlu0 %v7325, 80
      %v8095 = vpop.permute.xlu0 %8094
      %8096 = vrot.lane.b32.xlu0 %v7411, 80
      %v8097 = vpop.permute.xlu0 %8096
      %8098 = vrot.lane.b32.xlu0 %v7413, 80
      %v8099 = vpop.permute.xlu0 %8098
      %8100 = vrot.lane.b32.xlu0 %v7424, 80
      %v8101 = vpop.permute.xlu0 %8100
      %8102 = vrot.lane.b32.xlu0 %v7426, 80
      %v8103 = vpop.permute.xlu0 %8102
      %v8136 = vsel %vm7055, %v7144, %v7465
      %v8137 = vsel %vm7055, %v7145, %v7467
      %v8138 = vsel %vm7055, %v7147, %v7469
      %v8139 = vsel %vm7055, %v7148, %v7471
      %v8140 = vsel %vm7055, %v7150, %v7473
      %v8141 = vsel %vm7055, %v7151, %v7475
      %v8142 = vsel %vm7055, %v7153, %v7477
      %v8143 = vsel %vm7055, %v7154, %v7479
      %v8144 = vsel %vm7055, %v7156, %v7481
      %v8145 = vsel %vm7055, %v7157, %v7483
      %v8146 = vsel %vm7055, %v7159, %v7485
      %v8147 = vsel %vm7055, %v7160, %v7487
      %v8148 = vsel %vm7055, %v7162, %v7489
      %v8149 = vsel %vm7055, %v7163, %v7491
      %v8150 = vsel %vm7055, %v7165, %v7493
      %v8151 = vsel %vm7055, %v7166, %v7495
      %v8152 = vsel %vm7055, %v7168, %v7497
      %v8153 = vsel %vm7055, %v7169, %v7499
      %v8154 = vsel %vm7055, %v7171, %v7501
      %v8155 = vsel %vm7055, %v7172, %v7503
      %v8156 = vsel %vm7055, %v7174, %v7505
      %v8157 = vsel %vm7055, %v7175, %v7507
      %v8158 = vsel %vm7055, %v7177, %v7509
      %v8159 = vsel %vm7055, %v7178, %v7511
      %v8160 = vsel %vm7055, %v7180, %v7513
      %v8161 = vsel %vm7055, %v7181, %v7515
      %v8162 = vsel %vm7055, %v7183, %v7517
      %v8163 = vsel %vm7055, %v7184, %v7519
      %v8164 = vsel %vm7055, %v7186, %v7521
      %v8165 = vsel %vm7055, %v7187, %v7523
      %v8166 = vsel %vm7055, %v7189, %v7525
      %v8167 = vsel %vm7055, %v7190, %v7527
      %vm8168 = vcmask 785408
      %v8169 = vsel %vm8168, %v8136, %v7561
      %v8170 = vsel %vm8168, %v8137, %v7563
      %v8171 = vsel %vm8168, %v8138, %v7565
      %v8172 = vsel %vm8168, %v8139, %v7567
      %v8173 = vsel %vm8168, %v8140, %v7569
      %v8174 = vsel %vm8168, %v8141, %v7571
      %v8175 = vsel %vm8168, %v8142, %v7573
      %v8176 = vsel %vm8168, %v8143, %v7575
      %v8177 = vsel %vm8168, %v8144, %v7577
      %v8178 = vsel %vm8168, %v8145, %v7579
      %v8179 = vsel %vm8168, %v8146, %v7581
      %v8180 = vsel %vm8168, %v8147, %v7583
      %v8181 = vsel %vm8168, %v8148, %v7585
      %v8182 = vsel %vm8168, %v8149, %v7587
      %v8183 = vsel %vm8168, %v8150, %v7589
      %v8184 = vsel %vm8168, %v8151, %v7591
      %v8185 = vsel %vm8168, %v8152, %v7593
      %v8186 = vsel %vm8168, %v8153, %v7595
      %v8187 = vsel %vm8168, %v8154, %v7597
      %v8188 = vsel %vm8168, %v8155, %v7599
      %v8189 = vsel %vm8168, %v8156, %v7601
      %v8190 = vsel %vm8168, %v8157, %v7603
      %v8191 = vsel %vm8168, %v8158, %v7605
      %v8192 = vsel %vm8168, %v8159, %v7607
      %v8193 = vsel %vm8168, %v8160, %v7609
      %v8194 = vsel %vm8168, %v8161, %v7611
      %v8195 = vsel %vm8168, %v8162, %v7613
      %v8196 = vsel %vm8168, %v8163, %v7615
      %v8197 = vsel %vm8168, %v8164, %v7617
      %v8198 = vsel %vm8168, %v8165, %v7619
      %v8199 = vsel %vm8168, %v8166, %v7621
      %v8200 = vsel %vm8168, %v8167, %v7623
      %v8201 = vsel %vm1964, %v7561, %v7657
      %v8202 = vsel %vm1964, %v7563, %v7659
      %v8203 = vsel %vm1964, %v7565, %v7661
      %v8204 = vsel %vm1964, %v7567, %v7663
      %v8205 = vsel %vm1964, %v7569, %v7665
      %v8206 = vsel %vm1964, %v7571, %v7667
      %v8207 = vsel %vm1964, %v7573, %v7669
      %v8208 = vsel %vm1964, %v7575, %v7671
      %v8209 = vsel %vm1964, %v7577, %v7673
      %v8210 = vsel %vm1964, %v7579, %v7675
      %v8211 = vsel %vm1964, %v7581, %v7677
      %v8212 = vsel %vm1964, %v7583, %v7679
      %v8213 = vsel %vm1964, %v7585, %v7681
      %v8214 = vsel %vm1964, %v7587, %v7683
      %v8215 = vsel %vm1964, %v7589, %v7685
      %v8216 = vsel %vm1964, %v7591, %v7687
      %v8217 = vsel %vm1964, %v7593, %v7689
      %v8218 = vsel %vm1964, %v7595, %v7691
      %v8219 = vsel %vm1964, %v7597, %v7693
      %v8220 = vsel %vm1964, %v7599, %v7695
      %v8221 = vsel %vm1964, %v7601, %v7697
      %v8222 = vsel %vm1964, %v7603, %v7699
      %v8223 = vsel %vm1964, %v7605, %v7701
      %v8224 = vsel %vm1964, %v7607, %v7703
      %v8225 = vsel %vm1964, %v7609, %v7705
      %v8226 = vsel %vm1964, %v7611, %v7707
      %v8227 = vsel %vm1964, %v7613, %v7709
      %v8228 = vsel %vm1964, %v7615, %v7711
      %v8229 = vsel %vm1964, %v7617, %v7713
      %v8230 = vsel %vm1964, %v7619, %v7715
      %v8231 = vsel %vm1964, %v7621, %v7717
      %v8232 = vsel %vm1964, %v7623, %v7719
      %vm8233 = vcmask 523264
      %v8234 = vsel %vm8233, %v8201, %v7753
      %v8235 = vsel %vm8233, %v8202, %v7755
      %v8236 = vsel %vm8233, %v8203, %v7757
      %v8237 = vsel %vm8233, %v8204, %v7759
      %v8238 = vsel %vm8233, %v8205, %v7761
      %v8239 = vsel %vm8233, %v8206, %v7763
      %v8240 = vsel %vm8233, %v8207, %v7765
      %v8241 = vsel %vm8233, %v8208, %v7767
      %v8242 = vsel %vm8233, %v8209, %v7769
      %v8243 = vsel %vm8233, %v8210, %v7771
      %v8244 = vsel %vm8233, %v8211, %v7773
      %v8245 = vsel %vm8233, %v8212, %v7775
      %v8246 = vsel %vm8233, %v8213, %v7777
      %v8247 = vsel %vm8233, %v8214, %v7779
      %v8248 = vsel %vm8233, %v8215, %v7781
      %v8249 = vsel %vm8233, %v8216, %v7783
      %v8250 = vsel %vm8233, %v8217, %v7785
      %v8251 = vsel %vm8233, %v8218, %v7787
      %v8252 = vsel %vm8233, %v8219, %v7789
      %v8253 = vsel %vm8233, %v8220, %v7791
      %v8254 = vsel %vm8233, %v8221, %v7793
      %v8255 = vsel %vm8233, %v8222, %v7795
      %v8256 = vsel %vm8233, %v8223, %v7797
      %v8257 = vsel %vm8233, %v8224, %v7799
      %v8258 = vsel %vm8233, %v8225, %v7801
      %v8259 = vsel %vm8233, %v8226, %v7803
      %v8260 = vsel %vm8233, %v8227, %v7805
      %v8261 = vsel %vm8233, %v8228, %v7807
      %v8262 = vsel %vm8233, %v8229, %v7809
      %v8263 = vsel %vm8233, %v8230, %v7811
      %v8264 = vsel %vm8233, %v8231, %v7813
      %v8265 = vsel %vm8233, %v8232, %v7815
      %vm8266 = vcmask 916480
      %v8267 = vsel %vm8266, %v8234, %v7849
      %v8268 = vsel %vm8266, %v8235, %v7851
      %v8269 = vsel %vm8266, %v8236, %v7853
      %v8270 = vsel %vm8266, %v8237, %v7855
      %v8271 = vsel %vm8266, %v8238, %v7857
      %v8272 = vsel %vm8266, %v8239, %v7859
      %v8273 = vsel %vm8266, %v8240, %v7861
      %v8274 = vsel %vm8266, %v8241, %v7863
      %v8275 = vsel %vm8266, %v8242, %v7865
      %v8276 = vsel %vm8266, %v8243, %v7867
      %v8277 = vsel %vm8266, %v8244, %v7869
      %v8278 = vsel %vm8266, %v8245, %v7871
      %v8279 = vsel %vm8266, %v8246, %v7873
      %v8280 = vsel %vm8266, %v8247, %v7875
      %v8281 = vsel %vm8266, %v8248, %v7877
      %v8282 = vsel %vm8266, %v8249, %v7879
      %v8283 = vsel %vm8266, %v8250, %v7881
      %v8284 = vsel %vm8266, %v8251, %v7883
      %v8285 = vsel %vm8266, %v8252, %v7885
      %v8286 = vsel %vm8266, %v8253, %v7887
      %v8287 = vsel %vm8266, %v8254, %v7889
      %v8288 = vsel %vm8266, %v8255, %v7891
      %v8289 = vsel %vm8266, %v8256, %v7893
      %v8290 = vsel %vm8266, %v8257, %v7895
      %v8291 = vsel %vm8266, %v8258, %v7897
      %v8292 = vsel %vm8266, %v8259, %v7899
      %v8293 = vsel %vm8266, %v8260, %v7901
      %v8294 = vsel %vm8266, %v8261, %v7903
      %v8295 = vsel %vm8266, %v8262, %v7905
      %v8296 = vsel %vm8266, %v8263, %v7907
      %v8297 = vsel %vm8266, %v8264, %v7909
      %v8298 = vsel %vm8266, %v8265, %v7911
      %v8299 = vsel %vm2096, %v7849, %v7945
      %v8300 = vsel %vm2096, %v7851, %v7947
      %v8301 = vsel %vm2096, %v7853, %v7949
      %v8302 = vsel %vm2096, %v7855, %v7951
      %v8303 = vsel %vm2096, %v7857, %v7953
      %v8304 = vsel %vm2096, %v7859, %v7955
      %v8305 = vsel %vm2096, %v7861, %v7957
      %v8306 = vsel %vm2096, %v7863, %v7959
      %v8307 = vsel %vm2096, %v7865, %v7961
      %v8308 = vsel %vm2096, %v7867, %v7963
      %v8309 = vsel %vm2096, %v7869, %v7965
      %v8310 = vsel %vm2096, %v7871, %v7967
      %v8311 = vsel %vm2096, %v7873, %v7969
      %v8312 = vsel %vm2096, %v7875, %v7971
      %v8313 = vsel %vm2096, %v7877, %v7973
      %v8314 = vsel %vm2096, %v7879, %v7975
      %v8315 = vsel %vm2096, %v7881, %v7977
      %v8316 = vsel %vm2096, %v7883, %v7979
      %v8317 = vsel %vm2096, %v7885, %v7981
      %v8318 = vsel %vm2096, %v7887, %v7983
      %v8319 = vsel %vm2096, %v7889, %v7985
      %v8320 = vsel %vm2096, %v7891, %v7987
      %v8321 = vsel %vm2096, %v7893, %v7989
      %v8322 = vsel %vm2096, %v7895, %v7991
      %v8323 = vsel %vm2096, %v7897, %v7993
      %v8324 = vsel %vm2096, %v7899, %v7995
      %v8325 = vsel %vm2096, %v7901, %v7997
      %v8326 = vsel %vm2096, %v7903, %v7999
      %v8327 = vsel %vm2096, %v7905, %v8001
      %v8328 = vsel %vm2096, %v7907, %v8003
      %v8329 = vsel %vm2096, %v7909, %v8005
      %v8330 = vsel %vm2096, %v7911, %v8007
      %vm8331 = vcmask 654336
      %v8332 = vsel %vm8331, %v8299, %v8041
      %v8333 = vsel %vm8331, %v8300, %v8043
      %v8334 = vsel %vm8331, %v8301, %v8045
      %v8335 = vsel %vm8331, %v8302, %v8047
      %v8336 = vsel %vm8331, %v8303, %v8049
      %v8337 = vsel %vm8331, %v8304, %v8051
      %v8338 = vsel %vm8331, %v8305, %v8053
      %v8339 = vsel %vm8331, %v8306, %v8055
      %v8340 = vsel %vm8331, %v8307, %v8057
      %v8341 = vsel %vm8331, %v8308, %v8059
      %v8342 = vsel %vm8331, %v8309, %v8061
      %v8343 = vsel %vm8331, %v8310, %v8063
      %v8344 = vsel %vm8331, %v8311, %v8065
      %v8345 = vsel %vm8331, %v8312, %v8067
      %v8346 = vsel %vm8331, %v8313, %v8069
      %v8347 = vsel %vm8331, %v8314, %v8071
      %v8348 = vsel %vm8331, %v8315, %v8073
      %v8349 = vsel %vm8331, %v8316, %v8075
      %v8350 = vsel %vm8331, %v8317, %v8077
      %v8351 = vsel %vm8331, %v8318, %v8079
      %v8352 = vsel %vm8331, %v8319, %v8081
      %v8353 = vsel %vm8331, %v8320, %v8083
      %v8354 = vsel %vm8331, %v8321, %v8085
      %v8355 = vsel %vm8331, %v8322, %v8087
      %v8356 = vsel %vm8331, %v8323, %v8089
      %v8357 = vsel %vm8331, %v8324, %v8091
      %v8358 = vsel %vm8331, %v8325, %v8093
      %v8359 = vsel %vm8331, %v8326, %v8095
      %v8360 = vsel %vm8331, %v8327, %v8097
      %v8361 = vsel %vm8331, %v8328, %v8099
      %v8362 = vsel %vm8331, %v8329, %v8101
      %v8363 = vsel %vm8331, %v8330, %v8103
      %v8364 = vpack.c.bf16 %v8170, %v8169
      %v8365 = vpack.c.bf16 %v8268, %v8267
      %v8366 = vpack.c.bf16 %v8333, %v8332
      %v8367 = vpack.c.bf16 %v7340, %v7338
      %v8368 = vpack.c.bf16 %v8172, %v8171
      %v8369 = vpack.c.bf16 %v8270, %v8269
      %v8370 = vpack.c.bf16 %v8335, %v8334
      %v8371 = vpack.c.bf16 %v7345, %v7343
      %v8372 = vpack.c.bf16 %v8174, %v8173
      %v8373 = vpack.c.bf16 %v8272, %v8271
      %v8374 = vpack.c.bf16 %v8337, %v8336
      %v8375 = vpack.c.bf16 %v7350, %v7348
      %v8376 = vpack.c.bf16 %v8176, %v8175
      %v8377 = vpack.c.bf16 %v8274, %v8273
      %v8378 = vpack.c.bf16 %v8339, %v8338
      %v8379 = vpack.c.bf16 %v7355, %v7353
      %v8380 = vpack.c.bf16 %v8178, %v8177
      %v8381 = vpack.c.bf16 %v8276, %v8275
      %v8382 = vpack.c.bf16 %v8341, %v8340
      %v8383 = vpack.c.bf16 %v7360, %v7358
      %v8384 = vpack.c.bf16 %v8180, %v8179
      %v8385 = vpack.c.bf16 %v8278, %v8277
      %v8386 = vpack.c.bf16 %v8343, %v8342
      %v8387 = vpack.c.bf16 %v7365, %v7363
      %v8388 = vpack.c.bf16 %v8182, %v8181
      %v8389 = vpack.c.bf16 %v8280, %v8279
      %v8390 = vpack.c.bf16 %v8345, %v8344
      %v8391 = vpack.c.bf16 %v7370, %v7368
      %v8392 = vpack.c.bf16 %v8184, %v8183
      %v8393 = vpack.c.bf16 %v8282, %v8281
      %v8394 = vpack.c.bf16 %v8347, %v8346
      %v8395 = vpack.c.bf16 %v7375, %v7373
      %v8396 = vpack.c.bf16 %v8186, %v8185
      %v8397 = vpack.c.bf16 %v8284, %v8283
      %v8398 = vpack.c.bf16 %v8349, %v8348
      %v8399 = vpack.c.bf16 %v7380, %v7378
      %v8400 = vpack.c.bf16 %v8188, %v8187
      %v8401 = vpack.c.bf16 %v8286, %v8285
      %v8402 = vpack.c.bf16 %v8351, %v8350
      %v8403 = vpack.c.bf16 %v7385, %v7383
      %v8404 = vpack.c.bf16 %v8190, %v8189
      %v8405 = vpack.c.bf16 %v8288, %v8287
      %v8406 = vpack.c.bf16 %v8353, %v8352
      %v8407 = vpack.c.bf16 %v7390, %v7388
      %v8408 = vpack.c.bf16 %v8192, %v8191
      %v8409 = vpack.c.bf16 %v8290, %v8289
      %v8410 = vpack.c.bf16 %v8355, %v8354
      %v8411 = vpack.c.bf16 %v7395, %v7393
      %v8412 = vpack.c.bf16 %v8194, %v8193
      %v8413 = vpack.c.bf16 %v8292, %v8291
      %v8414 = vpack.c.bf16 %v8357, %v8356
      %v8415 = vpack.c.bf16 %v7400, %v7398
      %v8416 = vpack.c.bf16 %v8196, %v8195
      %v8417 = vpack.c.bf16 %v8294, %v8293
      %v8418 = vpack.c.bf16 %v8359, %v8358
      %v8419 = vpack.c.bf16 %v7405, %v7403
      %v8420 = vpack.c.bf16 %v8198, %v8197
      %v8421 = vpack.c.bf16 %v8296, %v8295
      %v8422 = vpack.c.bf16 %v8361, %v8360
      %v8423 = vpack.c.bf16 %v7418, %v7416
      %v8424 = vpack.c.bf16 %v8200, %v8199
      %v8425 = vpack.c.bf16 %v8298, %v8297
      %v8426 = vpack.c.bf16 %v8363, %v8362
      %v8427 = vpack.c.bf16 %v7431, %v7429
      %v8428 = vld [vmem:[%s12] sm:$0xf]
      %v8429 = vld [vmem:[%s12 + $0x4] sm:$0xf]
      %v8430 = vld [vmem:[%s12 + $0x8] sm:$0xf]
      %v8431 = vld [vmem:[%s12 + $0xc] sm:$0xf]
      %v8432 = vld [vmem:[%s12 + $0x10] sm:$0xf]
      %v8433 = vld [vmem:[%s12 + $0x14] sm:$0xf]
      %v8434 = vld [vmem:[%s12 + $0x18] sm:$0xf]
      %v8435 = vld [vmem:[%s12 + $0x1c] sm:$0xf]
      %v8436 = vld [vmem:[%s12 + $0x20] sm:$0xf]
      %v8437 = vld [vmem:[%s12 + $0x24] sm:$0xf]
      %v8438 = vld [vmem:[%s12 + $0x28] sm:$0xf]
      %v8439 = vld [vmem:[%s12 + $0x2c] sm:$0xf]
      %v8440 = vld [vmem:[%s12 + $0x30] sm:$0xf]
      %v8441 = vld [vmem:[%s12 + $0x34] sm:$0xf]
      %v8442 = vld [vmem:[%s12 + $0x38] sm:$0xf]
      %v8443 = vld [vmem:[%s12 + $0x3c] sm:$0xf]
      %v8444 = vld [vmem:[%s12 + $0x40] sm:$0xf]
      %v8445 = vld [vmem:[%s12 + $0x44] sm:$0xf]
      %v8446 = vld [vmem:[%s12 + $0x48] sm:$0xf]
      %v8447 = vld [vmem:[%s12 + $0x4c] sm:$0xf]
      %v8448 = vld [vmem:[%s12 + $0x50] sm:$0xf]
      %v8449 = vld [vmem:[%s12 + $0x54] sm:$0xf]
      %v8450 = vld [vmem:[%s12 + $0x58] sm:$0xf]
      %v8451 = vld [vmem:[%s12 + $0x5c] sm:$0xf]
      %v8452 = vld [vmem:[%s12 + $0x60] sm:$0xf]
      %v8453 = vld [vmem:[%s12 + $0x64] sm:$0xf]
      %v8454 = vld [vmem:[%s12 + $0x68] sm:$0xf]
      %v8455 = vld [vmem:[%s12 + $0x6c] sm:$0xf]
      %v8456 = vld [vmem:[%s12 + $0x70] sm:$0xf]
      %v8457 = vld [vmem:[%s12 + $0x74] sm:$0xf]
      %v8458 = vld [vmem:[%s12 + $0x78] sm:$0xf]
      %v8459 = vld [vmem:[%s12 + $0x7c] sm:$0xf]
      %v8460 = vld [vmem:[%s12 + $0x80] sm:$0xf]
      %v8461 = vld [vmem:[%s12 + $0x84] sm:$0xf]
      %v8462 = vld [vmem:[%s12 + $0x88] sm:$0xf]
      %v8463 = vld [vmem:[%s12 + $0x8c] sm:$0xf]
      %v8464 = vld [vmem:[%s12 + $0x90] sm:$0xf]
      %v8465 = vld [vmem:[%s12 + $0x94] sm:$0xf]
      %v8466 = vld [vmem:[%s12 + $0x98] sm:$0xf]
      %v8467 = vld [vmem:[%s12 + $0x9c] sm:$0xf]
      %v8468 = vld [vmem:[%s12 + $0xa0] sm:$0xf]
      %v8469 = vld [vmem:[%s12 + $0xa4] sm:$0xf]
      %v8470 = vld [vmem:[%s12 + $0xa8] sm:$0xf]
      %v8471 = vld [vmem:[%s12 + $0xac] sm:$0xf]
      %v8472 = vld [vmem:[%s12 + $0xb0] sm:$0xf]
      %v8473 = vld [vmem:[%s12 + $0xb4] sm:$0xf]
      %v8474 = vld [vmem:[%s12 + $0xb8] sm:$0xf]
      %v8475 = vld [vmem:[%s12 + $0xbc] sm:$0xf]
      %v8476 = vld [vmem:[%s12 + $0xc0] sm:$0xf]
      %v8477 = vld [vmem:[%s12 + $0xc4] sm:$0xf]
      %v8478 = vld [vmem:[%s12 + $0xc8] sm:$0xf]
      %v8479 = vld [vmem:[%s12 + $0xcc] sm:$0xf]
      %v8480 = vld [vmem:[%s12 + $0xd0] sm:$0xf]
      %v8481 = vld [vmem:[%s12 + $0xd4] sm:$0xf]
      %v8482 = vld [vmem:[%s13] sm:$0x1]
      %v8484 = vlaneseq
      %v8485 = vshrl.u32 %v8484, 7
      %v8486 = vsub.s32 0, %v8485
      %v8487 = vrot.slane %v8482, %v8486
      %v8543 = vunpack.c.l.b16 %v8428
      %v8544 = vunpack.c.l.b16 %v8429
      %v8545 = vunpack.c.l.b16 %v8430
      %v8546 = vunpack.c.l.b16 %v8431
      %v8547 = vunpack.c.l.b16 %v8432
      %v8548 = vunpack.c.l.b16 %v8433
      %v8549 = vunpack.c.l.b16 %v8434
      %v8550 = vunpack.c.l.b16 %v8435
      %v8551 = vunpack.c.l.b16 %v8436
      %v8552 = vunpack.c.l.b16 %v8437
      %v8553 = vunpack.c.l.b16 %v8438
      %v8554 = vunpack.c.l.b16 %v8439
      %v8555 = vunpack.c.l.b16 %v8440
      %v8556 = vunpack.c.l.b16 %v8441
      %v8557 = vunpack.c.l.b16 %v8442
      %v8558 = vunpack.c.l.b16 %v8443
      %v8559 = vunpack.c.l.b16 %v8444
      %v8560 = vunpack.c.l.b16 %v8445
      %v8561 = vunpack.c.l.b16 %v8446
      %v8562 = vunpack.c.l.b16 %v8447
      %v8563 = vunpack.c.l.b16 %v8448
      %v8564 = vunpack.c.l.b16 %v8449
      %v8565 = vunpack.c.l.b16 %v8450
      %v8566 = vunpack.c.l.b16 %v8451
      %v8567 = vunpack.c.l.b16 %v8452
      %v8568 = vunpack.c.l.b16 %v8453
      %v8569 = vunpack.c.l.b16 %v8454
      %v8570 = vunpack.c.l.b16 %v8455
      %v8571 = vunpack.c.l.b16 %v8456
      %v8572 = vunpack.c.l.b16 %v8457
      %v8573 = vunpack.c.l.b16 %v8458
      %v8574 = vunpack.c.l.b16 %v8459
      %v8575 = vunpack.c.l.b16 %v8460
      %v8576 = vunpack.c.l.b16 %v8461
      %v8577 = vunpack.c.l.b16 %v8462
      %v8578 = vunpack.c.l.b16 %v8463
      %v8579 = vunpack.c.l.b16 %v8464
      %v8580 = vunpack.c.l.b16 %v8465
      %v8581 = vunpack.c.l.b16 %v8466
      %v8582 = vunpack.c.l.b16 %v8467
      %v8583 = vunpack.c.l.b16 %v8468
      %v8584 = vunpack.c.l.b16 %v8469
      %v8585 = vunpack.c.l.b16 %v8470
      %v8586 = vunpack.c.l.b16 %v8471
      %v8587 = vunpack.c.l.b16 %v8472
      %v8588 = vunpack.c.l.b16 %v8473
      %v8589 = vunpack.c.l.b16 %v8474
      %v8590 = vunpack.c.l.b16 %v8475
      %v8591 = vunpack.c.l.b16 %v8476
      %v8592 = vunpack.c.l.b16 %v8477
      %v8593 = vunpack.c.l.b16 %v8478
      %v8594 = vunpack.c.l.b16 %v8479
      %v8595 = vunpack.c.l.b16 %v8480
      %v8596 = vunpack.c.l.b16 %v8481
      %v8597 = vpack.c.b16 %v8544, %v8543
      %v8598 = vpack.c.b16 %v8546, %v8545
      %v8599 = vpack.c.b16 %v8548, %v8547
      %v8600 = vpack.c.b16 %v8550, %v8549
      %v8601 = vpack.c.b16 %v8552, %v8551
      %v8602 = vpack.c.b16 %v8554, %v8553
      %v8603 = vpack.c.b16 %v8556, %v8555
      %v8604 = vpack.c.b16 %v8558, %v8557
      %v8605 = vpack.c.b16 %v8560, %v8559
      %v8606 = vpack.c.b16 %v8562, %v8561
      %v8607 = vpack.c.b16 %v8564, %v8563
      %v8608 = vpack.c.b16 %v8566, %v8565
      %v8609 = vpack.c.b16 %v8568, %v8567
      %v8610 = vpack.c.b16 %v8570, %v8569
      %v8611 = vpack.c.b16 %v8572, %v8571
      %v8612 = vpack.c.b16 %v8574, %v8573
      %v8613 = vpack.c.b16 %v8576, %v8575
      %v8614 = vpack.c.b16 %v8578, %v8577
      %v8615 = vpack.c.b16 %v8580, %v8579
      %v8616 = vpack.c.b16 %v8582, %v8581
      %v8617 = vpack.c.b16 %v8584, %v8583
      %v8618 = vpack.c.b16 %v8586, %v8585
      %v8619 = vpack.c.b16 %v8588, %v8587
      %v8620 = vpack.c.b16 %v8590, %v8589
      %v8621 = vpack.c.b16 %v8592, %v8591
      %v8622 = vpack.c.b16 %v8594, %v8593
      %v8623 = vpack.c.b16 %v8596, %v8595
      %v8652 = vsel %vm7055, %v8367, 0
      %v8655 = vsel %vm7055, %v8371, 0
      %v8658 = vsel %vm7055, %v8375, 0
      %v8661 = vsel %vm7055, %v8379, 0
      %v8664 = vsel %vm7055, %v8383, 0
      %v8667 = vsel %vm7055, %v8387, 0
      %v8670 = vsel %vm7055, %v8391, 0
      %v8673 = vsel %vm7055, %v8395, 0
      %v8676 = vsel %vm7055, %v8399, 0
      %v8679 = vsel %vm7055, %v8403, 0
      %v8682 = vsel %vm7055, %v8407, 0
      %v8685 = vsel %vm7055, %v8411, 0
      %v8688 = vsel %vm7055, %v8415, 0
      %v8691 = vsel %vm7055, %v8419, 0
      %v8694 = vsel %vm7055, %v8423, 0
      %v8697 = vsel %vm7055, %v8427, 0
      %8699 = vmatprep.subr.bf16.mxu0 0
      %8700 = vmatpush1.bf16.msra.mxu0 %v8597
      %8701 = vmatprep.subr.bf16.mxu0 0
      %8702 = vmatpush1.bf16.msra.mxu0 %v8598
      %8703 = vmatprep.subr.bf16.mxu0 0
      %8704 = vmatpush1.bf16.msra.mxu0 %v8599
      %8705 = vmatprep.subr.bf16.mxu0 0
      %8706 = vmatpush1.bf16.msra.mxu0 %v8600
      %8707 = vmatprep.subr.bf16.mxu0 0
      %8708 = vmatpush1.bf16.msra.mxu0 %v8601
      %8709 = vmatprep.subr.bf16.mxu0 0
      %8710 = vmatpush1.bf16.msra.mxu0 %v8602
      %8711 = vmatprep.subr.bf16.mxu0 0
      %8712 = vmatpush1.bf16.msra.mxu0 %v8603
      %8713 = vmatprep.subr.bf16.mxu0 0
      %8714 = vmatpush1.bf16.msra.mxu0 %v8604
      %8715 = vmatprep.subr.bf16.mxu0 0
      %8716 = vmatpush1.bf16.msra.mxu0 %v8605
      %8717 = vmatprep.subr.bf16.mxu0 0
      %8718 = vmatpush1.bf16.msra.mxu0 %v8606
      %8719 = vmatprep.subr.bf16.mxu0 0
      %8720 = vmatpush1.bf16.msra.mxu0 %v8607
      %8721 = vmatprep.subr.bf16.mxu0 0
      %8722 = vmatpush1.bf16.msra.mxu0 %v8608
      %8723 = vmatprep.subr.bf16.mxu0 0
      %8724 = vmatpush1.bf16.msra.mxu0 %v8609
      %8725 = vmatprep.subr.bf16.mxu0 0
      %8726 = vmatpush1.bf16.msra.mxu0 %v8610
      %8727 = vmatprep.subr.bf16.mxu0 0
      %8728 = vmatpush1.bf16.msra.mxu0 %v8611
      %8729 = vmatprep.subr.bf16.mxu0 0
      %8730 = vmatpush1.bf16.msra.mxu0 %v8612
      %8731 = vmatprep.mubr.bf16.mxu0 %v8365
      %8732 = vmatmul.mubr.bf16.gmra.mrb[0].mxu0 %v8364
      %v8733 = vpop.f32.mrb[0].mxu0
      %v8734 = vadd.f32 %v8487, %v8733
      %v8735 = vpop.f32.mrb[0].mxu0
      %v8736 = vpop.f32.mrb[0].mxu0
      %v8737 = vadd.f32 %v8487, %v8736
      %v8738 = vpop.f32.mrb[0].mxu0
      %8739 = vmatprep.mubr.bf16.mxu0 %v8369
      %8740 = vmatmul.mubr.bf16.gmra.mrb[0].mxu0 %v8368
      %v8741 = vpop.f32.mrb[0].mxu0
      %v8742 = vadd.f32 %v8487, %v8741
      %v8743 = vpop.f32.mrb[0].mxu0
      %v8744 = vpop.f32.mrb[0].mxu0
      %v8745 = vadd.f32 %v8487, %v8744
      %v8746 = vpop.f32.mrb[0].mxu0
      %8747 = vmatprep.mubr.bf16.mxu0 %v8373
      %8748 = vmatmul.mubr.bf16.gmra.mrb[0].mxu0 %v8372
      %v8749 = vpop.f32.mrb[0].mxu0
      %v8750 = vadd.f32 %v8487, %v8749
      %v8751 = vpop.f32.mrb[0].mxu0
      %v8752 = vpop.f32.mrb[0].mxu0
      %v8753 = vadd.f32 %v8487, %v8752
      %v8754 = vpop.f32.mrb[0].mxu0
      %8755 = vmatprep.mubr.bf16.mxu0 %v8377
      %8756 = vmatmul.mubr.bf16.gmra.mrb[0].mxu0 %v8376
      %v8757 = vpop.f32.mrb[0].mxu0
      %v8758 = vadd.f32 %v8487, %v8757
      %v8759 = vpop.f32.mrb[0].mxu0
      %v8760 = vpop.f32.mrb[0].mxu0
      %v8761 = vadd.f32 %v8487, %v8760
      %v8762 = vpop.f32.mrb[0].mxu0
      %8763 = vmatprep.mubr.bf16.mxu0 %v8381
      %8764 = vmatmul.mubr.bf16.gmra.mrb[0].mxu0 %v8380
      %v8765 = vpop.f32.mrb[0].mxu0
      %v8766 = vadd.f32 %v8487, %v8765
      %v8767 = vpop.f32.mrb[0].mxu0
      %v8768 = vpop.f32.mrb[0].mxu0
      %v8769 = vadd.f32 %v8487, %v8768
      %v8770 = vpop.f32.mrb[0].mxu0
      %8771 = vmatprep.mubr.bf16.mxu0 %v8385
      %8772 = vmatmul.mubr.bf16.gmra.mrb[0].mxu0 %v8384
      %v8773 = vpop.f32.mrb[0].mxu0
      %v8774 = vadd.f32 %v8487, %v8773
      %v8775 = vpop.f32.mrb[0].mxu0
      %v8776 = vpop.f32.mrb[0].mxu0
      %v8777 = vadd.f32 %v8487, %v8776
      %v8778 = vpop.f32.mrb[0].mxu0
      %8779 = vmatprep.mubr.bf16.mxu0 %v8389
      %8780 = vmatmul.mubr.bf16.gmra.mrb[0].mxu0 %v8388
      %v8781 = vpop.f32.mrb[0].mxu0
      %v8782 = vadd.f32 %v8487, %v8781
      %v8783 = vpop.f32.mrb[0].mxu0
      %v8784 = vpop.f32.mrb[0].mxu0
      %v8785 = vadd.f32 %v8487, %v8784
      %v8786 = vpop.f32.mrb[0].mxu0
      %8787 = vmatprep.mubr.bf16.mxu0 %v8393
      %8788 = vmatmul.mubr.bf16.gmra.mrb[0].mxu0 %v8392
      %v8789 = vpop.f32.mrb[0].mxu0
      %v8790 = vadd.f32 %v8487, %v8789
      %v8791 = vpop.f32.mrb[0].mxu0
      %v8792 = vpop.f32.mrb[0].mxu0
      %v8793 = vadd.f32 %v8487, %v8792
      %v8794 = vpop.f32.mrb[0].mxu0
      %8795 = vmatprep.mubr.bf16.mxu0 %v8397
      %8796 = vmatmul.mubr.bf16.gmra.mrb[0].mxu0 %v8396
      %v8797 = vpop.f32.mrb[0].mxu0
      %v8798 = vadd.f32 %v8487, %v8797
      %v8799 = vpop.f32.mrb[0].mxu0
      %v8800 = vpop.f32.mrb[0].mxu0
      %v8801 = vadd.f32 %v8487, %v8800
      %v8802 = vpop.f32.mrb[0].mxu0
      %8803 = vmatprep.mubr.bf16.mxu0 %v8401
      %8804 = vmatmul.mubr.bf16.gmra.mrb[0].mxu0 %v8400
      %v8805 = vpop.f32.mrb[0].mxu0
      %v8806 = vadd.f32 %v8487, %v8805
      %v8807 = vpop.f32.mrb[0].mxu0
      %v8808 = vpop.f32.mrb[0].mxu0
      %v8809 = vadd.f32 %v8487, %v8808
      %v8810 = vpop.f32.mrb[0].mxu0
      %8811 = vmatprep.mubr.bf16.mxu0 %v8405
      %8812 = vmatmul.mubr.bf16.gmra.mrb[0].mxu0 %v8404
      %v8813 = vpop.f32.mrb[0].mxu0
      %v8814 = vadd.f32 %v8487, %v8813
      %v8815 = vpop.f32.mrb[0].mxu0
      %v8816 = vpop.f32.mrb[0].mxu0
      %v8817 = vadd.f32 %v8487, %v8816
      %v8818 = vpop.f32.mrb[0].mxu0
      %8819 = vmatprep.mubr.bf16.mxu0 %v8409
      %8820 = vmatmul.mubr.bf16.gmra.mrb[0].mxu0 %v8408
      %v8821 = vpop.f32.mrb[0].mxu0
      %v8822 = vadd.f32 %v8487, %v8821
      %v8823 = vpop.f32.mrb[0].mxu0
      %v8824 = vpop.f32.mrb[0].mxu0
      %v8825 = vadd.f32 %v8487, %v8824
      %v8826 = vpop.f32.mrb[0].mxu0
      %8827 = vmatprep.mubr.bf16.mxu0 %v8413
      %8828 = vmatmul.mubr.bf16.gmra.mrb[0].mxu0 %v8412
      %v8829 = vpop.f32.mrb[0].mxu0
      %v8830 = vadd.f32 %v8487, %v8829
      %v8831 = vpop.f32.mrb[0].mxu0
      %v8832 = vpop.f32.mrb[0].mxu0
      %v8833 = vadd.f32 %v8487, %v8832
      %v8834 = vpop.f32.mrb[0].mxu0
      %8835 = vmatprep.mubr.bf16.mxu0 %v8417
      %8836 = vmatmul.mubr.bf16.gmra.mrb[0].mxu0 %v8416
      %v8837 = vpop.f32.mrb[0].mxu0
      %v8838 = vadd.f32 %v8487, %v8837
      %v8839 = vpop.f32.mrb[0].mxu0
      %v8840 = vpop.f32.mrb[0].mxu0
      %v8841 = vadd.f32 %v8487, %v8840
      %v8842 = vpop.f32.mrb[0].mxu0
      %8843 = vmatprep.mubr.bf16.mxu0 %v8421
      %8844 = vmatmul.mubr.bf16.gmra.mrb[0].mxu0 %v8420
      %v8845 = vpop.f32.mrb[0].mxu0
      %v8846 = vadd.f32 %v8487, %v8845
      %v8847 = vpop.f32.mrb[0].mxu0
      %v8848 = vpop.f32.mrb[0].mxu0
      %v8849 = vadd.f32 %v8487, %v8848
      %v8850 = vpop.f32.mrb[0].mxu0
      %8851 = vmatprep.mubr.bf16.mxu0 %v8425
      %8852 = vmatmul.mubr.bf16.gmra.mrb[0].mxu0 %v8424
      %v8853 = vpop.f32.mrb[0].mxu0
      %v8854 = vadd.f32 %v8487, %v8853
      %v8855 = vpop.f32.mrb[0].mxu0
      %v8856 = vpop.f32.mrb[0].mxu0
      %v8857 = vadd.f32 %v8487, %v8856
      %v8858 = vpop.f32.mrb[0].mxu0
      %8859 = vdwg.mxu0
      %8860 = vmatprep.subr.bf16.mxu0 0
      %8861 = vmatpush1.bf16.msra.mxu0 %v8613
      %8862 = vmatprep.subr.bf16.mxu0 0
      %8863 = vmatpush1.bf16.msra.mxu0 %v8614
      %8864 = vmatprep.subr.bf16.mxu0 0
      %8865 = vmatpush1.bf16.msra.mxu0 %v8615
      %8866 = vmatprep.subr.bf16.mxu0 0
      %8867 = vmatpush1.bf16.msra.mxu0 %v8616
      %8868 = vmatprep.subr.bf16.mxu0 0
      %8869 = vmatpush1.bf16.msra.mxu0 %v8617
      %8870 = vmatprep.subr.bf16.mxu0 0
      %8871 = vmatpush1.bf16.msra.mxu0 %v8618
      %8872 = vmatprep.subr.bf16.mxu0 0
      %8873 = vmatpush1.bf16.msra.mxu0 %v8619
      %8874 = vmatprep.subr.bf16.mxu0 0
      %8875 = vmatpush1.bf16.msra.mxu0 %v8620
      %8876 = vmatprep.subr.bf16.mxu0 0
      %8877 = vmatpush1.bf16.msra.mxu0 %v8621
      %8878 = vmatprep.subr.bf16.mxu0 0
      %8879 = vmatpush1.bf16.msra.mxu0 %v8622
      %8880 = vmatprep.subr.bf16.mxu0 0
      %8881 = vmatpush1.bf16.msra.mxu0 %v8623
      %8882 = vmatprep.subr.bf16.mxu0 0
      %8883 = vmatpush1.bf16.msra.mxu0 0
      %8884 = vmatprep.subr.bf16.mxu0 0
      %8885 = vmatpush1.bf16.msra.mxu0 0
      %8886 = vmatprep.subr.bf16.mxu0 0
      %8887 = vmatpush1.bf16.msra.mxu0 0
      %8888 = vmatprep.subr.bf16.mxu0 0
      %8889 = vmatpush1.bf16.msra.mxu0 0
      %8890 = vmatprep.subr.bf16.mxu0 0
      %8891 = vmatpush1.bf16.msra.mxu0 0
      %8892 = vmatprep.mubr.bf16.mxu0 %v8652
      %8893 = vmatmul.mubr.bf16.gmra.mrb[0].mxu0 %v8366
      %v8894 = vpop.f32.mrb[0].mxu0
      %v8895 = vadd.f32 %v8734, %v8894
      %v8896 = vpop.f32.mrb[0].mxu0
      %v8897 = vpop.f32.mrb[0].mxu0
      %v8898 = vadd.f32 %v8737, %v8897
      %v8899 = vpop.f32.mrb[0].mxu0
      %8900 = vmatprep.mubr.bf16.mxu0 %v8655
      %8901 = vmatmul.mubr.bf16.gmra.mrb[0].mxu0 %v8370
      %v8902 = vpop.f32.mrb[0].mxu0
      %v8903 = vadd.f32 %v8742, %v8902
      %v8904 = vpop.f32.mrb[0].mxu0
      %v8905 = vpop.f32.mrb[0].mxu0
      %v8906 = vadd.f32 %v8745, %v8905
      %v8907 = vpop.f32.mrb[0].mxu0
      %8908 = vmatprep.mubr.bf16.mxu0 %v8658
      %8909 = vmatmul.mubr.bf16.gmra.mrb[0].mxu0 %v8374
      %v8910 = vpop.f32.mrb[0].mxu0
      %v8911 = vadd.f32 %v8750, %v8910
      %v8912 = vpop.f32.mrb[0].mxu0
      %v8913 = vpop.f32.mrb[0].mxu0
      %v8914 = vadd.f32 %v8753, %v8913
      %v8915 = vpop.f32.mrb[0].mxu0
      %8916 = vmatprep.mubr.bf16.mxu0 %v8661
      %8917 = vmatmul.mubr.bf16.gmra.mrb[0].mxu0 %v8378
      %v8918 = vpop.f32.mrb[0].mxu0
      %v8919 = vadd.f32 %v8758, %v8918
      %v8920 = vpop.f32.mrb[0].mxu0
      %v8921 = vpop.f32.mrb[0].mxu0
      %v8922 = vadd.f32 %v8761, %v8921
      %v8923 = vpop.f32.mrb[0].mxu0
      %8924 = vmatprep.mubr.bf16.mxu0 %v8664
      %8925 = vmatmul.mubr.bf16.gmra.mrb[0].mxu0 %v8382
      %v8926 = vpop.f32.mrb[0].mxu0
      %v8927 = vadd.f32 %v8766, %v8926
      %v8928 = vpop.f32.mrb[0].mxu0
      %v8929 = vpop.f32.mrb[0].mxu0
      %v8930 = vadd.f32 %v8769, %v8929
      %v8931 = vpop.f32.mrb[0].mxu0
      %8932 = vmatprep.mubr.bf16.mxu0 %v8667
      %8933 = vmatmul.mubr.bf16.gmra.mrb[0].mxu0 %v8386
      %v8934 = vpop.f32.mrb[0].mxu0
      %v8935 = vadd.f32 %v8774, %v8934
      %v8936 = vpop.f32.mrb[0].mxu0
      %v8937 = vpop.f32.mrb[0].mxu0
      %v8938 = vadd.f32 %v8777, %v8937
      %v8939 = vpop.f32.mrb[0].mxu0
      %8940 = vmatprep.mubr.bf16.mxu0 %v8670
      %8941 = vmatmul.mubr.bf16.gmra.mrb[0].mxu0 %v8390
      %v8942 = vpop.f32.mrb[0].mxu0
      %v8943 = vadd.f32 %v8782, %v8942
      %v8944 = vpop.f32.mrb[0].mxu0
      %v8945 = vpop.f32.mrb[0].mxu0
      %v8946 = vadd.f32 %v8785, %v8945
      %v8947 = vpop.f32.mrb[0].mxu0
      %8948 = vmatprep.mubr.bf16.mxu0 %v8673
      %8949 = vmatmul.mubr.bf16.gmra.mrb[0].mxu0 %v8394
      %v8950 = vpop.f32.mrb[0].mxu0
      %v8951 = vadd.f32 %v8790, %v8950
      %v8952 = vpop.f32.mrb[0].mxu0
      %v8953 = vpop.f32.mrb[0].mxu0
      %v8954 = vadd.f32 %v8793, %v8953
      %v8955 = vpop.f32.mrb[0].mxu0
      %8956 = vmatprep.mubr.bf16.mxu0 %v8676
      %8957 = vmatmul.mubr.bf16.gmra.mrb[0].mxu0 %v8398
      %v8958 = vpop.f32.mrb[0].mxu0
      %v8959 = vadd.f32 %v8798, %v8958
      %v8960 = vpop.f32.mrb[0].mxu0
      %v8961 = vpop.f32.mrb[0].mxu0
      %v8962 = vadd.f32 %v8801, %v8961
      %v8963 = vpop.f32.mrb[0].mxu0
      %8964 = vmatprep.mubr.bf16.mxu0 %v8679
      %8965 = vmatmul.mubr.bf16.gmra.mrb[0].mxu0 %v8402
      %v8966 = vpop.f32.mrb[0].mxu0
      %v8967 = vadd.f32 %v8806, %v8966
      %v8968 = vpop.f32.mrb[0].mxu0
      %v8969 = vpop.f32.mrb[0].mxu0
      %v8970 = vadd.f32 %v8809, %v8969
      %v8971 = vpop.f32.mrb[0].mxu0
      %8972 = vmatprep.mubr.bf16.mxu0 %v8682
      %8973 = vmatmul.mubr.bf16.gmra.mrb[0].mxu0 %v8406
      %v8974 = vpop.f32.mrb[0].mxu0
      %v8975 = vadd.f32 %v8814, %v8974
      %v8976 = vpop.f32.mrb[0].mxu0
      %v8977 = vpop.f32.mrb[0].mxu0
      %v8978 = vadd.f32 %v8817, %v8977
      %v8979 = vpop.f32.mrb[0].mxu0
      %8980 = vmatprep.mubr.bf16.mxu0 %v8685
      %8981 = vmatmul.mubr.bf16.gmra.mrb[0].mxu0 %v8410
      %v8982 = vpop.f32.mrb[0].mxu0
      %v8983 = vadd.f32 %v8822, %v8982
      %v8984 = vpop.f32.mrb[0].mxu0
      %v8985 = vpop.f32.mrb[0].mxu0
      %v8986 = vadd.f32 %v8825, %v8985
      %v8987 = vpop.f32.mrb[0].mxu0
      %8988 = vmatprep.mubr.bf16.mxu0 %v8688
      %8989 = vmatmul.mubr.bf16.gmra.mrb[0].mxu0 %v8414
      %v8990 = vpop.f32.mrb[0].mxu0
      %v8991 = vadd.f32 %v8830, %v8990
      %v8992 = vpop.f32.mrb[0].mxu0
      %v8993 = vpop.f32.mrb[0].mxu0
      %v8994 = vadd.f32 %v8833, %v8993
      %v8995 = vpop.f32.mrb[0].mxu0
      %8996 = vmatprep.mubr.bf16.mxu0 %v8691
      %8997 = vmatmul.mubr.bf16.gmra.mrb[0].mxu0 %v8418
      %v8998 = vpop.f32.mrb[0].mxu0
      %v8999 = vadd.f32 %v8838, %v8998
      %v9000 = vpop.f32.mrb[0].mxu0
      %v9001 = vpop.f32.mrb[0].mxu0
      %v9002 = vadd.f32 %v8841, %v9001
      %v9003 = vpop.f32.mrb[0].mxu0
      %9004 = vmatprep.mubr.bf16.mxu0 %v8694
      %9005 = vmatmul.mubr.bf16.gmra.mrb[0].mxu0 %v8422
      %v9006 = vpop.f32.mrb[0].mxu0
      %v9007 = vadd.f32 %v8846, %v9006
      %v9008 = vpop.f32.mrb[0].mxu0
      %v9009 = vpop.f32.mrb[0].mxu0
      %v9010 = vadd.f32 %v8849, %v9009
      %v9011 = vpop.f32.mrb[0].mxu0
      %9012 = vmatprep.mubr.bf16.mxu0 %v8697
      %9013 = vmatmul.mubr.bf16.gmra.mrb[0].mxu0 %v8426
      %v9014 = vpop.f32.mrb[0].mxu0
      %v9015 = vadd.f32 %v8854, %v9014
      %v9016 = vpop.f32.mrb[0].mxu0
      %v9017 = vpop.f32.mrb[0].mxu0
      %v9018 = vadd.f32 %v8857, %v9017
      %v9019 = vpop.f32.mrb[0].mxu0
      %9020 = vdwg.mxu0
      %v9021 = vxor.u32 %v8895, 2147483648
      %v9022 = vxor.u32 %v8898, 2147483648
      %v9023 = vxor.u32 %v8903, 2147483648
      %v9024 = vxor.u32 %v8906, 2147483648
      %v9025 = vxor.u32 %v8911, 2147483648
      %v9026 = vxor.u32 %v8914, 2147483648
      %v9027 = vxor.u32 %v8919, 2147483648
      %v9028 = vxor.u32 %v8922, 2147483648
      %v9029 = vxor.u32 %v8927, 2147483648
      %v9030 = vxor.u32 %v8930, 2147483648
      %v9031 = vxor.u32 %v8935, 2147483648
      %v9032 = vxor.u32 %v8938, 2147483648
      %v9033 = vxor.u32 %v8943, 2147483648
      %v9034 = vxor.u32 %v8946, 2147483648
      %v9035 = vxor.u32 %v8951, 2147483648
      %v9036 = vxor.u32 %v8954, 2147483648
      %v9037 = vxor.u32 %v8959, 2147483648
      %v9038 = vxor.u32 %v8962, 2147483648
      %v9039 = vxor.u32 %v8967, 2147483648
      %v9040 = vxor.u32 %v8970, 2147483648
      %v9041 = vxor.u32 %v8975, 2147483648
      %v9042 = vxor.u32 %v8978, 2147483648
      %v9043 = vxor.u32 %v8983, 2147483648
      %v9044 = vxor.u32 %v8986, 2147483648
      %v9045 = vxor.u32 %v8991, 2147483648
      %v9046 = vxor.u32 %v8994, 2147483648
      %v9047 = vxor.u32 %v8999, 2147483648
      %v9048 = vxor.u32 %v9002, 2147483648
      %v9049 = vxor.u32 %v9007, 2147483648
      %v9050 = vxor.u32 %v9010, 2147483648
      %v9051 = vxor.u32 %v9015, 2147483648
      %v9052 = vxor.u32 %v9018, 2147483648
      %v9053 = vmul.f32 %v9021, 1.442695
      %v9054 = vpow.pop %v9053
      %v9055 = vmul.f32 %v9022, 1.442695
      %v9056 = vpow.pop %v9055
      %v9057 = vmul.f32 %v9023, 1.442695
      %v9058 = vpow.pop %v9057
      %v9059 = vmul.f32 %v9024, 1.442695
      %v9060 = vpow.pop %v9059
      %v9061 = vmul.f32 %v9025, 1.442695
      %v9062 = vpow.pop %v9061
      %v9063 = vmul.f32 %v9026, 1.442695
      %v9064 = vpow.pop %v9063
      %v9065 = vmul.f32 %v9027, 1.442695
      %v9066 = vpow.pop %v9065
      %v9067 = vmul.f32 %v9028, 1.442695
      %v9068 = vpow.pop %v9067
      %v9069 = vmul.f32 %v9029, 1.442695
      %v9070 = vpow.pop %v9069
      %v9071 = vmul.f32 %v9030, 1.442695
      %v9072 = vpow.pop %v9071
      %v9073 = vmul.f32 %v9031, 1.442695
      %v9074 = vpow.pop %v9073
      %v9075 = vmul.f32 %v9032, 1.442695
      %v9076 = vpow.pop %v9075
      %v9077 = vmul.f32 %v9033, 1.442695
      %v9078 = vpow.pop %v9077
      %v9079 = vmul.f32 %v9034, 1.442695
      %v9080 = vpow.pop %v9079
      %v9081 = vmul.f32 %v9035, 1.442695
      %v9082 = vpow.pop %v9081
      %v9083 = vmul.f32 %v9036, 1.442695
      %v9084 = vpow.pop %v9083
      %v9085 = vmul.f32 %v9037, 1.442695
      %v9086 = vpow.pop %v9085
      %v9087 = vmul.f32 %v9038, 1.442695
      %v9088 = vpow.pop %v9087
      %v9089 = vmul.f32 %v9039, 1.442695
      %v9090 = vpow.pop %v9089
      %v9091 = vmul.f32 %v9040, 1.442695
      %v9092 = vpow.pop %v9091
      %v9093 = vmul.f32 %v9041, 1.442695
      %v9094 = vpow.pop %v9093
      %v9095 = vmul.f32 %v9042, 1.442695
      %v9096 = vpow.pop %v9095
      %v9097 = vmul.f32 %v9043, 1.442695
      %v9098 = vpow.pop %v9097
      %v9099 = vmul.f32 %v9044, 1.442695
      %v9100 = vpow.pop %v9099
      %v9101 = vmul.f32 %v9045, 1.442695
      %v9102 = vpow.pop %v9101
      %v9103 = vmul.f32 %v9046, 1.442695
      %v9104 = vpow.pop %v9103
      %v9105 = vmul.f32 %v9047, 1.442695
      %v9106 = vpow.pop %v9105
      %v9107 = vmul.f32 %v9048, 1.442695
      %v9108 = vpow.pop %v9107
      %v9109 = vmul.f32 %v9049, 1.442695
      %v9110 = vpow.pop %v9109
      %v9111 = vmul.f32 %v9050, 1.442695
      %v9112 = vpow.pop %v9111
      %v9113 = vmul.f32 %v9051, 1.442695
      %v9114 = vpow.pop %v9113
      %v9115 = vmul.f32 %v9052, 1.442695
      %v9116 = vpow.pop %v9115
      %v9117 = vadd.f32 %v9054, 1.0
      %v9118 = vadd.f32 %v9056, 1.0
      %v9119 = vadd.f32 %v9058, 1.0
      %v9120 = vadd.f32 %v9060, 1.0
      %v9121 = vadd.f32 %v9062, 1.0
      %v9122 = vadd.f32 %v9064, 1.0
      %v9123 = vadd.f32 %v9066, 1.0
      %v9124 = vadd.f32 %v9068, 1.0
      %v9125 = vadd.f32 %v9070, 1.0
      %v9126 = vadd.f32 %v9072, 1.0
      %v9127 = vadd.f32 %v9074, 1.0
      %v9128 = vadd.f32 %v9076, 1.0
      %v9129 = vadd.f32 %v9078, 1.0
      %v9130 = vadd.f32 %v9080, 1.0
      %v9131 = vadd.f32 %v9082, 1.0
      %v9132 = vadd.f32 %v9084, 1.0
      %v9133 = vadd.f32 %v9086, 1.0
      %v9134 = vadd.f32 %v9088, 1.0
      %v9135 = vadd.f32 %v9090, 1.0
      %v9136 = vadd.f32 %v9092, 1.0
      %v9137 = vadd.f32 %v9094, 1.0
      %v9138 = vadd.f32 %v9096, 1.0
      %v9139 = vadd.f32 %v9098, 1.0
      %v9140 = vadd.f32 %v9100, 1.0
      %v9141 = vadd.f32 %v9102, 1.0
      %v9142 = vadd.f32 %v9104, 1.0
      %v9143 = vadd.f32 %v9106, 1.0
      %v9144 = vadd.f32 %v9108, 1.0
      %v9145 = vadd.f32 %v9110, 1.0
      %v9146 = vadd.f32 %v9112, 1.0
      %v9147 = vadd.f32 %v9114, 1.0
      %v9148 = vadd.f32 %v9116, 1.0
      %v9149 = vrcp.pop %v9117
      %v9150 = vmul.f32 1.0, %v9149
      %v9151 = vrcp.pop %v9118
      %v9152 = vmul.f32 1.0, %v9151
      %v9153 = vrcp.pop %v9119
      %v9154 = vmul.f32 1.0, %v9153
      %v9155 = vrcp.pop %v9120
      %v9156 = vmul.f32 1.0, %v9155
      %v9157 = vrcp.pop %v9121
      %v9158 = vmul.f32 1.0, %v9157
      %v9159 = vrcp.pop %v9122
      %v9160 = vmul.f32 1.0, %v9159
      %v9161 = vrcp.pop %v9123
      %v9162 = vmul.f32 1.0, %v9161
      %v9163 = vrcp.pop %v9124
      %v9164 = vmul.f32 1.0, %v9163
      %v9165 = vrcp.pop %v9125
      %v9166 = vmul.f32 1.0, %v9165
      %v9167 = vrcp.pop %v9126
      %v9168 = vmul.f32 1.0, %v9167
      %v9169 = vrcp.pop %v9127
      %v9170 = vmul.f32 1.0, %v9169
      %v9171 = vrcp.pop %v9128
      %v9172 = vmul.f32 1.0, %v9171
      %v9173 = vrcp.pop %v9129
      %v9174 = vmul.f32 1.0, %v9173
      %v9175 = vrcp.pop %v9130
      %v9176 = vmul.f32 1.0, %v9175
      %v9177 = vrcp.pop %v9131
      %v9178 = vmul.f32 1.0, %v9177
      %v9179 = vrcp.pop %v9132
      %v9180 = vmul.f32 1.0, %v9179
      %v9181 = vrcp.pop %v9133
      %v9182 = vmul.f32 1.0, %v9181
      %v9183 = vrcp.pop %v9134
      %v9184 = vmul.f32 1.0, %v9183
      %v9185 = vrcp.pop %v9135
      %v9186 = vmul.f32 1.0, %v9185
      %v9187 = vrcp.pop %v9136
      %v9188 = vmul.f32 1.0, %v9187
      %v9189 = vrcp.pop %v9137
      %v9190 = vmul.f32 1.0, %v9189
      %v9191 = vrcp.pop %v9138
      %v9192 = vmul.f32 1.0, %v9191
      %v9193 = vrcp.pop %v9139
      %v9194 = vmul.f32 1.0, %v9193
      %v9195 = vrcp.pop %v9140
      %v9196 = vmul.f32 1.0, %v9195
      %v9197 = vrcp.pop %v9141
      %v9198 = vmul.f32 1.0, %v9197
      %v9199 = vrcp.pop %v9142
      %v9200 = vmul.f32 1.0, %v9199
      %v9201 = vrcp.pop %v9143
      %v9202 = vmul.f32 1.0, %v9201
      %v9203 = vrcp.pop %v9144
      %v9204 = vmul.f32 1.0, %v9203
      %v9205 = vrcp.pop %v9145
      %v9206 = vmul.f32 1.0, %v9205
      %v9207 = vrcp.pop %v9146
      %v9208 = vmul.f32 1.0, %v9207
      %v9209 = vrcp.pop %v9147
      %v9210 = vmul.f32 1.0, %v9209
      %v9211 = vrcp.pop %v9148
      %v9212 = vmul.f32 1.0, %v9211
      %v9213 = vtanh.pop %v8895
      %v9214 = vtanh.pop %v8898
      %v9215 = vtanh.pop %v8903
      %v9216 = vtanh.pop %v8906
      %v9217 = vtanh.pop %v8911
      %v9218 = vtanh.pop %v8914
      %v9219 = vtanh.pop %v8919
      %v9220 = vtanh.pop %v8922
      %v9221 = vtanh.pop %v8927
      %v9222 = vtanh.pop %v8930
      %v9223 = vtanh.pop %v8935
      %v9224 = vtanh.pop %v8938
      %v9225 = vtanh.pop %v8943
      %v9226 = vtanh.pop %v8946
      %v9227 = vtanh.pop %v8951
      %v9228 = vtanh.pop %v8954
      %v9229 = vtanh.pop %v8959
      %v9230 = vtanh.pop %v8962
      %v9231 = vtanh.pop %v8967
      %v9232 = vtanh.pop %v8970
      %v9233 = vtanh.pop %v8975
      %v9234 = vtanh.pop %v8978
      %v9235 = vtanh.pop %v8983
      %v9236 = vtanh.pop %v8986
      %v9237 = vtanh.pop %v8991
      %v9238 = vtanh.pop %v8994
      %v9239 = vtanh.pop %v8999
      %v9240 = vtanh.pop %v9002
      %v9241 = vtanh.pop %v9007
      %v9242 = vtanh.pop %v9010
      %v9243 = vtanh.pop %v9015
      %v9244 = vtanh.pop %v9018
      %9277 = vrot.lane.b32.xlu0 %v9213, 96
      %v9278 = vpop.permute.xlu0 %9277
      %9279 = vrot.lane.b32.xlu0 %v9214, 96
      %v9280 = vpop.permute.xlu0 %9279
      %9281 = vrot.lane.b32.xlu0 %v9215, 96
      %v9282 = vpop.permute.xlu0 %9281
      %9283 = vrot.lane.b32.xlu0 %v9216, 96
      %v9284 = vpop.permute.xlu0 %9283
      %9285 = vrot.lane.b32.xlu0 %v9217, 96
      %v9286 = vpop.permute.xlu0 %9285
      %9287 = vrot.lane.b32.xlu0 %v9218, 96
      %v9288 = vpop.permute.xlu0 %9287
      %9289 = vrot.lane.b32.xlu0 %v9219, 96
      %v9290 = vpop.permute.xlu0 %9289
      %9291 = vrot.lane.b32.xlu0 %v9220, 96
      %v9292 = vpop.permute.xlu0 %9291
      %9293 = vrot.lane.b32.xlu0 %v9221, 96
      %v9294 = vpop.permute.xlu0 %9293
      %9295 = vrot.lane.b32.xlu0 %v9222, 96
      %v9296 = vpop.permute.xlu0 %9295
      %9297 = vrot.lane.b32.xlu0 %v9223, 96
      %v9298 = vpop.permute.xlu0 %9297
      %9299 = vrot.lane.b32.xlu0 %v9224, 96
      %v9300 = vpop.permute.xlu0 %9299
      %9301 = vrot.lane.b32.xlu0 %v9225, 96
      %v9302 = vpop.permute.xlu0 %9301
      %9303 = vrot.lane.b32.xlu0 %v9226, 96
      %v9304 = vpop.permute.xlu0 %9303
      %9305 = vrot.lane.b32.xlu0 %v9227, 96
      %v9306 = vpop.permute.xlu0 %9305
      %9307 = vrot.lane.b32.xlu0 %v9228, 96
      %v9308 = vpop.permute.xlu0 %9307
      %9309 = vrot.lane.b32.xlu0 %v9229, 96
      %v9310 = vpop.permute.xlu0 %9309
      %9311 = vrot.lane.b32.xlu0 %v9230, 96
      %v9312 = vpop.permute.xlu0 %9311
      %9313 = vrot.lane.b32.xlu0 %v9231, 96
      %v9314 = vpop.permute.xlu0 %9313
      %9315 = vrot.lane.b32.xlu0 %v9232, 96
      %v9316 = vpop.permute.xlu0 %9315
      %9317 = vrot.lane.b32.xlu0 %v9233, 96
      %v9318 = vpop.permute.xlu0 %9317
      %9319 = vrot.lane.b32.xlu0 %v9234, 96
      %v9320 = vpop.permute.xlu0 %9319
      %9321 = vrot.lane.b32.xlu0 %v9235, 96
      %v9322 = vpop.permute.xlu0 %9321
      %9323 = vrot.lane.b32.xlu0 %v9236, 96
      %v9324 = vpop.permute.xlu0 %9323
      %9325 = vrot.lane.b32.xlu0 %v9237, 96
      %v9326 = vpop.permute.xlu0 %9325
      %9327 = vrot.lane.b32.xlu0 %v9238, 96
      %v9328 = vpop.permute.xlu0 %9327
      %9329 = vrot.lane.b32.xlu0 %v9239, 96
      %v9330 = vpop.permute.xlu0 %9329
      %9331 = vrot.lane.b32.xlu0 %v9240, 96
      %v9332 = vpop.permute.xlu0 %9331
      %9333 = vrot.lane.b32.xlu0 %v9241, 96
      %v9334 = vpop.permute.xlu0 %9333
      %9335 = vrot.lane.b32.xlu0 %v9242, 96
      %v9336 = vpop.permute.xlu0 %9335
      %9337 = vrot.lane.b32.xlu0 %v9243, 96
      %v9338 = vpop.permute.xlu0 %9337
      %9339 = vrot.lane.b32.xlu0 %v9244, 96
      %v9340 = vpop.permute.xlu0 %9339
      %v9373 = vmul.f32 %v9150, %v9278
      %v9374 = vmul.f32 %v9152, %v9280
      %v9375 = vmul.f32 %v9154, %v9282
      %v9376 = vmul.f32 %v9156, %v9284
      %v9377 = vmul.f32 %v9158, %v9286
      %v9378 = vmul.f32 %v9160, %v9288
      %v9379 = vmul.f32 %v9162, %v9290
      %v9380 = vmul.f32 %v9164, %v9292
      %v9381 = vmul.f32 %v9166, %v9294
      %v9382 = vmul.f32 %v9168, %v9296
      %v9383 = vmul.f32 %v9170, %v9298
      %v9384 = vmul.f32 %v9172, %v9300
      %v9385 = vmul.f32 %v9174, %v9302
      %v9386 = vmul.f32 %v9176, %v9304
      %v9387 = vmul.f32 %v9178, %v9306
      %v9388 = vmul.f32 %v9180, %v9308
      %v9389 = vmul.f32 %v9182, %v9310
      %v9390 = vmul.f32 %v9184, %v9312
      %v9391 = vmul.f32 %v9186, %v9314
      %v9392 = vmul.f32 %v9188, %v9316
      %v9393 = vmul.f32 %v9190, %v9318
      %v9394 = vmul.f32 %v9192, %v9320
      %v9395 = vmul.f32 %v9194, %v9322
      %v9396 = vmul.f32 %v9196, %v9324
      %v9397 = vmul.f32 %v9198, %v9326
      %v9398 = vmul.f32 %v9200, %v9328
      %v9399 = vmul.f32 %v9202, %v9330
      %v9400 = vmul.f32 %v9204, %v9332
      %v9401 = vmul.f32 %v9206, %v9334
      %v9402 = vmul.f32 %v9208, %v9336
      %v9403 = vmul.f32 %v9210, %v9338
      %v9404 = vmul.f32 %v9212, %v9340
      %v9405 = vsub.f32 1.0, %v9150
      %v9406 = vsub.f32 1.0, %v9152
      %v9407 = vsub.f32 1.0, %v9154
      %v9408 = vsub.f32 1.0, %v9156
      %v9409 = vsub.f32 1.0, %v9158
      %v9410 = vsub.f32 1.0, %v9160
      %v9411 = vsub.f32 1.0, %v9162
      %v9412 = vsub.f32 1.0, %v9164
      %v9413 = vsub.f32 1.0, %v9166
      %v9414 = vsub.f32 1.0, %v9168
      %v9415 = vsub.f32 1.0, %v9170
      %v9416 = vsub.f32 1.0, %v9172
      %v9417 = vsub.f32 1.0, %v9174
      %v9418 = vsub.f32 1.0, %v9176
      %v9419 = vsub.f32 1.0, %v9178
      %v9420 = vsub.f32 1.0, %v9180
      %v9421 = vsub.f32 1.0, %v9182
      %v9422 = vsub.f32 1.0, %v9184
      %v9423 = vsub.f32 1.0, %v9186
      %v9424 = vsub.f32 1.0, %v9188
      %v9425 = vsub.f32 1.0, %v9190
      %v9426 = vsub.f32 1.0, %v9192
      %v9427 = vsub.f32 1.0, %v9194
      %v9428 = vsub.f32 1.0, %v9196
      %v9429 = vsub.f32 1.0, %v9198
      %v9430 = vsub.f32 1.0, %v9200
      %v9431 = vsub.f32 1.0, %v9202
      %v9432 = vsub.f32 1.0, %v9204
      %v9433 = vsub.f32 1.0, %v9206
      %v9434 = vsub.f32 1.0, %v9208
      %v9435 = vsub.f32 1.0, %v9210
      %v9436 = vsub.f32 1.0, %v9212
      %v9437 = vmul.f32 %v9405, %v3715
      %v9438 = vmul.f32 %v9406, %v3716
      %v9439 = vmul.f32 %v9407, %v3717
      %v9440 = vmul.f32 %v9408, %v3718
      %v9441 = vmul.f32 %v9409, %v3719
      %v9442 = vmul.f32 %v9410, %v3720
      %v9443 = vmul.f32 %v9411, %v3721
      %v9444 = vmul.f32 %v9412, %v3722
      %v9445 = vmul.f32 %v9413, %v3723
      %v9446 = vmul.f32 %v9414, %v3724
      %v9447 = vmul.f32 %v9415, %v3725
      %v9448 = vmul.f32 %v9416, %v3726
      %v9449 = vmul.f32 %v9417, %v3727
      %v9450 = vmul.f32 %v9418, %v3728
      %v9451 = vmul.f32 %v9419, %v3729
      %v9452 = vmul.f32 %v9420, %v3730
      %v9453 = vmul.f32 %v9421, %v3747
      %v9454 = vmul.f32 %v9422, %v3748
      %v9455 = vmul.f32 %v9423, %v3749
      %v9456 = vmul.f32 %v9424, %v3750
      %v9457 = vmul.f32 %v9425, %v3751
      %v9458 = vmul.f32 %v9426, %v3752
      %v9459 = vmul.f32 %v9427, %v3753
      %v9460 = vmul.f32 %v9428, %v3754
      %v9461 = vmul.f32 %v9429, %v3755
      %v9462 = vmul.f32 %v9430, %v3756
      %v9463 = vmul.f32 %v9431, %v3757
      %v9464 = vmul.f32 %v9432, %v3758
      %v9465 = vmul.f32 %v9433, %v3759
      %v9466 = vmul.f32 %v9434, %v3760
      %v9467 = vmul.f32 %v9435, %v3761
      %v9468 = vmul.f32 %v9436, %v3762
      %v9469 = vadd.f32 %v9373, %v9437
      %v9470 = vadd.f32 %v9374, %v9438
      %v9471 = vadd.f32 %v9375, %v9439
      %v9472 = vadd.f32 %v9376, %v9440
      %v9473 = vadd.f32 %v9377, %v9441
      %v9474 = vadd.f32 %v9378, %v9442
      %v9475 = vadd.f32 %v9379, %v9443
      %v9476 = vadd.f32 %v9380, %v9444
      %v9477 = vadd.f32 %v9381, %v9445
      %v9478 = vadd.f32 %v9382, %v9446
      %v9479 = vadd.f32 %v9383, %v9447
      %v9480 = vadd.f32 %v9384, %v9448
      %v9481 = vadd.f32 %v9385, %v9449
      %v9482 = vadd.f32 %v9386, %v9450
      %v9483 = vadd.f32 %v9387, %v9451
      %v9484 = vadd.f32 %v9388, %v9452
      %v9485 = vadd.f32 %v9389, %v9453
      %v9486 = vadd.f32 %v9390, %v9454
      %v9487 = vadd.f32 %v9391, %v9455
      %v9488 = vadd.f32 %v9392, %v9456
      %v9489 = vadd.f32 %v9393, %v9457
      %v9490 = vadd.f32 %v9394, %v9458
      %v9491 = vadd.f32 %v9395, %v9459
      %v9492 = vadd.f32 %v9396, %v9460
      %v9493 = vadd.f32 %v9397, %v9461
      %v9494 = vadd.f32 %v9398, %v9462
      %v9495 = vadd.f32 %v9399, %v9463
      %v9496 = vadd.f32 %v9400, %v9464
      %v9497 = vadd.f32 %v9401, %v9465
      %v9498 = vadd.f32 %v9402, %v9466
      %v9499 = vadd.f32 %v9403, %v9467
      %v9500 = vadd.f32 %v9404, %v9468
      %9533 = vrot.lane.b32.xlu0 %v9469, 64
      %v9534 = vpop.permute.xlu0 %9533
      %9535 = vrot.lane.b32.xlu0 %v9470, 64
      %v9536 = vpop.permute.xlu0 %9535
      %9537 = vrot.lane.b32.xlu0 %v9471, 64
      %v9538 = vpop.permute.xlu0 %9537
      %9539 = vrot.lane.b32.xlu0 %v9472, 64
      %v9540 = vpop.permute.xlu0 %9539
      %9541 = vrot.lane.b32.xlu0 %v9473, 64
      %v9542 = vpop.permute.xlu0 %9541
      %9543 = vrot.lane.b32.xlu0 %v9474, 64
      %v9544 = vpop.permute.xlu0 %9543
      %9545 = vrot.lane.b32.xlu0 %v9475, 64
      %v9546 = vpop.permute.xlu0 %9545
      %9547 = vrot.lane.b32.xlu0 %v9476, 64
      %v9548 = vpop.permute.xlu0 %9547
      %9549 = vrot.lane.b32.xlu0 %v9477, 64
      %v9550 = vpop.permute.xlu0 %9549
      %9551 = vrot.lane.b32.xlu0 %v9478, 64
      %v9552 = vpop.permute.xlu0 %9551
      %9553 = vrot.lane.b32.xlu0 %v9479, 64
      %v9554 = vpop.permute.xlu0 %9553
      %9555 = vrot.lane.b32.xlu0 %v9480, 64
      %v9556 = vpop.permute.xlu0 %9555
      %9557 = vrot.lane.b32.xlu0 %v9481, 64
      %v9558 = vpop.permute.xlu0 %9557
      %9559 = vrot.lane.b32.xlu0 %v9482, 64
      %v9560 = vpop.permute.xlu0 %9559
      %9561 = vrot.lane.b32.xlu0 %v9483, 64
      %v9562 = vpop.permute.xlu0 %9561
      %9563 = vrot.lane.b32.xlu0 %v9484, 64
      %v9564 = vpop.permute.xlu0 %9563
      %9565 = vrot.lane.b32.xlu0 %v9485, 64
      %v9566 = vpop.permute.xlu0 %9565
      %9567 = vrot.lane.b32.xlu0 %v9486, 64
      %v9568 = vpop.permute.xlu0 %9567
      %9569 = vrot.lane.b32.xlu0 %v9487, 64
      %v9570 = vpop.permute.xlu0 %9569
      %9571 = vrot.lane.b32.xlu0 %v9488, 64
      %v9572 = vpop.permute.xlu0 %9571
      %9573 = vrot.lane.b32.xlu0 %v9489, 64
      %v9574 = vpop.permute.xlu0 %9573
      %9575 = vrot.lane.b32.xlu0 %v9490, 64
      %v9576 = vpop.permute.xlu0 %9575
      %9577 = vrot.lane.b32.xlu0 %v9491, 64
      %v9578 = vpop.permute.xlu0 %9577
      %9579 = vrot.lane.b32.xlu0 %v9492, 64
      %v9580 = vpop.permute.xlu0 %9579
      %9581 = vrot.lane.b32.xlu0 %v9493, 64
      %v9582 = vpop.permute.xlu0 %9581
      %9583 = vrot.lane.b32.xlu0 %v9494, 64
      %v9584 = vpop.permute.xlu0 %9583
      %9585 = vrot.lane.b32.xlu0 %v9495, 64
      %v9586 = vpop.permute.xlu0 %9585
      %9587 = vrot.lane.b32.xlu0 %v9496, 64
      %v9588 = vpop.permute.xlu0 %9587
      %9589 = vrot.lane.b32.xlu0 %v9497, 64
      %v9590 = vpop.permute.xlu0 %9589
      %9591 = vrot.lane.b32.xlu0 %v9498, 64
      %v9592 = vpop.permute.xlu0 %9591
      %9593 = vrot.lane.b32.xlu0 %v9499, 64
      %v9594 = vpop.permute.xlu0 %9593
      %9595 = vrot.lane.b32.xlu0 %v9500, 64
      %v9596 = vpop.permute.xlu0 %9595
      %v9629 = vmul.f32 %v9150, %v9534
      %v9630 = vmul.f32 %v9152, %v9536
      %v9631 = vmul.f32 %v9154, %v9538
      %v9632 = vmul.f32 %v9156, %v9540
      %v9633 = vmul.f32 %v9158, %v9542
      %v9634 = vmul.f32 %v9160, %v9544
      %v9635 = vmul.f32 %v9162, %v9546
      %v9636 = vmul.f32 %v9164, %v9548
      %v9637 = vmul.f32 %v9166, %v9550
      %v9638 = vmul.f32 %v9168, %v9552
      %v9639 = vmul.f32 %v9170, %v9554
      %v9640 = vmul.f32 %v9172, %v9556
      %v9641 = vmul.f32 %v9174, %v9558
      %v9642 = vmul.f32 %v9176, %v9560
      %v9643 = vmul.f32 %v9178, %v9562
      %v9644 = vmul.f32 %v9180, %v9564
      %v9645 = vmul.f32 %v9182, %v9566
      %v9646 = vmul.f32 %v9184, %v9568
      %v9647 = vmul.f32 %v9186, %v9570
      %v9648 = vmul.f32 %v9188, %v9572
      %v9649 = vmul.f32 %v9190, %v9574
      %v9650 = vmul.f32 %v9192, %v9576
      %v9651 = vmul.f32 %v9194, %v9578
      %v9652 = vmul.f32 %v9196, %v9580
      %v9653 = vmul.f32 %v9198, %v9582
      %v9654 = vmul.f32 %v9200, %v9584
      %v9655 = vmul.f32 %v9202, %v9586
      %v9656 = vmul.f32 %v9204, %v9588
      %v9657 = vmul.f32 %v9206, %v9590
      %v9658 = vmul.f32 %v9208, %v9592
      %v9659 = vmul.f32 %v9210, %v9594
      %v9660 = vmul.f32 %v9212, %v9596
      %9693 = vrot.lane.b32.xlu0 %v9629, 64
      %v9694 = vpop.permute.xlu0 %9693
      %9695 = vrot.lane.b32.xlu0 %v9630, 64
      %v9696 = vpop.permute.xlu0 %9695
      %9697 = vrot.lane.b32.xlu0 %v9631, 64
      %v9698 = vpop.permute.xlu0 %9697
      %9699 = vrot.lane.b32.xlu0 %v9632, 64
      %v9700 = vpop.permute.xlu0 %9699
      %9701 = vrot.lane.b32.xlu0 %v9633, 64
      %v9702 = vpop.permute.xlu0 %9701
      %9703 = vrot.lane.b32.xlu0 %v9634, 64
      %v9704 = vpop.permute.xlu0 %9703
      %9705 = vrot.lane.b32.xlu0 %v9635, 64
      %v9706 = vpop.permute.xlu0 %9705
      %9707 = vrot.lane.b32.xlu0 %v9636, 64
      %v9708 = vpop.permute.xlu0 %9707
      %9709 = vrot.lane.b32.xlu0 %v9637, 64
      %v9710 = vpop.permute.xlu0 %9709
      %9711 = vrot.lane.b32.xlu0 %v9638, 64
      %v9712 = vpop.permute.xlu0 %9711
      %9713 = vrot.lane.b32.xlu0 %v9639, 64
      %v9714 = vpop.permute.xlu0 %9713
      %9715 = vrot.lane.b32.xlu0 %v9640, 64
      %v9716 = vpop.permute.xlu0 %9715
      %9717 = vrot.lane.b32.xlu0 %v9641, 64
      %v9718 = vpop.permute.xlu0 %9717
      %9719 = vrot.lane.b32.xlu0 %v9642, 64
      %v9720 = vpop.permute.xlu0 %9719
      %9721 = vrot.lane.b32.xlu0 %v9643, 64
      %v9722 = vpop.permute.xlu0 %9721
      %9723 = vrot.lane.b32.xlu0 %v9644, 64
      %v9724 = vpop.permute.xlu0 %9723
      %9725 = vrot.lane.b32.xlu0 %v9645, 64
      %v9726 = vpop.permute.xlu0 %9725
      %9727 = vrot.lane.b32.xlu0 %v9646, 64
      %v9728 = vpop.permute.xlu0 %9727
      %9729 = vrot.lane.b32.xlu0 %v9647, 64
      %v9730 = vpop.permute.xlu0 %9729
      %9731 = vrot.lane.b32.xlu0 %v9648, 64
      %v9732 = vpop.permute.xlu0 %9731
      %9733 = vrot.lane.b32.xlu0 %v9649, 64
      %v9734 = vpop.permute.xlu0 %9733
      %9735 = vrot.lane.b32.xlu0 %v9650, 64
      %v9736 = vpop.permute.xlu0 %9735
      %9737 = vrot.lane.b32.xlu0 %v9651, 64
      %v9738 = vpop.permute.xlu0 %9737
      %9739 = vrot.lane.b32.xlu0 %v9652, 64
      %v9740 = vpop.permute.xlu0 %9739
      %9741 = vrot.lane.b32.xlu0 %v9653, 64
      %v9742 = vpop.permute.xlu0 %9741
      %9743 = vrot.lane.b32.xlu0 %v9654, 64
      %v9744 = vpop.permute.xlu0 %9743
      %9745 = vrot.lane.b32.xlu0 %v9655, 64
      %v9746 = vpop.permute.xlu0 %9745
      %9747 = vrot.lane.b32.xlu0 %v9656, 64
      %v9748 = vpop.permute.xlu0 %9747
      %9749 = vrot.lane.b32.xlu0 %v9657, 64
      %v9750 = vpop.permute.xlu0 %9749
      %9751 = vrot.lane.b32.xlu0 %v9658, 64
      %v9752 = vpop.permute.xlu0 %9751
      %9753 = vrot.lane.b32.xlu0 %v9659, 64
      %v9754 = vpop.permute.xlu0 %9753
      %9755 = vrot.lane.b32.xlu0 %v9660, 64
      %v9756 = vpop.permute.xlu0 %9755
      %9789 = vxpose.xlu0.b32.start [1/16] %v9694, 128
      %9790 = vxpose.xlu0.b32.cont [2/16] %v9696, 128
      %9791 = vxpose.xlu0.b32.cont [3/16] %v9698, 128
      %9792 = vxpose.xlu0.b32.cont [4/16] %v9700, 128
      %9793 = vxpose.xlu0.b32.cont [5/16] %v9702, 128
      %9794 = vxpose.xlu0.b32.cont [6/16] %v9704, 128
      %9795 = vxpose.xlu0.b32.cont [7/16] %v9706, 128
      %9796 = vxpose.xlu0.b32.cont [8/16] %v9708, 128
      %9797 = vxpose.xlu0.b32.cont [9/16] %v9710, 128
      %9798 = vxpose.xlu0.b32.cont [10/16] %v9712, 128
      %9799 = vxpose.xlu0.b32.cont [11/16] %v9714, 128
      %9800 = vxpose.xlu0.b32.cont [12/16] %v9716, 128
      %9801 = vxpose.xlu0.b32.cont [13/16] %v9718, 128
      %9802 = vxpose.xlu0.b32.cont [14/16] %v9720, 128
      %9803 = vxpose.xlu0.b32.cont [15/16] %v9722, 128
      %9804 = vxpose.xlu0.b32.end [16/16] %v9724, 128
      %v9805 = vpop.trf.xlu0
      %v9806 = vpop.trf.xlu0
      %v9807 = vpop.trf.xlu0
      %v9808 = vpop.trf.xlu0
      %v9809 = vpop.trf.xlu0
      %v9810 = vpop.trf.xlu0
      %v9811 = vpop.trf.xlu0
      %v9812 = vpop.trf.xlu0
      %v9813 = vpop.trf.xlu0
      %v9814 = vpop.trf.xlu0
      %v9815 = vpop.trf.xlu0
      %v9816 = vpop.trf.xlu0
      %v9817 = vpop.trf.xlu0
      %v9818 = vpop.trf.xlu0
      %v9819 = vpop.trf.xlu0
      %v9820 = vpop.trf.xlu0
      %9821 = vxpose.xlu0.b32.start [1/16] %v9726, 128
      %9822 = vxpose.xlu0.b32.cont [2/16] %v9728, 128
      %9823 = vxpose.xlu0.b32.cont [3/16] %v9730, 128
      %9824 = vxpose.xlu0.b32.cont [4/16] %v9732, 128
      %9825 = vxpose.xlu0.b32.cont [5/16] %v9734, 128
      %9826 = vxpose.xlu0.b32.cont [6/16] %v9736, 128
      %9827 = vxpose.xlu0.b32.cont [7/16] %v9738, 128
      %9828 = vxpose.xlu0.b32.cont [8/16] %v9740, 128
      %9829 = vxpose.xlu0.b32.cont [9/16] %v9742, 128
      %9830 = vxpose.xlu0.b32.cont [10/16] %v9744, 128
      %9831 = vxpose.xlu0.b32.cont [11/16] %v9746, 128
      %9832 = vxpose.xlu0.b32.cont [12/16] %v9748, 128
      %9833 = vxpose.xlu0.b32.cont [13/16] %v9750, 128
      %9834 = vxpose.xlu0.b32.cont [14/16] %v9752, 128
      %9835 = vxpose.xlu0.b32.cont [15/16] %v9754, 128
      %9836 = vxpose.xlu0.b32.end [16/16] %v9756, 128
      %v9837 = vpop.trf.xlu0
      %v9838 = vpop.trf.xlu0
      %v9839 = vpop.trf.xlu0
      %v9840 = vpop.trf.xlu0
      %v9841 = vpop.trf.xlu0
      %v9842 = vpop.trf.xlu0
      %v9843 = vpop.trf.xlu0
      %v9844 = vpop.trf.xlu0
      %v9845 = vpop.trf.xlu0
      %v9846 = vpop.trf.xlu0
      %v9847 = vpop.trf.xlu0
      %v9848 = vpop.trf.xlu0
      %v9849 = vpop.trf.xlu0
      %v9850 = vpop.trf.xlu0
      %v9851 = vpop.trf.xlu0
      %v9852 = vpop.trf.xlu0
      %9853 = vst [vmem:[%s596] sm:$0xff] %v9805
      %9854 = vst [vmem:[%s596 + $0x8] sm:$0xff] %v9837
      %9855 = vst [vmem:[%s596 + $0x10] sm:$0xff] %v9806
      %9856 = vst [vmem:[%s596 + $0x18] sm:$0xff] %v9838
      %9857 = vst [vmem:[%s596 + $0x20] sm:$0xff] %v9807
      %9858 = vst [vmem:[%s596 + $0x28] sm:$0xff] %v9839
      %9859 = vst [vmem:[%s596 + $0x30] sm:$0xff] %v9808
      %9860 = vst [vmem:[%s596 + $0x38] sm:$0xff] %v9840
      %9893 = vrot.lane.b32.xlu0 %v3467, 96
      %v9894 = vpop.permute.xlu0 %9893
      %9895 = vrot.lane.b32.xlu0 %v3468, 96
      %v9896 = vpop.permute.xlu0 %9895
      %9897 = vrot.lane.b32.xlu0 %v3469, 96
      %v9898 = vpop.permute.xlu0 %9897
      %9899 = vrot.lane.b32.xlu0 %v3470, 96
      %v9900 = vpop.permute.xlu0 %9899
      %9901 = vrot.lane.b32.xlu0 %v3471, 96
      %v9902 = vpop.permute.xlu0 %9901
      %9903 = vrot.lane.b32.xlu0 %v3472, 96
      %v9904 = vpop.permute.xlu0 %9903
      %9905 = vrot.lane.b32.xlu0 %v3473, 96
      %v9906 = vpop.permute.xlu0 %9905
      %9907 = vrot.lane.b32.xlu0 %v3474, 96
      %v9908 = vpop.permute.xlu0 %9907
      %9909 = vrot.lane.b32.xlu0 %v3475, 96
      %v9910 = vpop.permute.xlu0 %9909
      %9911 = vrot.lane.b32.xlu0 %v3476, 96
      %v9912 = vpop.permute.xlu0 %9911
      %9913 = vrot.lane.b32.xlu0 %v3477, 96
      %v9914 = vpop.permute.xlu0 %9913
      %9915 = vrot.lane.b32.xlu0 %v3478, 96
      %v9916 = vpop.permute.xlu0 %9915
      %9917 = vrot.lane.b32.xlu0 %v3479, 96
      %v9918 = vpop.permute.xlu0 %9917
      %9919 = vrot.lane.b32.xlu0 %v3480, 96
      %v9920 = vpop.permute.xlu0 %9919
      %9921 = vrot.lane.b32.xlu0 %v3481, 96
      %v9922 = vpop.permute.xlu0 %9921
      %9923 = vrot.lane.b32.xlu0 %v3482, 96
      %v9924 = vpop.permute.xlu0 %9923
      %9925 = vrot.lane.b32.xlu0 %v3483, 96
      %v9926 = vpop.permute.xlu0 %9925
      %9927 = vrot.lane.b32.xlu0 %v3484, 96
      %v9928 = vpop.permute.xlu0 %9927
      %9929 = vrot.lane.b32.xlu0 %v3485, 96
      %v9930 = vpop.permute.xlu0 %9929
      %9931 = vrot.lane.b32.xlu0 %v3486, 96
      %v9932 = vpop.permute.xlu0 %9931
      %9933 = vrot.lane.b32.xlu0 %v3487, 96
      %v9934 = vpop.permute.xlu0 %9933
      %9935 = vrot.lane.b32.xlu0 %v3488, 96
      %v9936 = vpop.permute.xlu0 %9935
      %9937 = vrot.lane.b32.xlu0 %v3489, 96
      %v9938 = vpop.permute.xlu0 %9937
      %9939 = vrot.lane.b32.xlu0 %v3490, 96
      %v9940 = vpop.permute.xlu0 %9939
      %9941 = vrot.lane.b32.xlu0 %v3491, 96
      %v9942 = vpop.permute.xlu0 %9941
      %9943 = vrot.lane.b32.xlu0 %v3492, 96
      %v9944 = vpop.permute.xlu0 %9943
      %9945 = vrot.lane.b32.xlu0 %v3493, 96
      %v9946 = vpop.permute.xlu0 %9945
      %9947 = vrot.lane.b32.xlu0 %v3494, 96
      %v9948 = vpop.permute.xlu0 %9947
      %9949 = vrot.lane.b32.xlu0 %v3495, 96
      %v9950 = vpop.permute.xlu0 %9949
      %9951 = vrot.lane.b32.xlu0 %v3496, 96
      %v9952 = vpop.permute.xlu0 %9951
      %9953 = vrot.lane.b32.xlu0 %v3497, 96
      %v9954 = vpop.permute.xlu0 %9953
      %9955 = vrot.lane.b32.xlu0 %v3498, 96
      %v9956 = vpop.permute.xlu0 %9955
      %9989 = vxpose.xlu0.b32.start [1/16] %v9894, 128
      %9990 = vxpose.xlu0.b32.cont [2/16] %v9896, 128
      %9991 = vxpose.xlu0.b32.cont [3/16] %v9898, 128
      %9992 = vxpose.xlu0.b32.cont [4/16] %v9900, 128
      %9993 = vxpose.xlu0.b32.cont [5/16] %v9902, 128
      %9994 = vxpose.xlu0.b32.cont [6/16] %v9904, 128
      %9995 = vxpose.xlu0.b32.cont [7/16] %v9906, 128
      %9996 = vxpose.xlu0.b32.cont [8/16] %v9908, 128
      %9997 = vxpose.xlu0.b32.cont [9/16] %v9910, 128
      %9998 = vxpose.xlu0.b32.cont [10/16] %v9912, 128
      %9999 = vxpose.xlu0.b32.cont [11/16] %v9914, 128
      %10000 = vxpose.xlu0.b32.cont [12/16] %v9916, 128
      %10001 = vxpose.xlu0.b32.cont [13/16] %v9918, 128
      %10002 = vxpose.xlu0.b32.cont [14/16] %v9920, 128
      %10003 = vxpose.xlu0.b32.cont [15/16] %v9922, 128
      %10004 = vxpose.xlu0.b32.end [16/16] %v9924, 128
      %v10005 = vpop.trf.xlu0
      %v10006 = vpop.trf.xlu0
      %v10007 = vpop.trf.xlu0
      %v10008 = vpop.trf.xlu0
      %v10009 = vpop.trf.xlu0
      %v10010 = vpop.trf.xlu0
      %v10011 = vpop.trf.xlu0
      %v10012 = vpop.trf.xlu0
      %v10013 = vpop.trf.xlu0
      %v10014 = vpop.trf.xlu0
      %v10015 = vpop.trf.xlu0
      %v10016 = vpop.trf.xlu0
      %v10017 = vpop.trf.xlu0
      %v10018 = vpop.trf.xlu0
      %v10019 = vpop.trf.xlu0
      %v10020 = vpop.trf.xlu0
      %10021 = vxpose.xlu0.b32.start [1/16] %v9926, 128
      %10022 = vxpose.xlu0.b32.cont [2/16] %v9928, 128
      %10023 = vxpose.xlu0.b32.cont [3/16] %v9930, 128
      %10024 = vxpose.xlu0.b32.cont [4/16] %v9932, 128
      %10025 = vxpose.xlu0.b32.cont [5/16] %v9934, 128
      %10026 = vxpose.xlu0.b32.cont [6/16] %v9936, 128
      %10027 = vxpose.xlu0.b32.cont [7/16] %v9938, 128
      %10028 = vxpose.xlu0.b32.cont [8/16] %v9940, 128
      %10029 = vxpose.xlu0.b32.cont [9/16] %v9942, 128
      %10030 = vxpose.xlu0.b32.cont [10/16] %v9944, 128
      %10031 = vxpose.xlu0.b32.cont [11/16] %v9946, 128
      %10032 = vxpose.xlu0.b32.cont [12/16] %v9948, 128
      %10033 = vxpose.xlu0.b32.cont [13/16] %v9950, 128
      %10034 = vxpose.xlu0.b32.cont [14/16] %v9952, 128
      %10035 = vxpose.xlu0.b32.cont [15/16] %v9954, 128
      %10036 = vxpose.xlu0.b32.end [16/16] %v9956, 128
      %v10037 = vpop.trf.xlu0
      %v10038 = vpop.trf.xlu0
      %v10039 = vpop.trf.xlu0
      %v10040 = vpop.trf.xlu0
      %v10041 = vpop.trf.xlu0
      %v10042 = vpop.trf.xlu0
      %v10043 = vpop.trf.xlu0
      %v10044 = vpop.trf.xlu0
      %v10045 = vpop.trf.xlu0
      %v10046 = vpop.trf.xlu0
      %v10047 = vpop.trf.xlu0
      %v10048 = vpop.trf.xlu0
      %v10049 = vpop.trf.xlu0
      %v10050 = vpop.trf.xlu0
      %v10051 = vpop.trf.xlu0
      %v10052 = vpop.trf.xlu0
      %10053 = vst [vmem:[%s601] sm:$0xff] %v10005
      %10054 = vst [vmem:[%s601 + $0x8] sm:$0xff] %v10037
      %10055 = vst [vmem:[%s601 + $0x10] sm:$0xff] %v10006
      %10056 = vst [vmem:[%s601 + $0x18] sm:$0xff] %v10038
      %10057 = vst [vmem:[%s601 + $0x20] sm:$0xff] %v10007
      %10058 = vst [vmem:[%s601 + $0x28] sm:$0xff] %v10039
      %10059 = vst [vmem:[%s601 + $0x30] sm:$0xff] %v10008
      %10060 = vst [vmem:[%s601 + $0x38] sm:$0xff] %v10040
      %10061 = vxpose.xlu0.b32.start [1/16] %v9469, 128
      %10062 = vxpose.xlu0.b32.cont [2/16] %v9470, 128
      %10063 = vxpose.xlu0.b32.cont [3/16] %v9471, 128
      %10064 = vxpose.xlu0.b32.cont [4/16] %v9472, 128
      %10065 = vxpose.xlu0.b32.cont [5/16] %v9473, 128
      %10066 = vxpose.xlu0.b32.cont [6/16] %v9474, 128
      %10067 = vxpose.xlu0.b32.cont [7/16] %v9475, 128
      %10068 = vxpose.xlu0.b32.cont [8/16] %v9476, 128
      %10069 = vxpose.xlu0.b32.cont [9/16] %v9477, 128
      %10070 = vxpose.xlu0.b32.cont [10/16] %v9478, 128
      %10071 = vxpose.xlu0.b32.cont [11/16] %v9479, 128
      %10072 = vxpose.xlu0.b32.cont [12/16] %v9480, 128
      %10073 = vxpose.xlu0.b32.cont [13/16] %v9481, 128
      %10074 = vxpose.xlu0.b32.cont [14/16] %v9482, 128
      %10075 = vxpose.xlu0.b32.cont [15/16] %v9483, 128
      %10076 = vxpose.xlu0.b32.end [16/16] %v9484, 128
      %v10077 = vpop.trf.xlu0
      %v10078 = vpop.trf.xlu0
      %v10079 = vpop.trf.xlu0
      %v10080 = vpop.trf.xlu0
      %v10081 = vpop.trf.xlu0
      %v10082 = vpop.trf.xlu0
      %v10083 = vpop.trf.xlu0
      %v10084 = vpop.trf.xlu0
      %v10085 = vpop.trf.xlu0
      %v10086 = vpop.trf.xlu0
      %v10087 = vpop.trf.xlu0
      %v10088 = vpop.trf.xlu0
      %v10089 = vpop.trf.xlu0
      %v10090 = vpop.trf.xlu0
      %v10091 = vpop.trf.xlu0
      %v10092 = vpop.trf.xlu0
      %10093 = vxpose.xlu0.b32.start [1/16] %v9485, 128
      %10094 = vxpose.xlu0.b32.cont [2/16] %v9486, 128
      %10095 = vxpose.xlu0.b32.cont [3/16] %v9487, 128
      %10096 = vxpose.xlu0.b32.cont [4/16] %v9488, 128
      %10097 = vxpose.xlu0.b32.cont [5/16] %v9489, 128
      %10098 = vxpose.xlu0.b32.cont [6/16] %v9490, 128
      %10099 = vxpose.xlu0.b32.cont [7/16] %v9491, 128
      %10100 = vxpose.xlu0.b32.cont [8/16] %v9492, 128
      %10101 = vxpose.xlu0.b32.cont [9/16] %v9493, 128
      %10102 = vxpose.xlu0.b32.cont [10/16] %v9494, 128
      %10103 = vxpose.xlu0.b32.cont [11/16] %v9495, 128
      %10104 = vxpose.xlu0.b32.cont [12/16] %v9496, 128
      %10105 = vxpose.xlu0.b32.cont [13/16] %v9497, 128
      %10106 = vxpose.xlu0.b32.cont [14/16] %v9498, 128
      %10107 = vxpose.xlu0.b32.cont [15/16] %v9499, 128
      %10108 = vxpose.xlu0.b32.end [16/16] %v9500, 128
      %v10109 = vpop.trf.xlu0
      %v10110 = vpop.trf.xlu0
      %v10111 = vpop.trf.xlu0
      %v10112 = vpop.trf.xlu0
      %v10113 = vpop.trf.xlu0
      %v10114 = vpop.trf.xlu0
      %v10115 = vpop.trf.xlu0
      %v10116 = vpop.trf.xlu0
      %v10117 = vpop.trf.xlu0
      %v10118 = vpop.trf.xlu0
      %v10119 = vpop.trf.xlu0
      %v10120 = vpop.trf.xlu0
      %v10121 = vpop.trf.xlu0
      %v10122 = vpop.trf.xlu0
      %v10123 = vpop.trf.xlu0
      %v10124 = vpop.trf.xlu0
      %10125 = vst [vmem:[%s606] sm:$0xff] %v10077
      %10126 = vst [vmem:[%s606 + $0x8] sm:$0xff] %v10109
      %10127 = vst [vmem:[%s606 + $0x10] sm:$0xff] %v10078
      %10128 = vst [vmem:[%s606 + $0x18] sm:$0xff] %v10110
      %10129 = vst [vmem:[%s606 + $0x20] sm:$0xff] %v10079
      %10130 = vst [vmem:[%s606 + $0x28] sm:$0xff] %v10111
      %10131 = vst [vmem:[%s606 + $0x30] sm:$0xff] %v10080
      %10132 = vst [vmem:[%s606 + $0x38] sm:$0xff] %v10112
      %p10133 = scmp.lt.s32.totalorder %s28, 1
      %s10134 = scalar_select %p10133, %s28, 1
      %s10135 = smul.addr %s10134, 8
      %s10136 = smul.addr %s10135, 8
      %s10137 = scalar_lea.vmem %s14, %s10136
      %p10138 = scmp.lt.s32.totalorder %s28, 1
      %s10139 = scalar_select %p10138, %s28, 1
      %s10140 = smul.addr %s10139, 8
      %s10141 = smul.addr %s10140, 8
      %s10142 = scalar_lea.vmem %s15, %s10141
      %p10143 = scmp.lt.s32.totalorder %s28, 1
      %s10144 = scalar_select %p10143, %s28, 1
      %s10145 = smul.addr %s10144, 8
      %s10146 = smul.addr %s10145, 8
      %s10147 = scalar_lea.vmem %s16, %s10146
      // Predicated region
      $region77: #{sa_convlstm_cell_forward.1} parent=75 // pred_check
        %p10148 = pneg %p360
      $region78: #{sa_convlstm_cell_forward.1} parent=75 // pred_check_branch
        %10150 = sbr.rel (%p10148) target = $region80
      $region79: #{sa_convlstm_cell_forward.1} parent=75 // pred_region
        _
      $region80: #{sa_convlstm_cell_forward.1} parent=75 // pred_fallthru
        _
      // Predicated region
      $region81: #{sa_convlstm_cell_forward.1} parent=75 // pred_check
        %p10151 = pneg %p386
      $region82: #{sa_convlstm_cell_forward.1} parent=75 // pred_check_branch
        %10153 = sbr.rel (%p10151) target = $region84
      $region83: #{sa_convlstm_cell_forward.1} parent=75 // pred_region
        _
      $region84: #{sa_convlstm_cell_forward.1} parent=75 // pred_fallthru
        _
      // Predicated region
      $region85: #{sa_convlstm_cell_forward.1} parent=75 // pred_check
        %p10154 = pneg %p412
      $region86: #{sa_convlstm_cell_forward.1} parent=75 // pred_check_branch
        %10156 = sbr.rel (%p10154) target = $region88
      $region87: #{sa_convlstm_cell_forward.1} parent=75 // pred_region
        _
      $region88: #{sa_convlstm_cell_forward.1} parent=75 // pred_fallthru
        _
    $region76: #{sa_convlstm_cell_forward.1} parent=5 // pred_fallthru
      _
    %p10157 = scmp.le.s32.totalorder 2, %s23
    // Predicated region
    $region89: #{sa_convlstm_cell_forward.1} parent=5 // pred_check
      %p10158 = pneg %p10157
    $region90: #{sa_convlstm_cell_forward.1} parent=5 // pred_check_branch
      %10160 = sbr.rel (%p10158) target = $region92
    $region91: #{sa_convlstm_cell_forward.1} parent=5 // pred_region
      %s10161 = ssub.s32 %s23, 2
      // Predicated region
      $region93: #{sa_convlstm_cell_forward.1} parent=91 // pred_check
        %p10162 = pneg %p366
      $region94: #{sa_convlstm_cell_forward.1} parent=91 // pred_check_branch
        %10164 = sbr.rel (%p10162) target = $region96
      $region95: #{sa_convlstm_cell_forward.1} parent=91 // pred_region
        %p10165 = scmp.lt.s32.totalorder %s29, 1
        %s10166 = scalar_select %p10165, %s29, 1
        %s10167 = smul.addr %s10166, 8
        %s10168 = smul.addr %s10167, 8
        %s10169 = scalar_lea.vmem %s14, %s10168
      $region96: #{sa_convlstm_cell_forward.1} parent=91 // pred_fallthru
        _
      // Predicated region
      $region97: #{sa_convlstm_cell_forward.1} parent=91 // pred_check
        %p10170 = pneg %p392
      $region98: #{sa_convlstm_cell_forward.1} parent=91 // pred_check_branch
        %10172 = sbr.rel (%p10170) target = $region100
      $region99: #{sa_convlstm_cell_forward.1} parent=91 // pred_region
        %p10173 = scmp.lt.s32.totalorder %s29, 1
        %s10174 = scalar_select %p10173, %s29, 1
        %s10175 = smul.addr %s10174, 8
        %s10176 = smul.addr %s10175, 8
        %s10177 = scalar_lea.vmem %s15, %s10176
      $region100: #{sa_convlstm_cell_forward.1} parent=91 // pred_fallthru
        _
      // Predicated region
      $region101: #{sa_convlstm_cell_forward.1} parent=91 // pred_check
        %p10178 = pneg %p418
      $region102: #{sa_convlstm_cell_forward.1} parent=91 // pred_check_branch
        %10180 = sbr.rel (%p10178) target = $region104
      $region103: #{sa_convlstm_cell_forward.1} parent=91 // pred_region
        %p10181 = scmp.lt.s32.totalorder %s29, 1
        %s10182 = scalar_select %p10181, %s29, 1
        %s10183 = smul.addr %s10182, 8
        %s10184 = smul.addr %s10183, 8
        %s10185 = scalar_lea.vmem %s16, %s10184
      $region104: #{sa_convlstm_cell_forward.1} parent=91 // pred_fallthru
        _
    $region92: #{sa_convlstm_cell_forward.1} parent=5 // pred_fallthru
      _
  $region6: #{sa_convlstm_cell_forward.1} parent=0 // loop_footer
    %s27 = sadd.s32 1, %s23
  $region7: #{sa_convlstm_cell_forward.1} parent=0 // loop_footer_branch
    %22 = sbr.rel target = $region3
  $region8: #{sa_convlstm_cell_forward.1} parent=0 // loop_exit
    _

</llo_original>
